<compile_context>
chip_gen: v7x
topology: tpu7x:2x2x1
jax: 0.10.0
libtpu: 0.0.40
codegen_flags: <defaults>
</compile_context>

<pallas_src>
import functools
import math

import numpy as np

import jax
import jax.numpy as jnp
from jax.experimental import pallas as pl
from jax.experimental.pallas import tpu as pltpu

_BN_EPS = 1e-5


# ---------------------------------------------------------------------------
# Pallas kernel (whole generator, single invocation, everything in VMEM)
# ---------------------------------------------------------------------------
def _sigmoid(z):
    return 1.0 / (1.0 + jnp.exp(-z))


def _make_generator_kernel(n_blocks):
    """Kernel ref layout:
        inputs : xb, w0, g0_scale, g0_shift,
                 [w_taps, g_taps, bn_scale, bn_shift] * n_blocks,
                 m_final, b_final
        output : out  -- shape (1, N*H*W), lane-dense
    """

    def kernel(*refs):
        xb_ref, w0_ref, g0s_ref, g0h_ref = refs[0:4]
        mfin_ref = refs[4 + 4 * n_blocks]
        bfin_ref = refs[5 + 4 * n_blocks]
        out_ref = refs[-1]

        # ---- Linear + BatchNorm2d + Swish, produced directly in the
        # (C0, N*cis*cis) layout (the .view() reshape is folded into the
        # precomputed weight/input matrices). --------------------------------
        a = jnp.dot(w0_ref[...], xb_ref[...],
                    preferred_element_type=jnp.float32)
        a = a * g0s_ref[...] + g0h_ref[...]          # folded bias + BN (eval)
        a = a * _sigmoid(a)                          # Swish

        # ---- Upsampling blocks: ConvTranspose2d(k3,s2,p1,op1, no bias)
        # + BatchNorm + Swish.  Per tap: channel mix (MXU) then constant 0/1
        # scatter matrix (MXU).  Accumulate over the 9 taps in f32. ----------
        for blk in range(n_blocks):
            w_ref, g_ref, s_ref, h_ref = refs[4 + 4 * blk: 8 + 4 * blk]
            n_taps, c_out = w_ref.shape[0], w_ref.shape[1]
            p_out = g_ref.shape[2]
            acc = jnp.zeros((c_out, p_out), jnp.float32)
            for t in range(n_taps):
                mix = jnp.dot(w_ref[t], a,
                              preferred_element_type=jnp.float32)
                acc = acc + jnp.dot(mix, g_ref[t],
                                    preferred_element_type=jnp.float32)
            a = acc * s_ref[...] + h_ref[...]        # folded BatchNorm (eval)
            a = a * _sigmoid(a)                      # Swish

        # ---- ReflectionPad2d(3) + Conv2d(Cin, 1, 7): the 49 taps are folded
        # per input channel into a (P, P) matrix; output is a single
        # lane-dense (1, N*H*W) row. -----------------------------------------
        out = jnp.zeros(out_ref.shape, jnp.float32)
        for c in range(mfin_ref.shape[0]):
            out = out + jnp.dot(a[c:c + 1, :], mfin_ref[c],
                                preferred_element_type=jnp.float32)
        out_ref[...] = out + bfin_ref[...]

    return kernel


# ---------------------------------------------------------------------------
# Constant gather / fold matrices (numpy, computed once from the weights)
# ---------------------------------------------------------------------------
def _convT_gathers(n_batch, h_in, w_in, k=3, stride=2, pad=1, out_pad=1):
    """Per-tap 0/1 scatter matrices for ConvTranspose2d(k, stride, pad, out_pad).

    G[t, p_in, p_out] = 1 iff input position p_in contributes to output
    position p_out through kernel tap t = ky*k + kx (same batch element).
    Positions are flattened as p = n*H*W + y*W + x.
    """
    h_out = (h_in - 1) * stride - 2 * pad + k + out_pad
    w_out = (w_in - 1) * stride - 2 * pad + k + out_pad
    p_in, p_out = n_batch * h_in * w_in, n_batch * h_out * w_out
    g = np.zeros((k * k, p_in, p_out), np.float32)
    for ky in range(k):
        for kx in range(k):
            t = ky * k + kx
            for yo in range(h_out):
                yy = yo + pad - ky
                if yy < 0 or yy % stride != 0:
                    continue
                yi = yy // stride
                if yi >= h_in:
                    continue
                for xo in range(w_out):
                    xx = xo + pad - kx
                    if xx < 0 or xx % stride != 0:
                        continue
                    xi = xx // stride
                    if xi >= w_in:
                        continue
                    for n in range(n_batch):
                        g[t,
                          n * h_in * w_in + yi * w_in + xi,
                          n * h_out * w_out + yo * w_out + xo] = 1.0
    return g


def _reflect_conv_matrices(weight, n_batch, hw, pad=3):
    """Fold ReflectionPad2d(pad) + Conv2d(cin, 1, k) into per-cin (P, P) maps.

    M[cin, p_in, p_out] = sum over kernel taps of w[0, cin, ky, kx] where the
    reflected-padded sample for output (yo, xo) is input (yi, xi).
    """
    cout, cin, k, _ = weight.shape
    assert cout == 1

    def refl(t):
        if t < 0:
            return -t
        if t >= hw:
            return 2 * (hw - 1) - t
        return t

    spatial = np.zeros((cin, hw * hw, hw * hw), np.float32)
    for c in range(cin):
        for ky in range(k):
            for kx in range(k):
                wv = float(weight[0, c, ky, kx])
                for yo in range(hw):
                    yi = refl(yo + ky - pad)
                    for xo in range(hw):
                        xi = refl(xo + kx - pad)
                        spatial[c, yi * hw + xi, yo * hw + xo] += wv
    eye = np.eye(n_batch, dtype=np.float32)
    return np.stack([np.kron(eye, spatial[c]) for c in range(cin)], axis=0)


def _bn_fold(bn):
    # TODO(synk): BatchNorm is folded in inference mode (running stats);
    # training-mode batch statistics are not computed inside the kernel.
    scale = np.asarray(bn["gamma"], np.float32) / np.sqrt(
        np.asarray(bn["var"], np.float32) + _BN_EPS)
    shift = np.asarray(bn["beta"], np.float32) - np.asarray(
        bn["mean"], np.float32) * scale
    return scale, shift


# ---------------------------------------------------------------------------
# Parameter construction (deterministic, PyTorch-default-like uniform init)
# ---------------------------------------------------------------------------
def init_generator_params(key, in_channels, output_size, conv_input_size=4):
    n_blocks = int(math.log2(output_size // conv_input_size))
    assert output_size == 2 ** n_blocks * conv_input_size
    hidden = in_channels * conv_input_size ** 2

    def bn_init(c):
        return {"gamma": jnp.ones((c,), jnp.float32),
                "beta": jnp.zeros((c,), jnp.float32),
                "mean": jnp.zeros((c,), jnp.float32),
                "var": jnp.ones((c,), jnp.float32)}

    params = {}
    keys = jax.random.split(key, 4 + n_blocks)

    bnd = 1.0 / math.sqrt(in_channels)
    params["lin_w"] = jax.random.uniform(
        keys[0], (hidden, in_channels), jnp.float32, -bnd, bnd)
    params["lin_b"] = jax.random.uniform(
        keys[1], (hidden,), jnp.float32, -bnd, bnd)
    params["bn0"] = bn_init(hidden)

    for i in range(n_blocks):
        cin = in_channels // 2 ** i
        cout = cin // 2
        bnd = 1.0 / math.sqrt(cin * 3 * 3)
        params[f"up{i}_w"] = jax.random.uniform(        # (Cin, Cout, 3, 3)
            keys[2 + i], (cin, cout, 3, 3), jnp.float32, -bnd, bnd)
        params[f"up{i}_bn"] = bn_init(cout)

    cin = in_channels // 2 ** n_blocks
    bnd = 1.0 / math.sqrt(cin * 7 * 7)
    params["conv_w"] = jax.random.uniform(
        keys[2 + n_blocks], (1, cin, 7, 7), jnp.float32, -bnd, bnd)
    params["conv_b"] = jax.random.uniform(
        keys[3 + n_blocks], (1,), jnp.float32, -bnd, bnd)

    params["_meta"] = (in_channels, output_size, conv_input_size, n_blocks)
    return params


def prepare_generator(params, batch_size):
    """One-time fold of weights / BN / spatial gathers into kernel constants."""
    in_ch, out_size, cis, n_blocks = params["_meta"]
    n = batch_size
    s0 = cis * cis
    c0 = in_ch                          # channels after .view(N, -1, cis, cis)
    prep = {"output_size": out_size, "conv_input_size": cis,
            "n_blocks": n_blocks}

    # ---- Linear + BatchNorm2d + Swish (layer 0) ---------------------------
    w_lin = np.asarray(params["lin_w"], np.float32)     # (c0*s0, in_ch)
    b_lin = np.asarray(params["lin_b"], np.float32)
    # W0m[c, s*in_ch + i] = w_lin[c*s0 + s, i]
    prep["w0"] = jnp.asarray(w_lin.reshape(c0, s0 * in_ch))
    scale0, shift0 = _bn_fold(params["bn0"])            # per feature f=c*s0+s
    g0 = scale0                                         # y = g0*v + h0
    h0 = scale0 * b_lin + shift0                        # (Linear bias folded)
    prep["g0_scale"] = jnp.asarray(
        np.repeat(g0.reshape(c0, 1, s0), n, axis=1).reshape(c0, n * s0))
    prep["g0_shift"] = jnp.asarray(
        np.repeat(h0.reshape(c0, 1, s0), n, axis=1).reshape(c0, n * s0))

    # ---- Upsampling blocks ------------------------------------------------
    h_cur = cis
    for i in range(n_blocks):
        wt = np.asarray(params[f"up{i}_w"], np.float32)  # (cin, cout, 3, 3)
        cin, cout, k, _ = wt.shape
        # per-tap channel-mix matrices (Cout, Cin), t = ky*3 + kx
        prep[f"w{i + 1}"] = jnp.asarray(
            np.transpose(wt, (2, 3, 1, 0)).reshape(k * k, cout, cin))
        prep[f"g{i + 1}"] = jnp.asarray(_convT_gathers(n, h_cur, h_cur))
        s, sh = _bn_fold(params[f"up{i}_bn"])
        prep[f"bn{i + 1}_scale"] = jnp.asarray(s.reshape(cout, 1))
        prep[f"bn{i + 1}_shift"] = jnp.asarray(sh.reshape(cout, 1))
        h_cur *= 2

    # ---- ReflectionPad2d(3) + Conv2d(cin, 1, 7) ---------------------------
    prep["m_final"] = jnp.asarray(
        _reflect_conv_matrices(np.asarray(params["conv_w"], np.float32),
                               n, h_cur))
    prep["b_final"] = jnp.asarray(
        np.asarray(params["conv_b"], np.float32).reshape(1, 1))
    return prep


# ---------------------------------------------------------------------------
# Forward pass (matches Generator.forward)
# ---------------------------------------------------------------------------
def generator_forward(prep, x):
    """x: (N, in_channels) float32  ->  (N, 1, output_size, output_size)."""
    n = x.shape[0]
    in_feat = x.shape[1]
    s0 = prep["conv_input_size"] ** 2
    h = prep["output_size"]
    n_blocks = prep["n_blocks"]

    # Expand x (N, in) into Xb (s0*in, N*s0) so the Linear layer lands
    # directly in the (channels, N*H*W) layout inside the kernel.
    eye = jnp.eye(s0, dtype=jnp.float32)
    xb = (eye[:, None, None, :] * x.T[None, :, :, None]).reshape(
        s0 * in_feat, n * s0)

    args = [xb, prep["w0"], prep["g0_scale"], prep["g0_shift"]]
    for i in range(n_blocks):
        args += [prep[f"w{i + 1}"], prep[f"g{i + 1}"],
                 prep[f"bn{i + 1}_scale"], prep[f"bn{i + 1}_shift"]]
    args += [prep["m_final"], prep["b_final"]]

    out_flat = pl.pallas_call(
        _make_generator_kernel(n_blocks),
        out_shape=jax.ShapeDtypeStruct((1, n * h * h), jnp.float32),
        compiler_params=pltpu.CompilerParams(
            vmem_limit_bytes=48 * 1024 * 1024),
    )(*args)

    # (1, N*H*W) with columns ordered (n, y, x)  ->  NCHW (N, 1, H, W)
    return out_flat.reshape(n, 1, h, h)


if __name__ == "__main__":
    key = jax.random.PRNGKey(0)
    k_param, k_input = jax.random.split(key)

    IN_CHANNELS, OUTPUT_SIZE, CONV_INPUT_SIZE, BATCH = 16, 16, 4, 2
    params = init_generator_params(k_param, IN_CHANNELS, OUTPUT_SIZE,
                                   CONV_INPUT_SIZE)
    prep = prepare_generator(params, BATCH)

    x = jax.random.normal(k_input, (BATCH, IN_CHANNELS), jnp.float32)

    fwd = jax.jit(functools.partial(generator_forward, prep))
    y = jax.block_until_ready(fwd(x))

    assert y.shape == (BATCH, 1, OUTPUT_SIZE, OUTPUT_SIZE), y.shape
    assert bool(jnp.all(jnp.isfinite(y)))
    print("KERNEL_OK")
</pallas_src>

<mosaic_0001>
module attributes {stable_mosaic.version = 11 : i64} {
  func.func @kernel(%arg0: memref<256x32xf32, #tpu.memory_space<vmem>>, %arg1: memref<16x256xf32, #tpu.memory_space<vmem>>, %arg2: memref<16x32xf32, #tpu.memory_space<vmem>>, %arg3: memref<16x32xf32, #tpu.memory_space<vmem>>, %arg4: memref<9x8x16xf32, #tpu.memory_space<vmem>>, %arg5: memref<9x32x128xf32, #tpu.memory_space<vmem>>, %arg6: memref<8x1xf32, #tpu.memory_space<vmem>>, %arg7: memref<8x1xf32, #tpu.memory_space<vmem>>, %arg8: memref<9x4x8xf32, #tpu.memory_space<vmem>>, %arg9: memref<9x128x512xf32, #tpu.memory_space<vmem>>, %arg10: memref<4x1xf32, #tpu.memory_space<vmem>>, %arg11: memref<4x1xf32, #tpu.memory_space<vmem>>, %arg12: memref<4x512x512xf32, #tpu.memory_space<vmem>>, %arg13: memref<1x1xf32, #tpu.memory_space<vmem>>, %arg14: memref<1x512xf32, #tpu.memory_space<vmem>>) attributes {dimension_semantics = [], scalar_prefetch = 0 : i64, scratch_operands = 0 : i64, tpu.core_type = #tpu.core_type<tc>} {
    %c0 = arith.constant 0 : index
    %c0_0 = arith.constant 0 : index
    %0 = vector.load %arg1[%c0, %c0_0] : memref<16x256xf32, #tpu.memory_space<vmem>>, vector<16x256xf32>
    %c0_1 = arith.constant 0 : index
    %c0_2 = arith.constant 0 : index
    %1 = vector.load %arg0[%c0_1, %c0_2] : memref<256x32xf32, #tpu.memory_space<vmem>>, vector<256x32xf32>
    %cst = arith.constant dense<0.000000e+00> : vector<16x32xf32>
    %2 = tpu.matmul %0, %1, %cst {dimension_numbers = #tpu.dot_dimension_numbers<[1], [0], [0], [1], [0, 0, 1, 1], [], []>} : vector<16x256xf32>, vector<256x32xf32>, vector<16x32xf32> -> vector<16x32xf32>
    %c0_3 = arith.constant 0 : index
    %c0_4 = arith.constant 0 : index
    %3 = vector.load %arg2[%c0_3, %c0_4] : memref<16x32xf32, #tpu.memory_space<vmem>>, vector<16x32xf32>
    %4 = arith.mulf %2, %3 : vector<16x32xf32>
    %c0_5 = arith.constant 0 : index
    %c0_6 = arith.constant 0 : index
    %5 = vector.load %arg3[%c0_5, %c0_6] : memref<16x32xf32, #tpu.memory_space<vmem>>, vector<16x32xf32>
    %6 = arith.addf %4, %5 : vector<16x32xf32>
    %cst_7 = arith.constant 0.000000e+00 : f32
    %7 = vector.broadcast %cst_7 : f32 to vector<16x32xf32>
    %8 = arith.subf %7, %6 : vector<16x32xf32>
    %9 = math.exp %8 : vector<16x32xf32>
    %cst_8 = arith.constant 1.000000e+00 : f32
    %10 = vector.broadcast %cst_8 : f32 to vector<16x32xf32>
    %11 = arith.addf %10, %9 : vector<16x32xf32>
    %cst_9 = arith.constant 1.000000e+00 : f32
    %12 = vector.broadcast %cst_9 : f32 to vector<16x32xf32>
    %13 = arith.divf %12, %11 : vector<16x32xf32>
    %14 = arith.mulf %6, %13 : vector<16x32xf32>
    %cst_10 = arith.constant 0.000000e+00 : f32
    %15 = vector.broadcast %cst_10 : f32 to vector<8x128xf32>
    %c0_11 = arith.constant 0 : index
    %c0_12 = arith.constant 0 : index
    %c0_13 = arith.constant 0 : index
    %16 = vector.load %arg4[%c0_11, %c0_12, %c0_13] : memref<9x8x16xf32, #tpu.memory_space<vmem>>, vector<1x8x16xf32>
    %17 = vector.shape_cast %16 : vector<1x8x16xf32> to vector<8x16xf32>
    %cst_14 = arith.constant dense<0.000000e+00> : vector<8x32xf32>
    %18 = tpu.matmul %17, %14, %cst_14 {dimension_numbers = #tpu.dot_dimension_numbers<[1], [0], [0], [1], [0, 0, 1, 1], [], []>} : vector<8x16xf32>, vector<16x32xf32>, vector<8x32xf32> -> vector<8x32xf32>
    %c0_15 = arith.constant 0 : index
    %c0_16 = arith.constant 0 : index
    %c0_17 = arith.constant 0 : index
    %19 = vector.load %arg5[%c0_15, %c0_16, %c0_17] : memref<9x32x128xf32, #tpu.memory_space<vmem>>, vector<1x32x128xf32>
    %20 = vector.shape_cast %19 : vector<1x32x128xf32> to vector<32x128xf32>
    %cst_18 = arith.constant dense<0.000000e+00> : vector<8x128xf32>
    %21 = tpu.matmul %18, %20, %cst_18 {dimension_numbers = #tpu.dot_dimension_numbers<[1], [0], [0], [1], [0, 0, 1, 1], [], []>} : vector<8x32xf32>, vector<32x128xf32>, vector<8x128xf32> -> vector<8x128xf32>
    %22 = arith.addf %15, %21 : vector<8x128xf32>
    %c1 = arith.constant 1 : index
    %c0_19 = arith.constant 0 : index
    %c0_20 = arith.constant 0 : index
    %23 = vector.load %arg4[%c1, %c0_19, %c0_20] : memref<9x8x16xf32, #tpu.memory_space<vmem>>, vector<1x8x16xf32>
    %24 = vector.shape_cast %23 : vector<1x8x16xf32> to vector<8x16xf32>
    %cst_21 = arith.constant dense<0.000000e+00> : vector<8x32xf32>
    %25 = tpu.matmul %24, %14, %cst_21 {dimension_numbers = #tpu.dot_dimension_numbers<[1], [0], [0], [1], [0, 0, 1, 1], [], []>} : vector<8x16xf32>, vector<16x32xf32>, vector<8x32xf32> -> vector<8x32xf32>
    %c1_22 = arith.constant 1 : index
    %c0_23 = arith.constant 0 : index
    %c0_24 = arith.constant 0 : index
    %26 = vector.load %arg5[%c1_22, %c0_23, %c0_24] : memref<9x32x128xf32, #tpu.memory_space<vmem>>, vector<1x32x128xf32>
    %27 = vector.shape_cast %26 : vector<1x32x128xf32> to vector<32x128xf32>
    %cst_25 = arith.constant dense<0.000000e+00> : vector<8x128xf32>
    %28 = tpu.matmul %25, %27, %cst_25 {dimension_numbers = #tpu.dot_dimension_numbers<[1], [0], [0], [1], [0, 0, 1, 1], [], []>} : vector<8x32xf32>, vector<32x128xf32>, vector<8x128xf32> -> vector<8x128xf32>
    %29 = arith.addf %22, %28 : vector<8x128xf32>
    %c2 = arith.constant 2 : index
    %c0_26 = arith.constant 0 : index
    %c0_27 = arith.constant 0 : index
    %30 = vector.load %arg4[%c2, %c0_26, %c0_27] : memref<9x8x16xf32, #tpu.memory_space<vmem>>, vector<1x8x16xf32>
    %31 = vector.shape_cast %30 : vector<1x8x16xf32> to vector<8x16xf32>
    %cst_28 = arith.constant dense<0.000000e+00> : vector<8x32xf32>
    %32 = tpu.matmul %31, %14, %cst_28 {dimension_numbers = #tpu.dot_dimension_numbers<[1], [0], [0], [1], [0, 0, 1, 1], [], []>} : vector<8x16xf32>, vector<16x32xf32>, vector<8x32xf32> -> vector<8x32xf32>
    %c2_29 = arith.constant 2 : index
    %c0_30 = arith.constant 0 : index
    %c0_31 = arith.constant 0 : index
    %33 = vector.load %arg5[%c2_29, %c0_30, %c0_31] : memref<9x32x128xf32, #tpu.memory_space<vmem>>, vector<1x32x128xf32>
    %34 = vector.shape_cast %33 : vector<1x32x128xf32> to vector<32x128xf32>
    %cst_32 = arith.constant dense<0.000000e+00> : vector<8x128xf32>
    %35 = tpu.matmul %32, %34, %cst_32 {dimension_numbers = #tpu.dot_dimension_numbers<[1], [0], [0], [1], [0, 0, 1, 1], [], []>} : vector<8x32xf32>, vector<32x128xf32>, vector<8x128xf32> -> vector<8x128xf32>
    %36 = arith.addf %29, %35 : vector<8x128xf32>
    %c3 = arith.constant 3 : index
    %c0_33 = arith.constant 0 : index
    %c0_34 = arith.constant 0 : index
    %37 = vector.load %arg4[%c3, %c0_33, %c0_34] : memref<9x8x16xf32, #tpu.memory_space<vmem>>, vector<1x8x16xf32>
    %38 = vector.shape_cast %37 : vector<1x8x16xf32> to vector<8x16xf32>
    %cst_35 = arith.constant dense<0.000000e+00> : vector<8x32xf32>
    %39 = tpu.matmul %38, %14, %cst_35 {dimension_numbers = #tpu.dot_dimension_numbers<[1], [0], [0], [1], [0, 0, 1, 1], [], []>} : vector<8x16xf32>, vector<16x32xf32>, vector<8x32xf32> -> vector<8x32xf32>
    %c3_36 = arith.constant 3 : index
    %c0_37 = arith.constant 0 : index
    %c0_38 = arith.constant 0 : index
    %40 = vector.load %arg5[%c3_36, %c0_37, %c0_38] : memref<9x32x128xf32, #tpu.memory_space<vmem>>, vector<1x32x128xf32>
    %41 = vector.shape_cast %40 : vector<1x32x128xf32> to vector<32x128xf32>
    %cst_39 = arith.constant dense<0.000000e+00> : vector<8x128xf32>
    %42 = tpu.matmul %39, %41, %cst_39 {dimension_numbers = #tpu.dot_dimension_numbers<[1], [0], [0], [1], [0, 0, 1, 1], [], []>} : vector<8x32xf32>, vector<32x128xf32>, vector<8x128xf32> -> vector<8x128xf32>
    %43 = arith.addf %36, %42 : vector<8x128xf32>
    %c4 = arith.constant 4 : index
    %c0_40 = arith.constant 0 : index
    %c0_41 = arith.constant 0 : index
    %44 = vector.load %arg4[%c4, %c0_40, %c0_41] : memref<9x8x16xf32, #tpu.memory_space<vmem>>, vector<1x8x16xf32>
    %45 = vector.shape_cast %44 : vector<1x8x16xf32> to vector<8x16xf32>
    %cst_42 = arith.constant dense<0.000000e+00> : vector<8x32xf32>
    %46 = tpu.matmul %45, %14, %cst_42 {dimension_numbers = #tpu.dot_dimension_numbers<[1], [0], [0], [1], [0, 0, 1, 1], [], []>} : vector<8x16xf32>, vector<16x32xf32>, vector<8x32xf32> -> vector<8x32xf32>
    %c4_43 = arith.constant 4 : index
    %c0_44 = arith.constant 0 : index
    %c0_45 = arith.constant 0 : index
    %47 = vector.load %arg5[%c4_43, %c0_44, %c0_45] : memref<9x32x128xf32, #tpu.memory_space<vmem>>, vector<1x32x128xf32>
    %48 = vector.shape_cast %47 : vector<1x32x128xf32> to vector<32x128xf32>
    %cst_46 = arith.constant dense<0.000000e+00> : vector<8x128xf32>
    %49 = tpu.matmul %46, %48, %cst_46 {dimension_numbers = #tpu.dot_dimension_numbers<[1], [0], [0], [1], [0, 0, 1, 1], [], []>} : vector<8x32xf32>, vector<32x128xf32>, vector<8x128xf32> -> vector<8x128xf32>
    %50 = arith.addf %43, %49 : vector<8x128xf32>
    %c5 = arith.constant 5 : index
    %c0_47 = arith.constant 0 : index
    %c0_48 = arith.constant 0 : index
    %51 = vector.load %arg4[%c5, %c0_47, %c0_48] : memref<9x8x16xf32, #tpu.memory_space<vmem>>, vector<1x8x16xf32>
    %52 = vector.shape_cast %51 : vector<1x8x16xf32> to vector<8x16xf32>
    %cst_49 = arith.constant dense<0.000000e+00> : vector<8x32xf32>
    %53 = tpu.matmul %52, %14, %cst_49 {dimension_numbers = #tpu.dot_dimension_numbers<[1], [0], [0], [1], [0, 0, 1, 1], [], []>} : vector<8x16xf32>, vector<16x32xf32>, vector<8x32xf32> -> vector<8x32xf32>
    %c5_50 = arith.constant 5 : index
    %c0_51 = arith.constant 0 : index
    %c0_52 = arith.constant 0 : index
    %54 = vector.load %arg5[%c5_50, %c0_51, %c0_52] : memref<9x32x128xf32, #tpu.memory_space<vmem>>, vector<1x32x128xf32>
    %55 = vector.shape_cast %54 : vector<1x32x128xf32> to vector<32x128xf32>
    %cst_53 = arith.constant dense<0.000000e+00> : vector<8x128xf32>
    %56 = tpu.matmul %53, %55, %cst_53 {dimension_numbers = #tpu.dot_dimension_numbers<[1], [0], [0], [1], [0, 0, 1, 1], [], []>} : vector<8x32xf32>, vector<32x128xf32>, vector<8x128xf32> -> vector<8x128xf32>
    %57 = arith.addf %50, %56 : vector<8x128xf32>
    %c6 = arith.constant 6 : index
    %c0_54 = arith.constant 0 : index
    %c0_55 = arith.constant 0 : index
    %58 = vector.load %arg4[%c6, %c0_54, %c0_55] : memref<9x8x16xf32, #tpu.memory_space<vmem>>, vector<1x8x16xf32>
    %59 = vector.shape_cast %58 : vector<1x8x16xf32> to vector<8x16xf32>
    %cst_56 = arith.constant dense<0.000000e+00> : vector<8x32xf32>
    %60 = tpu.matmul %59, %14, %cst_56 {dimension_numbers = #tpu.dot_dimension_numbers<[1], [0], [0], [1], [0, 0, 1, 1], [], []>} : vector<8x16xf32>, vector<16x32xf32>, vector<8x32xf32> -> vector<8x32xf32>
    %c6_57 = arith.constant 6 : index
    %c0_58 = arith.constant 0 : index
    %c0_59 = arith.constant 0 : index
    %61 = vector.load %arg5[%c6_57, %c0_58, %c0_59] : memref<9x32x128xf32, #tpu.memory_space<vmem>>, vector<1x32x128xf32>
    %62 = vector.shape_cast %61 : vector<1x32x128xf32> to vector<32x128xf32>
    %cst_60 = arith.constant dense<0.000000e+00> : vector<8x128xf32>
    %63 = tpu.matmul %60, %62, %cst_60 {dimension_numbers = #tpu.dot_dimension_numbers<[1], [0], [0], [1], [0, 0, 1, 1], [], []>} : vector<8x32xf32>, vector<32x128xf32>, vector<8x128xf32> -> vector<8x128xf32>
    %64 = arith.addf %57, %63 : vector<8x128xf32>
    %c7 = arith.constant 7 : index
    %c0_61 = arith.constant 0 : index
    %c0_62 = arith.constant 0 : index
    %65 = vector.load %arg4[%c7, %c0_61, %c0_62] : memref<9x8x16xf32, #tpu.memory_space<vmem>>, vector<1x8x16xf32>
    %66 = vector.shape_cast %65 : vector<1x8x16xf32> to vector<8x16xf32>
    %cst_63 = arith.constant dense<0.000000e+00> : vector<8x32xf32>
    %67 = tpu.matmul %66, %14, %cst_63 {dimension_numbers = #tpu.dot_dimension_numbers<[1], [0], [0], [1], [0, 0, 1, 1], [], []>} : vector<8x16xf32>, vector<16x32xf32>, vector<8x32xf32> -> vector<8x32xf32>
    %c7_64 = arith.constant 7 : index
    %c0_65 = arith.constant 0 : index
    %c0_66 = arith.constant 0 : index
    %68 = vector.load %arg5[%c7_64, %c0_65, %c0_66] : memref<9x32x128xf32, #tpu.memory_space<vmem>>, vector<1x32x128xf32>
    %69 = vector.shape_cast %68 : vector<1x32x128xf32> to vector<32x128xf32>
    %cst_67 = arith.constant dense<0.000000e+00> : vector<8x128xf32>
    %70 = tpu.matmul %67, %69, %cst_67 {dimension_numbers = #tpu.dot_dimension_numbers<[1], [0], [0], [1], [0, 0, 1, 1], [], []>} : vector<8x32xf32>, vector<32x128xf32>, vector<8x128xf32> -> vector<8x128xf32>
    %71 = arith.addf %64, %70 : vector<8x128xf32>
    %c8 = arith.constant 8 : index
    %c0_68 = arith.constant 0 : index
    %c0_69 = arith.constant 0 : index
    %72 = vector.load %arg4[%c8, %c0_68, %c0_69] : memref<9x8x16xf32, #tpu.memory_space<vmem>>, vector<1x8x16xf32>
    %73 = vector.shape_cast %72 : vector<1x8x16xf32> to vector<8x16xf32>
    %cst_70 = arith.constant dense<0.000000e+00> : vector<8x32xf32>
    %74 = tpu.matmul %73, %14, %cst_70 {dimension_numbers = #tpu.dot_dimension_numbers<[1], [0], [0], [1], [0, 0, 1, 1], [], []>} : vector<8x16xf32>, vector<16x32xf32>, vector<8x32xf32> -> vector<8x32xf32>
    %c8_71 = arith.constant 8 : index
    %c0_72 = arith.constant 0 : index
    %c0_73 = arith.constant 0 : index
    %75 = vector.load %arg5[%c8_71, %c0_72, %c0_73] : memref<9x32x128xf32, #tpu.memory_space<vmem>>, vector<1x32x128xf32>
    %76 = vector.shape_cast %75 : vector<1x32x128xf32> to vector<32x128xf32>
    %cst_74 = arith.constant dense<0.000000e+00> : vector<8x128xf32>
    %77 = tpu.matmul %74, %76, %cst_74 {dimension_numbers = #tpu.dot_dimension_numbers<[1], [0], [0], [1], [0, 0, 1, 1], [], []>} : vector<8x32xf32>, vector<32x128xf32>, vector<8x128xf32> -> vector<8x128xf32>
    %78 = arith.addf %71, %77 : vector<8x128xf32>
    %c0_75 = arith.constant 0 : index
    %c0_76 = arith.constant 0 : index
    %79 = vector.load %arg6[%c0_75, %c0_76] : memref<8x1xf32, #tpu.memory_space<vmem>>, vector<8x1xf32>
    %80 = vector.broadcast %79 : vector<8x1xf32> to vector<8x128xf32>
    %81 = arith.mulf %78, %80 : vector<8x128xf32>
    %c0_77 = arith.constant 0 : index
    %c0_78 = arith.constant 0 : index
    %82 = vector.load %arg7[%c0_77, %c0_78] : memref<8x1xf32, #tpu.memory_space<vmem>>, vector<8x1xf32>
    %83 = vector.broadcast %82 : vector<8x1xf32> to vector<8x128xf32>
    %84 = arith.addf %81, %83 : vector<8x128xf32>
    %cst_79 = arith.constant 0.000000e+00 : f32
    %85 = vector.broadcast %cst_79 : f32 to vector<8x128xf32>
    %86 = arith.subf %85, %84 : vector<8x128xf32>
    %87 = math.exp %86 : vector<8x128xf32>
    %cst_80 = arith.constant 1.000000e+00 : f32
    %88 = vector.broadcast %cst_80 : f32 to vector<8x128xf32>
    %89 = arith.addf %88, %87 : vector<8x128xf32>
    %cst_81 = arith.constant 1.000000e+00 : f32
    %90 = vector.broadcast %cst_81 : f32 to vector<8x128xf32>
    %91 = arith.divf %90, %89 : vector<8x128xf32>
    %92 = arith.mulf %84, %91 : vector<8x128xf32>
    %cst_82 = arith.constant 0.000000e+00 : f32
    %93 = vector.broadcast %cst_82 : f32 to vector<4x512xf32>
    %c0_83 = arith.constant 0 : index
    %c0_84 = arith.constant 0 : index
    %c0_85 = arith.constant 0 : index
    %94 = vector.load %arg8[%c0_83, %c0_84, %c0_85] : memref<9x4x8xf32, #tpu.memory_space<vmem>>, vector<1x4x8xf32>
    %95 = vector.shape_cast %94 : vector<1x4x8xf32> to vector<4x8xf32>
    %cst_86 = arith.constant dense<0.000000e+00> : vector<4x128xf32>
    %96 = tpu.matmul %95, %92, %cst_86 {dimension_numbers = #tpu.dot_dimension_numbers<[1], [0], [0], [1], [0, 0, 1, 1], [], []>} : vector<4x8xf32>, vector<8x128xf32>, vector<4x128xf32> -> vector<4x128xf32>
    %c0_87 = arith.constant 0 : index
    %c0_88 = arith.constant 0 : index
    %c0_89 = arith.constant 0 : index
    %97 = vector.load %arg9[%c0_87, %c0_88, %c0_89] : memref<9x128x512xf32, #tpu.memory_space<vmem>>, vector<1x128x512xf32>
    %98 = vector.shape_cast %97 : vector<1x128x512xf32> to vector<128x512xf32>
    %cst_90 = arith.constant dense<0.000000e+00> : vector<4x512xf32>
    %99 = tpu.matmul %96, %98, %cst_90 {dimension_numbers = #tpu.dot_dimension_numbers<[1], [0], [0], [1], [0, 0, 1, 1], [], []>} : vector<4x128xf32>, vector<128x512xf32>, vector<4x512xf32> -> vector<4x512xf32>
    %100 = arith.addf %93, %99 : vector<4x512xf32>
    %c1_91 = arith.constant 1 : index
    %c0_92 = arith.constant 0 : index
    %c0_93 = arith.constant 0 : index
    %101 = vector.load %arg8[%c1_91, %c0_92, %c0_93] : memref<9x4x8xf32, #tpu.memory_space<vmem>>, vector<1x4x8xf32>
    %102 = vector.shape_cast %101 : vector<1x4x8xf32> to vector<4x8xf32>
    %cst_94 = arith.constant dense<0.000000e+00> : vector<4x128xf32>
    %103 = tpu.matmul %102, %92, %cst_94 {dimension_numbers = #tpu.dot_dimension_numbers<[1], [0], [0], [1], [0, 0, 1, 1], [], []>} : vector<4x8xf32>, vector<8x128xf32>, vector<4x128xf32> -> vector<4x128xf32>
    %c1_95 = arith.constant 1 : index
    %c0_96 = arith.constant 0 : index
    %c0_97 = arith.constant 0 : index
    %104 = vector.load %arg9[%c1_95, %c0_96, %c0_97] : memref<9x128x512xf32, #tpu.memory_space<vmem>>, vector<1x128x512xf32>
    %105 = vector.shape_cast %104 : vector<1x128x512xf32> to vector<128x512xf32>
    %cst_98 = arith.constant dense<0.000000e+00> : vector<4x512xf32>
    %106 = tpu.matmul %103, %105, %cst_98 {dimension_numbers = #tpu.dot_dimension_numbers<[1], [0], [0], [1], [0, 0, 1, 1], [], []>} : vector<4x128xf32>, vector<128x512xf32>, vector<4x512xf32> -> vector<4x512xf32>
    %107 = arith.addf %100, %106 : vector<4x512xf32>
    %c2_99 = arith.constant 2 : index
    %c0_100 = arith.constant 0 : index
    %c0_101 = arith.constant 0 : index
    %108 = vector.load %arg8[%c2_99, %c0_100, %c0_101] : memref<9x4x8xf32, #tpu.memory_space<vmem>>, vector<1x4x8xf32>
    %109 = vector.shape_cast %108 : vector<1x4x8xf32> to vector<4x8xf32>
    %cst_102 = arith.constant dense<0.000000e+00> : vector<4x128xf32>
    %110 = tpu.matmul %109, %92, %cst_102 {dimension_numbers = #tpu.dot_dimension_numbers<[1], [0], [0], [1], [0, 0, 1, 1], [], []>} : vector<4x8xf32>, vector<8x128xf32>, vector<4x128xf32> -> vector<4x128xf32>
    %c2_103 = arith.constant 2 : index
    %c0_104 = arith.constant 0 : index
    %c0_105 = arith.constant 0 : index
    %111 = vector.load %arg9[%c2_103, %c0_104, %c0_105] : memref<9x128x512xf32, #tpu.memory_space<vmem>>, vector<1x128x512xf32>
    %112 = vector.shape_cast %111 : vector<1x128x512xf32> to vector<128x512xf32>
    %cst_106 = arith.constant dense<0.000000e+00> : vector<4x512xf32>
    %113 = tpu.matmul %110, %112, %cst_106 {dimension_numbers = #tpu.dot_dimension_numbers<[1], [0], [0], [1], [0, 0, 1, 1], [], []>} : vector<4x128xf32>, vector<128x512xf32>, vector<4x512xf32> -> vector<4x512xf32>
    %114 = arith.addf %107, %113 : vector<4x512xf32>
    %c3_107 = arith.constant 3 : index
    %c0_108 = arith.constant 0 : index
    %c0_109 = arith.constant 0 : index
    %115 = vector.load %arg8[%c3_107, %c0_108, %c0_109] : memref<9x4x8xf32, #tpu.memory_space<vmem>>, vector<1x4x8xf32>
    %116 = vector.shape_cast %115 : vector<1x4x8xf32> to vector<4x8xf32>
    %cst_110 = arith.constant dense<0.000000e+00> : vector<4x128xf32>
    %117 = tpu.matmul %116, %92, %cst_110 {dimension_numbers = #tpu.dot_dimension_numbers<[1], [0], [0], [1], [0, 0, 1, 1], [], []>} : vector<4x8xf32>, vector<8x128xf32>, vector<4x128xf32> -> vector<4x128xf32>
    %c3_111 = arith.constant 3 : index
    %c0_112 = arith.constant 0 : index
    %c0_113 = arith.constant 0 : index
    %118 = vector.load %arg9[%c3_111, %c0_112, %c0_113] : memref<9x128x512xf32, #tpu.memory_space<vmem>>, vector<1x128x512xf32>
    %119 = vector.shape_cast %118 : vector<1x128x512xf32> to vector<128x512xf32>
    %cst_114 = arith.constant dense<0.000000e+00> : vector<4x512xf32>
    %120 = tpu.matmul %117, %119, %cst_114 {dimension_numbers = #tpu.dot_dimension_numbers<[1], [0], [0], [1], [0, 0, 1, 1], [], []>} : vector<4x128xf32>, vector<128x512xf32>, vector<4x512xf32> -> vector<4x512xf32>
    %121 = arith.addf %114, %120 : vector<4x512xf32>
    %c4_115 = arith.constant 4 : index
    %c0_116 = arith.constant 0 : index
    %c0_117 = arith.constant 0 : index
    %122 = vector.load %arg8[%c4_115, %c0_116, %c0_117] : memref<9x4x8xf32, #tpu.memory_space<vmem>>, vector<1x4x8xf32>
    %123 = vector.shape_cast %122 : vector<1x4x8xf32> to vector<4x8xf32>
    %cst_118 = arith.constant dense<0.000000e+00> : vector<4x128xf32>
    %124 = tpu.matmul %123, %92, %cst_118 {dimension_numbers = #tpu.dot_dimension_numbers<[1], [0], [0], [1], [0, 0, 1, 1], [], []>} : vector<4x8xf32>, vector<8x128xf32>, vector<4x128xf32> -> vector<4x128xf32>
    %c4_119 = arith.constant 4 : index
    %c0_120 = arith.constant 0 : index
    %c0_121 = arith.constant 0 : index
    %125 = vector.load %arg9[%c4_119, %c0_120, %c0_121] : memref<9x128x512xf32, #tpu.memory_space<vmem>>, vector<1x128x512xf32>
    %126 = vector.shape_cast %125 : vector<1x128x512xf32> to vector<128x512xf32>
    %cst_122 = arith.constant dense<0.000000e+00> : vector<4x512xf32>
    %127 = tpu.matmul %124, %126, %cst_122 {dimension_numbers = #tpu.dot_dimension_numbers<[1], [0], [0], [1], [0, 0, 1, 1], [], []>} : vector<4x128xf32>, vector<128x512xf32>, vector<4x512xf32> -> vector<4x512xf32>
    %128 = arith.addf %121, %127 : vector<4x512xf32>
    %c5_123 = arith.constant 5 : index
    %c0_124 = arith.constant 0 : index
    %c0_125 = arith.constant 0 : index
    %129 = vector.load %arg8[%c5_123, %c0_124, %c0_125] : memref<9x4x8xf32, #tpu.memory_space<vmem>>, vector<1x4x8xf32>
    %130 = vector.shape_cast %129 : vector<1x4x8xf32> to vector<4x8xf32>
    %cst_126 = arith.constant dense<0.000000e+00> : vector<4x128xf32>
    %131 = tpu.matmul %130, %92, %cst_126 {dimension_numbers = #tpu.dot_dimension_numbers<[1], [0], [0], [1], [0, 0, 1, 1], [], []>} : vector<4x8xf32>, vector<8x128xf32>, vector<4x128xf32> -> vector<4x128xf32>
    %c5_127 = arith.constant 5 : index
    %c0_128 = arith.constant 0 : index
    %c0_129 = arith.constant 0 : index
    %132 = vector.load %arg9[%c5_127, %c0_128, %c0_129] : memref<9x128x512xf32, #tpu.memory_space<vmem>>, vector<1x128x512xf32>
    %133 = vector.shape_cast %132 : vector<1x128x512xf32> to vector<128x512xf32>
    %cst_130 = arith.constant dense<0.000000e+00> : vector<4x512xf32>
    %134 = tpu.matmul %131, %133, %cst_130 {dimension_numbers = #tpu.dot_dimension_numbers<[1], [0], [0], [1], [0, 0, 1, 1], [], []>} : vector<4x128xf32>, vector<128x512xf32>, vector<4x512xf32> -> vector<4x512xf32>
    %135 = arith.addf %128, %134 : vector<4x512xf32>
    %c6_131 = arith.constant 6 : index
    %c0_132 = arith.constant 0 : index
    %c0_133 = arith.constant 0 : index
    %136 = vector.load %arg8[%c6_131, %c0_132, %c0_133] : memref<9x4x8xf32, #tpu.memory_space<vmem>>, vector<1x4x8xf32>
    %137 = vector.shape_cast %136 : vector<1x4x8xf32> to vector<4x8xf32>
    %cst_134 = arith.constant dense<0.000000e+00> : vector<4x128xf32>
    %138 = tpu.matmul %137, %92, %cst_134 {dimension_numbers = #tpu.dot_dimension_numbers<[1], [0], [0], [1], [0, 0, 1, 1], [], []>} : vector<4x8xf32>, vector<8x128xf32>, vector<4x128xf32> -> vector<4x128xf32>
    %c6_135 = arith.constant 6 : index
    %c0_136 = arith.constant 0 : index
    %c0_137 = arith.constant 0 : index
    %139 = vector.load %arg9[%c6_135, %c0_136, %c0_137] : memref<9x128x512xf32, #tpu.memory_space<vmem>>, vector<1x128x512xf32>
    %140 = vector.shape_cast %139 : vector<1x128x512xf32> to vector<128x512xf32>
    %cst_138 = arith.constant dense<0.000000e+00> : vector<4x512xf32>
    %141 = tpu.matmul %138, %140, %cst_138 {dimension_numbers = #tpu.dot_dimension_numbers<[1], [0], [0], [1], [0, 0, 1, 1], [], []>} : vector<4x128xf32>, vector<128x512xf32>, vector<4x512xf32> -> vector<4x512xf32>
    %142 = arith.addf %135, %141 : vector<4x512xf32>
    %c7_139 = arith.constant 7 : index
    %c0_140 = arith.constant 0 : index
    %c0_141 = arith.constant 0 : index
    %143 = vector.load %arg8[%c7_139, %c0_140, %c0_141] : memref<9x4x8xf32, #tpu.memory_space<vmem>>, vector<1x4x8xf32>
    %144 = vector.shape_cast %143 : vector<1x4x8xf32> to vector<4x8xf32>
    %cst_142 = arith.constant dense<0.000000e+00> : vector<4x128xf32>
    %145 = tpu.matmul %144, %92, %cst_142 {dimension_numbers = #tpu.dot_dimension_numbers<[1], [0], [0], [1], [0, 0, 1, 1], [], []>} : vector<4x8xf32>, vector<8x128xf32>, vector<4x128xf32> -> vector<4x128xf32>
    %c7_143 = arith.constant 7 : index
    %c0_144 = arith.constant 0 : index
    %c0_145 = arith.constant 0 : index
    %146 = vector.load %arg9[%c7_143, %c0_144, %c0_145] : memref<9x128x512xf32, #tpu.memory_space<vmem>>, vector<1x128x512xf32>
    %147 = vector.shape_cast %146 : vector<1x128x512xf32> to vector<128x512xf32>
    %cst_146 = arith.constant dense<0.000000e+00> : vector<4x512xf32>
    %148 = tpu.matmul %145, %147, %cst_146 {dimension_numbers = #tpu.dot_dimension_numbers<[1], [0], [0], [1], [0, 0, 1, 1], [], []>} : vector<4x128xf32>, vector<128x512xf32>, vector<4x512xf32> -> vector<4x512xf32>
    %149 = arith.addf %142, %148 : vector<4x512xf32>
    %c8_147 = arith.constant 8 : index
    %c0_148 = arith.constant 0 : index
    %c0_149 = arith.constant 0 : index
    %150 = vector.load %arg8[%c8_147, %c0_148, %c0_149] : memref<9x4x8xf32, #tpu.memory_space<vmem>>, vector<1x4x8xf32>
    %151 = vector.shape_cast %150 : vector<1x4x8xf32> to vector<4x8xf32>
    %cst_150 = arith.constant dense<0.000000e+00> : vector<4x128xf32>
    %152 = tpu.matmul %151, %92, %cst_150 {dimension_numbers = #tpu.dot_dimension_numbers<[1], [0], [0], [1], [0, 0, 1, 1], [], []>} : vector<4x8xf32>, vector<8x128xf32>, vector<4x128xf32> -> vector<4x128xf32>
    %c8_151 = arith.constant 8 : index
    %c0_152 = arith.constant 0 : index
    %c0_153 = arith.constant 0 : index
    %153 = vector.load %arg9[%c8_151, %c0_152, %c0_153] : memref<9x128x512xf32, #tpu.memory_space<vmem>>, vector<1x128x512xf32>
    %154 = vector.shape_cast %153 : vector<1x128x512xf32> to vector<128x512xf32>
    %cst_154 = arith.constant dense<0.000000e+00> : vector<4x512xf32>
    %155 = tpu.matmul %152, %154, %cst_154 {dimension_numbers = #tpu.dot_dimension_numbers<[1], [0], [0], [1], [0, 0, 1, 1], [], []>} : vector<4x128xf32>, vector<128x512xf32>, vector<4x512xf32> -> vector<4x512xf32>
    %156 = arith.addf %149, %155 : vector<4x512xf32>
    %c0_155 = arith.constant 0 : index
    %c0_156 = arith.constant 0 : index
    %157 = vector.load %arg10[%c0_155, %c0_156] : memref<4x1xf32, #tpu.memory_space<vmem>>, vector<4x1xf32>
    %158 = vector.broadcast %157 : vector<4x1xf32> to vector<4x512xf32>
    %159 = arith.mulf %156, %158 : vector<4x512xf32>
    %c0_157 = arith.constant 0 : index
    %c0_158 = arith.constant 0 : index
    %160 = vector.load %arg11[%c0_157, %c0_158] : memref<4x1xf32, #tpu.memory_space<vmem>>, vector<4x1xf32>
    %161 = vector.broadcast %160 : vector<4x1xf32> to vector<4x512xf32>
    %162 = arith.addf %159, %161 : vector<4x512xf32>
    %cst_159 = arith.constant 0.000000e+00 : f32
    %163 = vector.broadcast %cst_159 : f32 to vector<4x512xf32>
    %164 = arith.subf %163, %162 : vector<4x512xf32>
    %165 = math.exp %164 : vector<4x512xf32>
    %cst_160 = arith.constant 1.000000e+00 : f32
    %166 = vector.broadcast %cst_160 : f32 to vector<4x512xf32>
    %167 = arith.addf %166, %165 : vector<4x512xf32>
    %cst_161 = arith.constant 1.000000e+00 : f32
    %168 = vector.broadcast %cst_161 : f32 to vector<4x512xf32>
    %169 = arith.divf %168, %167 : vector<4x512xf32>
    %170 = arith.mulf %162, %169 : vector<4x512xf32>
    %cst_162 = arith.constant 0.000000e+00 : f32
    %171 = vector.broadcast %cst_162 : f32 to vector<1x512xf32>
    %172 = vector.extract_strided_slice %170 {offsets = [0, 0], sizes = [1, 512], strides = [1, 1]} : vector<4x512xf32> to vector<1x512xf32>
    %c0_163 = arith.constant 0 : index
    %c0_164 = arith.constant 0 : index
    %c0_165 = arith.constant 0 : index
    %173 = vector.load %arg12[%c0_163, %c0_164, %c0_165] : memref<4x512x512xf32, #tpu.memory_space<vmem>>, vector<1x512x512xf32>
    %174 = vector.shape_cast %173 : vector<1x512x512xf32> to vector<512x512xf32>
    %cst_166 = arith.constant dense<0.000000e+00> : vector<1x512xf32>
    %175 = tpu.matmul %172, %174, %cst_166 {dimension_numbers = #tpu.dot_dimension_numbers<[1], [0], [0], [1], [0, 0, 1, 1], [], []>} : vector<1x512xf32>, vector<512x512xf32>, vector<1x512xf32> -> vector<1x512xf32>
    %176 = arith.addf %171, %175 : vector<1x512xf32>
    %177 = vector.extract_strided_slice %170 {offsets = [1, 0], sizes = [1, 512], strides = [1, 1]} : vector<4x512xf32> to vector<1x512xf32>
    %c1_167 = arith.constant 1 : index
    %c0_168 = arith.constant 0 : index
    %c0_169 = arith.constant 0 : index
    %178 = vector.load %arg12[%c1_167, %c0_168, %c0_169] : memref<4x512x512xf32, #tpu.memory_space<vmem>>, vector<1x512x512xf32>
    %179 = vector.shape_cast %178 : vector<1x512x512xf32> to vector<512x512xf32>
    %cst_170 = arith.constant dense<0.000000e+00> : vector<1x512xf32>
    %180 = tpu.matmul %177, %179, %cst_170 {dimension_numbers = #tpu.dot_dimension_numbers<[1], [0], [0], [1], [0, 0, 1, 1], [], []>} : vector<1x512xf32>, vector<512x512xf32>, vector<1x512xf32> -> vector<1x512xf32>
    %181 = arith.addf %176, %180 : vector<1x512xf32>
    %182 = vector.extract_strided_slice %170 {offsets = [2, 0], sizes = [1, 512], strides = [1, 1]} : vector<4x512xf32> to vector<1x512xf32>
    %c2_171 = arith.constant 2 : index
    %c0_172 = arith.constant 0 : index
    %c0_173 = arith.constant 0 : index
    %183 = vector.load %arg12[%c2_171, %c0_172, %c0_173] : memref<4x512x512xf32, #tpu.memory_space<vmem>>, vector<1x512x512xf32>
    %184 = vector.shape_cast %183 : vector<1x512x512xf32> to vector<512x512xf32>
    %cst_174 = arith.constant dense<0.000000e+00> : vector<1x512xf32>
    %185 = tpu.matmul %182, %184, %cst_174 {dimension_numbers = #tpu.dot_dimension_numbers<[1], [0], [0], [1], [0, 0, 1, 1], [], []>} : vector<1x512xf32>, vector<512x512xf32>, vector<1x512xf32> -> vector<1x512xf32>
    %186 = arith.addf %181, %185 : vector<1x512xf32>
    %187 = vector.extract_strided_slice %170 {offsets = [3, 0], sizes = [1, 512], strides = [1, 1]} : vector<4x512xf32> to vector<1x512xf32>
    %c3_175 = arith.constant 3 : index
    %c0_176 = arith.constant 0 : index
    %c0_177 = arith.constant 0 : index
    %188 = vector.load %arg12[%c3_175, %c0_176, %c0_177] : memref<4x512x512xf32, #tpu.memory_space<vmem>>, vector<1x512x512xf32>
    %189 = vector.shape_cast %188 : vector<1x512x512xf32> to vector<512x512xf32>
    %cst_178 = arith.constant dense<0.000000e+00> : vector<1x512xf32>
    %190 = tpu.matmul %187, %189, %cst_178 {dimension_numbers = #tpu.dot_dimension_numbers<[1], [0], [0], [1], [0, 0, 1, 1], [], []>} : vector<1x512xf32>, vector<512x512xf32>, vector<1x512xf32> -> vector<1x512xf32>
    %191 = arith.addf %186, %190 : vector<1x512xf32>
    %c0_179 = arith.constant 0 : index
    %c0_180 = arith.constant 0 : index
    %192 = vector.load %arg13[%c0_179, %c0_180] : memref<1x1xf32, #tpu.memory_space<vmem>>, vector<1x1xf32>
    %193 = vector.broadcast %192 : vector<1x1xf32> to vector<1x512xf32>
    %194 = arith.addf %191, %193 : vector<1x512xf32>
    %c0_181 = arith.constant 0 : index
    %c0_182 = arith.constant 0 : index
    %195 = vector.load %arg14[%c0_181, %c0_182] : memref<1x512xf32, #tpu.memory_space<vmem>>, vector<1x512xf32>
    tpu.vector_store %arg14[%c0_181, %c0_182], %194 {strides = array<i32>} : memref<1x512xf32, #tpu.memory_space<vmem>>, vector<1x512xf32>,
    return
  }
}

</mosaic_0001>

<llo_original>
// kernel: generator_forward.1
$region0: #{generator_forward.1}
  #allocation0 [shape = 'u32[]', space=smem, size = 0x4, offset = 0x4, fixed_abs, tag = 'smem constant byte address 0x4 - core index']
  #allocation1 [shape = 'u32[144,128]{1,0:T(1,128)}', space=vmem, size = 0x12000, scoped, tag = 'internal scratch']
  #allocation2 [shape = 'f32[1,1]{1,0:T(1,128)S(1)}', space=vmem, size = 0x200, scoped, tag = 'scoped memory for generator_forward.1']
  %s0 = inlined_call_operand.vmem [shape: f32[256,32], index: 0, kind: input, shape index: {}]
  %s1 = inlined_call_operand.hbm [shape: f32[16,256], index: 1, kind: input, shape index: {}]
  %s2 = inlined_call_operand.vmem [shape: f32[16,32], index: 2, kind: input, shape index: {}]
  %s3 = inlined_call_operand.hbm [shape: f32[16,32], index: 3, kind: input, shape index: {}]
  %s4 = inlined_call_operand.hbm [shape: f32[9,8,16], index: 4, kind: input, shape index: {}]
  %s5 = inlined_call_operand.hbm [shape: f32[9,32,128], index: 5, kind: input, shape index: {}]
  %s6 = inlined_call_operand.vmem [shape: f32[8,1], index: 6, kind: input, shape index: {}]
  %s7 = inlined_call_operand.vmem [shape: f32[8,1], index: 7, kind: input, shape index: {}]
  %s8 = inlined_call_operand.hbm [shape: f32[9,4,8], index: 8, kind: input, shape index: {}]
  %s9 = inlined_call_operand.hbm [shape: f32[9,128,512], index: 9, kind: input, shape index: {}]
  %s10 = inlined_call_operand.vmem [shape: f32[4,1], index: 10, kind: input, shape index: {}]
  %s11 = inlined_call_operand.vmem [shape: f32[4,1], index: 11, kind: input, shape index: {}]
  %s12 = inlined_call_operand.hbm [shape: f32[4,512,512], index: 12, kind: input, shape index: {}]
  %s13 = inlined_call_operand.<no memory space> [shape: f32[1,1], index: 13, kind: input, shape index: {}]
  %s14 = inlined_call_operand.vmem [shape: f32[1,512], index: 14, kind: output, shape index: {}]
  %s15 = sld [smem:[#allocation0]]
  $region94: #{generator_forward.1} parent=0
    _
  %s17 = ssub.s32 1, %s15
  %s18 = scalar_select 0, %s17, %s15
  %v19 = vstv %s13
  %20 = vst [vmem:[#allocation2] sm:$0x1] %v19
  $region1: #{generator_forward.1} parent=0
    #allocation3 [shape = 'u8[16384]{0}', space=vmem, size = 0x4000, scoped, tag = 'input window, operand 1, single buffered']
    #allocation4 [shape = 's32[1]{0}', space=sflag, size = 0x4, scoped, tag = 'scoped memory for generator_forward.1']
    #allocation5 [shape = 'u8[8192]{0}', space=vmem, size = 0x2000, scoped, tag = 'input window, operand 3, single buffered']
    #allocation6 [shape = 's32[1]{0}', space=sflag, size = 0x4, scoped, tag = 'scoped memory for generator_forward.1']
    #allocation7 [shape = 'u8[36864]{0}', space=vmem, size = 0x9000, scoped, tag = 'input window, operand 4, single buffered']
    #allocation8 [shape = 'u8[147456]{0}', space=vmem, size = 0x24000, scoped, tag = 'input window, operand 5, single buffered']
    #allocation9 [shape = 's32[1]{0}', space=sflag, size = 0x4, scoped, tag = 'scoped memory for generator_forward.1']
    #allocation10 [shape = 'u8[18432]{0}', space=vmem, size = 0x4800, scoped, tag = 'input window, operand 8, single buffered']
    #allocation11 [shape = 'u8[2359296]{0}', space=vmem, size = 0x240000, scoped, tag = 'input window, operand 9, single buffered']
    #allocation12 [shape = 's32[1]{0}', space=sflag, size = 0x4, scoped, tag = 'scoped memory for generator_forward.1']
    #allocation13 [shape = 'u8[4194304]{0}', space=vmem, size = 0x400000, scoped, tag = 'input window, operand 12, single buffered']
    %21 = vsyncpa [#allocation4], 0
    %22 = vsyncpa [#allocation6], 0
    %23 = vsyncpa [#allocation9], 0
    %24 = vsyncpa [#allocation12], 0
    // Predicated region
    $region2: #{generator_forward.1} parent=1 // pred_check
      _
    $region3: #{generator_forward.1} parent=1 // pred_check_branch
      %26 = sbr.rel (0) target = $region5
    $region4: #{generator_forward.1} parent=1 // pred_region
      _
    $region5: #{generator_forward.1} parent=1 // pred_fallthru
      _
    // Predicated region
    $region6: #{generator_forward.1} parent=1 // pred_check
      _
    $region7: #{generator_forward.1} parent=1 // pred_check_branch
      %28 = sbr.rel (0) target = $region9
    $region8: #{generator_forward.1} parent=1 // pred_region
      %s30 = ssub.s32 512, 512
      %31 = vsyncadd [#allocation4], %s30
      %s32 = sshll.u32 [#allocation3], 4
      %s33 = int_to_ptr.vmem [resolvable:$true] %s32
      %38 = dma.hbm_to_vmem [thread:$0]  %s1, 512, %s33, [#allocation4], 256, 256, 16
    $region9: #{generator_forward.1} parent=1 // pred_fallthru
      _
    // Predicated region
    $region10: #{generator_forward.1} parent=1 // pred_check
      _
    $region11: #{generator_forward.1} parent=1 // pred_check_branch
      %40 = sbr.rel (0) target = $region13
    $region12: #{generator_forward.1} parent=1 // pred_region
      _
    $region13: #{generator_forward.1} parent=1 // pred_fallthru
      _
    // Predicated region
    $region14: #{generator_forward.1} parent=1 // pred_check
      _
    $region15: #{generator_forward.1} parent=1 // pred_check_branch
      %42 = sbr.rel (0) target = $region17
    $region16: #{generator_forward.1} parent=1 // pred_region
      %s44 = ssub.s32 256, 256
      %45 = vsyncadd [#allocation6], %s44
      %s46 = sshll.u32 [#allocation5], 4
      %s47 = int_to_ptr.vmem [resolvable:$true] %s46
      %52 = dma.hbm_to_vmem [thread:$0]  %s3, 256, %s47, [#allocation6], 128, 128, 8
    $region17: #{generator_forward.1} parent=1 // pred_fallthru
      _
    // Predicated region
    $region18: #{generator_forward.1} parent=1 // pred_check
      _
    $region19: #{generator_forward.1} parent=1 // pred_check_branch
      %54 = sbr.rel (0) target = $region21
    $region20: #{generator_forward.1} parent=1 // pred_region
      %s56 = ssub.s32 1152, 1152
      %57 = vsyncadd [#allocation6], %s56
      %s58 = sshll.u32 [#allocation7], 4
      %s59 = int_to_ptr.vmem [resolvable:$true] %s58
      %64 = dma.hbm_to_vmem [thread:$0]  %s4, 1152, %s59, [#allocation6], 128, 128, 8
    $region21: #{generator_forward.1} parent=1 // pred_fallthru
      _
    // Predicated region
    $region22: #{generator_forward.1} parent=1 // pred_check
      _
    $region23: #{generator_forward.1} parent=1 // pred_check_branch
      %66 = sbr.rel (0) target = $region25
    $region24: #{generator_forward.1} parent=1 // pred_region
      %s68 = ssub.s32 4608, 4608
      %69 = vsyncadd [#allocation9], %s68
      %s70 = sshll.u32 [#allocation8], 4
      %s71 = int_to_ptr.vmem [resolvable:$true] %s70
      %76 = dma.hbm_to_vmem [thread:$0]  %s5, 4608, %s71, [#allocation9], 128, 128, 8
    $region25: #{generator_forward.1} parent=1 // pred_fallthru
      _
    // Predicated region
    $region26: #{generator_forward.1} parent=1 // pred_check
      _
    $region27: #{generator_forward.1} parent=1 // pred_check_branch
      %78 = sbr.rel (0) target = $region29
    $region28: #{generator_forward.1} parent=1 // pred_region
      _
    $region29: #{generator_forward.1} parent=1 // pred_fallthru
      _
    // Predicated region
    $region30: #{generator_forward.1} parent=1 // pred_check
      _
    $region31: #{generator_forward.1} parent=1 // pred_check_branch
      %80 = sbr.rel (0) target = $region33
    $region32: #{generator_forward.1} parent=1 // pred_region
      _
    $region33: #{generator_forward.1} parent=1 // pred_fallthru
      _
    // Predicated region
    $region34: #{generator_forward.1} parent=1 // pred_check
      _
    $region35: #{generator_forward.1} parent=1 // pred_check_branch
      %82 = sbr.rel (0) target = $region37
    $region36: #{generator_forward.1} parent=1 // pred_region
      %s84 = ssub.s32 576, 576
      %85 = vsyncadd [#allocation9], %s84
      %s86 = sshll.u32 [#allocation10], 4
      %s87 = int_to_ptr.vmem [resolvable:$true] %s86
      %92 = dma.hbm_to_vmem [thread:$0]  %s8, 576, %s87, [#allocation9], 64, 64, 4
    $region37: #{generator_forward.1} parent=1 // pred_fallthru
      _
    // Predicated region
    $region38: #{generator_forward.1} parent=1 // pred_check
      _
    $region39: #{generator_forward.1} parent=1 // pred_check_branch
      %94 = sbr.rel (0) target = $region41
    $region40: #{generator_forward.1} parent=1 // pred_region
      %s96 = ssub.s32 73728, 73728
      %97 = vsyncadd [#allocation12], %s96
      %s98 = sshll.u32 [#allocation11], 4
      %s99 = int_to_ptr.vmem [resolvable:$true] %s98
      %104 = dma.hbm_to_vmem [thread:$0]  %s9, 73728, %s99, [#allocation12], 512, 512, 32
    $region41: #{generator_forward.1} parent=1 // pred_fallthru
      _
    // Predicated region
    $region42: #{generator_forward.1} parent=1 // pred_check
      _
    $region43: #{generator_forward.1} parent=1 // pred_check_branch
      %106 = sbr.rel (0) target = $region45
    $region44: #{generator_forward.1} parent=1 // pred_region
      _
    $region45: #{generator_forward.1} parent=1 // pred_fallthru
      _
    // Predicated region
    $region46: #{generator_forward.1} parent=1 // pred_check
      _
    $region47: #{generator_forward.1} parent=1 // pred_check_branch
      %108 = sbr.rel (0) target = $region49
    $region48: #{generator_forward.1} parent=1 // pred_region
      _
    $region49: #{generator_forward.1} parent=1 // pred_fallthru
      _
    // Predicated region
    $region50: #{generator_forward.1} parent=1 // pred_check
      _
    $region51: #{generator_forward.1} parent=1 // pred_check_branch
      %110 = sbr.rel (0) target = $region53
    $region52: #{generator_forward.1} parent=1 // pred_region
      %s112 = ssub.s32 131072, 131072
      %113 = vsyncadd [#allocation12], %s112
      %s114 = sshll.u32 [#allocation13], 4
      %s115 = int_to_ptr.vmem [resolvable:$true] %s114
      %120 = dma.hbm_to_vmem [thread:$0]  %s12, 131072, %s115, [#allocation12], 512, 512, 32
    $region53: #{generator_forward.1} parent=1 // pred_fallthru
      _
    // Predicated region
    $region54: #{generator_forward.1} parent=1 // pred_check
      _
    $region55: #{generator_forward.1} parent=1 // pred_check_branch
      %122 = sbr.rel (0) target = $region57
    $region56: #{generator_forward.1} parent=1 // pred_region
      _
    $region57: #{generator_forward.1} parent=1 // pred_fallthru
      _
    // Predicated region
    $region58: #{generator_forward.1} parent=1 // pred_check
      _
    $region59: #{generator_forward.1} parent=1 // pred_check_branch
      %124 = sbr.rel (0) target = $region61
    $region60: #{generator_forward.1} parent=1 // pred_region
      %125 = dma.done [#allocation4], 512
    $region61: #{generator_forward.1} parent=1 // pred_fallthru
      _
    // Predicated region
    $region62: #{generator_forward.1} parent=1 // pred_check
      _
    $region63: #{generator_forward.1} parent=1 // pred_check_branch
      %127 = sbr.rel (0) target = $region65
    $region64: #{generator_forward.1} parent=1 // pred_region
      %128 = dma.done [#allocation6], 256
    $region65: #{generator_forward.1} parent=1 // pred_fallthru
      _
    // Predicated region
    $region66: #{generator_forward.1} parent=1 // pred_check
      _
    $region67: #{generator_forward.1} parent=1 // pred_check_branch
      %130 = sbr.rel (0) target = $region69
    $region68: #{generator_forward.1} parent=1 // pred_region
      %131 = dma.done [#allocation6], 1152
    $region69: #{generator_forward.1} parent=1 // pred_fallthru
      _
    // Predicated region
    $region70: #{generator_forward.1} parent=1 // pred_check
      _
    $region71: #{generator_forward.1} parent=1 // pred_check_branch
      %133 = sbr.rel (0) target = $region73
    $region72: #{generator_forward.1} parent=1 // pred_region
      %134 = dma.done [#allocation9], 4608
    $region73: #{generator_forward.1} parent=1 // pred_fallthru
      _
    // Predicated region
    $region74: #{generator_forward.1} parent=1 // pred_check
      _
    $region75: #{generator_forward.1} parent=1 // pred_check_branch
      %136 = sbr.rel (0) target = $region77
    $region76: #{generator_forward.1} parent=1 // pred_region
      %137 = dma.done [#allocation9], 576
    $region77: #{generator_forward.1} parent=1 // pred_fallthru
      _
    // Predicated region
    $region78: #{generator_forward.1} parent=1 // pred_check
      _
    $region79: #{generator_forward.1} parent=1 // pred_check_branch
      %139 = sbr.rel (0) target = $region81
    $region80: #{generator_forward.1} parent=1 // pred_region
      %140 = dma.done [#allocation12], 73728
    $region81: #{generator_forward.1} parent=1 // pred_fallthru
      _
    // Predicated region
    $region82: #{generator_forward.1} parent=1 // pred_check
      _
    $region83: #{generator_forward.1} parent=1 // pred_check_branch
      %142 = sbr.rel (0) target = $region85
    $region84: #{generator_forward.1} parent=1 // pred_region
      %143 = dma.done [#allocation12], 131072
    $region85: #{generator_forward.1} parent=1 // pred_fallthru
      _
    %v144 = vld [vmem:[#allocation3] sm:$0xff]
    %v145 = vld [vmem:[#allocation3 + $0x8] sm:$0xff]
    %v146 = vld [vmem:[#allocation3 + $0x10] sm:$0xff]
    %v147 = vld [vmem:[#allocation3 + $0x18] sm:$0xff]
    %v148 = vld [vmem:[%s0] sm:$0xff]
    %v149 = vld [vmem:[%s0 + $0x8] sm:$0xff]
    %v150 = vld [vmem:[%s0 + $0x10] sm:$0xff]
    %v151 = vld [vmem:[%s0 + $0x18] sm:$0xff]
    %v152 = vld [vmem:[%s0 + $0x20] sm:$0xff]
    %v153 = vld [vmem:[%s0 + $0x28] sm:$0xff]
    %v154 = vld [vmem:[%s0 + $0x30] sm:$0xff]
    %v155 = vld [vmem:[%s0 + $0x38] sm:$0xff]
    %v156 = vld [vmem:[%s0 + $0x40] sm:$0xff]
    %v157 = vld [vmem:[%s0 + $0x48] sm:$0xff]
    %v158 = vld [vmem:[%s0 + $0x50] sm:$0xff]
    %v159 = vld [vmem:[%s0 + $0x58] sm:$0xff]
    %v160 = vld [vmem:[%s0 + $0x60] sm:$0xff]
    %v161 = vld [vmem:[%s0 + $0x68] sm:$0xff]
    %v162 = vld [vmem:[%s0 + $0x70] sm:$0xff]
    %v163 = vld [vmem:[%s0 + $0x78] sm:$0xff]
    %v164 = vld [vmem:[%s0 + $0x80] sm:$0xff]
    %v165 = vld [vmem:[%s0 + $0x88] sm:$0xff]
    %v166 = vld [vmem:[%s0 + $0x90] sm:$0xff]
    %v167 = vld [vmem:[%s0 + $0x98] sm:$0xff]
    %v168 = vld [vmem:[%s0 + $0xa0] sm:$0xff]
    %v169 = vld [vmem:[%s0 + $0xa8] sm:$0xff]
    %v170 = vld [vmem:[%s0 + $0xb0] sm:$0xff]
    %v171 = vld [vmem:[%s0 + $0xb8] sm:$0xff]
    %v172 = vld [vmem:[%s0 + $0xc0] sm:$0xff]
    %v173 = vld [vmem:[%s0 + $0xc8] sm:$0xff]
    %v174 = vld [vmem:[%s0 + $0xd0] sm:$0xff]
    %v175 = vld [vmem:[%s0 + $0xd8] sm:$0xff]
    %v176 = vld [vmem:[%s0 + $0xe0] sm:$0xff]
    %v177 = vld [vmem:[%s0 + $0xe8] sm:$0xff]
    %v178 = vld [vmem:[%s0 + $0xf0] sm:$0xff]
    %v179 = vld [vmem:[%s0 + $0xf8] sm:$0xff]
    %180 = vmatprep.subr.mxu0 0.0
    %181 = vmatpush1.msra.mxu0 %v148
    %182 = vmatprep.subr.mxu0 0.0
    %183 = vmatpush1.msra.mxu0 %v149
    %184 = vmatprep.subr.mxu0 0.0
    %185 = vmatpush1.msra.mxu0 %v150
    %186 = vmatprep.subr.mxu0 0.0
    %187 = vmatpush1.msra.mxu0 %v151
    %188 = vmatprep.subr.mxu0 0.0
    %189 = vmatpush1.msra.mxu0 %v152
    %190 = vmatprep.subr.mxu0 0.0
    %191 = vmatpush1.msra.mxu0 %v153
    %192 = vmatprep.subr.mxu0 0.0
    %193 = vmatpush1.msra.mxu0 %v154
    %194 = vmatprep.subr.mxu0 0.0
    %195 = vmatpush1.msra.mxu0 %v155
    %196 = vmatprep.subr.mxu0 0.0
    %197 = vmatpush1.msra.mxu0 %v156
    %198 = vmatprep.subr.mxu0 0.0
    %199 = vmatpush1.msra.mxu0 %v157
    %200 = vmatprep.subr.mxu0 0.0
    %201 = vmatpush1.msra.mxu0 %v158
    %202 = vmatprep.subr.mxu0 0.0
    %203 = vmatpush1.msra.mxu0 %v159
    %204 = vmatprep.subr.mxu0 0.0
    %205 = vmatpush1.msra.mxu0 %v160
    %206 = vmatprep.subr.mxu0 0.0
    %207 = vmatpush1.msra.mxu0 %v161
    %208 = vmatprep.subr.mxu0 0.0
    %209 = vmatpush1.msra.mxu0 %v162
    %210 = vmatprep.subr.mxu0 0.0
    %211 = vmatpush1.msra.mxu0 %v163
    %212 = vmatprep.subr.mxu0 0.0
    %213 = vmatpush1.msra.mxu0 %v164
    %214 = vmatprep.subr.mxu0 0.0
    %215 = vmatpush1.msra.mxu0 %v165
    %216 = vmatprep.subr.mxu0 0.0
    %217 = vmatpush1.msra.mxu0 %v166
    %218 = vmatprep.subr.mxu0 0.0
    %219 = vmatpush1.msra.mxu0 %v167
    %220 = vmatprep.subr.mxu0 0.0
    %221 = vmatpush1.msra.mxu0 %v168
    %222 = vmatprep.subr.mxu0 0.0
    %223 = vmatpush1.msra.mxu0 %v169
    %224 = vmatprep.subr.mxu0 0.0
    %225 = vmatpush1.msra.mxu0 %v170
    %226 = vmatprep.subr.mxu0 0.0
    %227 = vmatpush1.msra.mxu0 %v171
    %228 = vmatprep.subr.mxu0 0.0
    %229 = vmatpush1.msra.mxu0 %v172
    %230 = vmatprep.subr.mxu0 0.0
    %231 = vmatpush1.msra.mxu0 %v173
    %232 = vmatprep.subr.mxu0 0.0
    %233 = vmatpush1.msra.mxu0 %v174
    %234 = vmatprep.subr.mxu0 0.0
    %235 = vmatpush1.msra.mxu0 %v175
    %236 = vmatprep.subr.mxu0 0.0
    %237 = vmatpush1.msra.mxu0 %v176
    %238 = vmatprep.subr.mxu0 0.0
    %239 = vmatpush1.msra.mxu0 %v177
    %240 = vmatprep.subr.mxu0 0.0
    %241 = vmatpush1.msra.mxu0 %v178
    %242 = vmatprep.subr.mxu0 0.0
    %243 = vmatpush1.msra.mxu0 %v179
    %244 = vmatprep.mubr.f32.mxu0 %v145
    %245 = vmatmul.mubr.f32.gmra.mrb[0].mxu0 %v144
    %v246 = vpop.f32.mrb[0].mxu0
    %v247 = vadd.f32 0.0, %v246
    %v248 = vpop.f32.mrb[0].mxu0
    %249 = vmatprep.mubr.f32.mxu0 %v147
    %250 = vmatmul.mubr.f32.gmra.mrb[0].mxu0 %v146
    %v251 = vpop.f32.mrb[0].mxu0
    %v252 = vadd.f32 0.0, %v251
    %v253 = vpop.f32.mrb[0].mxu0
    %254 = vdwg.mxu0
    %v255 = vld [vmem:[%s2] sm:$0xff]
    %v256 = vld [vmem:[%s2 + $0x8] sm:$0xff]
    %v257 = vmul.f32 %v247, %v255
    %v258 = vmul.f32 %v252, %v256
    %v259 = vld [vmem:[#allocation5] sm:$0xff]
    %v260 = vld [vmem:[#allocation5 + $0x8] sm:$0xff]
    %v261 = vadd.f32 %v257, %v259
    %v262 = vadd.f32 %v258, %v260
    %v263 = vsub.f32 0.0, %v261
    %v264 = vsub.f32 0.0, %v262
    %v265 = vmul.f32 %v263, 1.442695
    %v266 = vpow.pop %v265
    %v267 = vmul.f32 %v264, 1.442695
    %v268 = vpow.pop %v267
    %v269 = vadd.f32 %v266, 1.0
    %v270 = vadd.f32 %v268, 1.0
    %v271 = vrcp.pop %v269
    %v272 = vmul.f32 1.0, %v271
    %v273 = vrcp.pop %v270
    %v274 = vmul.f32 1.0, %v273
    %v275 = vmul.f32 %v261, %v272
    %v276 = vmul.f32 %v262, %v274
    %v277 = vld [vmem:[#allocation7] sm:$0xff]
    %vm278 = vcmask 130048
    %v280 = vsel %vm278, %v277, 0
    %282 = vmatprep.subr.mxu0 0.0
    %283 = vmatpush1.msra.mxu0 %v275
    %284 = vmatprep.subr.mxu0 0.0
    %285 = vmatpush1.msra.mxu0 %v276
    %286 = vmatprep.subr.mxu0 0.0
    %287 = vmatpush1.msra.mxu0 0.0
    %288 = vmatprep.subr.mxu0 0.0
    %289 = vmatpush1.msra.mxu0 0.0
    %290 = vmatprep.subr.mxu0 0.0
    %291 = vmatpush1.msra.mxu0 0.0
    %292 = vmatprep.subr.mxu0 0.0
    %293 = vmatpush1.msra.mxu0 0.0
    %294 = vmatprep.subr.mxu0 0.0
    %295 = vmatpush1.msra.mxu0 0.0
    %296 = vmatprep.subr.mxu0 0.0
    %297 = vmatpush1.msra.mxu0 0.0
    %298 = vmatprep.subr.mxu0 0.0
    %299 = vmatpush1.msra.mxu0 0.0
    %300 = vmatprep.subr.mxu0 0.0
    %301 = vmatpush1.msra.mxu0 0.0
    %302 = vmatprep.subr.mxu0 0.0
    %303 = vmatpush1.msra.mxu0 0.0
    %304 = vmatprep.subr.mxu0 0.0
    %305 = vmatpush1.msra.mxu0 0.0
    %306 = vmatprep.subr.mxu0 0.0
    %307 = vmatpush1.msra.mxu0 0.0
    %308 = vmatprep.subr.mxu0 0.0
    %309 = vmatpush1.msra.mxu0 0.0
    %310 = vmatprep.subr.mxu0 0.0
    %311 = vmatpush1.msra.mxu0 0.0
    %312 = vmatprep.subr.mxu0 0.0
    %313 = vmatpush1.msra.mxu0 0.0
    %314 = vmatprep.subr.mxu0 0.0
    %315 = vmatpush1.msra.mxu0 0.0
    %316 = vmatprep.subr.mxu0 0.0
    %317 = vmatpush1.msra.mxu0 0.0
    %318 = vmatprep.subr.mxu0 0.0
    %319 = vmatpush1.msra.mxu0 0.0
    %320 = vmatprep.subr.mxu0 0.0
    %321 = vmatpush1.msra.mxu0 0.0
    %322 = vmatprep.subr.mxu0 0.0
    %323 = vmatpush1.msra.mxu0 0.0
    %324 = vmatprep.subr.mxu0 0.0
    %325 = vmatpush1.msra.mxu0 0.0
    %326 = vmatprep.subr.mxu0 0.0
    %327 = vmatpush1.msra.mxu0 0.0
    %328 = vmatprep.subr.mxu0 0.0
    %329 = vmatpush1.msra.mxu0 0.0
    %330 = vmatprep.subr.mxu0 0.0
    %331 = vmatpush1.msra.mxu0 0.0
    %332 = vmatprep.subr.mxu0 0.0
    %333 = vmatpush1.msra.mxu0 0.0
    %334 = vmatprep.subr.mxu0 0.0
    %335 = vmatpush1.msra.mxu0 0.0
    %336 = vmatprep.subr.mxu0 0.0
    %337 = vmatpush1.msra.mxu0 0.0
    %338 = vmatprep.subr.mxu0 0.0
    %339 = vmatpush1.msra.mxu0 0.0
    %340 = vmatprep.subr.mxu0 0.0
    %341 = vmatpush1.msra.mxu0 0.0
    %342 = vmatprep.subr.mxu0 0.0
    %343 = vmatpush1.msra.mxu0 0.0
    %344 = vmatprep.subr.mxu0 0.0
    %345 = vmatpush1.msra.mxu0 0.0
    %346 = vmatprep.mubr.f32.mxu0 0.0
    %347 = vmatmul.mubr.f32.gmra.mrb[0].mxu0 %v280
    %v348 = vpop.f32.mrb[0].mxu0
    %v349 = vadd.f32 0.0, %v348
    %v350 = vpop.f32.mrb[0].mxu0
    %351 = vdwg.mxu0
    %v352 = vld [vmem:[#allocation8] sm:$0xff]
    %v353 = vld [vmem:[#allocation8 + $0x8] sm:$0xff]
    %v354 = vld [vmem:[#allocation8 + $0x10] sm:$0xff]
    %v355 = vld [vmem:[#allocation8 + $0x18] sm:$0xff]
    %s356 = scalar_lea.vmem [#allocation7], 8
    %v357 = vld [vmem:[%s356] sm:$0xff]
    %v359 = vsel %vm278, %v357, 0
    %361 = vmatprep.subr.mxu0 0.0
    %362 = vmatpush1.msra.mxu0 %v275
    %363 = vmatprep.subr.mxu0 0.0
    %364 = vmatpush1.msra.mxu0 %v276
    %365 = vmatprep.subr.mxu0 0.0
    %366 = vmatpush1.msra.mxu0 0.0
    %367 = vmatprep.subr.mxu0 0.0
    %368 = vmatpush1.msra.mxu0 0.0
    %369 = vmatprep.subr.mxu0 0.0
    %370 = vmatpush1.msra.mxu0 0.0
    %371 = vmatprep.subr.mxu0 0.0
    %372 = vmatpush1.msra.mxu0 0.0
    %373 = vmatprep.subr.mxu0 0.0
    %374 = vmatpush1.msra.mxu0 0.0
    %375 = vmatprep.subr.mxu0 0.0
    %376 = vmatpush1.msra.mxu0 0.0
    %377 = vmatprep.subr.mxu0 0.0
    %378 = vmatpush1.msra.mxu0 0.0
    %379 = vmatprep.subr.mxu0 0.0
    %380 = vmatpush1.msra.mxu0 0.0
    %381 = vmatprep.subr.mxu0 0.0
    %382 = vmatpush1.msra.mxu0 0.0
    %383 = vmatprep.subr.mxu0 0.0
    %384 = vmatpush1.msra.mxu0 0.0
    %385 = vmatprep.subr.mxu0 0.0
    %386 = vmatpush1.msra.mxu0 0.0
    %387 = vmatprep.subr.mxu0 0.0
    %388 = vmatpush1.msra.mxu0 0.0
    %389 = vmatprep.subr.mxu0 0.0
    %390 = vmatpush1.msra.mxu0 0.0
    %391 = vmatprep.subr.mxu0 0.0
    %392 = vmatpush1.msra.mxu0 0.0
    %393 = vmatprep.subr.mxu0 0.0
    %394 = vmatpush1.msra.mxu0 0.0
    %395 = vmatprep.subr.mxu0 0.0
    %396 = vmatpush1.msra.mxu0 0.0
    %397 = vmatprep.subr.mxu0 0.0
    %398 = vmatpush1.msra.mxu0 0.0
    %399 = vmatprep.subr.mxu0 0.0
    %400 = vmatpush1.msra.mxu0 0.0
    %401 = vmatprep.subr.mxu0 0.0
    %402 = vmatpush1.msra.mxu0 0.0
    %403 = vmatprep.subr.mxu0 0.0
    %404 = vmatpush1.msra.mxu0 0.0
    %405 = vmatprep.subr.mxu0 0.0
    %406 = vmatpush1.msra.mxu0 0.0
    %407 = vmatprep.subr.mxu0 0.0
    %408 = vmatpush1.msra.mxu0 0.0
    %409 = vmatprep.subr.mxu0 0.0
    %410 = vmatpush1.msra.mxu0 0.0
    %411 = vmatprep.subr.mxu0 0.0
    %412 = vmatpush1.msra.mxu0 0.0
    %413 = vmatprep.subr.mxu0 0.0
    %414 = vmatpush1.msra.mxu0 0.0
    %415 = vmatprep.subr.mxu0 0.0
    %416 = vmatpush1.msra.mxu0 0.0
    %417 = vmatprep.subr.mxu0 0.0
    %418 = vmatpush1.msra.mxu0 0.0
    %419 = vmatprep.subr.mxu0 0.0
    %420 = vmatpush1.msra.mxu0 0.0
    %421 = vmatprep.subr.mxu0 0.0
    %422 = vmatpush1.msra.mxu0 0.0
    %423 = vmatprep.subr.mxu0 0.0
    %424 = vmatpush1.msra.mxu0 0.0
    %425 = vmatprep.mubr.f32.mxu0 0.0
    %426 = vmatmul.mubr.f32.gmra.mrb[0].mxu0 %v359
    %v427 = vpop.f32.mrb[0].mxu0
    %v428 = vadd.f32 0.0, %v427
    %v429 = vpop.f32.mrb[0].mxu0
    %430 = vdwg.mxu0
    %s431 = scalar_lea.vmem [#allocation8], 32
    %v432 = vld [vmem:[%s431] sm:$0xff]
    %v433 = vld [vmem:[%s431 + $0x8] sm:$0xff]
    %v434 = vld [vmem:[%s431 + $0x10] sm:$0xff]
    %v435 = vld [vmem:[%s431 + $0x18] sm:$0xff]
    %vm436 = vcmask 261120
    %v438 = vsel %vm436, %v428, 0
    %440 = vmatprep.subr.mxu0 0.0
    %441 = vmatpush1.msra.mxu0 %v432
    %442 = vmatprep.subr.mxu0 0.0
    %443 = vmatpush1.msra.mxu0 %v433
    %444 = vmatprep.subr.mxu0 0.0
    %445 = vmatpush1.msra.mxu0 %v434
    %446 = vmatprep.subr.mxu0 0.0
    %447 = vmatpush1.msra.mxu0 %v435
    %448 = vmatprep.subr.mxu0 0.0
    %449 = vmatpush1.msra.mxu0 0.0
    %450 = vmatprep.subr.mxu0 0.0
    %451 = vmatpush1.msra.mxu0 0.0
    %452 = vmatprep.subr.mxu0 0.0
    %453 = vmatpush1.msra.mxu0 0.0
    %454 = vmatprep.subr.mxu0 0.0
    %455 = vmatpush1.msra.mxu0 0.0
    %456 = vmatprep.subr.mxu0 0.0
    %457 = vmatpush1.msra.mxu0 0.0
    %458 = vmatprep.subr.mxu0 0.0
    %459 = vmatpush1.msra.mxu0 0.0
    %460 = vmatprep.subr.mxu0 0.0
    %461 = vmatpush1.msra.mxu0 0.0
    %462 = vmatprep.subr.mxu0 0.0
    %463 = vmatpush1.msra.mxu0 0.0
    %464 = vmatprep.subr.mxu0 0.0
    %465 = vmatpush1.msra.mxu0 0.0
    %466 = vmatprep.subr.mxu0 0.0
    %467 = vmatpush1.msra.mxu0 0.0
    %468 = vmatprep.subr.mxu0 0.0
    %469 = vmatpush1.msra.mxu0 0.0
    %470 = vmatprep.subr.mxu0 0.0
    %471 = vmatpush1.msra.mxu0 0.0
    %472 = vmatprep.subr.mxu0 0.0
    %473 = vmatpush1.msra.mxu0 0.0
    %474 = vmatprep.subr.mxu0 0.0
    %475 = vmatpush1.msra.mxu0 0.0
    %476 = vmatprep.subr.mxu0 0.0
    %477 = vmatpush1.msra.mxu0 0.0
    %478 = vmatprep.subr.mxu0 0.0
    %479 = vmatpush1.msra.mxu0 0.0
    %480 = vmatprep.subr.mxu0 0.0
    %481 = vmatpush1.msra.mxu0 0.0
    %482 = vmatprep.subr.mxu0 0.0
    %483 = vmatpush1.msra.mxu0 0.0
    %484 = vmatprep.subr.mxu0 0.0
    %485 = vmatpush1.msra.mxu0 0.0
    %486 = vmatprep.subr.mxu0 0.0
    %487 = vmatpush1.msra.mxu0 0.0
    %488 = vmatprep.subr.mxu0 0.0
    %489 = vmatpush1.msra.mxu0 0.0
    %490 = vmatprep.subr.mxu0 0.0
    %491 = vmatpush1.msra.mxu0 0.0
    %492 = vmatprep.subr.mxu0 0.0
    %493 = vmatpush1.msra.mxu0 0.0
    %494 = vmatprep.subr.mxu0 0.0
    %495 = vmatpush1.msra.mxu0 0.0
    %496 = vmatprep.subr.mxu0 0.0
    %497 = vmatpush1.msra.mxu0 0.0
    %498 = vmatprep.subr.mxu0 0.0
    %499 = vmatpush1.msra.mxu0 0.0
    %500 = vmatprep.subr.mxu0 0.0
    %501 = vmatpush1.msra.mxu0 0.0
    %502 = vmatprep.subr.mxu0 0.0
    %503 = vmatpush1.msra.mxu0 0.0
    %504 = vmatprep.mubr.f32.mxu0 0.0
    %505 = vmatmul.mubr.f32.gmra.mrb[0].mxu0 %v438
    %v506 = vpop.f32.mrb[0].mxu0
    %v507 = vadd.f32 0.0, %v506
    %v508 = vpop.f32.mrb[0].mxu0
    %509 = vdwg.mxu0
    %v511 = vsel %vm436, %v349, 0
    %513 = vmatprep.subr.mxu0 0.0
    %514 = vmatpush1.msra.mxu0 %v352
    %515 = vmatprep.subr.mxu0 0.0
    %516 = vmatpush1.msra.mxu0 %v353
    %517 = vmatprep.subr.mxu0 0.0
    %518 = vmatpush1.msra.mxu0 %v354
    %519 = vmatprep.subr.mxu0 0.0
    %520 = vmatpush1.msra.mxu0 %v355
    %521 = vmatprep.subr.mxu0 0.0
    %522 = vmatpush1.msra.mxu0 0.0
    %523 = vmatprep.subr.mxu0 0.0
    %524 = vmatpush1.msra.mxu0 0.0
    %525 = vmatprep.subr.mxu0 0.0
    %526 = vmatpush1.msra.mxu0 0.0
    %527 = vmatprep.subr.mxu0 0.0
    %528 = vmatpush1.msra.mxu0 0.0
    %529 = vmatprep.subr.mxu0 0.0
    %530 = vmatpush1.msra.mxu0 0.0
    %531 = vmatprep.subr.mxu0 0.0
    %532 = vmatpush1.msra.mxu0 0.0
    %533 = vmatprep.subr.mxu0 0.0
    %534 = vmatpush1.msra.mxu0 0.0
    %535 = vmatprep.subr.mxu0 0.0
    %536 = vmatpush1.msra.mxu0 0.0
    %537 = vmatprep.subr.mxu0 0.0
    %538 = vmatpush1.msra.mxu0 0.0
    %539 = vmatprep.subr.mxu0 0.0
    %540 = vmatpush1.msra.mxu0 0.0
    %541 = vmatprep.subr.mxu0 0.0
    %542 = vmatpush1.msra.mxu0 0.0
    %543 = vmatprep.subr.mxu0 0.0
    %544 = vmatpush1.msra.mxu0 0.0
    %545 = vmatprep.subr.mxu0 0.0
    %546 = vmatpush1.msra.mxu0 0.0
    %547 = vmatprep.subr.mxu0 0.0
    %548 = vmatpush1.msra.mxu0 0.0
    %549 = vmatprep.subr.mxu0 0.0
    %550 = vmatpush1.msra.mxu0 0.0
    %551 = vmatprep.subr.mxu0 0.0
    %552 = vmatpush1.msra.mxu0 0.0
    %553 = vmatprep.subr.mxu0 0.0
    %554 = vmatpush1.msra.mxu0 0.0
    %555 = vmatprep.subr.mxu0 0.0
    %556 = vmatpush1.msra.mxu0 0.0
    %557 = vmatprep.subr.mxu0 0.0
    %558 = vmatpush1.msra.mxu0 0.0
    %559 = vmatprep.subr.mxu0 0.0
    %560 = vmatpush1.msra.mxu0 0.0
    %561 = vmatprep.subr.mxu0 0.0
    %562 = vmatpush1.msra.mxu0 0.0
    %563 = vmatprep.subr.mxu0 0.0
    %564 = vmatpush1.msra.mxu0 0.0
    %565 = vmatprep.subr.mxu0 0.0
    %566 = vmatpush1.msra.mxu0 0.0
    %567 = vmatprep.subr.mxu0 0.0
    %568 = vmatpush1.msra.mxu0 0.0
    %569 = vmatprep.subr.mxu0 0.0
    %570 = vmatpush1.msra.mxu0 0.0
    %571 = vmatprep.subr.mxu0 0.0
    %572 = vmatpush1.msra.mxu0 0.0
    %573 = vmatprep.subr.mxu0 0.0
    %574 = vmatpush1.msra.mxu0 0.0
    %575 = vmatprep.subr.mxu0 0.0
    %576 = vmatpush1.msra.mxu0 0.0
    %577 = vmatprep.mubr.f32.mxu0 0.0
    %578 = vmatmul.mubr.f32.gmra.mrb[0].mxu0 %v511
    %v579 = vpop.f32.mrb[0].mxu0
    %v580 = vadd.f32 %v507, %v579
    %v581 = vpop.f32.mrb[0].mxu0
    %582 = vdwg.mxu0
    %s583 = scalar_lea.vmem [#allocation7], 16
    %v584 = vld [vmem:[%s583] sm:$0xff]
    %v586 = vsel %vm278, %v584, 0
    %588 = vmatprep.subr.mxu0 0.0
    %589 = vmatpush1.msra.mxu0 %v275
    %590 = vmatprep.subr.mxu0 0.0
    %591 = vmatpush1.msra.mxu0 %v276
    %592 = vmatprep.subr.mxu0 0.0
    %593 = vmatpush1.msra.mxu0 0.0
    %594 = vmatprep.subr.mxu0 0.0
    %595 = vmatpush1.msra.mxu0 0.0
    %596 = vmatprep.subr.mxu0 0.0
    %597 = vmatpush1.msra.mxu0 0.0
    %598 = vmatprep.subr.mxu0 0.0
    %599 = vmatpush1.msra.mxu0 0.0
    %600 = vmatprep.subr.mxu0 0.0
    %601 = vmatpush1.msra.mxu0 0.0
    %602 = vmatprep.subr.mxu0 0.0
    %603 = vmatpush1.msra.mxu0 0.0
    %604 = vmatprep.subr.mxu0 0.0
    %605 = vmatpush1.msra.mxu0 0.0
    %606 = vmatprep.subr.mxu0 0.0
    %607 = vmatpush1.msra.mxu0 0.0
    %608 = vmatprep.subr.mxu0 0.0
    %609 = vmatpush1.msra.mxu0 0.0
    %610 = vmatprep.subr.mxu0 0.0
    %611 = vmatpush1.msra.mxu0 0.0
    %612 = vmatprep.subr.mxu0 0.0
    %613 = vmatpush1.msra.mxu0 0.0
    %614 = vmatprep.subr.mxu0 0.0
    %615 = vmatpush1.msra.mxu0 0.0
    %616 = vmatprep.subr.mxu0 0.0
    %617 = vmatpush1.msra.mxu0 0.0
    %618 = vmatprep.subr.mxu0 0.0
    %619 = vmatpush1.msra.mxu0 0.0
    %620 = vmatprep.subr.mxu0 0.0
    %621 = vmatpush1.msra.mxu0 0.0
    %622 = vmatprep.subr.mxu0 0.0
    %623 = vmatpush1.msra.mxu0 0.0
    %624 = vmatprep.subr.mxu0 0.0
    %625 = vmatpush1.msra.mxu0 0.0
    %626 = vmatprep.subr.mxu0 0.0
    %627 = vmatpush1.msra.mxu0 0.0
    %628 = vmatprep.subr.mxu0 0.0
    %629 = vmatpush1.msra.mxu0 0.0
    %630 = vmatprep.subr.mxu0 0.0
    %631 = vmatpush1.msra.mxu0 0.0
    %632 = vmatprep.subr.mxu0 0.0
    %633 = vmatpush1.msra.mxu0 0.0
    %634 = vmatprep.subr.mxu0 0.0
    %635 = vmatpush1.msra.mxu0 0.0
    %636 = vmatprep.subr.mxu0 0.0
    %637 = vmatpush1.msra.mxu0 0.0
    %638 = vmatprep.subr.mxu0 0.0
    %639 = vmatpush1.msra.mxu0 0.0
    %640 = vmatprep.subr.mxu0 0.0
    %641 = vmatpush1.msra.mxu0 0.0
    %642 = vmatprep.subr.mxu0 0.0
    %643 = vmatpush1.msra.mxu0 0.0
    %644 = vmatprep.subr.mxu0 0.0
    %645 = vmatpush1.msra.mxu0 0.0
    %646 = vmatprep.subr.mxu0 0.0
    %647 = vmatpush1.msra.mxu0 0.0
    %648 = vmatprep.subr.mxu0 0.0
    %649 = vmatpush1.msra.mxu0 0.0
    %650 = vmatprep.subr.mxu0 0.0
    %651 = vmatpush1.msra.mxu0 0.0
    %652 = vmatprep.mubr.f32.mxu0 0.0
    %653 = vmatmul.mubr.f32.gmra.mrb[0].mxu0 %v586
    %v654 = vpop.f32.mrb[0].mxu0
    %v655 = vadd.f32 0.0, %v654
    %v656 = vpop.f32.mrb[0].mxu0
    %657 = vdwg.mxu0
    %s658 = scalar_lea.vmem [#allocation8], 64
    %v659 = vld [vmem:[%s658] sm:$0xff]
    %v660 = vld [vmem:[%s658 + $0x8] sm:$0xff]
    %v661 = vld [vmem:[%s658 + $0x10] sm:$0xff]
    %v662 = vld [vmem:[%s658 + $0x18] sm:$0xff]
    %v664 = vsel %vm436, %v655, 0
    %666 = vmatprep.subr.mxu0 0.0
    %667 = vmatpush1.msra.mxu0 %v659
    %668 = vmatprep.subr.mxu0 0.0
    %669 = vmatpush1.msra.mxu0 %v660
    %670 = vmatprep.subr.mxu0 0.0
    %671 = vmatpush1.msra.mxu0 %v661
    %672 = vmatprep.subr.mxu0 0.0
    %673 = vmatpush1.msra.mxu0 %v662
    %674 = vmatprep.subr.mxu0 0.0
    %675 = vmatpush1.msra.mxu0 0.0
    %676 = vmatprep.subr.mxu0 0.0
    %677 = vmatpush1.msra.mxu0 0.0
    %678 = vmatprep.subr.mxu0 0.0
    %679 = vmatpush1.msra.mxu0 0.0
    %680 = vmatprep.subr.mxu0 0.0
    %681 = vmatpush1.msra.mxu0 0.0
    %682 = vmatprep.subr.mxu0 0.0
    %683 = vmatpush1.msra.mxu0 0.0
    %684 = vmatprep.subr.mxu0 0.0
    %685 = vmatpush1.msra.mxu0 0.0
    %686 = vmatprep.subr.mxu0 0.0
    %687 = vmatpush1.msra.mxu0 0.0
    %688 = vmatprep.subr.mxu0 0.0
    %689 = vmatpush1.msra.mxu0 0.0
    %690 = vmatprep.subr.mxu0 0.0
    %691 = vmatpush1.msra.mxu0 0.0
    %692 = vmatprep.subr.mxu0 0.0
    %693 = vmatpush1.msra.mxu0 0.0
    %694 = vmatprep.subr.mxu0 0.0
    %695 = vmatpush1.msra.mxu0 0.0
    %696 = vmatprep.subr.mxu0 0.0
    %697 = vmatpush1.msra.mxu0 0.0
    %698 = vmatprep.subr.mxu0 0.0
    %699 = vmatpush1.msra.mxu0 0.0
    %700 = vmatprep.subr.mxu0 0.0
    %701 = vmatpush1.msra.mxu0 0.0
    %702 = vmatprep.subr.mxu0 0.0
    %703 = vmatpush1.msra.mxu0 0.0
    %704 = vmatprep.subr.mxu0 0.0
    %705 = vmatpush1.msra.mxu0 0.0
    %706 = vmatprep.subr.mxu0 0.0
    %707 = vmatpush1.msra.mxu0 0.0
    %708 = vmatprep.subr.mxu0 0.0
    %709 = vmatpush1.msra.mxu0 0.0
    %710 = vmatprep.subr.mxu0 0.0
    %711 = vmatpush1.msra.mxu0 0.0
    %712 = vmatprep.subr.mxu0 0.0
    %713 = vmatpush1.msra.mxu0 0.0
    %714 = vmatprep.subr.mxu0 0.0
    %715 = vmatpush1.msra.mxu0 0.0
    %716 = vmatprep.subr.mxu0 0.0
    %717 = vmatpush1.msra.mxu0 0.0
    %718 = vmatprep.subr.mxu0 0.0
    %719 = vmatpush1.msra.mxu0 0.0
    %720 = vmatprep.subr.mxu0 0.0
    %721 = vmatpush1.msra.mxu0 0.0
    %722 = vmatprep.subr.mxu0 0.0
    %723 = vmatpush1.msra.mxu0 0.0
    %724 = vmatprep.subr.mxu0 0.0
    %725 = vmatpush1.msra.mxu0 0.0
    %726 = vmatprep.subr.mxu0 0.0
    %727 = vmatpush1.msra.mxu0 0.0
    %728 = vmatprep.subr.mxu0 0.0
    %729 = vmatpush1.msra.mxu0 0.0
    %730 = vmatprep.mubr.f32.mxu0 0.0
    %731 = vmatmul.mubr.f32.gmra.mrb[0].mxu0 %v664
    %v732 = vpop.f32.mrb[0].mxu0
    %v733 = vadd.f32 0.0, %v732
    %v734 = vpop.f32.mrb[0].mxu0
    %735 = vdwg.mxu0
    %v736 = vadd.f32 %v580, %v733
    %s737 = scalar_lea.vmem [#allocation7], 24
    %v738 = vld [vmem:[%s737] sm:$0xff]
    %v740 = vsel %vm278, %v738, 0
    %742 = vmatprep.subr.mxu0 0.0
    %743 = vmatpush1.msra.mxu0 %v275
    %744 = vmatprep.subr.mxu0 0.0
    %745 = vmatpush1.msra.mxu0 %v276
    %746 = vmatprep.subr.mxu0 0.0
    %747 = vmatpush1.msra.mxu0 0.0
    %748 = vmatprep.subr.mxu0 0.0
    %749 = vmatpush1.msra.mxu0 0.0
    %750 = vmatprep.subr.mxu0 0.0
    %751 = vmatpush1.msra.mxu0 0.0
    %752 = vmatprep.subr.mxu0 0.0
    %753 = vmatpush1.msra.mxu0 0.0
    %754 = vmatprep.subr.mxu0 0.0
    %755 = vmatpush1.msra.mxu0 0.0
    %756 = vmatprep.subr.mxu0 0.0
    %757 = vmatpush1.msra.mxu0 0.0
    %758 = vmatprep.subr.mxu0 0.0
    %759 = vmatpush1.msra.mxu0 0.0
    %760 = vmatprep.subr.mxu0 0.0
    %761 = vmatpush1.msra.mxu0 0.0
    %762 = vmatprep.subr.mxu0 0.0
    %763 = vmatpush1.msra.mxu0 0.0
    %764 = vmatprep.subr.mxu0 0.0
    %765 = vmatpush1.msra.mxu0 0.0
    %766 = vmatprep.subr.mxu0 0.0
    %767 = vmatpush1.msra.mxu0 0.0
    %768 = vmatprep.subr.mxu0 0.0
    %769 = vmatpush1.msra.mxu0 0.0
    %770 = vmatprep.subr.mxu0 0.0
    %771 = vmatpush1.msra.mxu0 0.0
    %772 = vmatprep.subr.mxu0 0.0
    %773 = vmatpush1.msra.mxu0 0.0
    %774 = vmatprep.subr.mxu0 0.0
    %775 = vmatpush1.msra.mxu0 0.0
    %776 = vmatprep.subr.mxu0 0.0
    %777 = vmatpush1.msra.mxu0 0.0
    %778 = vmatprep.subr.mxu0 0.0
    %779 = vmatpush1.msra.mxu0 0.0
    %780 = vmatprep.subr.mxu0 0.0
    %781 = vmatpush1.msra.mxu0 0.0
    %782 = vmatprep.subr.mxu0 0.0
    %783 = vmatpush1.msra.mxu0 0.0
    %784 = vmatprep.subr.mxu0 0.0
    %785 = vmatpush1.msra.mxu0 0.0
    %786 = vmatprep.subr.mxu0 0.0
    %787 = vmatpush1.msra.mxu0 0.0
    %788 = vmatprep.subr.mxu0 0.0
    %789 = vmatpush1.msra.mxu0 0.0
    %790 = vmatprep.subr.mxu0 0.0
    %791 = vmatpush1.msra.mxu0 0.0
    %792 = vmatprep.subr.mxu0 0.0
    %793 = vmatpush1.msra.mxu0 0.0
    %794 = vmatprep.subr.mxu0 0.0
    %795 = vmatpush1.msra.mxu0 0.0
    %796 = vmatprep.subr.mxu0 0.0
    %797 = vmatpush1.msra.mxu0 0.0
    %798 = vmatprep.subr.mxu0 0.0
    %799 = vmatpush1.msra.mxu0 0.0
    %800 = vmatprep.subr.mxu0 0.0
    %801 = vmatpush1.msra.mxu0 0.0
    %802 = vmatprep.subr.mxu0 0.0
    %803 = vmatpush1.msra.mxu0 0.0
    %804 = vmatprep.subr.mxu0 0.0
    %805 = vmatpush1.msra.mxu0 0.0
    %806 = vmatprep.mubr.f32.mxu0 0.0
    %807 = vmatmul.mubr.f32.gmra.mrb[0].mxu0 %v740
    %v808 = vpop.f32.mrb[0].mxu0
    %v809 = vadd.f32 0.0, %v808
    %v810 = vpop.f32.mrb[0].mxu0
    %811 = vdwg.mxu0
    %s812 = scalar_lea.vmem [#allocation8], 96
    %v813 = vld [vmem:[%s812] sm:$0xff]
    %v814 = vld [vmem:[%s812 + $0x8] sm:$0xff]
    %v815 = vld [vmem:[%s812 + $0x10] sm:$0xff]
    %v816 = vld [vmem:[%s812 + $0x18] sm:$0xff]
    %v818 = vsel %vm436, %v809, 0
    %820 = vmatprep.subr.mxu0 0.0
    %821 = vmatpush1.msra.mxu0 %v813
    %822 = vmatprep.subr.mxu0 0.0
    %823 = vmatpush1.msra.mxu0 %v814
    %824 = vmatprep.subr.mxu0 0.0
    %825 = vmatpush1.msra.mxu0 %v815
    %826 = vmatprep.subr.mxu0 0.0
    %827 = vmatpush1.msra.mxu0 %v816
    %828 = vmatprep.subr.mxu0 0.0
    %829 = vmatpush1.msra.mxu0 0.0
    %830 = vmatprep.subr.mxu0 0.0
    %831 = vmatpush1.msra.mxu0 0.0
    %832 = vmatprep.subr.mxu0 0.0
    %833 = vmatpush1.msra.mxu0 0.0
    %834 = vmatprep.subr.mxu0 0.0
    %835 = vmatpush1.msra.mxu0 0.0
    %836 = vmatprep.subr.mxu0 0.0
    %837 = vmatpush1.msra.mxu0 0.0
    %838 = vmatprep.subr.mxu0 0.0
    %839 = vmatpush1.msra.mxu0 0.0
    %840 = vmatprep.subr.mxu0 0.0
    %841 = vmatpush1.msra.mxu0 0.0
    %842 = vmatprep.subr.mxu0 0.0
    %843 = vmatpush1.msra.mxu0 0.0
    %844 = vmatprep.subr.mxu0 0.0
    %845 = vmatpush1.msra.mxu0 0.0
    %846 = vmatprep.subr.mxu0 0.0
    %847 = vmatpush1.msra.mxu0 0.0
    %848 = vmatprep.subr.mxu0 0.0
    %849 = vmatpush1.msra.mxu0 0.0
    %850 = vmatprep.subr.mxu0 0.0
    %851 = vmatpush1.msra.mxu0 0.0
    %852 = vmatprep.subr.mxu0 0.0
    %853 = vmatpush1.msra.mxu0 0.0
    %854 = vmatprep.subr.mxu0 0.0
    %855 = vmatpush1.msra.mxu0 0.0
    %856 = vmatprep.subr.mxu0 0.0
    %857 = vmatpush1.msra.mxu0 0.0
    %858 = vmatprep.subr.mxu0 0.0
    %859 = vmatpush1.msra.mxu0 0.0
    %860 = vmatprep.subr.mxu0 0.0
    %861 = vmatpush1.msra.mxu0 0.0
    %862 = vmatprep.subr.mxu0 0.0
    %863 = vmatpush1.msra.mxu0 0.0
    %864 = vmatprep.subr.mxu0 0.0
    %865 = vmatpush1.msra.mxu0 0.0
    %866 = vmatprep.subr.mxu0 0.0
    %867 = vmatpush1.msra.mxu0 0.0
    %868 = vmatprep.subr.mxu0 0.0
    %869 = vmatpush1.msra.mxu0 0.0
    %870 = vmatprep.subr.mxu0 0.0
    %871 = vmatpush1.msra.mxu0 0.0
    %872 = vmatprep.subr.mxu0 0.0
    %873 = vmatpush1.msra.mxu0 0.0
    %874 = vmatprep.subr.mxu0 0.0
    %875 = vmatpush1.msra.mxu0 0.0
    %876 = vmatprep.subr.mxu0 0.0
    %877 = vmatpush1.msra.mxu0 0.0
    %878 = vmatprep.subr.mxu0 0.0
    %879 = vmatpush1.msra.mxu0 0.0
    %880 = vmatprep.subr.mxu0 0.0
    %881 = vmatpush1.msra.mxu0 0.0
    %882 = vmatprep.subr.mxu0 0.0
    %883 = vmatpush1.msra.mxu0 0.0
    %884 = vmatprep.mubr.f32.mxu0 0.0
    %885 = vmatmul.mubr.f32.gmra.mrb[0].mxu0 %v818
    %v886 = vpop.f32.mrb[0].mxu0
    %v887 = vadd.f32 0.0, %v886
    %v888 = vpop.f32.mrb[0].mxu0
    %889 = vdwg.mxu0
    %v890 = vadd.f32 %v736, %v887
    %s891 = scalar_lea.vmem [#allocation7], 32
    %v892 = vld [vmem:[%s891] sm:$0xff]
    %v894 = vsel %vm278, %v892, 0
    %896 = vmatprep.subr.mxu0 0.0
    %897 = vmatpush1.msra.mxu0 %v275
    %898 = vmatprep.subr.mxu0 0.0
    %899 = vmatpush1.msra.mxu0 %v276
    %900 = vmatprep.subr.mxu0 0.0
    %901 = vmatpush1.msra.mxu0 0.0
    %902 = vmatprep.subr.mxu0 0.0
    %903 = vmatpush1.msra.mxu0 0.0
    %904 = vmatprep.subr.mxu0 0.0
    %905 = vmatpush1.msra.mxu0 0.0
    %906 = vmatprep.subr.mxu0 0.0
    %907 = vmatpush1.msra.mxu0 0.0
    %908 = vmatprep.subr.mxu0 0.0
    %909 = vmatpush1.msra.mxu0 0.0
    %910 = vmatprep.subr.mxu0 0.0
    %911 = vmatpush1.msra.mxu0 0.0
    %912 = vmatprep.subr.mxu0 0.0
    %913 = vmatpush1.msra.mxu0 0.0
    %914 = vmatprep.subr.mxu0 0.0
    %915 = vmatpush1.msra.mxu0 0.0
    %916 = vmatprep.subr.mxu0 0.0
    %917 = vmatpush1.msra.mxu0 0.0
    %918 = vmatprep.subr.mxu0 0.0
    %919 = vmatpush1.msra.mxu0 0.0
    %920 = vmatprep.subr.mxu0 0.0
    %921 = vmatpush1.msra.mxu0 0.0
    %922 = vmatprep.subr.mxu0 0.0
    %923 = vmatpush1.msra.mxu0 0.0
    %924 = vmatprep.subr.mxu0 0.0
    %925 = vmatpush1.msra.mxu0 0.0
    %926 = vmatprep.subr.mxu0 0.0
    %927 = vmatpush1.msra.mxu0 0.0
    %928 = vmatprep.subr.mxu0 0.0
    %929 = vmatpush1.msra.mxu0 0.0
    %930 = vmatprep.subr.mxu0 0.0
    %931 = vmatpush1.msra.mxu0 0.0
    %932 = vmatprep.subr.mxu0 0.0
    %933 = vmatpush1.msra.mxu0 0.0
    %934 = vmatprep.subr.mxu0 0.0
    %935 = vmatpush1.msra.mxu0 0.0
    %936 = vmatprep.subr.mxu0 0.0
    %937 = vmatpush1.msra.mxu0 0.0
    %938 = vmatprep.subr.mxu0 0.0
    %939 = vmatpush1.msra.mxu0 0.0
    %940 = vmatprep.subr.mxu0 0.0
    %941 = vmatpush1.msra.mxu0 0.0
    %942 = vmatprep.subr.mxu0 0.0
    %943 = vmatpush1.msra.mxu0 0.0
    %944 = vmatprep.subr.mxu0 0.0
    %945 = vmatpush1.msra.mxu0 0.0
    %946 = vmatprep.subr.mxu0 0.0
    %947 = vmatpush1.msra.mxu0 0.0
    %948 = vmatprep.subr.mxu0 0.0
    %949 = vmatpush1.msra.mxu0 0.0
    %950 = vmatprep.subr.mxu0 0.0
    %951 = vmatpush1.msra.mxu0 0.0
    %952 = vmatprep.subr.mxu0 0.0
    %953 = vmatpush1.msra.mxu0 0.0
    %954 = vmatprep.subr.mxu0 0.0
    %955 = vmatpush1.msra.mxu0 0.0
    %956 = vmatprep.subr.mxu0 0.0
    %957 = vmatpush1.msra.mxu0 0.0
    %958 = vmatprep.subr.mxu0 0.0
    %959 = vmatpush1.msra.mxu0 0.0
    %960 = vmatprep.mubr.f32.mxu0 0.0
    %961 = vmatmul.mubr.f32.gmra.mrb[0].mxu0 %v894
    %v962 = vpop.f32.mrb[0].mxu0
    %v963 = vadd.f32 0.0, %v962
    %v964 = vpop.f32.mrb[0].mxu0
    %965 = vdwg.mxu0
    %s966 = scalar_lea.vmem [#allocation8], 128
    %v967 = vld [vmem:[%s966] sm:$0xff]
    %v968 = vld [vmem:[%s966 + $0x8] sm:$0xff]
    %v969 = vld [vmem:[%s966 + $0x10] sm:$0xff]
    %v970 = vld [vmem:[%s966 + $0x18] sm:$0xff]
    %v972 = vsel %vm436, %v963, 0
    %974 = vmatprep.subr.mxu0 0.0
    %975 = vmatpush1.msra.mxu0 %v967
    %976 = vmatprep.subr.mxu0 0.0
    %977 = vmatpush1.msra.mxu0 %v968
    %978 = vmatprep.subr.mxu0 0.0
    %979 = vmatpush1.msra.mxu0 %v969
    %980 = vmatprep.subr.mxu0 0.0
    %981 = vmatpush1.msra.mxu0 %v970
    %982 = vmatprep.subr.mxu0 0.0
    %983 = vmatpush1.msra.mxu0 0.0
    %984 = vmatprep.subr.mxu0 0.0
    %985 = vmatpush1.msra.mxu0 0.0
    %986 = vmatprep.subr.mxu0 0.0
    %987 = vmatpush1.msra.mxu0 0.0
    %988 = vmatprep.subr.mxu0 0.0
    %989 = vmatpush1.msra.mxu0 0.0
    %990 = vmatprep.subr.mxu0 0.0
    %991 = vmatpush1.msra.mxu0 0.0
    %992 = vmatprep.subr.mxu0 0.0
    %993 = vmatpush1.msra.mxu0 0.0
    %994 = vmatprep.subr.mxu0 0.0
    %995 = vmatpush1.msra.mxu0 0.0
    %996 = vmatprep.subr.mxu0 0.0
    %997 = vmatpush1.msra.mxu0 0.0
    %998 = vmatprep.subr.mxu0 0.0
    %999 = vmatpush1.msra.mxu0 0.0
    %1000 = vmatprep.subr.mxu0 0.0
    %1001 = vmatpush1.msra.mxu0 0.0
    %1002 = vmatprep.subr.mxu0 0.0
    %1003 = vmatpush1.msra.mxu0 0.0
    %1004 = vmatprep.subr.mxu0 0.0
    %1005 = vmatpush1.msra.mxu0 0.0
    %1006 = vmatprep.subr.mxu0 0.0
    %1007 = vmatpush1.msra.mxu0 0.0
    %1008 = vmatprep.subr.mxu0 0.0
    %1009 = vmatpush1.msra.mxu0 0.0
    %1010 = vmatprep.subr.mxu0 0.0
    %1011 = vmatpush1.msra.mxu0 0.0
    %1012 = vmatprep.subr.mxu0 0.0
    %1013 = vmatpush1.msra.mxu0 0.0
    %1014 = vmatprep.subr.mxu0 0.0
    %1015 = vmatpush1.msra.mxu0 0.0
    %1016 = vmatprep.subr.mxu0 0.0
    %1017 = vmatpush1.msra.mxu0 0.0
    %1018 = vmatprep.subr.mxu0 0.0
    %1019 = vmatpush1.msra.mxu0 0.0
    %1020 = vmatprep.subr.mxu0 0.0
    %1021 = vmatpush1.msra.mxu0 0.0
    %1022 = vmatprep.subr.mxu0 0.0
    %1023 = vmatpush1.msra.mxu0 0.0
    %1024 = vmatprep.subr.mxu0 0.0
    %1025 = vmatpush1.msra.mxu0 0.0
    %1026 = vmatprep.subr.mxu0 0.0
    %1027 = vmatpush1.msra.mxu0 0.0
    %1028 = vmatprep.subr.mxu0 0.0
    %1029 = vmatpush1.msra.mxu0 0.0
    %1030 = vmatprep.subr.mxu0 0.0
    %1031 = vmatpush1.msra.mxu0 0.0
    %1032 = vmatprep.subr.mxu0 0.0
    %1033 = vmatpush1.msra.mxu0 0.0
    %1034 = vmatprep.subr.mxu0 0.0
    %1035 = vmatpush1.msra.mxu0 0.0
    %1036 = vmatprep.subr.mxu0 0.0
    %1037 = vmatpush1.msra.mxu0 0.0
    %1038 = vmatprep.mubr.f32.mxu0 0.0
    %1039 = vmatmul.mubr.f32.gmra.mrb[0].mxu0 %v972
    %v1040 = vpop.f32.mrb[0].mxu0
    %v1041 = vadd.f32 0.0, %v1040
    %v1042 = vpop.f32.mrb[0].mxu0
    %1043 = vdwg.mxu0
    %v1044 = vadd.f32 %v890, %v1041
    %s1045 = scalar_lea.vmem [#allocation7], 40
    %v1046 = vld [vmem:[%s1045] sm:$0xff]
    %v1048 = vsel %vm278, %v1046, 0
    %1050 = vmatprep.subr.mxu0 0.0
    %1051 = vmatpush1.msra.mxu0 %v275
    %1052 = vmatprep.subr.mxu0 0.0
    %1053 = vmatpush1.msra.mxu0 %v276
    %1054 = vmatprep.subr.mxu0 0.0
    %1055 = vmatpush1.msra.mxu0 0.0
    %1056 = vmatprep.subr.mxu0 0.0
    %1057 = vmatpush1.msra.mxu0 0.0
    %1058 = vmatprep.subr.mxu0 0.0
    %1059 = vmatpush1.msra.mxu0 0.0
    %1060 = vmatprep.subr.mxu0 0.0
    %1061 = vmatpush1.msra.mxu0 0.0
    %1062 = vmatprep.subr.mxu0 0.0
    %1063 = vmatpush1.msra.mxu0 0.0
    %1064 = vmatprep.subr.mxu0 0.0
    %1065 = vmatpush1.msra.mxu0 0.0
    %1066 = vmatprep.subr.mxu0 0.0
    %1067 = vmatpush1.msra.mxu0 0.0
    %1068 = vmatprep.subr.mxu0 0.0
    %1069 = vmatpush1.msra.mxu0 0.0
    %1070 = vmatprep.subr.mxu0 0.0
    %1071 = vmatpush1.msra.mxu0 0.0
    %1072 = vmatprep.subr.mxu0 0.0
    %1073 = vmatpush1.msra.mxu0 0.0
    %1074 = vmatprep.subr.mxu0 0.0
    %1075 = vmatpush1.msra.mxu0 0.0
    %1076 = vmatprep.subr.mxu0 0.0
    %1077 = vmatpush1.msra.mxu0 0.0
    %1078 = vmatprep.subr.mxu0 0.0
    %1079 = vmatpush1.msra.mxu0 0.0
    %1080 = vmatprep.subr.mxu0 0.0
    %1081 = vmatpush1.msra.mxu0 0.0
    %1082 = vmatprep.subr.mxu0 0.0
    %1083 = vmatpush1.msra.mxu0 0.0
    %1084 = vmatprep.subr.mxu0 0.0
    %1085 = vmatpush1.msra.mxu0 0.0
    %1086 = vmatprep.subr.mxu0 0.0
    %1087 = vmatpush1.msra.mxu0 0.0
    %1088 = vmatprep.subr.mxu0 0.0
    %1089 = vmatpush1.msra.mxu0 0.0
    %1090 = vmatprep.subr.mxu0 0.0
    %1091 = vmatpush1.msra.mxu0 0.0
    %1092 = vmatprep.subr.mxu0 0.0
    %1093 = vmatpush1.msra.mxu0 0.0
    %1094 = vmatprep.subr.mxu0 0.0
    %1095 = vmatpush1.msra.mxu0 0.0
    %1096 = vmatprep.subr.mxu0 0.0
    %1097 = vmatpush1.msra.mxu0 0.0
    %1098 = vmatprep.subr.mxu0 0.0
    %1099 = vmatpush1.msra.mxu0 0.0
    %1100 = vmatprep.subr.mxu0 0.0
    %1101 = vmatpush1.msra.mxu0 0.0
    %1102 = vmatprep.subr.mxu0 0.0
    %1103 = vmatpush1.msra.mxu0 0.0
    %1104 = vmatprep.subr.mxu0 0.0
    %1105 = vmatpush1.msra.mxu0 0.0
    %1106 = vmatprep.subr.mxu0 0.0
    %1107 = vmatpush1.msra.mxu0 0.0
    %1108 = vmatprep.subr.mxu0 0.0
    %1109 = vmatpush1.msra.mxu0 0.0
    %1110 = vmatprep.subr.mxu0 0.0
    %1111 = vmatpush1.msra.mxu0 0.0
    %1112 = vmatprep.subr.mxu0 0.0
    %1113 = vmatpush1.msra.mxu0 0.0
    %1114 = vmatprep.mubr.f32.mxu0 0.0
    %1115 = vmatmul.mubr.f32.gmra.mrb[0].mxu0 %v1048
    %v1116 = vpop.f32.mrb[0].mxu0
    %v1117 = vadd.f32 0.0, %v1116
    %v1118 = vpop.f32.mrb[0].mxu0
    %1119 = vdwg.mxu0
    %s1120 = scalar_lea.vmem [#allocation8], 160
    %v1121 = vld [vmem:[%s1120] sm:$0xff]
    %v1122 = vld [vmem:[%s1120 + $0x8] sm:$0xff]
    %v1123 = vld [vmem:[%s1120 + $0x10] sm:$0xff]
    %v1124 = vld [vmem:[%s1120 + $0x18] sm:$0xff]
    %v1126 = vsel %vm436, %v1117, 0
    %1128 = vmatprep.subr.mxu0 0.0
    %1129 = vmatpush1.msra.mxu0 %v1121
    %1130 = vmatprep.subr.mxu0 0.0
    %1131 = vmatpush1.msra.mxu0 %v1122
    %1132 = vmatprep.subr.mxu0 0.0
    %1133 = vmatpush1.msra.mxu0 %v1123
    %1134 = vmatprep.subr.mxu0 0.0
    %1135 = vmatpush1.msra.mxu0 %v1124
    %1136 = vmatprep.subr.mxu0 0.0
    %1137 = vmatpush1.msra.mxu0 0.0
    %1138 = vmatprep.subr.mxu0 0.0
    %1139 = vmatpush1.msra.mxu0 0.0
    %1140 = vmatprep.subr.mxu0 0.0
    %1141 = vmatpush1.msra.mxu0 0.0
    %1142 = vmatprep.subr.mxu0 0.0
    %1143 = vmatpush1.msra.mxu0 0.0
    %1144 = vmatprep.subr.mxu0 0.0
    %1145 = vmatpush1.msra.mxu0 0.0
    %1146 = vmatprep.subr.mxu0 0.0
    %1147 = vmatpush1.msra.mxu0 0.0
    %1148 = vmatprep.subr.mxu0 0.0
    %1149 = vmatpush1.msra.mxu0 0.0
    %1150 = vmatprep.subr.mxu0 0.0
    %1151 = vmatpush1.msra.mxu0 0.0
    %1152 = vmatprep.subr.mxu0 0.0
    %1153 = vmatpush1.msra.mxu0 0.0
    %1154 = vmatprep.subr.mxu0 0.0
    %1155 = vmatpush1.msra.mxu0 0.0
    %1156 = vmatprep.subr.mxu0 0.0
    %1157 = vmatpush1.msra.mxu0 0.0
    %1158 = vmatprep.subr.mxu0 0.0
    %1159 = vmatpush1.msra.mxu0 0.0
    %1160 = vmatprep.subr.mxu0 0.0
    %1161 = vmatpush1.msra.mxu0 0.0
    %1162 = vmatprep.subr.mxu0 0.0
    %1163 = vmatpush1.msra.mxu0 0.0
    %1164 = vmatprep.subr.mxu0 0.0
    %1165 = vmatpush1.msra.mxu0 0.0
    %1166 = vmatprep.subr.mxu0 0.0
    %1167 = vmatpush1.msra.mxu0 0.0
    %1168 = vmatprep.subr.mxu0 0.0
    %1169 = vmatpush1.msra.mxu0 0.0
    %1170 = vmatprep.subr.mxu0 0.0
    %1171 = vmatpush1.msra.mxu0 0.0
    %1172 = vmatprep.subr.mxu0 0.0
    %1173 = vmatpush1.msra.mxu0 0.0
    %1174 = vmatprep.subr.mxu0 0.0
    %1175 = vmatpush1.msra.mxu0 0.0
    %1176 = vmatprep.subr.mxu0 0.0
    %1177 = vmatpush1.msra.mxu0 0.0
    %1178 = vmatprep.subr.mxu0 0.0
    %1179 = vmatpush1.msra.mxu0 0.0
    %1180 = vmatprep.subr.mxu0 0.0
    %1181 = vmatpush1.msra.mxu0 0.0
    %1182 = vmatprep.subr.mxu0 0.0
    %1183 = vmatpush1.msra.mxu0 0.0
    %1184 = vmatprep.subr.mxu0 0.0
    %1185 = vmatpush1.msra.mxu0 0.0
    %1186 = vmatprep.subr.mxu0 0.0
    %1187 = vmatpush1.msra.mxu0 0.0
    %1188 = vmatprep.subr.mxu0 0.0
    %1189 = vmatpush1.msra.mxu0 0.0
    %1190 = vmatprep.subr.mxu0 0.0
    %1191 = vmatpush1.msra.mxu0 0.0
    %1192 = vmatprep.mubr.f32.mxu0 0.0
    %1193 = vmatmul.mubr.f32.gmra.mrb[0].mxu0 %v1126
    %v1194 = vpop.f32.mrb[0].mxu0
    %v1195 = vadd.f32 0.0, %v1194
    %v1196 = vpop.f32.mrb[0].mxu0
    %1197 = vdwg.mxu0
    %v1198 = vadd.f32 %v1044, %v1195
    %s1199 = scalar_lea.vmem [#allocation7], 48
    %v1200 = vld [vmem:[%s1199] sm:$0xff]
    %v1202 = vsel %vm278, %v1200, 0
    %1204 = vmatprep.subr.mxu0 0.0
    %1205 = vmatpush1.msra.mxu0 %v275
    %1206 = vmatprep.subr.mxu0 0.0
    %1207 = vmatpush1.msra.mxu0 %v276
    %1208 = vmatprep.subr.mxu0 0.0
    %1209 = vmatpush1.msra.mxu0 0.0
    %1210 = vmatprep.subr.mxu0 0.0
    %1211 = vmatpush1.msra.mxu0 0.0
    %1212 = vmatprep.subr.mxu0 0.0
    %1213 = vmatpush1.msra.mxu0 0.0
    %1214 = vmatprep.subr.mxu0 0.0
    %1215 = vmatpush1.msra.mxu0 0.0
    %1216 = vmatprep.subr.mxu0 0.0
    %1217 = vmatpush1.msra.mxu0 0.0
    %1218 = vmatprep.subr.mxu0 0.0
    %1219 = vmatpush1.msra.mxu0 0.0
    %1220 = vmatprep.subr.mxu0 0.0
    %1221 = vmatpush1.msra.mxu0 0.0
    %1222 = vmatprep.subr.mxu0 0.0
    %1223 = vmatpush1.msra.mxu0 0.0
    %1224 = vmatprep.subr.mxu0 0.0
    %1225 = vmatpush1.msra.mxu0 0.0
    %1226 = vmatprep.subr.mxu0 0.0
    %1227 = vmatpush1.msra.mxu0 0.0
    %1228 = vmatprep.subr.mxu0 0.0
    %1229 = vmatpush1.msra.mxu0 0.0
    %1230 = vmatprep.subr.mxu0 0.0
    %1231 = vmatpush1.msra.mxu0 0.0
    %1232 = vmatprep.subr.mxu0 0.0
    %1233 = vmatpush1.msra.mxu0 0.0
    %1234 = vmatprep.subr.mxu0 0.0
    %1235 = vmatpush1.msra.mxu0 0.0
    %1236 = vmatprep.subr.mxu0 0.0
    %1237 = vmatpush1.msra.mxu0 0.0
    %1238 = vmatprep.subr.mxu0 0.0
    %1239 = vmatpush1.msra.mxu0 0.0
    %1240 = vmatprep.subr.mxu0 0.0
    %1241 = vmatpush1.msra.mxu0 0.0
    %1242 = vmatprep.subr.mxu0 0.0
    %1243 = vmatpush1.msra.mxu0 0.0
    %1244 = vmatprep.subr.mxu0 0.0
    %1245 = vmatpush1.msra.mxu0 0.0
    %1246 = vmatprep.subr.mxu0 0.0
    %1247 = vmatpush1.msra.mxu0 0.0
    %1248 = vmatprep.subr.mxu0 0.0
    %1249 = vmatpush1.msra.mxu0 0.0
    %1250 = vmatprep.subr.mxu0 0.0
    %1251 = vmatpush1.msra.mxu0 0.0
    %1252 = vmatprep.subr.mxu0 0.0
    %1253 = vmatpush1.msra.mxu0 0.0
    %1254 = vmatprep.subr.mxu0 0.0
    %1255 = vmatpush1.msra.mxu0 0.0
    %1256 = vmatprep.subr.mxu0 0.0
    %1257 = vmatpush1.msra.mxu0 0.0
    %1258 = vmatprep.subr.mxu0 0.0
    %1259 = vmatpush1.msra.mxu0 0.0
    %1260 = vmatprep.subr.mxu0 0.0
    %1261 = vmatpush1.msra.mxu0 0.0
    %1262 = vmatprep.subr.mxu0 0.0
    %1263 = vmatpush1.msra.mxu0 0.0
    %1264 = vmatprep.subr.mxu0 0.0
    %1265 = vmatpush1.msra.mxu0 0.0
    %1266 = vmatprep.subr.mxu0 0.0
    %1267 = vmatpush1.msra.mxu0 0.0
    %1268 = vmatprep.mubr.f32.mxu0 0.0
    %1269 = vmatmul.mubr.f32.gmra.mrb[0].mxu0 %v1202
    %v1270 = vpop.f32.mrb[0].mxu0
    %v1271 = vadd.f32 0.0, %v1270
    %v1272 = vpop.f32.mrb[0].mxu0
    %1273 = vdwg.mxu0
    %s1274 = scalar_lea.vmem [#allocation8], 192
    %v1275 = vld [vmem:[%s1274] sm:$0xff]
    %v1276 = vld [vmem:[%s1274 + $0x8] sm:$0xff]
    %v1277 = vld [vmem:[%s1274 + $0x10] sm:$0xff]
    %v1278 = vld [vmem:[%s1274 + $0x18] sm:$0xff]
    %v1280 = vsel %vm436, %v1271, 0
    %1282 = vmatprep.subr.mxu0 0.0
    %1283 = vmatpush1.msra.mxu0 %v1275
    %1284 = vmatprep.subr.mxu0 0.0
    %1285 = vmatpush1.msra.mxu0 %v1276
    %1286 = vmatprep.subr.mxu0 0.0
    %1287 = vmatpush1.msra.mxu0 %v1277
    %1288 = vmatprep.subr.mxu0 0.0
    %1289 = vmatpush1.msra.mxu0 %v1278
    %1290 = vmatprep.subr.mxu0 0.0
    %1291 = vmatpush1.msra.mxu0 0.0
    %1292 = vmatprep.subr.mxu0 0.0
    %1293 = vmatpush1.msra.mxu0 0.0
    %1294 = vmatprep.subr.mxu0 0.0
    %1295 = vmatpush1.msra.mxu0 0.0
    %1296 = vmatprep.subr.mxu0 0.0
    %1297 = vmatpush1.msra.mxu0 0.0
    %1298 = vmatprep.subr.mxu0 0.0
    %1299 = vmatpush1.msra.mxu0 0.0
    %1300 = vmatprep.subr.mxu0 0.0
    %1301 = vmatpush1.msra.mxu0 0.0
    %1302 = vmatprep.subr.mxu0 0.0
    %1303 = vmatpush1.msra.mxu0 0.0
    %1304 = vmatprep.subr.mxu0 0.0
    %1305 = vmatpush1.msra.mxu0 0.0
    %1306 = vmatprep.subr.mxu0 0.0
    %1307 = vmatpush1.msra.mxu0 0.0
    %1308 = vmatprep.subr.mxu0 0.0
    %1309 = vmatpush1.msra.mxu0 0.0
    %1310 = vmatprep.subr.mxu0 0.0
    %1311 = vmatpush1.msra.mxu0 0.0
    %1312 = vmatprep.subr.mxu0 0.0
    %1313 = vmatpush1.msra.mxu0 0.0
    %1314 = vmatprep.subr.mxu0 0.0
    %1315 = vmatpush1.msra.mxu0 0.0
    %1316 = vmatprep.subr.mxu0 0.0
    %1317 = vmatpush1.msra.mxu0 0.0
    %1318 = vmatprep.subr.mxu0 0.0
    %1319 = vmatpush1.msra.mxu0 0.0
    %1320 = vmatprep.subr.mxu0 0.0
    %1321 = vmatpush1.msra.mxu0 0.0
    %1322 = vmatprep.subr.mxu0 0.0
    %1323 = vmatpush1.msra.mxu0 0.0
    %1324 = vmatprep.subr.mxu0 0.0
    %1325 = vmatpush1.msra.mxu0 0.0
    %1326 = vmatprep.subr.mxu0 0.0
    %1327 = vmatpush1.msra.mxu0 0.0
    %1328 = vmatprep.subr.mxu0 0.0
    %1329 = vmatpush1.msra.mxu0 0.0
    %1330 = vmatprep.subr.mxu0 0.0
    %1331 = vmatpush1.msra.mxu0 0.0
    %1332 = vmatprep.subr.mxu0 0.0
    %1333 = vmatpush1.msra.mxu0 0.0
    %1334 = vmatprep.subr.mxu0 0.0
    %1335 = vmatpush1.msra.mxu0 0.0
    %1336 = vmatprep.subr.mxu0 0.0
    %1337 = vmatpush1.msra.mxu0 0.0
    %1338 = vmatprep.subr.mxu0 0.0
    %1339 = vmatpush1.msra.mxu0 0.0
    %1340 = vmatprep.subr.mxu0 0.0
    %1341 = vmatpush1.msra.mxu0 0.0
    %1342 = vmatprep.subr.mxu0 0.0
    %1343 = vmatpush1.msra.mxu0 0.0
    %1344 = vmatprep.subr.mxu0 0.0
    %1345 = vmatpush1.msra.mxu0 0.0
    %1346 = vmatprep.mubr.f32.mxu0 0.0
    %1347 = vmatmul.mubr.f32.gmra.mrb[0].mxu0 %v1280
    %v1348 = vpop.f32.mrb[0].mxu0
    %v1349 = vadd.f32 0.0, %v1348
    %v1350 = vpop.f32.mrb[0].mxu0
    %1351 = vdwg.mxu0
    %v1352 = vadd.f32 %v1198, %v1349
    %s1353 = scalar_lea.vmem [#allocation7], 56
    %v1354 = vld [vmem:[%s1353] sm:$0xff]
    %v1356 = vsel %vm278, %v1354, 0
    %1358 = vmatprep.subr.mxu0 0.0
    %1359 = vmatpush1.msra.mxu0 %v275
    %1360 = vmatprep.subr.mxu0 0.0
    %1361 = vmatpush1.msra.mxu0 %v276
    %1362 = vmatprep.subr.mxu0 0.0
    %1363 = vmatpush1.msra.mxu0 0.0
    %1364 = vmatprep.subr.mxu0 0.0
    %1365 = vmatpush1.msra.mxu0 0.0
    %1366 = vmatprep.subr.mxu0 0.0
    %1367 = vmatpush1.msra.mxu0 0.0
    %1368 = vmatprep.subr.mxu0 0.0
    %1369 = vmatpush1.msra.mxu0 0.0
    %1370 = vmatprep.subr.mxu0 0.0
    %1371 = vmatpush1.msra.mxu0 0.0
    %1372 = vmatprep.subr.mxu0 0.0
    %1373 = vmatpush1.msra.mxu0 0.0
    %1374 = vmatprep.subr.mxu0 0.0
    %1375 = vmatpush1.msra.mxu0 0.0
    %1376 = vmatprep.subr.mxu0 0.0
    %1377 = vmatpush1.msra.mxu0 0.0
    %1378 = vmatprep.subr.mxu0 0.0
    %1379 = vmatpush1.msra.mxu0 0.0
    %1380 = vmatprep.subr.mxu0 0.0
    %1381 = vmatpush1.msra.mxu0 0.0
    %1382 = vmatprep.subr.mxu0 0.0
    %1383 = vmatpush1.msra.mxu0 0.0
    %1384 = vmatprep.subr.mxu0 0.0
    %1385 = vmatpush1.msra.mxu0 0.0
    %1386 = vmatprep.subr.mxu0 0.0
    %1387 = vmatpush1.msra.mxu0 0.0
    %1388 = vmatprep.subr.mxu0 0.0
    %1389 = vmatpush1.msra.mxu0 0.0
    %1390 = vmatprep.subr.mxu0 0.0
    %1391 = vmatpush1.msra.mxu0 0.0
    %1392 = vmatprep.subr.mxu0 0.0
    %1393 = vmatpush1.msra.mxu0 0.0
    %1394 = vmatprep.subr.mxu0 0.0
    %1395 = vmatpush1.msra.mxu0 0.0
    %1396 = vmatprep.subr.mxu0 0.0
    %1397 = vmatpush1.msra.mxu0 0.0
    %1398 = vmatprep.subr.mxu0 0.0
    %1399 = vmatpush1.msra.mxu0 0.0
    %1400 = vmatprep.subr.mxu0 0.0
    %1401 = vmatpush1.msra.mxu0 0.0
    %1402 = vmatprep.subr.mxu0 0.0
    %1403 = vmatpush1.msra.mxu0 0.0
    %1404 = vmatprep.subr.mxu0 0.0
    %1405 = vmatpush1.msra.mxu0 0.0
    %1406 = vmatprep.subr.mxu0 0.0
    %1407 = vmatpush1.msra.mxu0 0.0
    %1408 = vmatprep.subr.mxu0 0.0
    %1409 = vmatpush1.msra.mxu0 0.0
    %1410 = vmatprep.subr.mxu0 0.0
    %1411 = vmatpush1.msra.mxu0 0.0
    %1412 = vmatprep.subr.mxu0 0.0
    %1413 = vmatpush1.msra.mxu0 0.0
    %1414 = vmatprep.subr.mxu0 0.0
    %1415 = vmatpush1.msra.mxu0 0.0
    %1416 = vmatprep.subr.mxu0 0.0
    %1417 = vmatpush1.msra.mxu0 0.0
    %1418 = vmatprep.subr.mxu0 0.0
    %1419 = vmatpush1.msra.mxu0 0.0
    %1420 = vmatprep.subr.mxu0 0.0
    %1421 = vmatpush1.msra.mxu0 0.0
    %1422 = vmatprep.mubr.f32.mxu0 0.0
    %1423 = vmatmul.mubr.f32.gmra.mrb[0].mxu0 %v1356
    %v1424 = vpop.f32.mrb[0].mxu0
    %v1425 = vadd.f32 0.0, %v1424
    %v1426 = vpop.f32.mrb[0].mxu0
    %1427 = vdwg.mxu0
    %s1428 = scalar_lea.vmem [#allocation8], 224
    %v1429 = vld [vmem:[%s1428] sm:$0xff]
    %v1430 = vld [vmem:[%s1428 + $0x8] sm:$0xff]
    %v1431 = vld [vmem:[%s1428 + $0x10] sm:$0xff]
    %v1432 = vld [vmem:[%s1428 + $0x18] sm:$0xff]
    %v1434 = vsel %vm436, %v1425, 0
    %1436 = vmatprep.subr.mxu0 0.0
    %1437 = vmatpush1.msra.mxu0 %v1429
    %1438 = vmatprep.subr.mxu0 0.0
    %1439 = vmatpush1.msra.mxu0 %v1430
    %1440 = vmatprep.subr.mxu0 0.0
    %1441 = vmatpush1.msra.mxu0 %v1431
    %1442 = vmatprep.subr.mxu0 0.0
    %1443 = vmatpush1.msra.mxu0 %v1432
    %1444 = vmatprep.subr.mxu0 0.0
    %1445 = vmatpush1.msra.mxu0 0.0
    %1446 = vmatprep.subr.mxu0 0.0
    %1447 = vmatpush1.msra.mxu0 0.0
    %1448 = vmatprep.subr.mxu0 0.0
    %1449 = vmatpush1.msra.mxu0 0.0
    %1450 = vmatprep.subr.mxu0 0.0
    %1451 = vmatpush1.msra.mxu0 0.0
    %1452 = vmatprep.subr.mxu0 0.0
    %1453 = vmatpush1.msra.mxu0 0.0
    %1454 = vmatprep.subr.mxu0 0.0
    %1455 = vmatpush1.msra.mxu0 0.0
    %1456 = vmatprep.subr.mxu0 0.0
    %1457 = vmatpush1.msra.mxu0 0.0
    %1458 = vmatprep.subr.mxu0 0.0
    %1459 = vmatpush1.msra.mxu0 0.0
    %1460 = vmatprep.subr.mxu0 0.0
    %1461 = vmatpush1.msra.mxu0 0.0
    %1462 = vmatprep.subr.mxu0 0.0
    %1463 = vmatpush1.msra.mxu0 0.0
    %1464 = vmatprep.subr.mxu0 0.0
    %1465 = vmatpush1.msra.mxu0 0.0
    %1466 = vmatprep.subr.mxu0 0.0
    %1467 = vmatpush1.msra.mxu0 0.0
    %1468 = vmatprep.subr.mxu0 0.0
    %1469 = vmatpush1.msra.mxu0 0.0
    %1470 = vmatprep.subr.mxu0 0.0
    %1471 = vmatpush1.msra.mxu0 0.0
    %1472 = vmatprep.subr.mxu0 0.0
    %1473 = vmatpush1.msra.mxu0 0.0
    %1474 = vmatprep.subr.mxu0 0.0
    %1475 = vmatpush1.msra.mxu0 0.0
    %1476 = vmatprep.subr.mxu0 0.0
    %1477 = vmatpush1.msra.mxu0 0.0
    %1478 = vmatprep.subr.mxu0 0.0
    %1479 = vmatpush1.msra.mxu0 0.0
    %1480 = vmatprep.subr.mxu0 0.0
    %1481 = vmatpush1.msra.mxu0 0.0
    %1482 = vmatprep.subr.mxu0 0.0
    %1483 = vmatpush1.msra.mxu0 0.0
    %1484 = vmatprep.subr.mxu0 0.0
    %1485 = vmatpush1.msra.mxu0 0.0
    %1486 = vmatprep.subr.mxu0 0.0
    %1487 = vmatpush1.msra.mxu0 0.0
    %1488 = vmatprep.subr.mxu0 0.0
    %1489 = vmatpush1.msra.mxu0 0.0
    %1490 = vmatprep.subr.mxu0 0.0
    %1491 = vmatpush1.msra.mxu0 0.0
    %1492 = vmatprep.subr.mxu0 0.0
    %1493 = vmatpush1.msra.mxu0 0.0
    %1494 = vmatprep.subr.mxu0 0.0
    %1495 = vmatpush1.msra.mxu0 0.0
    %1496 = vmatprep.subr.mxu0 0.0
    %1497 = vmatpush1.msra.mxu0 0.0
    %1498 = vmatprep.subr.mxu0 0.0
    %1499 = vmatpush1.msra.mxu0 0.0
    %1500 = vmatprep.mubr.f32.mxu0 0.0
    %1501 = vmatmul.mubr.f32.gmra.mrb[0].mxu0 %v1434
    %v1502 = vpop.f32.mrb[0].mxu0
    %v1503 = vadd.f32 0.0, %v1502
    %v1504 = vpop.f32.mrb[0].mxu0
    %1505 = vdwg.mxu0
    %v1506 = vadd.f32 %v1352, %v1503
    %s1507 = scalar_lea.vmem [#allocation7], 64
    %v1508 = vld [vmem:[%s1507] sm:$0xff]
    %v1510 = vsel %vm278, %v1508, 0
    %1512 = vmatprep.subr.mxu0 0.0
    %1513 = vmatpush1.msra.mxu0 %v275
    %1514 = vmatprep.subr.mxu0 0.0
    %1515 = vmatpush1.msra.mxu0 %v276
    %1516 = vmatprep.subr.mxu0 0.0
    %1517 = vmatpush1.msra.mxu0 0.0
    %1518 = vmatprep.subr.mxu0 0.0
    %1519 = vmatpush1.msra.mxu0 0.0
    %1520 = vmatprep.subr.mxu0 0.0
    %1521 = vmatpush1.msra.mxu0 0.0
    %1522 = vmatprep.subr.mxu0 0.0
    %1523 = vmatpush1.msra.mxu0 0.0
    %1524 = vmatprep.subr.mxu0 0.0
    %1525 = vmatpush1.msra.mxu0 0.0
    %1526 = vmatprep.subr.mxu0 0.0
    %1527 = vmatpush1.msra.mxu0 0.0
    %1528 = vmatprep.subr.mxu0 0.0
    %1529 = vmatpush1.msra.mxu0 0.0
    %1530 = vmatprep.subr.mxu0 0.0
    %1531 = vmatpush1.msra.mxu0 0.0
    %1532 = vmatprep.subr.mxu0 0.0
    %1533 = vmatpush1.msra.mxu0 0.0
    %1534 = vmatprep.subr.mxu0 0.0
    %1535 = vmatpush1.msra.mxu0 0.0
    %1536 = vmatprep.subr.mxu0 0.0
    %1537 = vmatpush1.msra.mxu0 0.0
    %1538 = vmatprep.subr.mxu0 0.0
    %1539 = vmatpush1.msra.mxu0 0.0
    %1540 = vmatprep.subr.mxu0 0.0
    %1541 = vmatpush1.msra.mxu0 0.0
    %1542 = vmatprep.subr.mxu0 0.0
    %1543 = vmatpush1.msra.mxu0 0.0
    %1544 = vmatprep.subr.mxu0 0.0
    %1545 = vmatpush1.msra.mxu0 0.0
    %1546 = vmatprep.subr.mxu0 0.0
    %1547 = vmatpush1.msra.mxu0 0.0
    %1548 = vmatprep.subr.mxu0 0.0
    %1549 = vmatpush1.msra.mxu0 0.0
    %1550 = vmatprep.subr.mxu0 0.0
    %1551 = vmatpush1.msra.mxu0 0.0
    %1552 = vmatprep.subr.mxu0 0.0
    %1553 = vmatpush1.msra.mxu0 0.0
    %1554 = vmatprep.subr.mxu0 0.0
    %1555 = vmatpush1.msra.mxu0 0.0
    %1556 = vmatprep.subr.mxu0 0.0
    %1557 = vmatpush1.msra.mxu0 0.0
    %1558 = vmatprep.subr.mxu0 0.0
    %1559 = vmatpush1.msra.mxu0 0.0
    %1560 = vmatprep.subr.mxu0 0.0
    %1561 = vmatpush1.msra.mxu0 0.0
    %1562 = vmatprep.subr.mxu0 0.0
    %1563 = vmatpush1.msra.mxu0 0.0
    %1564 = vmatprep.subr.mxu0 0.0
    %1565 = vmatpush1.msra.mxu0 0.0
    %1566 = vmatprep.subr.mxu0 0.0
    %1567 = vmatpush1.msra.mxu0 0.0
    %1568 = vmatprep.subr.mxu0 0.0
    %1569 = vmatpush1.msra.mxu0 0.0
    %1570 = vmatprep.subr.mxu0 0.0
    %1571 = vmatpush1.msra.mxu0 0.0
    %1572 = vmatprep.subr.mxu0 0.0
    %1573 = vmatpush1.msra.mxu0 0.0
    %1574 = vmatprep.subr.mxu0 0.0
    %1575 = vmatpush1.msra.mxu0 0.0
    %1576 = vmatprep.mubr.f32.mxu0 0.0
    %1577 = vmatmul.mubr.f32.gmra.mrb[0].mxu0 %v1510
    %v1578 = vpop.f32.mrb[0].mxu0
    %v1579 = vadd.f32 0.0, %v1578
    %v1580 = vpop.f32.mrb[0].mxu0
    %1581 = vdwg.mxu0
    %s1582 = scalar_lea.vmem [#allocation8], 256
    %v1583 = vld [vmem:[%s1582] sm:$0xff]
    %v1584 = vld [vmem:[%s1582 + $0x8] sm:$0xff]
    %v1585 = vld [vmem:[%s1582 + $0x10] sm:$0xff]
    %v1586 = vld [vmem:[%s1582 + $0x18] sm:$0xff]
    %v1588 = vsel %vm436, %v1579, 0
    %1590 = vmatprep.subr.mxu0 0.0
    %1591 = vmatpush1.msra.mxu0 %v1583
    %1592 = vmatprep.subr.mxu0 0.0
    %1593 = vmatpush1.msra.mxu0 %v1584
    %1594 = vmatprep.subr.mxu0 0.0
    %1595 = vmatpush1.msra.mxu0 %v1585
    %1596 = vmatprep.subr.mxu0 0.0
    %1597 = vmatpush1.msra.mxu0 %v1586
    %1598 = vmatprep.subr.mxu0 0.0
    %1599 = vmatpush1.msra.mxu0 0.0
    %1600 = vmatprep.subr.mxu0 0.0
    %1601 = vmatpush1.msra.mxu0 0.0
    %1602 = vmatprep.subr.mxu0 0.0
    %1603 = vmatpush1.msra.mxu0 0.0
    %1604 = vmatprep.subr.mxu0 0.0
    %1605 = vmatpush1.msra.mxu0 0.0
    %1606 = vmatprep.subr.mxu0 0.0
    %1607 = vmatpush1.msra.mxu0 0.0
    %1608 = vmatprep.subr.mxu0 0.0
    %1609 = vmatpush1.msra.mxu0 0.0
    %1610 = vmatprep.subr.mxu0 0.0
    %1611 = vmatpush1.msra.mxu0 0.0
    %1612 = vmatprep.subr.mxu0 0.0
    %1613 = vmatpush1.msra.mxu0 0.0
    %1614 = vmatprep.subr.mxu0 0.0
    %1615 = vmatpush1.msra.mxu0 0.0
    %1616 = vmatprep.subr.mxu0 0.0
    %1617 = vmatpush1.msra.mxu0 0.0
    %1618 = vmatprep.subr.mxu0 0.0
    %1619 = vmatpush1.msra.mxu0 0.0
    %1620 = vmatprep.subr.mxu0 0.0
    %1621 = vmatpush1.msra.mxu0 0.0
    %1622 = vmatprep.subr.mxu0 0.0
    %1623 = vmatpush1.msra.mxu0 0.0
    %1624 = vmatprep.subr.mxu0 0.0
    %1625 = vmatpush1.msra.mxu0 0.0
    %1626 = vmatprep.subr.mxu0 0.0
    %1627 = vmatpush1.msra.mxu0 0.0
    %1628 = vmatprep.subr.mxu0 0.0
    %1629 = vmatpush1.msra.mxu0 0.0
    %1630 = vmatprep.subr.mxu0 0.0
    %1631 = vmatpush1.msra.mxu0 0.0
    %1632 = vmatprep.subr.mxu0 0.0
    %1633 = vmatpush1.msra.mxu0 0.0
    %1634 = vmatprep.subr.mxu0 0.0
    %1635 = vmatpush1.msra.mxu0 0.0
    %1636 = vmatprep.subr.mxu0 0.0
    %1637 = vmatpush1.msra.mxu0 0.0
    %1638 = vmatprep.subr.mxu0 0.0
    %1639 = vmatpush1.msra.mxu0 0.0
    %1640 = vmatprep.subr.mxu0 0.0
    %1641 = vmatpush1.msra.mxu0 0.0
    %1642 = vmatprep.subr.mxu0 0.0
    %1643 = vmatpush1.msra.mxu0 0.0
    %1644 = vmatprep.subr.mxu0 0.0
    %1645 = vmatpush1.msra.mxu0 0.0
    %1646 = vmatprep.subr.mxu0 0.0
    %1647 = vmatpush1.msra.mxu0 0.0
    %1648 = vmatprep.subr.mxu0 0.0
    %1649 = vmatpush1.msra.mxu0 0.0
    %1650 = vmatprep.subr.mxu0 0.0
    %1651 = vmatpush1.msra.mxu0 0.0
    %1652 = vmatprep.subr.mxu0 0.0
    %1653 = vmatpush1.msra.mxu0 0.0
    %1654 = vmatprep.mubr.f32.mxu0 0.0
    %1655 = vmatmul.mubr.f32.gmra.mrb[0].mxu0 %v1588
    %v1656 = vpop.f32.mrb[0].mxu0
    %v1657 = vadd.f32 0.0, %v1656
    %v1658 = vpop.f32.mrb[0].mxu0
    %1659 = vdwg.mxu0
    %v1660 = vadd.f32 %v1506, %v1657
    %v1661 = vld [vmem:[%s6] sm:$0xff]
    %1663 = vset.pattern.permute.xlu0 0
    %1664 = vperm.xlu0 %1663, %v1661
    %v1665 = vpop.permute.xlu0 %1664
    %v1667 = vmul.f32 %v1660, %v1665
    %v1668 = vld [vmem:[%s7] sm:$0xff]
    %1670 = vset.pattern.permute.xlu0 0
    %1671 = vperm.xlu0 %1670, %v1668
    %v1672 = vpop.permute.xlu0 %1671
    %v1674 = vadd.f32 %v1667, %v1672
    %v1675 = vsub.f32 0.0, %v1674
    %v1676 = vmul.f32 %v1675, 1.442695
    %v1677 = vpow.pop %v1676
    %v1678 = vadd.f32 %v1677, 1.0
    %v1679 = vrcp.pop %v1678
    %v1680 = vmul.f32 1.0, %v1679
    %v1681 = vmul.f32 %v1674, %v1680
    %v1682 = vld [vmem:[#allocation10] sm:$0xf]
    %vm1683 = vcmask 64512
    %v1685 = vsel %vm1683, %v1682, 0
    %1687 = vmatprep.subr.mxu0 0.0
    %1688 = vmatpush1.msra.mxu0 %v1681
    %1689 = vmatprep.subr.mxu0 0.0
    %1690 = vmatpush1.msra.mxu0 0.0
    %1691 = vmatprep.subr.mxu0 0.0
    %1692 = vmatpush1.msra.mxu0 0.0
    %1693 = vmatprep.subr.mxu0 0.0
    %1694 = vmatpush1.msra.mxu0 0.0
    %1695 = vmatprep.subr.mxu0 0.0
    %1696 = vmatpush1.msra.mxu0 0.0
    %1697 = vmatprep.subr.mxu0 0.0
    %1698 = vmatpush1.msra.mxu0 0.0
    %1699 = vmatprep.subr.mxu0 0.0
    %1700 = vmatpush1.msra.mxu0 0.0
    %1701 = vmatprep.subr.mxu0 0.0
    %1702 = vmatpush1.msra.mxu0 0.0
    %1703 = vmatprep.subr.mxu0 0.0
    %1704 = vmatpush1.msra.mxu0 0.0
    %1705 = vmatprep.subr.mxu0 0.0
    %1706 = vmatpush1.msra.mxu0 0.0
    %1707 = vmatprep.subr.mxu0 0.0
    %1708 = vmatpush1.msra.mxu0 0.0
    %1709 = vmatprep.subr.mxu0 0.0
    %1710 = vmatpush1.msra.mxu0 0.0
    %1711 = vmatprep.subr.mxu0 0.0
    %1712 = vmatpush1.msra.mxu0 0.0
    %1713 = vmatprep.subr.mxu0 0.0
    %1714 = vmatpush1.msra.mxu0 0.0
    %1715 = vmatprep.subr.mxu0 0.0
    %1716 = vmatpush1.msra.mxu0 0.0
    %1717 = vmatprep.subr.mxu0 0.0
    %1718 = vmatpush1.msra.mxu0 0.0
    %1719 = vmatprep.subr.mxu0 0.0
    %1720 = vmatpush1.msra.mxu0 0.0
    %1721 = vmatprep.subr.mxu0 0.0
    %1722 = vmatpush1.msra.mxu0 0.0
    %1723 = vmatprep.subr.mxu0 0.0
    %1724 = vmatpush1.msra.mxu0 0.0
    %1725 = vmatprep.subr.mxu0 0.0
    %1726 = vmatpush1.msra.mxu0 0.0
    %1727 = vmatprep.subr.mxu0 0.0
    %1728 = vmatpush1.msra.mxu0 0.0
    %1729 = vmatprep.subr.mxu0 0.0
    %1730 = vmatpush1.msra.mxu0 0.0
    %1731 = vmatprep.subr.mxu0 0.0
    %1732 = vmatpush1.msra.mxu0 0.0
    %1733 = vmatprep.subr.mxu0 0.0
    %1734 = vmatpush1.msra.mxu0 0.0
    %1735 = vmatprep.subr.mxu0 0.0
    %1736 = vmatpush1.msra.mxu0 0.0
    %1737 = vmatprep.subr.mxu0 0.0
    %1738 = vmatpush1.msra.mxu0 0.0
    %1739 = vmatprep.subr.mxu0 0.0
    %1740 = vmatpush1.msra.mxu0 0.0
    %1741 = vmatprep.subr.mxu0 0.0
    %1742 = vmatpush1.msra.mxu0 0.0
    %1743 = vmatprep.subr.mxu0 0.0
    %1744 = vmatpush1.msra.mxu0 0.0
    %1745 = vmatprep.subr.mxu0 0.0
    %1746 = vmatpush1.msra.mxu0 0.0
    %1747 = vmatprep.subr.mxu0 0.0
    %1748 = vmatpush1.msra.mxu0 0.0
    %1749 = vmatprep.subr.mxu0 0.0
    %1750 = vmatpush1.msra.mxu0 0.0
    %1751 = vmatprep.mubr.f32.mxu0 0.0
    %1752 = vmatmul.mubr.f32.gmra.mrb[0].mxu0 %v1685
    %v1753 = vpop.f32.mrb[0].mxu0
    %v1754 = vadd.f32 0.0, %v1753
    %v1755 = vpop.f32.mrb[0].mxu0
    %1756 = vdwg.mxu0
    %v1757 = vld [vmem:[#allocation11] sm:$0xff]
    %v1758 = vld [vmem:[#allocation11 + $0x8] sm:$0xff]
    %v1759 = vld [vmem:[#allocation11 + $0x10] sm:$0xff]
    %v1760 = vld [vmem:[#allocation11 + $0x18] sm:$0xff]
    %v1761 = vld [vmem:[#allocation11 + $0x20] sm:$0xff]
    %v1762 = vld [vmem:[#allocation11 + $0x28] sm:$0xff]
    %v1763 = vld [vmem:[#allocation11 + $0x30] sm:$0xff]
    %v1764 = vld [vmem:[#allocation11 + $0x38] sm:$0xff]
    %v1765 = vld [vmem:[#allocation11 + $0x40] sm:$0xff]
    %v1766 = vld [vmem:[#allocation11 + $0x48] sm:$0xff]
    %v1767 = vld [vmem:[#allocation11 + $0x50] sm:$0xff]
    %v1768 = vld [vmem:[#allocation11 + $0x58] sm:$0xff]
    %v1769 = vld [vmem:[#allocation11 + $0x60] sm:$0xff]
    %v1770 = vld [vmem:[#allocation11 + $0x68] sm:$0xff]
    %v1771 = vld [vmem:[#allocation11 + $0x70] sm:$0xff]
    %v1772 = vld [vmem:[#allocation11 + $0x78] sm:$0xff]
    %v1773 = vld [vmem:[#allocation11 + $0x80] sm:$0xff]
    %v1774 = vld [vmem:[#allocation11 + $0x88] sm:$0xff]
    %v1775 = vld [vmem:[#allocation11 + $0x90] sm:$0xff]
    %v1776 = vld [vmem:[#allocation11 + $0x98] sm:$0xff]
    %v1777 = vld [vmem:[#allocation11 + $0xa0] sm:$0xff]
    %v1778 = vld [vmem:[#allocation11 + $0xa8] sm:$0xff]
    %v1779 = vld [vmem:[#allocation11 + $0xb0] sm:$0xff]
    %v1780 = vld [vmem:[#allocation11 + $0xb8] sm:$0xff]
    %v1781 = vld [vmem:[#allocation11 + $0xc0] sm:$0xff]
    %v1782 = vld [vmem:[#allocation11 + $0xc8] sm:$0xff]
    %v1783 = vld [vmem:[#allocation11 + $0xd0] sm:$0xff]
    %v1784 = vld [vmem:[#allocation11 + $0xd8] sm:$0xff]
    %v1785 = vld [vmem:[#allocation11 + $0xe0] sm:$0xff]
    %v1786 = vld [vmem:[#allocation11 + $0xe8] sm:$0xff]
    %v1787 = vld [vmem:[#allocation11 + $0xf0] sm:$0xff]
    %v1788 = vld [vmem:[#allocation11 + $0xf8] sm:$0xff]
    %v1789 = vld [vmem:[#allocation11 + $0x100] sm:$0xff]
    %v1790 = vld [vmem:[#allocation11 + $0x108] sm:$0xff]
    %v1791 = vld [vmem:[#allocation11 + $0x110] sm:$0xff]
    %v1792 = vld [vmem:[#allocation11 + $0x118] sm:$0xff]
    %v1793 = vld [vmem:[#allocation11 + $0x120] sm:$0xff]
    %v1794 = vld [vmem:[#allocation11 + $0x128] sm:$0xff]
    %v1795 = vld [vmem:[#allocation11 + $0x130] sm:$0xff]
    %v1796 = vld [vmem:[#allocation11 + $0x138] sm:$0xff]
    %v1797 = vld [vmem:[#allocation11 + $0x140] sm:$0xff]
    %v1798 = vld [vmem:[#allocation11 + $0x148] sm:$0xff]
    %v1799 = vld [vmem:[#allocation11 + $0x150] sm:$0xff]
    %v1800 = vld [vmem:[#allocation11 + $0x158] sm:$0xff]
    %v1801 = vld [vmem:[#allocation11 + $0x160] sm:$0xff]
    %v1802 = vld [vmem:[#allocation11 + $0x168] sm:$0xff]
    %v1803 = vld [vmem:[#allocation11 + $0x170] sm:$0xff]
    %v1804 = vld [vmem:[#allocation11 + $0x178] sm:$0xff]
    %v1805 = vld [vmem:[#allocation11 + $0x180] sm:$0xff]
    %v1806 = vld [vmem:[#allocation11 + $0x188] sm:$0xff]
    %v1807 = vld [vmem:[#allocation11 + $0x190] sm:$0xff]
    %v1808 = vld [vmem:[#allocation11 + $0x198] sm:$0xff]
    %v1809 = vld [vmem:[#allocation11 + $0x1a0] sm:$0xff]
    %v1810 = vld [vmem:[#allocation11 + $0x1a8] sm:$0xff]
    %v1811 = vld [vmem:[#allocation11 + $0x1b0] sm:$0xff]
    %v1812 = vld [vmem:[#allocation11 + $0x1b8] sm:$0xff]
    %v1813 = vld [vmem:[#allocation11 + $0x1c0] sm:$0xff]
    %v1814 = vld [vmem:[#allocation11 + $0x1c8] sm:$0xff]
    %v1815 = vld [vmem:[#allocation11 + $0x1d0] sm:$0xff]
    %v1816 = vld [vmem:[#allocation11 + $0x1d8] sm:$0xff]
    %v1817 = vld [vmem:[#allocation11 + $0x1e0] sm:$0xff]
    %v1818 = vld [vmem:[#allocation11 + $0x1e8] sm:$0xff]
    %v1819 = vld [vmem:[#allocation11 + $0x1f0] sm:$0xff]
    %v1820 = vld [vmem:[#allocation11 + $0x1f8] sm:$0xff]
    %s1821 = scalar_lea.vmem [#allocation10], 4
    %v1822 = vld [vmem:[%s1821] sm:$0xf]
    %v1824 = vsel %vm1683, %v1822, 0
    %1826 = vmatprep.subr.mxu0 0.0
    %1827 = vmatpush1.msra.mxu0 %v1681
    %1828 = vmatprep.subr.mxu0 0.0
    %1829 = vmatpush1.msra.mxu0 0.0
    %1830 = vmatprep.subr.mxu0 0.0
    %1831 = vmatpush1.msra.mxu0 0.0
    %1832 = vmatprep.subr.mxu0 0.0
    %1833 = vmatpush1.msra.mxu0 0.0
    %1834 = vmatprep.subr.mxu0 0.0
    %1835 = vmatpush1.msra.mxu0 0.0
    %1836 = vmatprep.subr.mxu0 0.0
    %1837 = vmatpush1.msra.mxu0 0.0
    %1838 = vmatprep.subr.mxu0 0.0
    %1839 = vmatpush1.msra.mxu0 0.0
    %1840 = vmatprep.subr.mxu0 0.0
    %1841 = vmatpush1.msra.mxu0 0.0
    %1842 = vmatprep.subr.mxu0 0.0
    %1843 = vmatpush1.msra.mxu0 0.0
    %1844 = vmatprep.subr.mxu0 0.0
    %1845 = vmatpush1.msra.mxu0 0.0
    %1846 = vmatprep.subr.mxu0 0.0
    %1847 = vmatpush1.msra.mxu0 0.0
    %1848 = vmatprep.subr.mxu0 0.0
    %1849 = vmatpush1.msra.mxu0 0.0
    %1850 = vmatprep.subr.mxu0 0.0
    %1851 = vmatpush1.msra.mxu0 0.0
    %1852 = vmatprep.subr.mxu0 0.0
    %1853 = vmatpush1.msra.mxu0 0.0
    %1854 = vmatprep.subr.mxu0 0.0
    %1855 = vmatpush1.msra.mxu0 0.0
    %1856 = vmatprep.subr.mxu0 0.0
    %1857 = vmatpush1.msra.mxu0 0.0
    %1858 = vmatprep.subr.mxu0 0.0
    %1859 = vmatpush1.msra.mxu0 0.0
    %1860 = vmatprep.subr.mxu0 0.0
    %1861 = vmatpush1.msra.mxu0 0.0
    %1862 = vmatprep.subr.mxu0 0.0
    %1863 = vmatpush1.msra.mxu0 0.0
    %1864 = vmatprep.subr.mxu0 0.0
    %1865 = vmatpush1.msra.mxu0 0.0
    %1866 = vmatprep.subr.mxu0 0.0
    %1867 = vmatpush1.msra.mxu0 0.0
    %1868 = vmatprep.subr.mxu0 0.0
    %1869 = vmatpush1.msra.mxu0 0.0
    %1870 = vmatprep.subr.mxu0 0.0
    %1871 = vmatpush1.msra.mxu0 0.0
    %1872 = vmatprep.subr.mxu0 0.0
    %1873 = vmatpush1.msra.mxu0 0.0
    %1874 = vmatprep.subr.mxu0 0.0
    %1875 = vmatpush1.msra.mxu0 0.0
    %1876 = vmatprep.subr.mxu0 0.0
    %1877 = vmatpush1.msra.mxu0 0.0
    %1878 = vmatprep.subr.mxu0 0.0
    %1879 = vmatpush1.msra.mxu0 0.0
    %1880 = vmatprep.subr.mxu0 0.0
    %1881 = vmatpush1.msra.mxu0 0.0
    %1882 = vmatprep.subr.mxu0 0.0
    %1883 = vmatpush1.msra.mxu0 0.0
    %1884 = vmatprep.subr.mxu0 0.0
    %1885 = vmatpush1.msra.mxu0 0.0
    %1886 = vmatprep.subr.mxu0 0.0
    %1887 = vmatpush1.msra.mxu0 0.0
    %1888 = vmatprep.subr.mxu0 0.0
    %1889 = vmatpush1.msra.mxu0 0.0
    %1890 = vmatprep.mubr.f32.mxu0 0.0
    %1891 = vmatmul.mubr.f32.gmra.mrb[0].mxu0 %v1824
    %v1892 = vpop.f32.mrb[0].mxu0
    %v1893 = vadd.f32 0.0, %v1892
    %v1894 = vpop.f32.mrb[0].mxu0
    %1895 = vdwg.mxu0
    %s1896 = scalar_lea.vmem [#allocation11], 512
    %v1897 = vld [vmem:[%s1896] sm:$0xff]
    %v1898 = vld [vmem:[%s1896 + $0x8] sm:$0xff]
    %v1899 = vld [vmem:[%s1896 + $0x10] sm:$0xff]
    %v1900 = vld [vmem:[%s1896 + $0x18] sm:$0xff]
    %v1901 = vld [vmem:[%s1896 + $0x20] sm:$0xff]
    %v1902 = vld [vmem:[%s1896 + $0x28] sm:$0xff]
    %v1903 = vld [vmem:[%s1896 + $0x30] sm:$0xff]
    %v1904 = vld [vmem:[%s1896 + $0x38] sm:$0xff]
    %v1905 = vld [vmem:[%s1896 + $0x40] sm:$0xff]
    %v1906 = vld [vmem:[%s1896 + $0x48] sm:$0xff]
    %v1907 = vld [vmem:[%s1896 + $0x50] sm:$0xff]
    %v1908 = vld [vmem:[%s1896 + $0x58] sm:$0xff]
    %v1909 = vld [vmem:[%s1896 + $0x60] sm:$0xff]
    %v1910 = vld [vmem:[%s1896 + $0x68] sm:$0xff]
    %v1911 = vld [vmem:[%s1896 + $0x70] sm:$0xff]
    %v1912 = vld [vmem:[%s1896 + $0x78] sm:$0xff]
    %v1913 = vld [vmem:[%s1896 + $0x80] sm:$0xff]
    %v1914 = vld [vmem:[%s1896 + $0x88] sm:$0xff]
    %v1915 = vld [vmem:[%s1896 + $0x90] sm:$0xff]
    %v1916 = vld [vmem:[%s1896 + $0x98] sm:$0xff]
    %v1917 = vld [vmem:[%s1896 + $0xa0] sm:$0xff]
    %v1918 = vld [vmem:[%s1896 + $0xa8] sm:$0xff]
    %v1919 = vld [vmem:[%s1896 + $0xb0] sm:$0xff]
    %v1920 = vld [vmem:[%s1896 + $0xb8] sm:$0xff]
    %v1921 = vld [vmem:[%s1896 + $0xc0] sm:$0xff]
    %v1922 = vld [vmem:[%s1896 + $0xc8] sm:$0xff]
    %v1923 = vld [vmem:[%s1896 + $0xd0] sm:$0xff]
    %v1924 = vld [vmem:[%s1896 + $0xd8] sm:$0xff]
    %v1925 = vld [vmem:[%s1896 + $0xe0] sm:$0xff]
    %v1926 = vld [vmem:[%s1896 + $0xe8] sm:$0xff]
    %v1927 = vld [vmem:[%s1896 + $0xf0] sm:$0xff]
    %v1928 = vld [vmem:[%s1896 + $0xf8] sm:$0xff]
    %v1929 = vld [vmem:[%s1896 + $0x100] sm:$0xff]
    %v1930 = vld [vmem:[%s1896 + $0x108] sm:$0xff]
    %v1931 = vld [vmem:[%s1896 + $0x110] sm:$0xff]
    %v1932 = vld [vmem:[%s1896 + $0x118] sm:$0xff]
    %v1933 = vld [vmem:[%s1896 + $0x120] sm:$0xff]
    %v1934 = vld [vmem:[%s1896 + $0x128] sm:$0xff]
    %v1935 = vld [vmem:[%s1896 + $0x130] sm:$0xff]
    %v1936 = vld [vmem:[%s1896 + $0x138] sm:$0xff]
    %v1937 = vld [vmem:[%s1896 + $0x140] sm:$0xff]
    %v1938 = vld [vmem:[%s1896 + $0x148] sm:$0xff]
    %v1939 = vld [vmem:[%s1896 + $0x150] sm:$0xff]
    %v1940 = vld [vmem:[%s1896 + $0x158] sm:$0xff]
    %v1941 = vld [vmem:[%s1896 + $0x160] sm:$0xff]
    %v1942 = vld [vmem:[%s1896 + $0x168] sm:$0xff]
    %v1943 = vld [vmem:[%s1896 + $0x170] sm:$0xff]
    %v1944 = vld [vmem:[%s1896 + $0x178] sm:$0xff]
    %v1945 = vld [vmem:[%s1896 + $0x180] sm:$0xff]
    %v1946 = vld [vmem:[%s1896 + $0x188] sm:$0xff]
    %v1947 = vld [vmem:[%s1896 + $0x190] sm:$0xff]
    %v1948 = vld [vmem:[%s1896 + $0x198] sm:$0xff]
    %v1949 = vld [vmem:[%s1896 + $0x1a0] sm:$0xff]
    %v1950 = vld [vmem:[%s1896 + $0x1a8] sm:$0xff]
    %v1951 = vld [vmem:[%s1896 + $0x1b0] sm:$0xff]
    %v1952 = vld [vmem:[%s1896 + $0x1b8] sm:$0xff]
    %v1953 = vld [vmem:[%s1896 + $0x1c0] sm:$0xff]
    %v1954 = vld [vmem:[%s1896 + $0x1c8] sm:$0xff]
    %v1955 = vld [vmem:[%s1896 + $0x1d0] sm:$0xff]
    %v1956 = vld [vmem:[%s1896 + $0x1d8] sm:$0xff]
    %v1957 = vld [vmem:[%s1896 + $0x1e0] sm:$0xff]
    %v1958 = vld [vmem:[%s1896 + $0x1e8] sm:$0xff]
    %v1959 = vld [vmem:[%s1896 + $0x1f0] sm:$0xff]
    %v1960 = vld [vmem:[%s1896 + $0x1f8] sm:$0xff]
    %1961 = vmatprep.subr.mxu0 %v1898
    %1962 = vmatpush1.msra.mxu0 %v1897
    %1963 = vmatprep.subr.mxu0 %v1902
    %1964 = vmatpush1.msra.mxu0 %v1901
    %1965 = vmatprep.subr.mxu0 %v1906
    %1966 = vmatpush1.msra.mxu0 %v1905
    %1967 = vmatprep.subr.mxu0 %v1910
    %1968 = vmatpush1.msra.mxu0 %v1909
    %1969 = vmatprep.subr.mxu0 %v1914
    %1970 = vmatpush1.msra.mxu0 %v1913
    %1971 = vmatprep.subr.mxu0 %v1918
    %1972 = vmatpush1.msra.mxu0 %v1917
    %1973 = vmatprep.subr.mxu0 %v1922
    %1974 = vmatpush1.msra.mxu0 %v1921
    %1975 = vmatprep.subr.mxu0 %v1926
    %1976 = vmatpush1.msra.mxu0 %v1925
    %1977 = vmatprep.subr.mxu0 %v1930
    %1978 = vmatpush1.msra.mxu0 %v1929
    %1979 = vmatprep.subr.mxu0 %v1934
    %1980 = vmatpush1.msra.mxu0 %v1933
    %1981 = vmatprep.subr.mxu0 %v1938
    %1982 = vmatpush1.msra.mxu0 %v1937
    %1983 = vmatprep.subr.mxu0 %v1942
    %1984 = vmatpush1.msra.mxu0 %v1941
    %1985 = vmatprep.subr.mxu0 %v1946
    %1986 = vmatpush1.msra.mxu0 %v1945
    %1987 = vmatprep.subr.mxu0 %v1950
    %1988 = vmatpush1.msra.mxu0 %v1949
    %1989 = vmatprep.subr.mxu0 %v1954
    %1990 = vmatpush1.msra.mxu0 %v1953
    %1991 = vmatprep.subr.mxu0 %v1958
    %1992 = vmatpush1.msra.mxu0 %v1957
    %1993 = vmatprep.subr.mxu0 0.0
    %1994 = vmatpush1.msra.mxu0 0.0
    %1995 = vmatprep.subr.mxu0 0.0
    %1996 = vmatpush1.msra.mxu0 0.0
    %1997 = vmatprep.subr.mxu0 0.0
    %1998 = vmatpush1.msra.mxu0 0.0
    %1999 = vmatprep.subr.mxu0 0.0
    %2000 = vmatpush1.msra.mxu0 0.0
    %2001 = vmatprep.subr.mxu0 0.0
    %2002 = vmatpush1.msra.mxu0 0.0
    %2003 = vmatprep.subr.mxu0 0.0
    %2004 = vmatpush1.msra.mxu0 0.0
    %2005 = vmatprep.subr.mxu0 0.0
    %2006 = vmatpush1.msra.mxu0 0.0
    %2007 = vmatprep.subr.mxu0 0.0
    %2008 = vmatpush1.msra.mxu0 0.0
    %2009 = vmatprep.subr.mxu0 0.0
    %2010 = vmatpush1.msra.mxu0 0.0
    %2011 = vmatprep.subr.mxu0 0.0
    %2012 = vmatpush1.msra.mxu0 0.0
    %2013 = vmatprep.subr.mxu0 0.0
    %2014 = vmatpush1.msra.mxu0 0.0
    %2015 = vmatprep.subr.mxu0 0.0
    %2016 = vmatpush1.msra.mxu0 0.0
    %2017 = vmatprep.subr.mxu0 0.0
    %2018 = vmatpush1.msra.mxu0 0.0
    %2019 = vmatprep.subr.mxu0 0.0
    %2020 = vmatpush1.msra.mxu0 0.0
    %2021 = vmatprep.subr.mxu0 0.0
    %2022 = vmatpush1.msra.mxu0 0.0
    %2023 = vmatprep.subr.mxu0 0.0
    %2024 = vmatpush1.msra.mxu0 0.0
    %2025 = vmatprep.mubr.f32.mxu0 0.0
    %2026 = vmatmul.mubr.f32.gmra.mrb[0].mxu0 %v1893
    %v2027 = vpop.f32.mrb[0].mxu0
    %v2028 = vadd.f32 0.0, %v2027
    %v2029 = vpop.f32.mrb[0].mxu0
    %v2030 = vadd.f32 0.0, %v2029
    %2031 = vdwg.mxu0
    %2032 = vmatprep.subr.mxu0 %v1900
    %2033 = vmatpush1.msra.mxu0 %v1899
    %2034 = vmatprep.subr.mxu0 %v1904
    %2035 = vmatpush1.msra.mxu0 %v1903
    %2036 = vmatprep.subr.mxu0 %v1908
    %2037 = vmatpush1.msra.mxu0 %v1907
    %2038 = vmatprep.subr.mxu0 %v1912
    %2039 = vmatpush1.msra.mxu0 %v1911
    %2040 = vmatprep.subr.mxu0 %v1916
    %2041 = vmatpush1.msra.mxu0 %v1915
    %2042 = vmatprep.subr.mxu0 %v1920
    %2043 = vmatpush1.msra.mxu0 %v1919
    %2044 = vmatprep.subr.mxu0 %v1924
    %2045 = vmatpush1.msra.mxu0 %v1923
    %2046 = vmatprep.subr.mxu0 %v1928
    %2047 = vmatpush1.msra.mxu0 %v1927
    %2048 = vmatprep.subr.mxu0 %v1932
    %2049 = vmatpush1.msra.mxu0 %v1931
    %2050 = vmatprep.subr.mxu0 %v1936
    %2051 = vmatpush1.msra.mxu0 %v1935
    %2052 = vmatprep.subr.mxu0 %v1940
    %2053 = vmatpush1.msra.mxu0 %v1939
    %2054 = vmatprep.subr.mxu0 %v1944
    %2055 = vmatpush1.msra.mxu0 %v1943
    %2056 = vmatprep.subr.mxu0 %v1948
    %2057 = vmatpush1.msra.mxu0 %v1947
    %2058 = vmatprep.subr.mxu0 %v1952
    %2059 = vmatpush1.msra.mxu0 %v1951
    %2060 = vmatprep.subr.mxu0 %v1956
    %2061 = vmatpush1.msra.mxu0 %v1955
    %2062 = vmatprep.subr.mxu0 %v1960
    %2063 = vmatpush1.msra.mxu0 %v1959
    %2064 = vmatprep.subr.mxu0 0.0
    %2065 = vmatpush1.msra.mxu0 0.0
    %2066 = vmatprep.subr.mxu0 0.0
    %2067 = vmatpush1.msra.mxu0 0.0
    %2068 = vmatprep.subr.mxu0 0.0
    %2069 = vmatpush1.msra.mxu0 0.0
    %2070 = vmatprep.subr.mxu0 0.0
    %2071 = vmatpush1.msra.mxu0 0.0
    %2072 = vmatprep.subr.mxu0 0.0
    %2073 = vmatpush1.msra.mxu0 0.0
    %2074 = vmatprep.subr.mxu0 0.0
    %2075 = vmatpush1.msra.mxu0 0.0
    %2076 = vmatprep.subr.mxu0 0.0
    %2077 = vmatpush1.msra.mxu0 0.0
    %2078 = vmatprep.subr.mxu0 0.0
    %2079 = vmatpush1.msra.mxu0 0.0
    %2080 = vmatprep.subr.mxu0 0.0
    %2081 = vmatpush1.msra.mxu0 0.0
    %2082 = vmatprep.subr.mxu0 0.0
    %2083 = vmatpush1.msra.mxu0 0.0
    %2084 = vmatprep.subr.mxu0 0.0
    %2085 = vmatpush1.msra.mxu0 0.0
    %2086 = vmatprep.subr.mxu0 0.0
    %2087 = vmatpush1.msra.mxu0 0.0
    %2088 = vmatprep.subr.mxu0 0.0
    %2089 = vmatpush1.msra.mxu0 0.0
    %2090 = vmatprep.subr.mxu0 0.0
    %2091 = vmatpush1.msra.mxu0 0.0
    %2092 = vmatprep.subr.mxu0 0.0
    %2093 = vmatpush1.msra.mxu0 0.0
    %2094 = vmatprep.subr.mxu0 0.0
    %2095 = vmatpush1.msra.mxu0 0.0
    %2096 = vmatprep.mubr.f32.mxu0 0.0
    %2097 = vmatmul.mubr.f32.gmra.mrb[0].mxu0 %v1893
    %v2098 = vpop.f32.mrb[0].mxu0
    %v2099 = vadd.f32 0.0, %v2098
    %v2100 = vpop.f32.mrb[0].mxu0
    %v2101 = vadd.f32 0.0, %v2100
    %2102 = vdwg.mxu0
    %2103 = vmatprep.subr.mxu0 %v1758
    %2104 = vmatpush1.msra.mxu0 %v1757
    %2105 = vmatprep.subr.mxu0 %v1762
    %2106 = vmatpush1.msra.mxu0 %v1761
    %2107 = vmatprep.subr.mxu0 %v1766
    %2108 = vmatpush1.msra.mxu0 %v1765
    %2109 = vmatprep.subr.mxu0 %v1770
    %2110 = vmatpush1.msra.mxu0 %v1769
    %2111 = vmatprep.subr.mxu0 %v1774
    %2112 = vmatpush1.msra.mxu0 %v1773
    %2113 = vmatprep.subr.mxu0 %v1778
    %2114 = vmatpush1.msra.mxu0 %v1777
    %2115 = vmatprep.subr.mxu0 %v1782
    %2116 = vmatpush1.msra.mxu0 %v1781
    %2117 = vmatprep.subr.mxu0 %v1786
    %2118 = vmatpush1.msra.mxu0 %v1785
    %2119 = vmatprep.subr.mxu0 %v1790
    %2120 = vmatpush1.msra.mxu0 %v1789
    %2121 = vmatprep.subr.mxu0 %v1794
    %2122 = vmatpush1.msra.mxu0 %v1793
    %2123 = vmatprep.subr.mxu0 %v1798
    %2124 = vmatpush1.msra.mxu0 %v1797
    %2125 = vmatprep.subr.mxu0 %v1802
    %2126 = vmatpush1.msra.mxu0 %v1801
    %2127 = vmatprep.subr.mxu0 %v1806
    %2128 = vmatpush1.msra.mxu0 %v1805
    %2129 = vmatprep.subr.mxu0 %v1810
    %2130 = vmatpush1.msra.mxu0 %v1809
    %2131 = vmatprep.subr.mxu0 %v1814
    %2132 = vmatpush1.msra.mxu0 %v1813
    %2133 = vmatprep.subr.mxu0 %v1818
    %2134 = vmatpush1.msra.mxu0 %v1817
    %2135 = vmatprep.subr.mxu0 0.0
    %2136 = vmatpush1.msra.mxu0 0.0
    %2137 = vmatprep.subr.mxu0 0.0
    %2138 = vmatpush1.msra.mxu0 0.0
    %2139 = vmatprep.subr.mxu0 0.0
    %2140 = vmatpush1.msra.mxu0 0.0
    %2141 = vmatprep.subr.mxu0 0.0
    %2142 = vmatpush1.msra.mxu0 0.0
    %2143 = vmatprep.subr.mxu0 0.0
    %2144 = vmatpush1.msra.mxu0 0.0
    %2145 = vmatprep.subr.mxu0 0.0
    %2146 = vmatpush1.msra.mxu0 0.0
    %2147 = vmatprep.subr.mxu0 0.0
    %2148 = vmatpush1.msra.mxu0 0.0
    %2149 = vmatprep.subr.mxu0 0.0
    %2150 = vmatpush1.msra.mxu0 0.0
    %2151 = vmatprep.subr.mxu0 0.0
    %2152 = vmatpush1.msra.mxu0 0.0
    %2153 = vmatprep.subr.mxu0 0.0
    %2154 = vmatpush1.msra.mxu0 0.0
    %2155 = vmatprep.subr.mxu0 0.0
    %2156 = vmatpush1.msra.mxu0 0.0
    %2157 = vmatprep.subr.mxu0 0.0
    %2158 = vmatpush1.msra.mxu0 0.0
    %2159 = vmatprep.subr.mxu0 0.0
    %2160 = vmatpush1.msra.mxu0 0.0
    %2161 = vmatprep.subr.mxu0 0.0
    %2162 = vmatpush1.msra.mxu0 0.0
    %2163 = vmatprep.subr.mxu0 0.0
    %2164 = vmatpush1.msra.mxu0 0.0
    %2165 = vmatprep.subr.mxu0 0.0
    %2166 = vmatpush1.msra.mxu0 0.0
    %2167 = vmatprep.mubr.f32.mxu0 0.0
    %2168 = vmatmul.mubr.f32.gmra.mrb[0].mxu0 %v1754
    %v2169 = vpop.f32.mrb[0].mxu0
    %v2170 = vadd.f32 %v2028, %v2169
    %v2171 = vpop.f32.mrb[0].mxu0
    %v2172 = vadd.f32 %v2030, %v2171
    %2173 = vdwg.mxu0
    %2174 = vmatprep.subr.mxu0 %v1760
    %2175 = vmatpush1.msra.mxu0 %v1759
    %2176 = vmatprep.subr.mxu0 %v1764
    %2177 = vmatpush1.msra.mxu0 %v1763
    %2178 = vmatprep.subr.mxu0 %v1768
    %2179 = vmatpush1.msra.mxu0 %v1767
    %2180 = vmatprep.subr.mxu0 %v1772
    %2181 = vmatpush1.msra.mxu0 %v1771
    %2182 = vmatprep.subr.mxu0 %v1776
    %2183 = vmatpush1.msra.mxu0 %v1775
    %2184 = vmatprep.subr.mxu0 %v1780
    %2185 = vmatpush1.msra.mxu0 %v1779
    %2186 = vmatprep.subr.mxu0 %v1784
    %2187 = vmatpush1.msra.mxu0 %v1783
    %2188 = vmatprep.subr.mxu0 %v1788
    %2189 = vmatpush1.msra.mxu0 %v1787
    %2190 = vmatprep.subr.mxu0 %v1792
    %2191 = vmatpush1.msra.mxu0 %v1791
    %2192 = vmatprep.subr.mxu0 %v1796
    %2193 = vmatpush1.msra.mxu0 %v1795
    %2194 = vmatprep.subr.mxu0 %v1800
    %2195 = vmatpush1.msra.mxu0 %v1799
    %2196 = vmatprep.subr.mxu0 %v1804
    %2197 = vmatpush1.msra.mxu0 %v1803
    %2198 = vmatprep.subr.mxu0 %v1808
    %2199 = vmatpush1.msra.mxu0 %v1807
    %2200 = vmatprep.subr.mxu0 %v1812
    %2201 = vmatpush1.msra.mxu0 %v1811
    %2202 = vmatprep.subr.mxu0 %v1816
    %2203 = vmatpush1.msra.mxu0 %v1815
    %2204 = vmatprep.subr.mxu0 %v1820
    %2205 = vmatpush1.msra.mxu0 %v1819
    %2206 = vmatprep.subr.mxu0 0.0
    %2207 = vmatpush1.msra.mxu0 0.0
    %2208 = vmatprep.subr.mxu0 0.0
    %2209 = vmatpush1.msra.mxu0 0.0
    %2210 = vmatprep.subr.mxu0 0.0
    %2211 = vmatpush1.msra.mxu0 0.0
    %2212 = vmatprep.subr.mxu0 0.0
    %2213 = vmatpush1.msra.mxu0 0.0
    %2214 = vmatprep.subr.mxu0 0.0
    %2215 = vmatpush1.msra.mxu0 0.0
    %2216 = vmatprep.subr.mxu0 0.0
    %2217 = vmatpush1.msra.mxu0 0.0
    %2218 = vmatprep.subr.mxu0 0.0
    %2219 = vmatpush1.msra.mxu0 0.0
    %2220 = vmatprep.subr.mxu0 0.0
    %2221 = vmatpush1.msra.mxu0 0.0
    %2222 = vmatprep.subr.mxu0 0.0
    %2223 = vmatpush1.msra.mxu0 0.0
    %2224 = vmatprep.subr.mxu0 0.0
    %2225 = vmatpush1.msra.mxu0 0.0
    %2226 = vmatprep.subr.mxu0 0.0
    %2227 = vmatpush1.msra.mxu0 0.0
    %2228 = vmatprep.subr.mxu0 0.0
    %2229 = vmatpush1.msra.mxu0 0.0
    %2230 = vmatprep.subr.mxu0 0.0
    %2231 = vmatpush1.msra.mxu0 0.0
    %2232 = vmatprep.subr.mxu0 0.0
    %2233 = vmatpush1.msra.mxu0 0.0
    %2234 = vmatprep.subr.mxu0 0.0
    %2235 = vmatpush1.msra.mxu0 0.0
    %2236 = vmatprep.subr.mxu0 0.0
    %2237 = vmatpush1.msra.mxu0 0.0
    %2238 = vmatprep.mubr.f32.mxu0 0.0
    %2239 = vmatmul.mubr.f32.gmra.mrb[0].mxu0 %v1754
    %v2240 = vpop.f32.mrb[0].mxu0
    %v2241 = vadd.f32 %v2099, %v2240
    %v2242 = vpop.f32.mrb[0].mxu0
    %v2243 = vadd.f32 %v2101, %v2242
    %2244 = vdwg.mxu0
    %s2245 = scalar_lea.vmem [#allocation10], 8
    %v2246 = vld [vmem:[%s2245] sm:$0xf]
    %v2248 = vsel %vm1683, %v2246, 0
    %2250 = vmatprep.subr.mxu0 0.0
    %2251 = vmatpush1.msra.mxu0 %v1681
    %2252 = vmatprep.subr.mxu0 0.0
    %2253 = vmatpush1.msra.mxu0 0.0
    %2254 = vmatprep.subr.mxu0 0.0
    %2255 = vmatpush1.msra.mxu0 0.0
    %2256 = vmatprep.subr.mxu0 0.0
    %2257 = vmatpush1.msra.mxu0 0.0
    %2258 = vmatprep.subr.mxu0 0.0
    %2259 = vmatpush1.msra.mxu0 0.0
    %2260 = vmatprep.subr.mxu0 0.0
    %2261 = vmatpush1.msra.mxu0 0.0
    %2262 = vmatprep.subr.mxu0 0.0
    %2263 = vmatpush1.msra.mxu0 0.0
    %2264 = vmatprep.subr.mxu0 0.0
    %2265 = vmatpush1.msra.mxu0 0.0
    %2266 = vmatprep.subr.mxu0 0.0
    %2267 = vmatpush1.msra.mxu0 0.0
    %2268 = vmatprep.subr.mxu0 0.0
    %2269 = vmatpush1.msra.mxu0 0.0
    %2270 = vmatprep.subr.mxu0 0.0
    %2271 = vmatpush1.msra.mxu0 0.0
    %2272 = vmatprep.subr.mxu0 0.0
    %2273 = vmatpush1.msra.mxu0 0.0
    %2274 = vmatprep.subr.mxu0 0.0
    %2275 = vmatpush1.msra.mxu0 0.0
    %2276 = vmatprep.subr.mxu0 0.0
    %2277 = vmatpush1.msra.mxu0 0.0
    %2278 = vmatprep.subr.mxu0 0.0
    %2279 = vmatpush1.msra.mxu0 0.0
    %2280 = vmatprep.subr.mxu0 0.0
    %2281 = vmatpush1.msra.mxu0 0.0
    %2282 = vmatprep.subr.mxu0 0.0
    %2283 = vmatpush1.msra.mxu0 0.0
    %2284 = vmatprep.subr.mxu0 0.0
    %2285 = vmatpush1.msra.mxu0 0.0
    %2286 = vmatprep.subr.mxu0 0.0
    %2287 = vmatpush1.msra.mxu0 0.0
    %2288 = vmatprep.subr.mxu0 0.0
    %2289 = vmatpush1.msra.mxu0 0.0
    %2290 = vmatprep.subr.mxu0 0.0
    %2291 = vmatpush1.msra.mxu0 0.0
    %2292 = vmatprep.subr.mxu0 0.0
    %2293 = vmatpush1.msra.mxu0 0.0
    %2294 = vmatprep.subr.mxu0 0.0
    %2295 = vmatpush1.msra.mxu0 0.0
    %2296 = vmatprep.subr.mxu0 0.0
    %2297 = vmatpush1.msra.mxu0 0.0
    %2298 = vmatprep.subr.mxu0 0.0
    %2299 = vmatpush1.msra.mxu0 0.0
    %2300 = vmatprep.subr.mxu0 0.0
    %2301 = vmatpush1.msra.mxu0 0.0
    %2302 = vmatprep.subr.mxu0 0.0
    %2303 = vmatpush1.msra.mxu0 0.0
    %2304 = vmatprep.subr.mxu0 0.0
    %2305 = vmatpush1.msra.mxu0 0.0
    %2306 = vmatprep.subr.mxu0 0.0
    %2307 = vmatpush1.msra.mxu0 0.0
    %2308 = vmatprep.subr.mxu0 0.0
    %2309 = vmatpush1.msra.mxu0 0.0
    %2310 = vmatprep.subr.mxu0 0.0
    %2311 = vmatpush1.msra.mxu0 0.0
    %2312 = vmatprep.subr.mxu0 0.0
    %2313 = vmatpush1.msra.mxu0 0.0
    %2314 = vmatprep.mubr.f32.mxu0 0.0
    %2315 = vmatmul.mubr.f32.gmra.mrb[0].mxu0 %v2248
    %v2316 = vpop.f32.mrb[0].mxu0
    %v2317 = vadd.f32 0.0, %v2316
    %v2318 = vpop.f32.mrb[0].mxu0
    %2319 = vdwg.mxu0
    %s2320 = scalar_lea.vmem [#allocation11], 1024
    %v2321 = vld [vmem:[%s2320] sm:$0xff]
    %v2322 = vld [vmem:[%s2320 + $0x8] sm:$0xff]
    %v2323 = vld [vmem:[%s2320 + $0x10] sm:$0xff]
    %v2324 = vld [vmem:[%s2320 + $0x18] sm:$0xff]
    %v2325 = vld [vmem:[%s2320 + $0x20] sm:$0xff]
    %v2326 = vld [vmem:[%s2320 + $0x28] sm:$0xff]
    %v2327 = vld [vmem:[%s2320 + $0x30] sm:$0xff]
    %v2328 = vld [vmem:[%s2320 + $0x38] sm:$0xff]
    %v2329 = vld [vmem:[%s2320 + $0x40] sm:$0xff]
    %v2330 = vld [vmem:[%s2320 + $0x48] sm:$0xff]
    %v2331 = vld [vmem:[%s2320 + $0x50] sm:$0xff]
    %v2332 = vld [vmem:[%s2320 + $0x58] sm:$0xff]
    %v2333 = vld [vmem:[%s2320 + $0x60] sm:$0xff]
    %v2334 = vld [vmem:[%s2320 + $0x68] sm:$0xff]
    %v2335 = vld [vmem:[%s2320 + $0x70] sm:$0xff]
    %v2336 = vld [vmem:[%s2320 + $0x78] sm:$0xff]
    %v2337 = vld [vmem:[%s2320 + $0x80] sm:$0xff]
    %v2338 = vld [vmem:[%s2320 + $0x88] sm:$0xff]
    %v2339 = vld [vmem:[%s2320 + $0x90] sm:$0xff]
    %v2340 = vld [vmem:[%s2320 + $0x98] sm:$0xff]
    %v2341 = vld [vmem:[%s2320 + $0xa0] sm:$0xff]
    %v2342 = vld [vmem:[%s2320 + $0xa8] sm:$0xff]
    %v2343 = vld [vmem:[%s2320 + $0xb0] sm:$0xff]
    %v2344 = vld [vmem:[%s2320 + $0xb8] sm:$0xff]
    %v2345 = vld [vmem:[%s2320 + $0xc0] sm:$0xff]
    %v2346 = vld [vmem:[%s2320 + $0xc8] sm:$0xff]
    %v2347 = vld [vmem:[%s2320 + $0xd0] sm:$0xff]
    %v2348 = vld [vmem:[%s2320 + $0xd8] sm:$0xff]
    %v2349 = vld [vmem:[%s2320 + $0xe0] sm:$0xff]
    %v2350 = vld [vmem:[%s2320 + $0xe8] sm:$0xff]
    %v2351 = vld [vmem:[%s2320 + $0xf0] sm:$0xff]
    %v2352 = vld [vmem:[%s2320 + $0xf8] sm:$0xff]
    %v2353 = vld [vmem:[%s2320 + $0x100] sm:$0xff]
    %v2354 = vld [vmem:[%s2320 + $0x108] sm:$0xff]
    %v2355 = vld [vmem:[%s2320 + $0x110] sm:$0xff]
    %v2356 = vld [vmem:[%s2320 + $0x118] sm:$0xff]
    %v2357 = vld [vmem:[%s2320 + $0x120] sm:$0xff]
    %v2358 = vld [vmem:[%s2320 + $0x128] sm:$0xff]
    %v2359 = vld [vmem:[%s2320 + $0x130] sm:$0xff]
    %v2360 = vld [vmem:[%s2320 + $0x138] sm:$0xff]
    %v2361 = vld [vmem:[%s2320 + $0x140] sm:$0xff]
    %v2362 = vld [vmem:[%s2320 + $0x148] sm:$0xff]
    %v2363 = vld [vmem:[%s2320 + $0x150] sm:$0xff]
    %v2364 = vld [vmem:[%s2320 + $0x158] sm:$0xff]
    %v2365 = vld [vmem:[%s2320 + $0x160] sm:$0xff]
    %v2366 = vld [vmem:[%s2320 + $0x168] sm:$0xff]
    %v2367 = vld [vmem:[%s2320 + $0x170] sm:$0xff]
    %v2368 = vld [vmem:[%s2320 + $0x178] sm:$0xff]
    %v2369 = vld [vmem:[%s2320 + $0x180] sm:$0xff]
    %v2370 = vld [vmem:[%s2320 + $0x188] sm:$0xff]
    %v2371 = vld [vmem:[%s2320 + $0x190] sm:$0xff]
    %v2372 = vld [vmem:[%s2320 + $0x198] sm:$0xff]
    %v2373 = vld [vmem:[%s2320 + $0x1a0] sm:$0xff]
    %v2374 = vld [vmem:[%s2320 + $0x1a8] sm:$0xff]
    %v2375 = vld [vmem:[%s2320 + $0x1b0] sm:$0xff]
    %v2376 = vld [vmem:[%s2320 + $0x1b8] sm:$0xff]
    %v2377 = vld [vmem:[%s2320 + $0x1c0] sm:$0xff]
    %v2378 = vld [vmem:[%s2320 + $0x1c8] sm:$0xff]
    %v2379 = vld [vmem:[%s2320 + $0x1d0] sm:$0xff]
    %v2380 = vld [vmem:[%s2320 + $0x1d8] sm:$0xff]
    %v2381 = vld [vmem:[%s2320 + $0x1e0] sm:$0xff]
    %v2382 = vld [vmem:[%s2320 + $0x1e8] sm:$0xff]
    %v2383 = vld [vmem:[%s2320 + $0x1f0] sm:$0xff]
    %v2384 = vld [vmem:[%s2320 + $0x1f8] sm:$0xff]
    %2385 = vmatprep.subr.mxu0 %v2322
    %2386 = vmatpush1.msra.mxu0 %v2321
    %2387 = vmatprep.subr.mxu0 %v2326
    %2388 = vmatpush1.msra.mxu0 %v2325
    %2389 = vmatprep.subr.mxu0 %v2330
    %2390 = vmatpush1.msra.mxu0 %v2329
    %2391 = vmatprep.subr.mxu0 %v2334
    %2392 = vmatpush1.msra.mxu0 %v2333
    %2393 = vmatprep.subr.mxu0 %v2338
    %2394 = vmatpush1.msra.mxu0 %v2337
    %2395 = vmatprep.subr.mxu0 %v2342
    %2396 = vmatpush1.msra.mxu0 %v2341
    %2397 = vmatprep.subr.mxu0 %v2346
    %2398 = vmatpush1.msra.mxu0 %v2345
    %2399 = vmatprep.subr.mxu0 %v2350
    %2400 = vmatpush1.msra.mxu0 %v2349
    %2401 = vmatprep.subr.mxu0 %v2354
    %2402 = vmatpush1.msra.mxu0 %v2353
    %2403 = vmatprep.subr.mxu0 %v2358
    %2404 = vmatpush1.msra.mxu0 %v2357
    %2405 = vmatprep.subr.mxu0 %v2362
    %2406 = vmatpush1.msra.mxu0 %v2361
    %2407 = vmatprep.subr.mxu0 %v2366
    %2408 = vmatpush1.msra.mxu0 %v2365
    %2409 = vmatprep.subr.mxu0 %v2370
    %2410 = vmatpush1.msra.mxu0 %v2369
    %2411 = vmatprep.subr.mxu0 %v2374
    %2412 = vmatpush1.msra.mxu0 %v2373
    %2413 = vmatprep.subr.mxu0 %v2378
    %2414 = vmatpush1.msra.mxu0 %v2377
    %2415 = vmatprep.subr.mxu0 %v2382
    %2416 = vmatpush1.msra.mxu0 %v2381
    %2417 = vmatprep.subr.mxu0 0.0
    %2418 = vmatpush1.msra.mxu0 0.0
    %2419 = vmatprep.subr.mxu0 0.0
    %2420 = vmatpush1.msra.mxu0 0.0
    %2421 = vmatprep.subr.mxu0 0.0
    %2422 = vmatpush1.msra.mxu0 0.0
    %2423 = vmatprep.subr.mxu0 0.0
    %2424 = vmatpush1.msra.mxu0 0.0
    %2425 = vmatprep.subr.mxu0 0.0
    %2426 = vmatpush1.msra.mxu0 0.0
    %2427 = vmatprep.subr.mxu0 0.0
    %2428 = vmatpush1.msra.mxu0 0.0
    %2429 = vmatprep.subr.mxu0 0.0
    %2430 = vmatpush1.msra.mxu0 0.0
    %2431 = vmatprep.subr.mxu0 0.0
    %2432 = vmatpush1.msra.mxu0 0.0
    %2433 = vmatprep.subr.mxu0 0.0
    %2434 = vmatpush1.msra.mxu0 0.0
    %2435 = vmatprep.subr.mxu0 0.0
    %2436 = vmatpush1.msra.mxu0 0.0
    %2437 = vmatprep.subr.mxu0 0.0
    %2438 = vmatpush1.msra.mxu0 0.0
    %2439 = vmatprep.subr.mxu0 0.0
    %2440 = vmatpush1.msra.mxu0 0.0
    %2441 = vmatprep.subr.mxu0 0.0
    %2442 = vmatpush1.msra.mxu0 0.0
    %2443 = vmatprep.subr.mxu0 0.0
    %2444 = vmatpush1.msra.mxu0 0.0
    %2445 = vmatprep.subr.mxu0 0.0
    %2446 = vmatpush1.msra.mxu0 0.0
    %2447 = vmatprep.subr.mxu0 0.0
    %2448 = vmatpush1.msra.mxu0 0.0
    %2449 = vmatprep.mubr.f32.mxu0 0.0
    %2450 = vmatmul.mubr.f32.gmra.mrb[0].mxu0 %v2317
    %v2451 = vpop.f32.mrb[0].mxu0
    %v2452 = vadd.f32 0.0, %v2451
    %v2453 = vpop.f32.mrb[0].mxu0
    %v2454 = vadd.f32 0.0, %v2453
    %2455 = vdwg.mxu0
    %2456 = vmatprep.subr.mxu0 %v2324
    %2457 = vmatpush1.msra.mxu0 %v2323
    %2458 = vmatprep.subr.mxu0 %v2328
    %2459 = vmatpush1.msra.mxu0 %v2327
    %2460 = vmatprep.subr.mxu0 %v2332
    %2461 = vmatpush1.msra.mxu0 %v2331
    %2462 = vmatprep.subr.mxu0 %v2336
    %2463 = vmatpush1.msra.mxu0 %v2335
    %2464 = vmatprep.subr.mxu0 %v2340
    %2465 = vmatpush1.msra.mxu0 %v2339
    %2466 = vmatprep.subr.mxu0 %v2344
    %2467 = vmatpush1.msra.mxu0 %v2343
    %2468 = vmatprep.subr.mxu0 %v2348
    %2469 = vmatpush1.msra.mxu0 %v2347
    %2470 = vmatprep.subr.mxu0 %v2352
    %2471 = vmatpush1.msra.mxu0 %v2351
    %2472 = vmatprep.subr.mxu0 %v2356
    %2473 = vmatpush1.msra.mxu0 %v2355
    %2474 = vmatprep.subr.mxu0 %v2360
    %2475 = vmatpush1.msra.mxu0 %v2359
    %2476 = vmatprep.subr.mxu0 %v2364
    %2477 = vmatpush1.msra.mxu0 %v2363
    %2478 = vmatprep.subr.mxu0 %v2368
    %2479 = vmatpush1.msra.mxu0 %v2367
    %2480 = vmatprep.subr.mxu0 %v2372
    %2481 = vmatpush1.msra.mxu0 %v2371
    %2482 = vmatprep.subr.mxu0 %v2376
    %2483 = vmatpush1.msra.mxu0 %v2375
    %2484 = vmatprep.subr.mxu0 %v2380
    %2485 = vmatpush1.msra.mxu0 %v2379
    %2486 = vmatprep.subr.mxu0 %v2384
    %2487 = vmatpush1.msra.mxu0 %v2383
    %2488 = vmatprep.subr.mxu0 0.0
    %2489 = vmatpush1.msra.mxu0 0.0
    %2490 = vmatprep.subr.mxu0 0.0
    %2491 = vmatpush1.msra.mxu0 0.0
    %2492 = vmatprep.subr.mxu0 0.0
    %2493 = vmatpush1.msra.mxu0 0.0
    %2494 = vmatprep.subr.mxu0 0.0
    %2495 = vmatpush1.msra.mxu0 0.0
    %2496 = vmatprep.subr.mxu0 0.0
    %2497 = vmatpush1.msra.mxu0 0.0
    %2498 = vmatprep.subr.mxu0 0.0
    %2499 = vmatpush1.msra.mxu0 0.0
    %2500 = vmatprep.subr.mxu0 0.0
    %2501 = vmatpush1.msra.mxu0 0.0
    %2502 = vmatprep.subr.mxu0 0.0
    %2503 = vmatpush1.msra.mxu0 0.0
    %2504 = vmatprep.subr.mxu0 0.0
    %2505 = vmatpush1.msra.mxu0 0.0
    %2506 = vmatprep.subr.mxu0 0.0
    %2507 = vmatpush1.msra.mxu0 0.0
    %2508 = vmatprep.subr.mxu0 0.0
    %2509 = vmatpush1.msra.mxu0 0.0
    %2510 = vmatprep.subr.mxu0 0.0
    %2511 = vmatpush1.msra.mxu0 0.0
    %2512 = vmatprep.subr.mxu0 0.0
    %2513 = vmatpush1.msra.mxu0 0.0
    %2514 = vmatprep.subr.mxu0 0.0
    %2515 = vmatpush1.msra.mxu0 0.0
    %2516 = vmatprep.subr.mxu0 0.0
    %2517 = vmatpush1.msra.mxu0 0.0
    %2518 = vmatprep.subr.mxu0 0.0
    %2519 = vmatpush1.msra.mxu0 0.0
    %2520 = vmatprep.mubr.f32.mxu0 0.0
    %2521 = vmatmul.mubr.f32.gmra.mrb[0].mxu0 %v2317
    %v2522 = vpop.f32.mrb[0].mxu0
    %v2523 = vadd.f32 0.0, %v2522
    %v2524 = vpop.f32.mrb[0].mxu0
    %v2525 = vadd.f32 0.0, %v2524
    %2526 = vdwg.mxu0
    %v2527 = vadd.f32 %v2170, %v2452
    %v2528 = vadd.f32 %v2172, %v2454
    %v2529 = vadd.f32 %v2241, %v2523
    %v2530 = vadd.f32 %v2243, %v2525
    %s2531 = scalar_lea.vmem [#allocation10], 12
    %v2532 = vld [vmem:[%s2531] sm:$0xf]
    %v2534 = vsel %vm1683, %v2532, 0
    %2536 = vmatprep.subr.mxu0 0.0
    %2537 = vmatpush1.msra.mxu0 %v1681
    %2538 = vmatprep.subr.mxu0 0.0
    %2539 = vmatpush1.msra.mxu0 0.0
    %2540 = vmatprep.subr.mxu0 0.0
    %2541 = vmatpush1.msra.mxu0 0.0
    %2542 = vmatprep.subr.mxu0 0.0
    %2543 = vmatpush1.msra.mxu0 0.0
    %2544 = vmatprep.subr.mxu0 0.0
    %2545 = vmatpush1.msra.mxu0 0.0
    %2546 = vmatprep.subr.mxu0 0.0
    %2547 = vmatpush1.msra.mxu0 0.0
    %2548 = vmatprep.subr.mxu0 0.0
    %2549 = vmatpush1.msra.mxu0 0.0
    %2550 = vmatprep.subr.mxu0 0.0
    %2551 = vmatpush1.msra.mxu0 0.0
    %2552 = vmatprep.subr.mxu0 0.0
    %2553 = vmatpush1.msra.mxu0 0.0
    %2554 = vmatprep.subr.mxu0 0.0
    %2555 = vmatpush1.msra.mxu0 0.0
    %2556 = vmatprep.subr.mxu0 0.0
    %2557 = vmatpush1.msra.mxu0 0.0
    %2558 = vmatprep.subr.mxu0 0.0
    %2559 = vmatpush1.msra.mxu0 0.0
    %2560 = vmatprep.subr.mxu0 0.0
    %2561 = vmatpush1.msra.mxu0 0.0
    %2562 = vmatprep.subr.mxu0 0.0
    %2563 = vmatpush1.msra.mxu0 0.0
    %2564 = vmatprep.subr.mxu0 0.0
    %2565 = vmatpush1.msra.mxu0 0.0
    %2566 = vmatprep.subr.mxu0 0.0
    %2567 = vmatpush1.msra.mxu0 0.0
    %2568 = vmatprep.subr.mxu0 0.0
    %2569 = vmatpush1.msra.mxu0 0.0
    %2570 = vmatprep.subr.mxu0 0.0
    %2571 = vmatpush1.msra.mxu0 0.0
    %2572 = vmatprep.subr.mxu0 0.0
    %2573 = vmatpush1.msra.mxu0 0.0
    %2574 = vmatprep.subr.mxu0 0.0
    %2575 = vmatpush1.msra.mxu0 0.0
    %2576 = vmatprep.subr.mxu0 0.0
    %2577 = vmatpush1.msra.mxu0 0.0
    %2578 = vmatprep.subr.mxu0 0.0
    %2579 = vmatpush1.msra.mxu0 0.0
    %2580 = vmatprep.subr.mxu0 0.0
    %2581 = vmatpush1.msra.mxu0 0.0
    %2582 = vmatprep.subr.mxu0 0.0
    %2583 = vmatpush1.msra.mxu0 0.0
    %2584 = vmatprep.subr.mxu0 0.0
    %2585 = vmatpush1.msra.mxu0 0.0
    %2586 = vmatprep.subr.mxu0 0.0
    %2587 = vmatpush1.msra.mxu0 0.0
    %2588 = vmatprep.subr.mxu0 0.0
    %2589 = vmatpush1.msra.mxu0 0.0
    %2590 = vmatprep.subr.mxu0 0.0
    %2591 = vmatpush1.msra.mxu0 0.0
    %2592 = vmatprep.subr.mxu0 0.0
    %2593 = vmatpush1.msra.mxu0 0.0
    %2594 = vmatprep.subr.mxu0 0.0
    %2595 = vmatpush1.msra.mxu0 0.0
    %2596 = vmatprep.subr.mxu0 0.0
    %2597 = vmatpush1.msra.mxu0 0.0
    %2598 = vmatprep.subr.mxu0 0.0
    %2599 = vmatpush1.msra.mxu0 0.0
    %2600 = vmatprep.mubr.f32.mxu0 0.0
    %2601 = vmatmul.mubr.f32.gmra.mrb[0].mxu0 %v2534
    %v2602 = vpop.f32.mrb[0].mxu0
    %v2603 = vadd.f32 0.0, %v2602
    %v2604 = vpop.f32.mrb[0].mxu0
    %2605 = vdwg.mxu0
    %s2606 = scalar_lea.vmem [#allocation11], 1536
    %v2607 = vld [vmem:[%s2606] sm:$0xff]
    %v2608 = vld [vmem:[%s2606 + $0x8] sm:$0xff]
    %v2609 = vld [vmem:[%s2606 + $0x10] sm:$0xff]
    %v2610 = vld [vmem:[%s2606 + $0x18] sm:$0xff]
    %v2611 = vld [vmem:[%s2606 + $0x20] sm:$0xff]
    %v2612 = vld [vmem:[%s2606 + $0x28] sm:$0xff]
    %v2613 = vld [vmem:[%s2606 + $0x30] sm:$0xff]
    %v2614 = vld [vmem:[%s2606 + $0x38] sm:$0xff]
    %v2615 = vld [vmem:[%s2606 + $0x40] sm:$0xff]
    %v2616 = vld [vmem:[%s2606 + $0x48] sm:$0xff]
    %v2617 = vld [vmem:[%s2606 + $0x50] sm:$0xff]
    %v2618 = vld [vmem:[%s2606 + $0x58] sm:$0xff]
    %v2619 = vld [vmem:[%s2606 + $0x60] sm:$0xff]
    %v2620 = vld [vmem:[%s2606 + $0x68] sm:$0xff]
    %v2621 = vld [vmem:[%s2606 + $0x70] sm:$0xff]
    %v2622 = vld [vmem:[%s2606 + $0x78] sm:$0xff]
    %v2623 = vld [vmem:[%s2606 + $0x80] sm:$0xff]
    %v2624 = vld [vmem:[%s2606 + $0x88] sm:$0xff]
    %v2625 = vld [vmem:[%s2606 + $0x90] sm:$0xff]
    %v2626 = vld [vmem:[%s2606 + $0x98] sm:$0xff]
    %v2627 = vld [vmem:[%s2606 + $0xa0] sm:$0xff]
    %v2628 = vld [vmem:[%s2606 + $0xa8] sm:$0xff]
    %v2629 = vld [vmem:[%s2606 + $0xb0] sm:$0xff]
    %v2630 = vld [vmem:[%s2606 + $0xb8] sm:$0xff]
    %v2631 = vld [vmem:[%s2606 + $0xc0] sm:$0xff]
    %v2632 = vld [vmem:[%s2606 + $0xc8] sm:$0xff]
    %v2633 = vld [vmem:[%s2606 + $0xd0] sm:$0xff]
    %v2634 = vld [vmem:[%s2606 + $0xd8] sm:$0xff]
    %v2635 = vld [vmem:[%s2606 + $0xe0] sm:$0xff]
    %v2636 = vld [vmem:[%s2606 + $0xe8] sm:$0xff]
    %v2637 = vld [vmem:[%s2606 + $0xf0] sm:$0xff]
    %v2638 = vld [vmem:[%s2606 + $0xf8] sm:$0xff]
    %v2639 = vld [vmem:[%s2606 + $0x100] sm:$0xff]
    %v2640 = vld [vmem:[%s2606 + $0x108] sm:$0xff]
    %v2641 = vld [vmem:[%s2606 + $0x110] sm:$0xff]
    %v2642 = vld [vmem:[%s2606 + $0x118] sm:$0xff]
    %v2643 = vld [vmem:[%s2606 + $0x120] sm:$0xff]
    %v2644 = vld [vmem:[%s2606 + $0x128] sm:$0xff]
    %v2645 = vld [vmem:[%s2606 + $0x130] sm:$0xff]
    %v2646 = vld [vmem:[%s2606 + $0x138] sm:$0xff]
    %v2647 = vld [vmem:[%s2606 + $0x140] sm:$0xff]
    %v2648 = vld [vmem:[%s2606 + $0x148] sm:$0xff]
    %v2649 = vld [vmem:[%s2606 + $0x150] sm:$0xff]
    %v2650 = vld [vmem:[%s2606 + $0x158] sm:$0xff]
    %v2651 = vld [vmem:[%s2606 + $0x160] sm:$0xff]
    %v2652 = vld [vmem:[%s2606 + $0x168] sm:$0xff]
    %v2653 = vld [vmem:[%s2606 + $0x170] sm:$0xff]
    %v2654 = vld [vmem:[%s2606 + $0x178] sm:$0xff]
    %v2655 = vld [vmem:[%s2606 + $0x180] sm:$0xff]
    %v2656 = vld [vmem:[%s2606 + $0x188] sm:$0xff]
    %v2657 = vld [vmem:[%s2606 + $0x190] sm:$0xff]
    %v2658 = vld [vmem:[%s2606 + $0x198] sm:$0xff]
    %v2659 = vld [vmem:[%s2606 + $0x1a0] sm:$0xff]
    %v2660 = vld [vmem:[%s2606 + $0x1a8] sm:$0xff]
    %v2661 = vld [vmem:[%s2606 + $0x1b0] sm:$0xff]
    %v2662 = vld [vmem:[%s2606 + $0x1b8] sm:$0xff]
    %v2663 = vld [vmem:[%s2606 + $0x1c0] sm:$0xff]
    %v2664 = vld [vmem:[%s2606 + $0x1c8] sm:$0xff]
    %v2665 = vld [vmem:[%s2606 + $0x1d0] sm:$0xff]
    %v2666 = vld [vmem:[%s2606 + $0x1d8] sm:$0xff]
    %v2667 = vld [vmem:[%s2606 + $0x1e0] sm:$0xff]
    %v2668 = vld [vmem:[%s2606 + $0x1e8] sm:$0xff]
    %v2669 = vld [vmem:[%s2606 + $0x1f0] sm:$0xff]
    %v2670 = vld [vmem:[%s2606 + $0x1f8] sm:$0xff]
    %2671 = vmatprep.subr.mxu0 %v2608
    %2672 = vmatpush1.msra.mxu0 %v2607
    %2673 = vmatprep.subr.mxu0 %v2612
    %2674 = vmatpush1.msra.mxu0 %v2611
    %2675 = vmatprep.subr.mxu0 %v2616
    %2676 = vmatpush1.msra.mxu0 %v2615
    %2677 = vmatprep.subr.mxu0 %v2620
    %2678 = vmatpush1.msra.mxu0 %v2619
    %2679 = vmatprep.subr.mxu0 %v2624
    %2680 = vmatpush1.msra.mxu0 %v2623
    %2681 = vmatprep.subr.mxu0 %v2628
    %2682 = vmatpush1.msra.mxu0 %v2627
    %2683 = vmatprep.subr.mxu0 %v2632
    %2684 = vmatpush1.msra.mxu0 %v2631
    %2685 = vmatprep.subr.mxu0 %v2636
    %2686 = vmatpush1.msra.mxu0 %v2635
    %2687 = vmatprep.subr.mxu0 %v2640
    %2688 = vmatpush1.msra.mxu0 %v2639
    %2689 = vmatprep.subr.mxu0 %v2644
    %2690 = vmatpush1.msra.mxu0 %v2643
    %2691 = vmatprep.subr.mxu0 %v2648
    %2692 = vmatpush1.msra.mxu0 %v2647
    %2693 = vmatprep.subr.mxu0 %v2652
    %2694 = vmatpush1.msra.mxu0 %v2651
    %2695 = vmatprep.subr.mxu0 %v2656
    %2696 = vmatpush1.msra.mxu0 %v2655
    %2697 = vmatprep.subr.mxu0 %v2660
    %2698 = vmatpush1.msra.mxu0 %v2659
    %2699 = vmatprep.subr.mxu0 %v2664
    %2700 = vmatpush1.msra.mxu0 %v2663
    %2701 = vmatprep.subr.mxu0 %v2668
    %2702 = vmatpush1.msra.mxu0 %v2667
    %2703 = vmatprep.subr.mxu0 0.0
    %2704 = vmatpush1.msra.mxu0 0.0
    %2705 = vmatprep.subr.mxu0 0.0
    %2706 = vmatpush1.msra.mxu0 0.0
    %2707 = vmatprep.subr.mxu0 0.0
    %2708 = vmatpush1.msra.mxu0 0.0
    %2709 = vmatprep.subr.mxu0 0.0
    %2710 = vmatpush1.msra.mxu0 0.0
    %2711 = vmatprep.subr.mxu0 0.0
    %2712 = vmatpush1.msra.mxu0 0.0
    %2713 = vmatprep.subr.mxu0 0.0
    %2714 = vmatpush1.msra.mxu0 0.0
    %2715 = vmatprep.subr.mxu0 0.0
    %2716 = vmatpush1.msra.mxu0 0.0
    %2717 = vmatprep.subr.mxu0 0.0
    %2718 = vmatpush1.msra.mxu0 0.0
    %2719 = vmatprep.subr.mxu0 0.0
    %2720 = vmatpush1.msra.mxu0 0.0
    %2721 = vmatprep.subr.mxu0 0.0
    %2722 = vmatpush1.msra.mxu0 0.0
    %2723 = vmatprep.subr.mxu0 0.0
    %2724 = vmatpush1.msra.mxu0 0.0
    %2725 = vmatprep.subr.mxu0 0.0
    %2726 = vmatpush1.msra.mxu0 0.0
    %2727 = vmatprep.subr.mxu0 0.0
    %2728 = vmatpush1.msra.mxu0 0.0
    %2729 = vmatprep.subr.mxu0 0.0
    %2730 = vmatpush1.msra.mxu0 0.0
    %2731 = vmatprep.subr.mxu0 0.0
    %2732 = vmatpush1.msra.mxu0 0.0
    %2733 = vmatprep.subr.mxu0 0.0
    %2734 = vmatpush1.msra.mxu0 0.0
    %2735 = vmatprep.mubr.f32.mxu0 0.0
    %2736 = vmatmul.mubr.f32.gmra.mrb[0].mxu0 %v2603
    %v2737 = vpop.f32.mrb[0].mxu0
    %v2738 = vadd.f32 0.0, %v2737
    %v2739 = vpop.f32.mrb[0].mxu0
    %v2740 = vadd.f32 0.0, %v2739
    %2741 = vdwg.mxu0
    %2742 = vmatprep.subr.mxu0 %v2610
    %2743 = vmatpush1.msra.mxu0 %v2609
    %2744 = vmatprep.subr.mxu0 %v2614
    %2745 = vmatpush1.msra.mxu0 %v2613
    %2746 = vmatprep.subr.mxu0 %v2618
    %2747 = vmatpush1.msra.mxu0 %v2617
    %2748 = vmatprep.subr.mxu0 %v2622
    %2749 = vmatpush1.msra.mxu0 %v2621
    %2750 = vmatprep.subr.mxu0 %v2626
    %2751 = vmatpush1.msra.mxu0 %v2625
    %2752 = vmatprep.subr.mxu0 %v2630
    %2753 = vmatpush1.msra.mxu0 %v2629
    %2754 = vmatprep.subr.mxu0 %v2634
    %2755 = vmatpush1.msra.mxu0 %v2633
    %2756 = vmatprep.subr.mxu0 %v2638
    %2757 = vmatpush1.msra.mxu0 %v2637
    %2758 = vmatprep.subr.mxu0 %v2642
    %2759 = vmatpush1.msra.mxu0 %v2641
    %2760 = vmatprep.subr.mxu0 %v2646
    %2761 = vmatpush1.msra.mxu0 %v2645
    %2762 = vmatprep.subr.mxu0 %v2650
    %2763 = vmatpush1.msra.mxu0 %v2649
    %2764 = vmatprep.subr.mxu0 %v2654
    %2765 = vmatpush1.msra.mxu0 %v2653
    %2766 = vmatprep.subr.mxu0 %v2658
    %2767 = vmatpush1.msra.mxu0 %v2657
    %2768 = vmatprep.subr.mxu0 %v2662
    %2769 = vmatpush1.msra.mxu0 %v2661
    %2770 = vmatprep.subr.mxu0 %v2666
    %2771 = vmatpush1.msra.mxu0 %v2665
    %2772 = vmatprep.subr.mxu0 %v2670
    %2773 = vmatpush1.msra.mxu0 %v2669
    %2774 = vmatprep.subr.mxu0 0.0
    %2775 = vmatpush1.msra.mxu0 0.0
    %2776 = vmatprep.subr.mxu0 0.0
    %2777 = vmatpush1.msra.mxu0 0.0
    %2778 = vmatprep.subr.mxu0 0.0
    %2779 = vmatpush1.msra.mxu0 0.0
    %2780 = vmatprep.subr.mxu0 0.0
    %2781 = vmatpush1.msra.mxu0 0.0
    %2782 = vmatprep.subr.mxu0 0.0
    %2783 = vmatpush1.msra.mxu0 0.0
    %2784 = vmatprep.subr.mxu0 0.0
    %2785 = vmatpush1.msra.mxu0 0.0
    %2786 = vmatprep.subr.mxu0 0.0
    %2787 = vmatpush1.msra.mxu0 0.0
    %2788 = vmatprep.subr.mxu0 0.0
    %2789 = vmatpush1.msra.mxu0 0.0
    %2790 = vmatprep.subr.mxu0 0.0
    %2791 = vmatpush1.msra.mxu0 0.0
    %2792 = vmatprep.subr.mxu0 0.0
    %2793 = vmatpush1.msra.mxu0 0.0
    %2794 = vmatprep.subr.mxu0 0.0
    %2795 = vmatpush1.msra.mxu0 0.0
    %2796 = vmatprep.subr.mxu0 0.0
    %2797 = vmatpush1.msra.mxu0 0.0
    %2798 = vmatprep.subr.mxu0 0.0
    %2799 = vmatpush1.msra.mxu0 0.0
    %2800 = vmatprep.subr.mxu0 0.0
    %2801 = vmatpush1.msra.mxu0 0.0
    %2802 = vmatprep.subr.mxu0 0.0
    %2803 = vmatpush1.msra.mxu0 0.0
    %2804 = vmatprep.subr.mxu0 0.0
    %2805 = vmatpush1.msra.mxu0 0.0
    %2806 = vmatprep.mubr.f32.mxu0 0.0
    %2807 = vmatmul.mubr.f32.gmra.mrb[0].mxu0 %v2603
    %v2808 = vpop.f32.mrb[0].mxu0
    %v2809 = vadd.f32 0.0, %v2808
    %v2810 = vpop.f32.mrb[0].mxu0
    %v2811 = vadd.f32 0.0, %v2810
    %2812 = vdwg.mxu0
    %v2813 = vadd.f32 %v2527, %v2738
    %v2814 = vadd.f32 %v2528, %v2740
    %v2815 = vadd.f32 %v2529, %v2809
    %v2816 = vadd.f32 %v2530, %v2811
    %s2817 = scalar_lea.vmem [#allocation10], 16
    %v2818 = vld [vmem:[%s2817] sm:$0xf]
    %v2820 = vsel %vm1683, %v2818, 0
    %2822 = vmatprep.subr.mxu0 0.0
    %2823 = vmatpush1.msra.mxu0 %v1681
    %2824 = vmatprep.subr.mxu0 0.0
    %2825 = vmatpush1.msra.mxu0 0.0
    %2826 = vmatprep.subr.mxu0 0.0
    %2827 = vmatpush1.msra.mxu0 0.0
    %2828 = vmatprep.subr.mxu0 0.0
    %2829 = vmatpush1.msra.mxu0 0.0
    %2830 = vmatprep.subr.mxu0 0.0
    %2831 = vmatpush1.msra.mxu0 0.0
    %2832 = vmatprep.subr.mxu0 0.0
    %2833 = vmatpush1.msra.mxu0 0.0
    %2834 = vmatprep.subr.mxu0 0.0
    %2835 = vmatpush1.msra.mxu0 0.0
    %2836 = vmatprep.subr.mxu0 0.0
    %2837 = vmatpush1.msra.mxu0 0.0
    %2838 = vmatprep.subr.mxu0 0.0
    %2839 = vmatpush1.msra.mxu0 0.0
    %2840 = vmatprep.subr.mxu0 0.0
    %2841 = vmatpush1.msra.mxu0 0.0
    %2842 = vmatprep.subr.mxu0 0.0
    %2843 = vmatpush1.msra.mxu0 0.0
    %2844 = vmatprep.subr.mxu0 0.0
    %2845 = vmatpush1.msra.mxu0 0.0
    %2846 = vmatprep.subr.mxu0 0.0
    %2847 = vmatpush1.msra.mxu0 0.0
    %2848 = vmatprep.subr.mxu0 0.0
    %2849 = vmatpush1.msra.mxu0 0.0
    %2850 = vmatprep.subr.mxu0 0.0
    %2851 = vmatpush1.msra.mxu0 0.0
    %2852 = vmatprep.subr.mxu0 0.0
    %2853 = vmatpush1.msra.mxu0 0.0
    %2854 = vmatprep.subr.mxu0 0.0
    %2855 = vmatpush1.msra.mxu0 0.0
    %2856 = vmatprep.subr.mxu0 0.0
    %2857 = vmatpush1.msra.mxu0 0.0
    %2858 = vmatprep.subr.mxu0 0.0
    %2859 = vmatpush1.msra.mxu0 0.0
    %2860 = vmatprep.subr.mxu0 0.0
    %2861 = vmatpush1.msra.mxu0 0.0
    %2862 = vmatprep.subr.mxu0 0.0
    %2863 = vmatpush1.msra.mxu0 0.0
    %2864 = vmatprep.subr.mxu0 0.0
    %2865 = vmatpush1.msra.mxu0 0.0
    %2866 = vmatprep.subr.mxu0 0.0
    %2867 = vmatpush1.msra.mxu0 0.0
    %2868 = vmatprep.subr.mxu0 0.0
    %2869 = vmatpush1.msra.mxu0 0.0
    %2870 = vmatprep.subr.mxu0 0.0
    %2871 = vmatpush1.msra.mxu0 0.0
    %2872 = vmatprep.subr.mxu0 0.0
    %2873 = vmatpush1.msra.mxu0 0.0
    %2874 = vmatprep.subr.mxu0 0.0
    %2875 = vmatpush1.msra.mxu0 0.0
    %2876 = vmatprep.subr.mxu0 0.0
    %2877 = vmatpush1.msra.mxu0 0.0
    %2878 = vmatprep.subr.mxu0 0.0
    %2879 = vmatpush1.msra.mxu0 0.0
    %2880 = vmatprep.subr.mxu0 0.0
    %2881 = vmatpush1.msra.mxu0 0.0
    %2882 = vmatprep.subr.mxu0 0.0
    %2883 = vmatpush1.msra.mxu0 0.0
    %2884 = vmatprep.subr.mxu0 0.0
    %2885 = vmatpush1.msra.mxu0 0.0
    %2886 = vmatprep.mubr.f32.mxu0 0.0
    %2887 = vmatmul.mubr.f32.gmra.mrb[0].mxu0 %v2820
    %v2888 = vpop.f32.mrb[0].mxu0
    %v2889 = vadd.f32 0.0, %v2888
    %v2890 = vpop.f32.mrb[0].mxu0
    %2891 = vdwg.mxu0
    %s2892 = scalar_lea.vmem [#allocation11], 2048
    %v2893 = vld [vmem:[%s2892] sm:$0xff]
    %v2894 = vld [vmem:[%s2892 + $0x8] sm:$0xff]
    %v2895 = vld [vmem:[%s2892 + $0x10] sm:$0xff]
    %v2896 = vld [vmem:[%s2892 + $0x18] sm:$0xff]
    %v2897 = vld [vmem:[%s2892 + $0x20] sm:$0xff]
    %v2898 = vld [vmem:[%s2892 + $0x28] sm:$0xff]
    %v2899 = vld [vmem:[%s2892 + $0x30] sm:$0xff]
    %v2900 = vld [vmem:[%s2892 + $0x38] sm:$0xff]
    %v2901 = vld [vmem:[%s2892 + $0x40] sm:$0xff]
    %v2902 = vld [vmem:[%s2892 + $0x48] sm:$0xff]
    %v2903 = vld [vmem:[%s2892 + $0x50] sm:$0xff]
    %v2904 = vld [vmem:[%s2892 + $0x58] sm:$0xff]
    %v2905 = vld [vmem:[%s2892 + $0x60] sm:$0xff]
    %v2906 = vld [vmem:[%s2892 + $0x68] sm:$0xff]
    %v2907 = vld [vmem:[%s2892 + $0x70] sm:$0xff]
    %v2908 = vld [vmem:[%s2892 + $0x78] sm:$0xff]
    %v2909 = vld [vmem:[%s2892 + $0x80] sm:$0xff]
    %v2910 = vld [vmem:[%s2892 + $0x88] sm:$0xff]
    %v2911 = vld [vmem:[%s2892 + $0x90] sm:$0xff]
    %v2912 = vld [vmem:[%s2892 + $0x98] sm:$0xff]
    %v2913 = vld [vmem:[%s2892 + $0xa0] sm:$0xff]
    %v2914 = vld [vmem:[%s2892 + $0xa8] sm:$0xff]
    %v2915 = vld [vmem:[%s2892 + $0xb0] sm:$0xff]
    %v2916 = vld [vmem:[%s2892 + $0xb8] sm:$0xff]
    %v2917 = vld [vmem:[%s2892 + $0xc0] sm:$0xff]
    %v2918 = vld [vmem:[%s2892 + $0xc8] sm:$0xff]
    %v2919 = vld [vmem:[%s2892 + $0xd0] sm:$0xff]
    %v2920 = vld [vmem:[%s2892 + $0xd8] sm:$0xff]
    %v2921 = vld [vmem:[%s2892 + $0xe0] sm:$0xff]
    %v2922 = vld [vmem:[%s2892 + $0xe8] sm:$0xff]
    %v2923 = vld [vmem:[%s2892 + $0xf0] sm:$0xff]
    %v2924 = vld [vmem:[%s2892 + $0xf8] sm:$0xff]
    %v2925 = vld [vmem:[%s2892 + $0x100] sm:$0xff]
    %v2926 = vld [vmem:[%s2892 + $0x108] sm:$0xff]
    %v2927 = vld [vmem:[%s2892 + $0x110] sm:$0xff]
    %v2928 = vld [vmem:[%s2892 + $0x118] sm:$0xff]
    %v2929 = vld [vmem:[%s2892 + $0x120] sm:$0xff]
    %v2930 = vld [vmem:[%s2892 + $0x128] sm:$0xff]
    %v2931 = vld [vmem:[%s2892 + $0x130] sm:$0xff]
    %v2932 = vld [vmem:[%s2892 + $0x138] sm:$0xff]
    %v2933 = vld [vmem:[%s2892 + $0x140] sm:$0xff]
    %v2934 = vld [vmem:[%s2892 + $0x148] sm:$0xff]
    %v2935 = vld [vmem:[%s2892 + $0x150] sm:$0xff]
    %v2936 = vld [vmem:[%s2892 + $0x158] sm:$0xff]
    %v2937 = vld [vmem:[%s2892 + $0x160] sm:$0xff]
    %v2938 = vld [vmem:[%s2892 + $0x168] sm:$0xff]
    %v2939 = vld [vmem:[%s2892 + $0x170] sm:$0xff]
    %v2940 = vld [vmem:[%s2892 + $0x178] sm:$0xff]
    %v2941 = vld [vmem:[%s2892 + $0x180] sm:$0xff]
    %v2942 = vld [vmem:[%s2892 + $0x188] sm:$0xff]
    %v2943 = vld [vmem:[%s2892 + $0x190] sm:$0xff]
    %v2944 = vld [vmem:[%s2892 + $0x198] sm:$0xff]
    %v2945 = vld [vmem:[%s2892 + $0x1a0] sm:$0xff]
    %v2946 = vld [vmem:[%s2892 + $0x1a8] sm:$0xff]
    %v2947 = vld [vmem:[%s2892 + $0x1b0] sm:$0xff]
    %v2948 = vld [vmem:[%s2892 + $0x1b8] sm:$0xff]
    %v2949 = vld [vmem:[%s2892 + $0x1c0] sm:$0xff]
    %v2950 = vld [vmem:[%s2892 + $0x1c8] sm:$0xff]
    %v2951 = vld [vmem:[%s2892 + $0x1d0] sm:$0xff]
    %v2952 = vld [vmem:[%s2892 + $0x1d8] sm:$0xff]
    %v2953 = vld [vmem:[%s2892 + $0x1e0] sm:$0xff]
    %v2954 = vld [vmem:[%s2892 + $0x1e8] sm:$0xff]
    %v2955 = vld [vmem:[%s2892 + $0x1f0] sm:$0xff]
    %v2956 = vld [vmem:[%s2892 + $0x1f8] sm:$0xff]
    %2957 = vmatprep.subr.mxu0 %v2894
    %2958 = vmatpush1.msra.mxu0 %v2893
    %2959 = vmatprep.subr.mxu0 %v2898
    %2960 = vmatpush1.msra.mxu0 %v2897
    %2961 = vmatprep.subr.mxu0 %v2902
    %2962 = vmatpush1.msra.mxu0 %v2901
    %2963 = vmatprep.subr.mxu0 %v2906
    %2964 = vmatpush1.msra.mxu0 %v2905
    %2965 = vmatprep.subr.mxu0 %v2910
    %2966 = vmatpush1.msra.mxu0 %v2909
    %2967 = vmatprep.subr.mxu0 %v2914
    %2968 = vmatpush1.msra.mxu0 %v2913
    %2969 = vmatprep.subr.mxu0 %v2918
    %2970 = vmatpush1.msra.mxu0 %v2917
    %2971 = vmatprep.subr.mxu0 %v2922
    %2972 = vmatpush1.msra.mxu0 %v2921
    %2973 = vmatprep.subr.mxu0 %v2926
    %2974 = vmatpush1.msra.mxu0 %v2925
    %2975 = vmatprep.subr.mxu0 %v2930
    %2976 = vmatpush1.msra.mxu0 %v2929
    %2977 = vmatprep.subr.mxu0 %v2934
    %2978 = vmatpush1.msra.mxu0 %v2933
    %2979 = vmatprep.subr.mxu0 %v2938
    %2980 = vmatpush1.msra.mxu0 %v2937
    %2981 = vmatprep.subr.mxu0 %v2942
    %2982 = vmatpush1.msra.mxu0 %v2941
    %2983 = vmatprep.subr.mxu0 %v2946
    %2984 = vmatpush1.msra.mxu0 %v2945
    %2985 = vmatprep.subr.mxu0 %v2950
    %2986 = vmatpush1.msra.mxu0 %v2949
    %2987 = vmatprep.subr.mxu0 %v2954
    %2988 = vmatpush1.msra.mxu0 %v2953
    %2989 = vmatprep.subr.mxu0 0.0
    %2990 = vmatpush1.msra.mxu0 0.0
    %2991 = vmatprep.subr.mxu0 0.0
    %2992 = vmatpush1.msra.mxu0 0.0
    %2993 = vmatprep.subr.mxu0 0.0
    %2994 = vmatpush1.msra.mxu0 0.0
    %2995 = vmatprep.subr.mxu0 0.0
    %2996 = vmatpush1.msra.mxu0 0.0
    %2997 = vmatprep.subr.mxu0 0.0
    %2998 = vmatpush1.msra.mxu0 0.0
    %2999 = vmatprep.subr.mxu0 0.0
    %3000 = vmatpush1.msra.mxu0 0.0
    %3001 = vmatprep.subr.mxu0 0.0
    %3002 = vmatpush1.msra.mxu0 0.0
    %3003 = vmatprep.subr.mxu0 0.0
    %3004 = vmatpush1.msra.mxu0 0.0
    %3005 = vmatprep.subr.mxu0 0.0
    %3006 = vmatpush1.msra.mxu0 0.0
    %3007 = vmatprep.subr.mxu0 0.0
    %3008 = vmatpush1.msra.mxu0 0.0
    %3009 = vmatprep.subr.mxu0 0.0
    %3010 = vmatpush1.msra.mxu0 0.0
    %3011 = vmatprep.subr.mxu0 0.0
    %3012 = vmatpush1.msra.mxu0 0.0
    %3013 = vmatprep.subr.mxu0 0.0
    %3014 = vmatpush1.msra.mxu0 0.0
    %3015 = vmatprep.subr.mxu0 0.0
    %3016 = vmatpush1.msra.mxu0 0.0
    %3017 = vmatprep.subr.mxu0 0.0
    %3018 = vmatpush1.msra.mxu0 0.0
    %3019 = vmatprep.subr.mxu0 0.0
    %3020 = vmatpush1.msra.mxu0 0.0
    %3021 = vmatprep.mubr.f32.mxu0 0.0
    %3022 = vmatmul.mubr.f32.gmra.mrb[0].mxu0 %v2889
    %v3023 = vpop.f32.mrb[0].mxu0
    %v3024 = vadd.f32 0.0, %v3023
    %v3025 = vpop.f32.mrb[0].mxu0
    %v3026 = vadd.f32 0.0, %v3025
    %3027 = vdwg.mxu0
    %3028 = vmatprep.subr.mxu0 %v2896
    %3029 = vmatpush1.msra.mxu0 %v2895
    %3030 = vmatprep.subr.mxu0 %v2900
    %3031 = vmatpush1.msra.mxu0 %v2899
    %3032 = vmatprep.subr.mxu0 %v2904
    %3033 = vmatpush1.msra.mxu0 %v2903
    %3034 = vmatprep.subr.mxu0 %v2908
    %3035 = vmatpush1.msra.mxu0 %v2907
    %3036 = vmatprep.subr.mxu0 %v2912
    %3037 = vmatpush1.msra.mxu0 %v2911
    %3038 = vmatprep.subr.mxu0 %v2916
    %3039 = vmatpush1.msra.mxu0 %v2915
    %3040 = vmatprep.subr.mxu0 %v2920
    %3041 = vmatpush1.msra.mxu0 %v2919
    %3042 = vmatprep.subr.mxu0 %v2924
    %3043 = vmatpush1.msra.mxu0 %v2923
    %3044 = vmatprep.subr.mxu0 %v2928
    %3045 = vmatpush1.msra.mxu0 %v2927
    %3046 = vmatprep.subr.mxu0 %v2932
    %3047 = vmatpush1.msra.mxu0 %v2931
    %3048 = vmatprep.subr.mxu0 %v2936
    %3049 = vmatpush1.msra.mxu0 %v2935
    %3050 = vmatprep.subr.mxu0 %v2940
    %3051 = vmatpush1.msra.mxu0 %v2939
    %3052 = vmatprep.subr.mxu0 %v2944
    %3053 = vmatpush1.msra.mxu0 %v2943
    %3054 = vmatprep.subr.mxu0 %v2948
    %3055 = vmatpush1.msra.mxu0 %v2947
    %3056 = vmatprep.subr.mxu0 %v2952
    %3057 = vmatpush1.msra.mxu0 %v2951
    %3058 = vmatprep.subr.mxu0 %v2956
    %3059 = vmatpush1.msra.mxu0 %v2955
    %3060 = vmatprep.subr.mxu0 0.0
    %3061 = vmatpush1.msra.mxu0 0.0
    %3062 = vmatprep.subr.mxu0 0.0
    %3063 = vmatpush1.msra.mxu0 0.0
    %3064 = vmatprep.subr.mxu0 0.0
    %3065 = vmatpush1.msra.mxu0 0.0
    %3066 = vmatprep.subr.mxu0 0.0
    %3067 = vmatpush1.msra.mxu0 0.0
    %3068 = vmatprep.subr.mxu0 0.0
    %3069 = vmatpush1.msra.mxu0 0.0
    %3070 = vmatprep.subr.mxu0 0.0
    %3071 = vmatpush1.msra.mxu0 0.0
    %3072 = vmatprep.subr.mxu0 0.0
    %3073 = vmatpush1.msra.mxu0 0.0
    %3074 = vmatprep.subr.mxu0 0.0
    %3075 = vmatpush1.msra.mxu0 0.0
    %3076 = vmatprep.subr.mxu0 0.0
    %3077 = vmatpush1.msra.mxu0 0.0
    %3078 = vmatprep.subr.mxu0 0.0
    %3079 = vmatpush1.msra.mxu0 0.0
    %3080 = vmatprep.subr.mxu0 0.0
    %3081 = vmatpush1.msra.mxu0 0.0
    %3082 = vmatprep.subr.mxu0 0.0
    %3083 = vmatpush1.msra.mxu0 0.0
    %3084 = vmatprep.subr.mxu0 0.0
    %3085 = vmatpush1.msra.mxu0 0.0
    %3086 = vmatprep.subr.mxu0 0.0
    %3087 = vmatpush1.msra.mxu0 0.0
    %3088 = vmatprep.subr.mxu0 0.0
    %3089 = vmatpush1.msra.mxu0 0.0
    %3090 = vmatprep.subr.mxu0 0.0
    %3091 = vmatpush1.msra.mxu0 0.0
    %3092 = vmatprep.mubr.f32.mxu0 0.0
    %3093 = vmatmul.mubr.f32.gmra.mrb[0].mxu0 %v2889
    %v3094 = vpop.f32.mrb[0].mxu0
    %v3095 = vadd.f32 0.0, %v3094
    %v3096 = vpop.f32.mrb[0].mxu0
    %v3097 = vadd.f32 0.0, %v3096
    %3098 = vdwg.mxu0
    %v3099 = vadd.f32 %v2813, %v3024
    %v3100 = vadd.f32 %v2814, %v3026
    %v3101 = vadd.f32 %v2815, %v3095
    %v3102 = vadd.f32 %v2816, %v3097
    %s3103 = scalar_lea.vmem [#allocation10], 20
    %v3104 = vld [vmem:[%s3103] sm:$0xf]
    %v3106 = vsel %vm1683, %v3104, 0
    %3108 = vmatprep.subr.mxu0 0.0
    %3109 = vmatpush1.msra.mxu0 %v1681
    %3110 = vmatprep.subr.mxu0 0.0
    %3111 = vmatpush1.msra.mxu0 0.0
    %3112 = vmatprep.subr.mxu0 0.0
    %3113 = vmatpush1.msra.mxu0 0.0
    %3114 = vmatprep.subr.mxu0 0.0
    %3115 = vmatpush1.msra.mxu0 0.0
    %3116 = vmatprep.subr.mxu0 0.0
    %3117 = vmatpush1.msra.mxu0 0.0
    %3118 = vmatprep.subr.mxu0 0.0
    %3119 = vmatpush1.msra.mxu0 0.0
    %3120 = vmatprep.subr.mxu0 0.0
    %3121 = vmatpush1.msra.mxu0 0.0
    %3122 = vmatprep.subr.mxu0 0.0
    %3123 = vmatpush1.msra.mxu0 0.0
    %3124 = vmatprep.subr.mxu0 0.0
    %3125 = vmatpush1.msra.mxu0 0.0
    %3126 = vmatprep.subr.mxu0 0.0
    %3127 = vmatpush1.msra.mxu0 0.0
    %3128 = vmatprep.subr.mxu0 0.0
    %3129 = vmatpush1.msra.mxu0 0.0
    %3130 = vmatprep.subr.mxu0 0.0
    %3131 = vmatpush1.msra.mxu0 0.0
    %3132 = vmatprep.subr.mxu0 0.0
    %3133 = vmatpush1.msra.mxu0 0.0
    %3134 = vmatprep.subr.mxu0 0.0
    %3135 = vmatpush1.msra.mxu0 0.0
    %3136 = vmatprep.subr.mxu0 0.0
    %3137 = vmatpush1.msra.mxu0 0.0
    %3138 = vmatprep.subr.mxu0 0.0
    %3139 = vmatpush1.msra.mxu0 0.0
    %3140 = vmatprep.subr.mxu0 0.0
    %3141 = vmatpush1.msra.mxu0 0.0
    %3142 = vmatprep.subr.mxu0 0.0
    %3143 = vmatpush1.msra.mxu0 0.0
    %3144 = vmatprep.subr.mxu0 0.0
    %3145 = vmatpush1.msra.mxu0 0.0
    %3146 = vmatprep.subr.mxu0 0.0
    %3147 = vmatpush1.msra.mxu0 0.0
    %3148 = vmatprep.subr.mxu0 0.0
    %3149 = vmatpush1.msra.mxu0 0.0
    %3150 = vmatprep.subr.mxu0 0.0
    %3151 = vmatpush1.msra.mxu0 0.0
    %3152 = vmatprep.subr.mxu0 0.0
    %3153 = vmatpush1.msra.mxu0 0.0
    %3154 = vmatprep.subr.mxu0 0.0
    %3155 = vmatpush1.msra.mxu0 0.0
    %3156 = vmatprep.subr.mxu0 0.0
    %3157 = vmatpush1.msra.mxu0 0.0
    %3158 = vmatprep.subr.mxu0 0.0
    %3159 = vmatpush1.msra.mxu0 0.0
    %3160 = vmatprep.subr.mxu0 0.0
    %3161 = vmatpush1.msra.mxu0 0.0
    %3162 = vmatprep.subr.mxu0 0.0
    %3163 = vmatpush1.msra.mxu0 0.0
    %3164 = vmatprep.subr.mxu0 0.0
    %3165 = vmatpush1.msra.mxu0 0.0
    %3166 = vmatprep.subr.mxu0 0.0
    %3167 = vmatpush1.msra.mxu0 0.0
    %3168 = vmatprep.subr.mxu0 0.0
    %3169 = vmatpush1.msra.mxu0 0.0
    %3170 = vmatprep.subr.mxu0 0.0
    %3171 = vmatpush1.msra.mxu0 0.0
    %3172 = vmatprep.mubr.f32.mxu0 0.0
    %3173 = vmatmul.mubr.f32.gmra.mrb[0].mxu0 %v3106
    %v3174 = vpop.f32.mrb[0].mxu0
    %v3175 = vadd.f32 0.0, %v3174
    %v3176 = vpop.f32.mrb[0].mxu0
    %3177 = vdwg.mxu0
    %s3178 = scalar_lea.vmem [#allocation11], 2560
    %v3179 = vld [vmem:[%s3178] sm:$0xff]
    %v3180 = vld [vmem:[%s3178 + $0x8] sm:$0xff]
    %v3181 = vld [vmem:[%s3178 + $0x10] sm:$0xff]
    %v3182 = vld [vmem:[%s3178 + $0x18] sm:$0xff]
    %v3183 = vld [vmem:[%s3178 + $0x20] sm:$0xff]
    %v3184 = vld [vmem:[%s3178 + $0x28] sm:$0xff]
    %v3185 = vld [vmem:[%s3178 + $0x30] sm:$0xff]
    %v3186 = vld [vmem:[%s3178 + $0x38] sm:$0xff]
    %v3187 = vld [vmem:[%s3178 + $0x40] sm:$0xff]
    %v3188 = vld [vmem:[%s3178 + $0x48] sm:$0xff]
    %v3189 = vld [vmem:[%s3178 + $0x50] sm:$0xff]
    %v3190 = vld [vmem:[%s3178 + $0x58] sm:$0xff]
    %v3191 = vld [vmem:[%s3178 + $0x60] sm:$0xff]
    %v3192 = vld [vmem:[%s3178 + $0x68] sm:$0xff]
    %v3193 = vld [vmem:[%s3178 + $0x70] sm:$0xff]
    %v3194 = vld [vmem:[%s3178 + $0x78] sm:$0xff]
    %v3195 = vld [vmem:[%s3178 + $0x80] sm:$0xff]
    %v3196 = vld [vmem:[%s3178 + $0x88] sm:$0xff]
    %v3197 = vld [vmem:[%s3178 + $0x90] sm:$0xff]
    %v3198 = vld [vmem:[%s3178 + $0x98] sm:$0xff]
    %v3199 = vld [vmem:[%s3178 + $0xa0] sm:$0xff]
    %v3200 = vld [vmem:[%s3178 + $0xa8] sm:$0xff]
    %v3201 = vld [vmem:[%s3178 + $0xb0] sm:$0xff]
    %v3202 = vld [vmem:[%s3178 + $0xb8] sm:$0xff]
    %v3203 = vld [vmem:[%s3178 + $0xc0] sm:$0xff]
    %v3204 = vld [vmem:[%s3178 + $0xc8] sm:$0xff]
    %v3205 = vld [vmem:[%s3178 + $0xd0] sm:$0xff]
    %v3206 = vld [vmem:[%s3178 + $0xd8] sm:$0xff]
    %v3207 = vld [vmem:[%s3178 + $0xe0] sm:$0xff]
    %v3208 = vld [vmem:[%s3178 + $0xe8] sm:$0xff]
    %v3209 = vld [vmem:[%s3178 + $0xf0] sm:$0xff]
    %v3210 = vld [vmem:[%s3178 + $0xf8] sm:$0xff]
    %v3211 = vld [vmem:[%s3178 + $0x100] sm:$0xff]
    %v3212 = vld [vmem:[%s3178 + $0x108] sm:$0xff]
    %v3213 = vld [vmem:[%s3178 + $0x110] sm:$0xff]
    %v3214 = vld [vmem:[%s3178 + $0x118] sm:$0xff]
    %v3215 = vld [vmem:[%s3178 + $0x120] sm:$0xff]
    %v3216 = vld [vmem:[%s3178 + $0x128] sm:$0xff]
    %v3217 = vld [vmem:[%s3178 + $0x130] sm:$0xff]
    %v3218 = vld [vmem:[%s3178 + $0x138] sm:$0xff]
    %v3219 = vld [vmem:[%s3178 + $0x140] sm:$0xff]
    %v3220 = vld [vmem:[%s3178 + $0x148] sm:$0xff]
    %v3221 = vld [vmem:[%s3178 + $0x150] sm:$0xff]
    %v3222 = vld [vmem:[%s3178 + $0x158] sm:$0xff]
    %v3223 = vld [vmem:[%s3178 + $0x160] sm:$0xff]
    %v3224 = vld [vmem:[%s3178 + $0x168] sm:$0xff]
    %v3225 = vld [vmem:[%s3178 + $0x170] sm:$0xff]
    %v3226 = vld [vmem:[%s3178 + $0x178] sm:$0xff]
    %v3227 = vld [vmem:[%s3178 + $0x180] sm:$0xff]
    %v3228 = vld [vmem:[%s3178 + $0x188] sm:$0xff]
    %v3229 = vld [vmem:[%s3178 + $0x190] sm:$0xff]
    %v3230 = vld [vmem:[%s3178 + $0x198] sm:$0xff]
    %v3231 = vld [vmem:[%s3178 + $0x1a0] sm:$0xff]
    %v3232 = vld [vmem:[%s3178 + $0x1a8] sm:$0xff]
    %v3233 = vld [vmem:[%s3178 + $0x1b0] sm:$0xff]
    %v3234 = vld [vmem:[%s3178 + $0x1b8] sm:$0xff]
    %v3235 = vld [vmem:[%s3178 + $0x1c0] sm:$0xff]
    %v3236 = vld [vmem:[%s3178 + $0x1c8] sm:$0xff]
    %v3237 = vld [vmem:[%s3178 + $0x1d0] sm:$0xff]
    %v3238 = vld [vmem:[%s3178 + $0x1d8] sm:$0xff]
    %v3239 = vld [vmem:[%s3178 + $0x1e0] sm:$0xff]
    %v3240 = vld [vmem:[%s3178 + $0x1e8] sm:$0xff]
    %v3241 = vld [vmem:[%s3178 + $0x1f0] sm:$0xff]
    %v3242 = vld [vmem:[%s3178 + $0x1f8] sm:$0xff]
    %3243 = vmatprep.subr.mxu0 %v3180
    %3244 = vmatpush1.msra.mxu0 %v3179
    %3245 = vmatprep.subr.mxu0 %v3184
    %3246 = vmatpush1.msra.mxu0 %v3183
    %3247 = vmatprep.subr.mxu0 %v3188
    %3248 = vmatpush1.msra.mxu0 %v3187
    %3249 = vmatprep.subr.mxu0 %v3192
    %3250 = vmatpush1.msra.mxu0 %v3191
    %3251 = vmatprep.subr.mxu0 %v3196
    %3252 = vmatpush1.msra.mxu0 %v3195
    %3253 = vmatprep.subr.mxu0 %v3200
    %3254 = vmatpush1.msra.mxu0 %v3199
    %3255 = vmatprep.subr.mxu0 %v3204
    %3256 = vmatpush1.msra.mxu0 %v3203
    %3257 = vmatprep.subr.mxu0 %v3208
    %3258 = vmatpush1.msra.mxu0 %v3207
    %3259 = vmatprep.subr.mxu0 %v3212
    %3260 = vmatpush1.msra.mxu0 %v3211
    %3261 = vmatprep.subr.mxu0 %v3216
    %3262 = vmatpush1.msra.mxu0 %v3215
    %3263 = vmatprep.subr.mxu0 %v3220
    %3264 = vmatpush1.msra.mxu0 %v3219
    %3265 = vmatprep.subr.mxu0 %v3224
    %3266 = vmatpush1.msra.mxu0 %v3223
    %3267 = vmatprep.subr.mxu0 %v3228
    %3268 = vmatpush1.msra.mxu0 %v3227
    %3269 = vmatprep.subr.mxu0 %v3232
    %3270 = vmatpush1.msra.mxu0 %v3231
    %3271 = vmatprep.subr.mxu0 %v3236
    %3272 = vmatpush1.msra.mxu0 %v3235
    %3273 = vmatprep.subr.mxu0 %v3240
    %3274 = vmatpush1.msra.mxu0 %v3239
    %3275 = vmatprep.subr.mxu0 0.0
    %3276 = vmatpush1.msra.mxu0 0.0
    %3277 = vmatprep.subr.mxu0 0.0
    %3278 = vmatpush1.msra.mxu0 0.0
    %3279 = vmatprep.subr.mxu0 0.0
    %3280 = vmatpush1.msra.mxu0 0.0
    %3281 = vmatprep.subr.mxu0 0.0
    %3282 = vmatpush1.msra.mxu0 0.0
    %3283 = vmatprep.subr.mxu0 0.0
    %3284 = vmatpush1.msra.mxu0 0.0
    %3285 = vmatprep.subr.mxu0 0.0
    %3286 = vmatpush1.msra.mxu0 0.0
    %3287 = vmatprep.subr.mxu0 0.0
    %3288 = vmatpush1.msra.mxu0 0.0
    %3289 = vmatprep.subr.mxu0 0.0
    %3290 = vmatpush1.msra.mxu0 0.0
    %3291 = vmatprep.subr.mxu0 0.0
    %3292 = vmatpush1.msra.mxu0 0.0
    %3293 = vmatprep.subr.mxu0 0.0
    %3294 = vmatpush1.msra.mxu0 0.0
    %3295 = vmatprep.subr.mxu0 0.0
    %3296 = vmatpush1.msra.mxu0 0.0
    %3297 = vmatprep.subr.mxu0 0.0
    %3298 = vmatpush1.msra.mxu0 0.0
    %3299 = vmatprep.subr.mxu0 0.0
    %3300 = vmatpush1.msra.mxu0 0.0
    %3301 = vmatprep.subr.mxu0 0.0
    %3302 = vmatpush1.msra.mxu0 0.0
    %3303 = vmatprep.subr.mxu0 0.0
    %3304 = vmatpush1.msra.mxu0 0.0
    %3305 = vmatprep.subr.mxu0 0.0
    %3306 = vmatpush1.msra.mxu0 0.0
    %3307 = vmatprep.mubr.f32.mxu0 0.0
    %3308 = vmatmul.mubr.f32.gmra.mrb[0].mxu0 %v3175
    %v3309 = vpop.f32.mrb[0].mxu0
    %v3310 = vadd.f32 0.0, %v3309
    %v3311 = vpop.f32.mrb[0].mxu0
    %v3312 = vadd.f32 0.0, %v3311
    %3313 = vdwg.mxu0
    %3314 = vmatprep.subr.mxu0 %v3182
    %3315 = vmatpush1.msra.mxu0 %v3181
    %3316 = vmatprep.subr.mxu0 %v3186
    %3317 = vmatpush1.msra.mxu0 %v3185
    %3318 = vmatprep.subr.mxu0 %v3190
    %3319 = vmatpush1.msra.mxu0 %v3189
    %3320 = vmatprep.subr.mxu0 %v3194
    %3321 = vmatpush1.msra.mxu0 %v3193
    %3322 = vmatprep.subr.mxu0 %v3198
    %3323 = vmatpush1.msra.mxu0 %v3197
    %3324 = vmatprep.subr.mxu0 %v3202
    %3325 = vmatpush1.msra.mxu0 %v3201
    %3326 = vmatprep.subr.mxu0 %v3206
    %3327 = vmatpush1.msra.mxu0 %v3205
    %3328 = vmatprep.subr.mxu0 %v3210
    %3329 = vmatpush1.msra.mxu0 %v3209
    %3330 = vmatprep.subr.mxu0 %v3214
    %3331 = vmatpush1.msra.mxu0 %v3213
    %3332 = vmatprep.subr.mxu0 %v3218
    %3333 = vmatpush1.msra.mxu0 %v3217
    %3334 = vmatprep.subr.mxu0 %v3222
    %3335 = vmatpush1.msra.mxu0 %v3221
    %3336 = vmatprep.subr.mxu0 %v3226
    %3337 = vmatpush1.msra.mxu0 %v3225
    %3338 = vmatprep.subr.mxu0 %v3230
    %3339 = vmatpush1.msra.mxu0 %v3229
    %3340 = vmatprep.subr.mxu0 %v3234
    %3341 = vmatpush1.msra.mxu0 %v3233
    %3342 = vmatprep.subr.mxu0 %v3238
    %3343 = vmatpush1.msra.mxu0 %v3237
    %3344 = vmatprep.subr.mxu0 %v3242
    %3345 = vmatpush1.msra.mxu0 %v3241
    %3346 = vmatprep.subr.mxu0 0.0
    %3347 = vmatpush1.msra.mxu0 0.0
    %3348 = vmatprep.subr.mxu0 0.0
    %3349 = vmatpush1.msra.mxu0 0.0
    %3350 = vmatprep.subr.mxu0 0.0
    %3351 = vmatpush1.msra.mxu0 0.0
    %3352 = vmatprep.subr.mxu0 0.0
    %3353 = vmatpush1.msra.mxu0 0.0
    %3354 = vmatprep.subr.mxu0 0.0
    %3355 = vmatpush1.msra.mxu0 0.0
    %3356 = vmatprep.subr.mxu0 0.0
    %3357 = vmatpush1.msra.mxu0 0.0
    %3358 = vmatprep.subr.mxu0 0.0
    %3359 = vmatpush1.msra.mxu0 0.0
    %3360 = vmatprep.subr.mxu0 0.0
    %3361 = vmatpush1.msra.mxu0 0.0
    %3362 = vmatprep.subr.mxu0 0.0
    %3363 = vmatpush1.msra.mxu0 0.0
    %3364 = vmatprep.subr.mxu0 0.0
    %3365 = vmatpush1.msra.mxu0 0.0
    %3366 = vmatprep.subr.mxu0 0.0
    %3367 = vmatpush1.msra.mxu0 0.0
    %3368 = vmatprep.subr.mxu0 0.0
    %3369 = vmatpush1.msra.mxu0 0.0
    %3370 = vmatprep.subr.mxu0 0.0
    %3371 = vmatpush1.msra.mxu0 0.0
    %3372 = vmatprep.subr.mxu0 0.0
    %3373 = vmatpush1.msra.mxu0 0.0
    %3374 = vmatprep.subr.mxu0 0.0
    %3375 = vmatpush1.msra.mxu0 0.0
    %3376 = vmatprep.subr.mxu0 0.0
    %3377 = vmatpush1.msra.mxu0 0.0
    %3378 = vmatprep.mubr.f32.mxu0 0.0
    %3379 = vmatmul.mubr.f32.gmra.mrb[0].mxu0 %v3175
    %v3380 = vpop.f32.mrb[0].mxu0
    %v3381 = vadd.f32 0.0, %v3380
    %v3382 = vpop.f32.mrb[0].mxu0
    %v3383 = vadd.f32 0.0, %v3382
    %3384 = vdwg.mxu0
    %v3385 = vadd.f32 %v3099, %v3310
    %v3386 = vadd.f32 %v3100, %v3312
    %v3387 = vadd.f32 %v3101, %v3381
    %v3388 = vadd.f32 %v3102, %v3383
    %s3389 = scalar_lea.vmem [#allocation10], 24
    %v3390 = vld [vmem:[%s3389] sm:$0xf]
    %v3392 = vsel %vm1683, %v3390, 0
    %3394 = vmatprep.subr.mxu0 0.0
    %3395 = vmatpush1.msra.mxu0 %v1681
    %3396 = vmatprep.subr.mxu0 0.0
    %3397 = vmatpush1.msra.mxu0 0.0
    %3398 = vmatprep.subr.mxu0 0.0
    %3399 = vmatpush1.msra.mxu0 0.0
    %3400 = vmatprep.subr.mxu0 0.0
    %3401 = vmatpush1.msra.mxu0 0.0
    %3402 = vmatprep.subr.mxu0 0.0
    %3403 = vmatpush1.msra.mxu0 0.0
    %3404 = vmatprep.subr.mxu0 0.0
    %3405 = vmatpush1.msra.mxu0 0.0
    %3406 = vmatprep.subr.mxu0 0.0
    %3407 = vmatpush1.msra.mxu0 0.0
    %3408 = vmatprep.subr.mxu0 0.0
    %3409 = vmatpush1.msra.mxu0 0.0
    %3410 = vmatprep.subr.mxu0 0.0
    %3411 = vmatpush1.msra.mxu0 0.0
    %3412 = vmatprep.subr.mxu0 0.0
    %3413 = vmatpush1.msra.mxu0 0.0
    %3414 = vmatprep.subr.mxu0 0.0
    %3415 = vmatpush1.msra.mxu0 0.0
    %3416 = vmatprep.subr.mxu0 0.0
    %3417 = vmatpush1.msra.mxu0 0.0
    %3418 = vmatprep.subr.mxu0 0.0
    %3419 = vmatpush1.msra.mxu0 0.0
    %3420 = vmatprep.subr.mxu0 0.0
    %3421 = vmatpush1.msra.mxu0 0.0
    %3422 = vmatprep.subr.mxu0 0.0
    %3423 = vmatpush1.msra.mxu0 0.0
    %3424 = vmatprep.subr.mxu0 0.0
    %3425 = vmatpush1.msra.mxu0 0.0
    %3426 = vmatprep.subr.mxu0 0.0
    %3427 = vmatpush1.msra.mxu0 0.0
    %3428 = vmatprep.subr.mxu0 0.0
    %3429 = vmatpush1.msra.mxu0 0.0
    %3430 = vmatprep.subr.mxu0 0.0
    %3431 = vmatpush1.msra.mxu0 0.0
    %3432 = vmatprep.subr.mxu0 0.0
    %3433 = vmatpush1.msra.mxu0 0.0
    %3434 = vmatprep.subr.mxu0 0.0
    %3435 = vmatpush1.msra.mxu0 0.0
    %3436 = vmatprep.subr.mxu0 0.0
    %3437 = vmatpush1.msra.mxu0 0.0
    %3438 = vmatprep.subr.mxu0 0.0
    %3439 = vmatpush1.msra.mxu0 0.0
    %3440 = vmatprep.subr.mxu0 0.0
    %3441 = vmatpush1.msra.mxu0 0.0
    %3442 = vmatprep.subr.mxu0 0.0
    %3443 = vmatpush1.msra.mxu0 0.0
    %3444 = vmatprep.subr.mxu0 0.0
    %3445 = vmatpush1.msra.mxu0 0.0
    %3446 = vmatprep.subr.mxu0 0.0
    %3447 = vmatpush1.msra.mxu0 0.0
    %3448 = vmatprep.subr.mxu0 0.0
    %3449 = vmatpush1.msra.mxu0 0.0
    %3450 = vmatprep.subr.mxu0 0.0
    %3451 = vmatpush1.msra.mxu0 0.0
    %3452 = vmatprep.subr.mxu0 0.0
    %3453 = vmatpush1.msra.mxu0 0.0
    %3454 = vmatprep.subr.mxu0 0.0
    %3455 = vmatpush1.msra.mxu0 0.0
    %3456 = vmatprep.subr.mxu0 0.0
    %3457 = vmatpush1.msra.mxu0 0.0
    %3458 = vmatprep.mubr.f32.mxu0 0.0
    %3459 = vmatmul.mubr.f32.gmra.mrb[0].mxu0 %v3392
    %v3460 = vpop.f32.mrb[0].mxu0
    %v3461 = vadd.f32 0.0, %v3460
    %v3462 = vpop.f32.mrb[0].mxu0
    %3463 = vdwg.mxu0
    %s3464 = scalar_lea.vmem [#allocation11], 3072
    %v3465 = vld [vmem:[%s3464] sm:$0xff]
    %v3466 = vld [vmem:[%s3464 + $0x8] sm:$0xff]
    %v3467 = vld [vmem:[%s3464 + $0x10] sm:$0xff]
    %v3468 = vld [vmem:[%s3464 + $0x18] sm:$0xff]
    %v3469 = vld [vmem:[%s3464 + $0x20] sm:$0xff]
    %v3470 = vld [vmem:[%s3464 + $0x28] sm:$0xff]
    %v3471 = vld [vmem:[%s3464 + $0x30] sm:$0xff]
    %v3472 = vld [vmem:[%s3464 + $0x38] sm:$0xff]
    %v3473 = vld [vmem:[%s3464 + $0x40] sm:$0xff]
    %v3474 = vld [vmem:[%s3464 + $0x48] sm:$0xff]
    %v3475 = vld [vmem:[%s3464 + $0x50] sm:$0xff]
    %v3476 = vld [vmem:[%s3464 + $0x58] sm:$0xff]
    %v3477 = vld [vmem:[%s3464 + $0x60] sm:$0xff]
    %v3478 = vld [vmem:[%s3464 + $0x68] sm:$0xff]
    %v3479 = vld [vmem:[%s3464 + $0x70] sm:$0xff]
    %v3480 = vld [vmem:[%s3464 + $0x78] sm:$0xff]
    %v3481 = vld [vmem:[%s3464 + $0x80] sm:$0xff]
    %v3482 = vld [vmem:[%s3464 + $0x88] sm:$0xff]
    %v3483 = vld [vmem:[%s3464 + $0x90] sm:$0xff]
    %v3484 = vld [vmem:[%s3464 + $0x98] sm:$0xff]
    %v3485 = vld [vmem:[%s3464 + $0xa0] sm:$0xff]
    %v3486 = vld [vmem:[%s3464 + $0xa8] sm:$0xff]
    %v3487 = vld [vmem:[%s3464 + $0xb0] sm:$0xff]
    %v3488 = vld [vmem:[%s3464 + $0xb8] sm:$0xff]
    %v3489 = vld [vmem:[%s3464 + $0xc0] sm:$0xff]
    %v3490 = vld [vmem:[%s3464 + $0xc8] sm:$0xff]
    %v3491 = vld [vmem:[%s3464 + $0xd0] sm:$0xff]
    %v3492 = vld [vmem:[%s3464 + $0xd8] sm:$0xff]
    %v3493 = vld [vmem:[%s3464 + $0xe0] sm:$0xff]
    %v3494 = vld [vmem:[%s3464 + $0xe8] sm:$0xff]
    %v3495 = vld [vmem:[%s3464 + $0xf0] sm:$0xff]
    %v3496 = vld [vmem:[%s3464 + $0xf8] sm:$0xff]
    %v3497 = vld [vmem:[%s3464 + $0x100] sm:$0xff]
    %v3498 = vld [vmem:[%s3464 + $0x108] sm:$0xff]
    %v3499 = vld [vmem:[%s3464 + $0x110] sm:$0xff]
    %v3500 = vld [vmem:[%s3464 + $0x118] sm:$0xff]
    %v3501 = vld [vmem:[%s3464 + $0x120] sm:$0xff]
    %v3502 = vld [vmem:[%s3464 + $0x128] sm:$0xff]
    %v3503 = vld [vmem:[%s3464 + $0x130] sm:$0xff]
    %v3504 = vld [vmem:[%s3464 + $0x138] sm:$0xff]
    %v3505 = vld [vmem:[%s3464 + $0x140] sm:$0xff]
    %v3506 = vld [vmem:[%s3464 + $0x148] sm:$0xff]
    %v3507 = vld [vmem:[%s3464 + $0x150] sm:$0xff]
    %v3508 = vld [vmem:[%s3464 + $0x158] sm:$0xff]
    %v3509 = vld [vmem:[%s3464 + $0x160] sm:$0xff]
    %v3510 = vld [vmem:[%s3464 + $0x168] sm:$0xff]
    %v3511 = vld [vmem:[%s3464 + $0x170] sm:$0xff]
    %v3512 = vld [vmem:[%s3464 + $0x178] sm:$0xff]
    %v3513 = vld [vmem:[%s3464 + $0x180] sm:$0xff]
    %v3514 = vld [vmem:[%s3464 + $0x188] sm:$0xff]
    %v3515 = vld [vmem:[%s3464 + $0x190] sm:$0xff]
    %v3516 = vld [vmem:[%s3464 + $0x198] sm:$0xff]
    %v3517 = vld [vmem:[%s3464 + $0x1a0] sm:$0xff]
    %v3518 = vld [vmem:[%s3464 + $0x1a8] sm:$0xff]
    %v3519 = vld [vmem:[%s3464 + $0x1b0] sm:$0xff]
    %v3520 = vld [vmem:[%s3464 + $0x1b8] sm:$0xff]
    %v3521 = vld [vmem:[%s3464 + $0x1c0] sm:$0xff]
    %v3522 = vld [vmem:[%s3464 + $0x1c8] sm:$0xff]
    %v3523 = vld [vmem:[%s3464 + $0x1d0] sm:$0xff]
    %v3524 = vld [vmem:[%s3464 + $0x1d8] sm:$0xff]
    %v3525 = vld [vmem:[%s3464 + $0x1e0] sm:$0xff]
    %v3526 = vld [vmem:[%s3464 + $0x1e8] sm:$0xff]
    %v3527 = vld [vmem:[%s3464 + $0x1f0] sm:$0xff]
    %v3528 = vld [vmem:[%s3464 + $0x1f8] sm:$0xff]
    %3529 = vmatprep.subr.mxu0 %v3466
    %3530 = vmatpush1.msra.mxu0 %v3465
    %3531 = vmatprep.subr.mxu0 %v3470
    %3532 = vmatpush1.msra.mxu0 %v3469
    %3533 = vmatprep.subr.mxu0 %v3474
    %3534 = vmatpush1.msra.mxu0 %v3473
    %3535 = vmatprep.subr.mxu0 %v3478
    %3536 = vmatpush1.msra.mxu0 %v3477
    %3537 = vmatprep.subr.mxu0 %v3482
    %3538 = vmatpush1.msra.mxu0 %v3481
    %3539 = vmatprep.subr.mxu0 %v3486
    %3540 = vmatpush1.msra.mxu0 %v3485
    %3541 = vmatprep.subr.mxu0 %v3490
    %3542 = vmatpush1.msra.mxu0 %v3489
    %3543 = vmatprep.subr.mxu0 %v3494
    %3544 = vmatpush1.msra.mxu0 %v3493
    %3545 = vmatprep.subr.mxu0 %v3498
    %3546 = vmatpush1.msra.mxu0 %v3497
    %3547 = vmatprep.subr.mxu0 %v3502
    %3548 = vmatpush1.msra.mxu0 %v3501
    %3549 = vmatprep.subr.mxu0 %v3506
    %3550 = vmatpush1.msra.mxu0 %v3505
    %3551 = vmatprep.subr.mxu0 %v3510
    %3552 = vmatpush1.msra.mxu0 %v3509
    %3553 = vmatprep.subr.mxu0 %v3514
    %3554 = vmatpush1.msra.mxu0 %v3513
    %3555 = vmatprep.subr.mxu0 %v3518
    %3556 = vmatpush1.msra.mxu0 %v3517
    %3557 = vmatprep.subr.mxu0 %v3522
    %3558 = vmatpush1.msra.mxu0 %v3521
    %3559 = vmatprep.subr.mxu0 %v3526
    %3560 = vmatpush1.msra.mxu0 %v3525
    %3561 = vmatprep.subr.mxu0 0.0
    %3562 = vmatpush1.msra.mxu0 0.0
    %3563 = vmatprep.subr.mxu0 0.0
    %3564 = vmatpush1.msra.mxu0 0.0
    %3565 = vmatprep.subr.mxu0 0.0
    %3566 = vmatpush1.msra.mxu0 0.0
    %3567 = vmatprep.subr.mxu0 0.0
    %3568 = vmatpush1.msra.mxu0 0.0
    %3569 = vmatprep.subr.mxu0 0.0
    %3570 = vmatpush1.msra.mxu0 0.0
    %3571 = vmatprep.subr.mxu0 0.0
    %3572 = vmatpush1.msra.mxu0 0.0
    %3573 = vmatprep.subr.mxu0 0.0
    %3574 = vmatpush1.msra.mxu0 0.0
    %3575 = vmatprep.subr.mxu0 0.0
    %3576 = vmatpush1.msra.mxu0 0.0
    %3577 = vmatprep.subr.mxu0 0.0
    %3578 = vmatpush1.msra.mxu0 0.0
    %3579 = vmatprep.subr.mxu0 0.0
    %3580 = vmatpush1.msra.mxu0 0.0
    %3581 = vmatprep.subr.mxu0 0.0
    %3582 = vmatpush1.msra.mxu0 0.0
    %3583 = vmatprep.subr.mxu0 0.0
    %3584 = vmatpush1.msra.mxu0 0.0
    %3585 = vmatprep.subr.mxu0 0.0
    %3586 = vmatpush1.msra.mxu0 0.0
    %3587 = vmatprep.subr.mxu0 0.0
    %3588 = vmatpush1.msra.mxu0 0.0
    %3589 = vmatprep.subr.mxu0 0.0
    %3590 = vmatpush1.msra.mxu0 0.0
    %3591 = vmatprep.subr.mxu0 0.0
    %3592 = vmatpush1.msra.mxu0 0.0
    %3593 = vmatprep.mubr.f32.mxu0 0.0
    %3594 = vmatmul.mubr.f32.gmra.mrb[0].mxu0 %v3461
    %v3595 = vpop.f32.mrb[0].mxu0
    %v3596 = vadd.f32 0.0, %v3595
    %v3597 = vpop.f32.mrb[0].mxu0
    %v3598 = vadd.f32 0.0, %v3597
    %3599 = vdwg.mxu0
    %3600 = vmatprep.subr.mxu0 %v3468
    %3601 = vmatpush1.msra.mxu0 %v3467
    %3602 = vmatprep.subr.mxu0 %v3472
    %3603 = vmatpush1.msra.mxu0 %v3471
    %3604 = vmatprep.subr.mxu0 %v3476
    %3605 = vmatpush1.msra.mxu0 %v3475
    %3606 = vmatprep.subr.mxu0 %v3480
    %3607 = vmatpush1.msra.mxu0 %v3479
    %3608 = vmatprep.subr.mxu0 %v3484
    %3609 = vmatpush1.msra.mxu0 %v3483
    %3610 = vmatprep.subr.mxu0 %v3488
    %3611 = vmatpush1.msra.mxu0 %v3487
    %3612 = vmatprep.subr.mxu0 %v3492
    %3613 = vmatpush1.msra.mxu0 %v3491
    %3614 = vmatprep.subr.mxu0 %v3496
    %3615 = vmatpush1.msra.mxu0 %v3495
    %3616 = vmatprep.subr.mxu0 %v3500
    %3617 = vmatpush1.msra.mxu0 %v3499
    %3618 = vmatprep.subr.mxu0 %v3504
    %3619 = vmatpush1.msra.mxu0 %v3503
    %3620 = vmatprep.subr.mxu0 %v3508
    %3621 = vmatpush1.msra.mxu0 %v3507
    %3622 = vmatprep.subr.mxu0 %v3512
    %3623 = vmatpush1.msra.mxu0 %v3511
    %3624 = vmatprep.subr.mxu0 %v3516
    %3625 = vmatpush1.msra.mxu0 %v3515
    %3626 = vmatprep.subr.mxu0 %v3520
    %3627 = vmatpush1.msra.mxu0 %v3519
    %3628 = vmatprep.subr.mxu0 %v3524
    %3629 = vmatpush1.msra.mxu0 %v3523
    %3630 = vmatprep.subr.mxu0 %v3528
    %3631 = vmatpush1.msra.mxu0 %v3527
    %3632 = vmatprep.subr.mxu0 0.0
    %3633 = vmatpush1.msra.mxu0 0.0
    %3634 = vmatprep.subr.mxu0 0.0
    %3635 = vmatpush1.msra.mxu0 0.0
    %3636 = vmatprep.subr.mxu0 0.0
    %3637 = vmatpush1.msra.mxu0 0.0
    %3638 = vmatprep.subr.mxu0 0.0
    %3639 = vmatpush1.msra.mxu0 0.0
    %3640 = vmatprep.subr.mxu0 0.0
    %3641 = vmatpush1.msra.mxu0 0.0
    %3642 = vmatprep.subr.mxu0 0.0
    %3643 = vmatpush1.msra.mxu0 0.0
    %3644 = vmatprep.subr.mxu0 0.0
    %3645 = vmatpush1.msra.mxu0 0.0
    %3646 = vmatprep.subr.mxu0 0.0
    %3647 = vmatpush1.msra.mxu0 0.0
    %3648 = vmatprep.subr.mxu0 0.0
    %3649 = vmatpush1.msra.mxu0 0.0
    %3650 = vmatprep.subr.mxu0 0.0
    %3651 = vmatpush1.msra.mxu0 0.0
    %3652 = vmatprep.subr.mxu0 0.0
    %3653 = vmatpush1.msra.mxu0 0.0
    %3654 = vmatprep.subr.mxu0 0.0
    %3655 = vmatpush1.msra.mxu0 0.0
    %3656 = vmatprep.subr.mxu0 0.0
    %3657 = vmatpush1.msra.mxu0 0.0
    %3658 = vmatprep.subr.mxu0 0.0
    %3659 = vmatpush1.msra.mxu0 0.0
    %3660 = vmatprep.subr.mxu0 0.0
    %3661 = vmatpush1.msra.mxu0 0.0
    %3662 = vmatprep.subr.mxu0 0.0
    %3663 = vmatpush1.msra.mxu0 0.0
    %3664 = vmatprep.mubr.f32.mxu0 0.0
    %3665 = vmatmul.mubr.f32.gmra.mrb[0].mxu0 %v3461
    %v3666 = vpop.f32.mrb[0].mxu0
    %v3667 = vadd.f32 0.0, %v3666
    %v3668 = vpop.f32.mrb[0].mxu0
    %v3669 = vadd.f32 0.0, %v3668
    %3670 = vdwg.mxu0
    %v3671 = vadd.f32 %v3385, %v3596
    %v3672 = vadd.f32 %v3386, %v3598
    %v3673 = vadd.f32 %v3387, %v3667
    %v3674 = vadd.f32 %v3388, %v3669
    %s3675 = scalar_lea.vmem [#allocation10], 28
    %v3676 = vld [vmem:[%s3675] sm:$0xf]
    %v3678 = vsel %vm1683, %v3676, 0
    %3680 = vmatprep.subr.mxu0 0.0
    %3681 = vmatpush1.msra.mxu0 %v1681
    %3682 = vmatprep.subr.mxu0 0.0
    %3683 = vmatpush1.msra.mxu0 0.0
    %3684 = vmatprep.subr.mxu0 0.0
    %3685 = vmatpush1.msra.mxu0 0.0
    %3686 = vmatprep.subr.mxu0 0.0
    %3687 = vmatpush1.msra.mxu0 0.0
    %3688 = vmatprep.subr.mxu0 0.0
    %3689 = vmatpush1.msra.mxu0 0.0
    %3690 = vmatprep.subr.mxu0 0.0
    %3691 = vmatpush1.msra.mxu0 0.0
    %3692 = vmatprep.subr.mxu0 0.0
    %3693 = vmatpush1.msra.mxu0 0.0
    %3694 = vmatprep.subr.mxu0 0.0
    %3695 = vmatpush1.msra.mxu0 0.0
    %3696 = vmatprep.subr.mxu0 0.0
    %3697 = vmatpush1.msra.mxu0 0.0
    %3698 = vmatprep.subr.mxu0 0.0
    %3699 = vmatpush1.msra.mxu0 0.0
    %3700 = vmatprep.subr.mxu0 0.0
    %3701 = vmatpush1.msra.mxu0 0.0
    %3702 = vmatprep.subr.mxu0 0.0
    %3703 = vmatpush1.msra.mxu0 0.0
    %3704 = vmatprep.subr.mxu0 0.0
    %3705 = vmatpush1.msra.mxu0 0.0
    %3706 = vmatprep.subr.mxu0 0.0
    %3707 = vmatpush1.msra.mxu0 0.0
    %3708 = vmatprep.subr.mxu0 0.0
    %3709 = vmatpush1.msra.mxu0 0.0
    %3710 = vmatprep.subr.mxu0 0.0
    %3711 = vmatpush1.msra.mxu0 0.0
    %3712 = vmatprep.subr.mxu0 0.0
    %3713 = vmatpush1.msra.mxu0 0.0
    %3714 = vmatprep.subr.mxu0 0.0
    %3715 = vmatpush1.msra.mxu0 0.0
    %3716 = vmatprep.subr.mxu0 0.0
    %3717 = vmatpush1.msra.mxu0 0.0
    %3718 = vmatprep.subr.mxu0 0.0
    %3719 = vmatpush1.msra.mxu0 0.0
    %3720 = vmatprep.subr.mxu0 0.0
    %3721 = vmatpush1.msra.mxu0 0.0
    %3722 = vmatprep.subr.mxu0 0.0
    %3723 = vmatpush1.msra.mxu0 0.0
    %3724 = vmatprep.subr.mxu0 0.0
    %3725 = vmatpush1.msra.mxu0 0.0
    %3726 = vmatprep.subr.mxu0 0.0
    %3727 = vmatpush1.msra.mxu0 0.0
    %3728 = vmatprep.subr.mxu0 0.0
    %3729 = vmatpush1.msra.mxu0 0.0
    %3730 = vmatprep.subr.mxu0 0.0
    %3731 = vmatpush1.msra.mxu0 0.0
    %3732 = vmatprep.subr.mxu0 0.0
    %3733 = vmatpush1.msra.mxu0 0.0
    %3734 = vmatprep.subr.mxu0 0.0
    %3735 = vmatpush1.msra.mxu0 0.0
    %3736 = vmatprep.subr.mxu0 0.0
    %3737 = vmatpush1.msra.mxu0 0.0
    %3738 = vmatprep.subr.mxu0 0.0
    %3739 = vmatpush1.msra.mxu0 0.0
    %3740 = vmatprep.subr.mxu0 0.0
    %3741 = vmatpush1.msra.mxu0 0.0
    %3742 = vmatprep.subr.mxu0 0.0
    %3743 = vmatpush1.msra.mxu0 0.0
    %3744 = vmatprep.mubr.f32.mxu0 0.0
    %3745 = vmatmul.mubr.f32.gmra.mrb[0].mxu0 %v3678
    %v3746 = vpop.f32.mrb[0].mxu0
    %v3747 = vadd.f32 0.0, %v3746
    %v3748 = vpop.f32.mrb[0].mxu0
    %3749 = vdwg.mxu0
    %s3750 = scalar_lea.vmem [#allocation11], 3584
    %v3751 = vld [vmem:[%s3750] sm:$0xff]
    %v3752 = vld [vmem:[%s3750 + $0x8] sm:$0xff]
    %v3753 = vld [vmem:[%s3750 + $0x10] sm:$0xff]
    %v3754 = vld [vmem:[%s3750 + $0x18] sm:$0xff]
    %v3755 = vld [vmem:[%s3750 + $0x20] sm:$0xff]
    %v3756 = vld [vmem:[%s3750 + $0x28] sm:$0xff]
    %v3757 = vld [vmem:[%s3750 + $0x30] sm:$0xff]
    %v3758 = vld [vmem:[%s3750 + $0x38] sm:$0xff]
    %v3759 = vld [vmem:[%s3750 + $0x40] sm:$0xff]
    %v3760 = vld [vmem:[%s3750 + $0x48] sm:$0xff]
    %v3761 = vld [vmem:[%s3750 + $0x50] sm:$0xff]
    %v3762 = vld [vmem:[%s3750 + $0x58] sm:$0xff]
    %v3763 = vld [vmem:[%s3750 + $0x60] sm:$0xff]
    %v3764 = vld [vmem:[%s3750 + $0x68] sm:$0xff]
    %v3765 = vld [vmem:[%s3750 + $0x70] sm:$0xff]
    %v3766 = vld [vmem:[%s3750 + $0x78] sm:$0xff]
    %v3767 = vld [vmem:[%s3750 + $0x80] sm:$0xff]
    %v3768 = vld [vmem:[%s3750 + $0x88] sm:$0xff]
    %v3769 = vld [vmem:[%s3750 + $0x90] sm:$0xff]
    %v3770 = vld [vmem:[%s3750 + $0x98] sm:$0xff]
    %v3771 = vld [vmem:[%s3750 + $0xa0] sm:$0xff]
    %v3772 = vld [vmem:[%s3750 + $0xa8] sm:$0xff]
    %v3773 = vld [vmem:[%s3750 + $0xb0] sm:$0xff]
    %v3774 = vld [vmem:[%s3750 + $0xb8] sm:$0xff]
    %v3775 = vld [vmem:[%s3750 + $0xc0] sm:$0xff]
    %v3776 = vld [vmem:[%s3750 + $0xc8] sm:$0xff]
    %v3777 = vld [vmem:[%s3750 + $0xd0] sm:$0xff]
    %v3778 = vld [vmem:[%s3750 + $0xd8] sm:$0xff]
    %v3779 = vld [vmem:[%s3750 + $0xe0] sm:$0xff]
    %v3780 = vld [vmem:[%s3750 + $0xe8] sm:$0xff]
    %v3781 = vld [vmem:[%s3750 + $0xf0] sm:$0xff]
    %v3782 = vld [vmem:[%s3750 + $0xf8] sm:$0xff]
    %v3783 = vld [vmem:[%s3750 + $0x100] sm:$0xff]
    %v3784 = vld [vmem:[%s3750 + $0x108] sm:$0xff]
    %v3785 = vld [vmem:[%s3750 + $0x110] sm:$0xff]
    %v3786 = vld [vmem:[%s3750 + $0x118] sm:$0xff]
    %v3787 = vld [vmem:[%s3750 + $0x120] sm:$0xff]
    %v3788 = vld [vmem:[%s3750 + $0x128] sm:$0xff]
    %v3789 = vld [vmem:[%s3750 + $0x130] sm:$0xff]
    %v3790 = vld [vmem:[%s3750 + $0x138] sm:$0xff]
    %v3791 = vld [vmem:[%s3750 + $0x140] sm:$0xff]
    %v3792 = vld [vmem:[%s3750 + $0x148] sm:$0xff]
    %v3793 = vld [vmem:[%s3750 + $0x150] sm:$0xff]
    %v3794 = vld [vmem:[%s3750 + $0x158] sm:$0xff]
    %v3795 = vld [vmem:[%s3750 + $0x160] sm:$0xff]
    %v3796 = vld [vmem:[%s3750 + $0x168] sm:$0xff]
    %v3797 = vld [vmem:[%s3750 + $0x170] sm:$0xff]
    %v3798 = vld [vmem:[%s3750 + $0x178] sm:$0xff]
    %v3799 = vld [vmem:[%s3750 + $0x180] sm:$0xff]
    %v3800 = vld [vmem:[%s3750 + $0x188] sm:$0xff]
    %v3801 = vld [vmem:[%s3750 + $0x190] sm:$0xff]
    %v3802 = vld [vmem:[%s3750 + $0x198] sm:$0xff]
    %v3803 = vld [vmem:[%s3750 + $0x1a0] sm:$0xff]
    %v3804 = vld [vmem:[%s3750 + $0x1a8] sm:$0xff]
    %v3805 = vld [vmem:[%s3750 + $0x1b0] sm:$0xff]
    %v3806 = vld [vmem:[%s3750 + $0x1b8] sm:$0xff]
    %v3807 = vld [vmem:[%s3750 + $0x1c0] sm:$0xff]
    %v3808 = vld [vmem:[%s3750 + $0x1c8] sm:$0xff]
    %v3809 = vld [vmem:[%s3750 + $0x1d0] sm:$0xff]
    %v3810 = vld [vmem:[%s3750 + $0x1d8] sm:$0xff]
    %v3811 = vld [vmem:[%s3750 + $0x1e0] sm:$0xff]
    %v3812 = vld [vmem:[%s3750 + $0x1e8] sm:$0xff]
    %v3813 = vld [vmem:[%s3750 + $0x1f0] sm:$0xff]
    %v3814 = vld [vmem:[%s3750 + $0x1f8] sm:$0xff]
    %3815 = vmatprep.subr.mxu0 %v3752
    %3816 = vmatpush1.msra.mxu0 %v3751
    %3817 = vmatprep.subr.mxu0 %v3756
    %3818 = vmatpush1.msra.mxu0 %v3755
    %3819 = vmatprep.subr.mxu0 %v3760
    %3820 = vmatpush1.msra.mxu0 %v3759
    %3821 = vmatprep.subr.mxu0 %v3764
    %3822 = vmatpush1.msra.mxu0 %v3763
    %3823 = vmatprep.subr.mxu0 %v3768
    %3824 = vmatpush1.msra.mxu0 %v3767
    %3825 = vmatprep.subr.mxu0 %v3772
    %3826 = vmatpush1.msra.mxu0 %v3771
    %3827 = vmatprep.subr.mxu0 %v3776
    %3828 = vmatpush1.msra.mxu0 %v3775
    %3829 = vmatprep.subr.mxu0 %v3780
    %3830 = vmatpush1.msra.mxu0 %v3779
    %3831 = vmatprep.subr.mxu0 %v3784
    %3832 = vmatpush1.msra.mxu0 %v3783
    %3833 = vmatprep.subr.mxu0 %v3788
    %3834 = vmatpush1.msra.mxu0 %v3787
    %3835 = vmatprep.subr.mxu0 %v3792
    %3836 = vmatpush1.msra.mxu0 %v3791
    %3837 = vmatprep.subr.mxu0 %v3796
    %3838 = vmatpush1.msra.mxu0 %v3795
    %3839 = vmatprep.subr.mxu0 %v3800
    %3840 = vmatpush1.msra.mxu0 %v3799
    %3841 = vmatprep.subr.mxu0 %v3804
    %3842 = vmatpush1.msra.mxu0 %v3803
    %3843 = vmatprep.subr.mxu0 %v3808
    %3844 = vmatpush1.msra.mxu0 %v3807
    %3845 = vmatprep.subr.mxu0 %v3812
    %3846 = vmatpush1.msra.mxu0 %v3811
    %3847 = vmatprep.subr.mxu0 0.0
    %3848 = vmatpush1.msra.mxu0 0.0
    %3849 = vmatprep.subr.mxu0 0.0
    %3850 = vmatpush1.msra.mxu0 0.0
    %3851 = vmatprep.subr.mxu0 0.0
    %3852 = vmatpush1.msra.mxu0 0.0
    %3853 = vmatprep.subr.mxu0 0.0
    %3854 = vmatpush1.msra.mxu0 0.0
    %3855 = vmatprep.subr.mxu0 0.0
    %3856 = vmatpush1.msra.mxu0 0.0
    %3857 = vmatprep.subr.mxu0 0.0
    %3858 = vmatpush1.msra.mxu0 0.0
    %3859 = vmatprep.subr.mxu0 0.0
    %3860 = vmatpush1.msra.mxu0 0.0
    %3861 = vmatprep.subr.mxu0 0.0
    %3862 = vmatpush1.msra.mxu0 0.0
    %3863 = vmatprep.subr.mxu0 0.0
    %3864 = vmatpush1.msra.mxu0 0.0
    %3865 = vmatprep.subr.mxu0 0.0
    %3866 = vmatpush1.msra.mxu0 0.0
    %3867 = vmatprep.subr.mxu0 0.0
    %3868 = vmatpush1.msra.mxu0 0.0
    %3869 = vmatprep.subr.mxu0 0.0
    %3870 = vmatpush1.msra.mxu0 0.0
    %3871 = vmatprep.subr.mxu0 0.0
    %3872 = vmatpush1.msra.mxu0 0.0
    %3873 = vmatprep.subr.mxu0 0.0
    %3874 = vmatpush1.msra.mxu0 0.0
    %3875 = vmatprep.subr.mxu0 0.0
    %3876 = vmatpush1.msra.mxu0 0.0
    %3877 = vmatprep.subr.mxu0 0.0
    %3878 = vmatpush1.msra.mxu0 0.0
    %3879 = vmatprep.mubr.f32.mxu0 0.0
    %3880 = vmatmul.mubr.f32.gmra.mrb[0].mxu0 %v3747
    %v3881 = vpop.f32.mrb[0].mxu0
    %v3882 = vadd.f32 0.0, %v3881
    %v3883 = vpop.f32.mrb[0].mxu0
    %v3884 = vadd.f32 0.0, %v3883
    %3885 = vdwg.mxu0
    %3886 = vmatprep.subr.mxu0 %v3754
    %3887 = vmatpush1.msra.mxu0 %v3753
    %3888 = vmatprep.subr.mxu0 %v3758
    %3889 = vmatpush1.msra.mxu0 %v3757
    %3890 = vmatprep.subr.mxu0 %v3762
    %3891 = vmatpush1.msra.mxu0 %v3761
    %3892 = vmatprep.subr.mxu0 %v3766
    %3893 = vmatpush1.msra.mxu0 %v3765
    %3894 = vmatprep.subr.mxu0 %v3770
    %3895 = vmatpush1.msra.mxu0 %v3769
    %3896 = vmatprep.subr.mxu0 %v3774
    %3897 = vmatpush1.msra.mxu0 %v3773
    %3898 = vmatprep.subr.mxu0 %v3778
    %3899 = vmatpush1.msra.mxu0 %v3777
    %3900 = vmatprep.subr.mxu0 %v3782
    %3901 = vmatpush1.msra.mxu0 %v3781
    %3902 = vmatprep.subr.mxu0 %v3786
    %3903 = vmatpush1.msra.mxu0 %v3785
    %3904 = vmatprep.subr.mxu0 %v3790
    %3905 = vmatpush1.msra.mxu0 %v3789
    %3906 = vmatprep.subr.mxu0 %v3794
    %3907 = vmatpush1.msra.mxu0 %v3793
    %3908 = vmatprep.subr.mxu0 %v3798
    %3909 = vmatpush1.msra.mxu0 %v3797
    %3910 = vmatprep.subr.mxu0 %v3802
    %3911 = vmatpush1.msra.mxu0 %v3801
    %3912 = vmatprep.subr.mxu0 %v3806
    %3913 = vmatpush1.msra.mxu0 %v3805
    %3914 = vmatprep.subr.mxu0 %v3810
    %3915 = vmatpush1.msra.mxu0 %v3809
    %3916 = vmatprep.subr.mxu0 %v3814
    %3917 = vmatpush1.msra.mxu0 %v3813
    %3918 = vmatprep.subr.mxu0 0.0
    %3919 = vmatpush1.msra.mxu0 0.0
    %3920 = vmatprep.subr.mxu0 0.0
    %3921 = vmatpush1.msra.mxu0 0.0
    %3922 = vmatprep.subr.mxu0 0.0
    %3923 = vmatpush1.msra.mxu0 0.0
    %3924 = vmatprep.subr.mxu0 0.0
    %3925 = vmatpush1.msra.mxu0 0.0
    %3926 = vmatprep.subr.mxu0 0.0
    %3927 = vmatpush1.msra.mxu0 0.0
    %3928 = vmatprep.subr.mxu0 0.0
    %3929 = vmatpush1.msra.mxu0 0.0
    %3930 = vmatprep.subr.mxu0 0.0
    %3931 = vmatpush1.msra.mxu0 0.0
    %3932 = vmatprep.subr.mxu0 0.0
    %3933 = vmatpush1.msra.mxu0 0.0
    %3934 = vmatprep.subr.mxu0 0.0
    %3935 = vmatpush1.msra.mxu0 0.0
    %3936 = vmatprep.subr.mxu0 0.0
    %3937 = vmatpush1.msra.mxu0 0.0
    %3938 = vmatprep.subr.mxu0 0.0
    %3939 = vmatpush1.msra.mxu0 0.0
    %3940 = vmatprep.subr.mxu0 0.0
    %3941 = vmatpush1.msra.mxu0 0.0
    %3942 = vmatprep.subr.mxu0 0.0
    %3943 = vmatpush1.msra.mxu0 0.0
    %3944 = vmatprep.subr.mxu0 0.0
    %3945 = vmatpush1.msra.mxu0 0.0
    %3946 = vmatprep.subr.mxu0 0.0
    %3947 = vmatpush1.msra.mxu0 0.0
    %3948 = vmatprep.subr.mxu0 0.0
    %3949 = vmatpush1.msra.mxu0 0.0
    %3950 = vmatprep.mubr.f32.mxu0 0.0
    %3951 = vmatmul.mubr.f32.gmra.mrb[0].mxu0 %v3747
    %v3952 = vpop.f32.mrb[0].mxu0
    %v3953 = vadd.f32 0.0, %v3952
    %v3954 = vpop.f32.mrb[0].mxu0
    %v3955 = vadd.f32 0.0, %v3954
    %3956 = vdwg.mxu0
    %v3957 = vadd.f32 %v3671, %v3882
    %v3958 = vadd.f32 %v3672, %v3884
    %v3959 = vadd.f32 %v3673, %v3953
    %v3960 = vadd.f32 %v3674, %v3955
    %s3961 = scalar_lea.vmem [#allocation10], 32
    %v3962 = vld [vmem:[%s3961] sm:$0xf]
    %v3964 = vsel %vm1683, %v3962, 0
    %3966 = vmatprep.subr.mxu0 0.0
    %3967 = vmatpush1.msra.mxu0 %v1681
    %3968 = vmatprep.subr.mxu0 0.0
    %3969 = vmatpush1.msra.mxu0 0.0
    %3970 = vmatprep.subr.mxu0 0.0
    %3971 = vmatpush1.msra.mxu0 0.0
    %3972 = vmatprep.subr.mxu0 0.0
    %3973 = vmatpush1.msra.mxu0 0.0
    %3974 = vmatprep.subr.mxu0 0.0
    %3975 = vmatpush1.msra.mxu0 0.0
    %3976 = vmatprep.subr.mxu0 0.0
    %3977 = vmatpush1.msra.mxu0 0.0
    %3978 = vmatprep.subr.mxu0 0.0
    %3979 = vmatpush1.msra.mxu0 0.0
    %3980 = vmatprep.subr.mxu0 0.0
    %3981 = vmatpush1.msra.mxu0 0.0
    %3982 = vmatprep.subr.mxu0 0.0
    %3983 = vmatpush1.msra.mxu0 0.0
    %3984 = vmatprep.subr.mxu0 0.0
    %3985 = vmatpush1.msra.mxu0 0.0
    %3986 = vmatprep.subr.mxu0 0.0
    %3987 = vmatpush1.msra.mxu0 0.0
    %3988 = vmatprep.subr.mxu0 0.0
    %3989 = vmatpush1.msra.mxu0 0.0
    %3990 = vmatprep.subr.mxu0 0.0
    %3991 = vmatpush1.msra.mxu0 0.0
    %3992 = vmatprep.subr.mxu0 0.0
    %3993 = vmatpush1.msra.mxu0 0.0
    %3994 = vmatprep.subr.mxu0 0.0
    %3995 = vmatpush1.msra.mxu0 0.0
    %3996 = vmatprep.subr.mxu0 0.0
    %3997 = vmatpush1.msra.mxu0 0.0
    %3998 = vmatprep.subr.mxu0 0.0
    %3999 = vmatpush1.msra.mxu0 0.0
    %4000 = vmatprep.subr.mxu0 0.0
    %4001 = vmatpush1.msra.mxu0 0.0
    %4002 = vmatprep.subr.mxu0 0.0
    %4003 = vmatpush1.msra.mxu0 0.0
    %4004 = vmatprep.subr.mxu0 0.0
    %4005 = vmatpush1.msra.mxu0 0.0
    %4006 = vmatprep.subr.mxu0 0.0
    %4007 = vmatpush1.msra.mxu0 0.0
    %4008 = vmatprep.subr.mxu0 0.0
    %4009 = vmatpush1.msra.mxu0 0.0
    %4010 = vmatprep.subr.mxu0 0.0
    %4011 = vmatpush1.msra.mxu0 0.0
    %4012 = vmatprep.subr.mxu0 0.0
    %4013 = vmatpush1.msra.mxu0 0.0
    %4014 = vmatprep.subr.mxu0 0.0
    %4015 = vmatpush1.msra.mxu0 0.0
    %4016 = vmatprep.subr.mxu0 0.0
    %4017 = vmatpush1.msra.mxu0 0.0
    %4018 = vmatprep.subr.mxu0 0.0
    %4019 = vmatpush1.msra.mxu0 0.0
    %4020 = vmatprep.subr.mxu0 0.0
    %4021 = vmatpush1.msra.mxu0 0.0
    %4022 = vmatprep.subr.mxu0 0.0
    %4023 = vmatpush1.msra.mxu0 0.0
    %4024 = vmatprep.subr.mxu0 0.0
    %4025 = vmatpush1.msra.mxu0 0.0
    %4026 = vmatprep.subr.mxu0 0.0
    %4027 = vmatpush1.msra.mxu0 0.0
    %4028 = vmatprep.subr.mxu0 0.0
    %4029 = vmatpush1.msra.mxu0 0.0
    %4030 = vmatprep.mubr.f32.mxu0 0.0
    %4031 = vmatmul.mubr.f32.gmra.mrb[0].mxu0 %v3964
    %v4032 = vpop.f32.mrb[0].mxu0
    %v4033 = vadd.f32 0.0, %v4032
    %v4034 = vpop.f32.mrb[0].mxu0
    %4035 = vdwg.mxu0
    %s4036 = scalar_lea.vmem [#allocation11], 4096
    %v4037 = vld [vmem:[%s4036] sm:$0xff]
    %v4038 = vld [vmem:[%s4036 + $0x8] sm:$0xff]
    %v4039 = vld [vmem:[%s4036 + $0x10] sm:$0xff]
    %v4040 = vld [vmem:[%s4036 + $0x18] sm:$0xff]
    %v4041 = vld [vmem:[%s4036 + $0x20] sm:$0xff]
    %v4042 = vld [vmem:[%s4036 + $0x28] sm:$0xff]
    %v4043 = vld [vmem:[%s4036 + $0x30] sm:$0xff]
    %v4044 = vld [vmem:[%s4036 + $0x38] sm:$0xff]
    %v4045 = vld [vmem:[%s4036 + $0x40] sm:$0xff]
    %v4046 = vld [vmem:[%s4036 + $0x48] sm:$0xff]
    %v4047 = vld [vmem:[%s4036 + $0x50] sm:$0xff]
    %v4048 = vld [vmem:[%s4036 + $0x58] sm:$0xff]
    %v4049 = vld [vmem:[%s4036 + $0x60] sm:$0xff]
    %v4050 = vld [vmem:[%s4036 + $0x68] sm:$0xff]
    %v4051 = vld [vmem:[%s4036 + $0x70] sm:$0xff]
    %v4052 = vld [vmem:[%s4036 + $0x78] sm:$0xff]
    %v4053 = vld [vmem:[%s4036 + $0x80] sm:$0xff]
    %v4054 = vld [vmem:[%s4036 + $0x88] sm:$0xff]
    %v4055 = vld [vmem:[%s4036 + $0x90] sm:$0xff]
    %v4056 = vld [vmem:[%s4036 + $0x98] sm:$0xff]
    %v4057 = vld [vmem:[%s4036 + $0xa0] sm:$0xff]
    %v4058 = vld [vmem:[%s4036 + $0xa8] sm:$0xff]
    %v4059 = vld [vmem:[%s4036 + $0xb0] sm:$0xff]
    %v4060 = vld [vmem:[%s4036 + $0xb8] sm:$0xff]
    %v4061 = vld [vmem:[%s4036 + $0xc0] sm:$0xff]
    %v4062 = vld [vmem:[%s4036 + $0xc8] sm:$0xff]
    %v4063 = vld [vmem:[%s4036 + $0xd0] sm:$0xff]
    %v4064 = vld [vmem:[%s4036 + $0xd8] sm:$0xff]
    %v4065 = vld [vmem:[%s4036 + $0xe0] sm:$0xff]
    %v4066 = vld [vmem:[%s4036 + $0xe8] sm:$0xff]
    %v4067 = vld [vmem:[%s4036 + $0xf0] sm:$0xff]
    %v4068 = vld [vmem:[%s4036 + $0xf8] sm:$0xff]
    %v4069 = vld [vmem:[%s4036 + $0x100] sm:$0xff]
    %v4070 = vld [vmem:[%s4036 + $0x108] sm:$0xff]
    %v4071 = vld [vmem:[%s4036 + $0x110] sm:$0xff]
    %v4072 = vld [vmem:[%s4036 + $0x118] sm:$0xff]
    %v4073 = vld [vmem:[%s4036 + $0x120] sm:$0xff]
    %v4074 = vld [vmem:[%s4036 + $0x128] sm:$0xff]
    %v4075 = vld [vmem:[%s4036 + $0x130] sm:$0xff]
    %v4076 = vld [vmem:[%s4036 + $0x138] sm:$0xff]
    %v4077 = vld [vmem:[%s4036 + $0x140] sm:$0xff]
    %v4078 = vld [vmem:[%s4036 + $0x148] sm:$0xff]
    %v4079 = vld [vmem:[%s4036 + $0x150] sm:$0xff]
    %v4080 = vld [vmem:[%s4036 + $0x158] sm:$0xff]
    %v4081 = vld [vmem:[%s4036 + $0x160] sm:$0xff]
    %v4082 = vld [vmem:[%s4036 + $0x168] sm:$0xff]
    %v4083 = vld [vmem:[%s4036 + $0x170] sm:$0xff]
    %v4084 = vld [vmem:[%s4036 + $0x178] sm:$0xff]
    %v4085 = vld [vmem:[%s4036 + $0x180] sm:$0xff]
    %v4086 = vld [vmem:[%s4036 + $0x188] sm:$0xff]
    %v4087 = vld [vmem:[%s4036 + $0x190] sm:$0xff]
    %v4088 = vld [vmem:[%s4036 + $0x198] sm:$0xff]
    %v4089 = vld [vmem:[%s4036 + $0x1a0] sm:$0xff]
    %v4090 = vld [vmem:[%s4036 + $0x1a8] sm:$0xff]
    %v4091 = vld [vmem:[%s4036 + $0x1b0] sm:$0xff]
    %v4092 = vld [vmem:[%s4036 + $0x1b8] sm:$0xff]
    %v4093 = vld [vmem:[%s4036 + $0x1c0] sm:$0xff]
    %v4094 = vld [vmem:[%s4036 + $0x1c8] sm:$0xff]
    %v4095 = vld [vmem:[%s4036 + $0x1d0] sm:$0xff]
    %v4096 = vld [vmem:[%s4036 + $0x1d8] sm:$0xff]
    %v4097 = vld [vmem:[%s4036 + $0x1e0] sm:$0xff]
    %v4098 = vld [vmem:[%s4036 + $0x1e8] sm:$0xff]
    %v4099 = vld [vmem:[%s4036 + $0x1f0] sm:$0xff]
    %v4100 = vld [vmem:[%s4036 + $0x1f8] sm:$0xff]
    %4101 = vmatprep.subr.mxu0 %v4038
    %4102 = vmatpush1.msra.mxu0 %v4037
    %4103 = vmatprep.subr.mxu0 %v4042
    %4104 = vmatpush1.msra.mxu0 %v4041
    %4105 = vmatprep.subr.mxu0 %v4046
    %4106 = vmatpush1.msra.mxu0 %v4045
    %4107 = vmatprep.subr.mxu0 %v4050
    %4108 = vmatpush1.msra.mxu0 %v4049
    %4109 = vmatprep.subr.mxu0 %v4054
    %4110 = vmatpush1.msra.mxu0 %v4053
    %4111 = vmatprep.subr.mxu0 %v4058
    %4112 = vmatpush1.msra.mxu0 %v4057
    %4113 = vmatprep.subr.mxu0 %v4062
    %4114 = vmatpush1.msra.mxu0 %v4061
    %4115 = vmatprep.subr.mxu0 %v4066
    %4116 = vmatpush1.msra.mxu0 %v4065
    %4117 = vmatprep.subr.mxu0 %v4070
    %4118 = vmatpush1.msra.mxu0 %v4069
    %4119 = vmatprep.subr.mxu0 %v4074
    %4120 = vmatpush1.msra.mxu0 %v4073
    %4121 = vmatprep.subr.mxu0 %v4078
    %4122 = vmatpush1.msra.mxu0 %v4077
    %4123 = vmatprep.subr.mxu0 %v4082
    %4124 = vmatpush1.msra.mxu0 %v4081
    %4125 = vmatprep.subr.mxu0 %v4086
    %4126 = vmatpush1.msra.mxu0 %v4085
    %4127 = vmatprep.subr.mxu0 %v4090
    %4128 = vmatpush1.msra.mxu0 %v4089
    %4129 = vmatprep.subr.mxu0 %v4094
    %4130 = vmatpush1.msra.mxu0 %v4093
    %4131 = vmatprep.subr.mxu0 %v4098
    %4132 = vmatpush1.msra.mxu0 %v4097
    %4133 = vmatprep.subr.mxu0 0.0
    %4134 = vmatpush1.msra.mxu0 0.0
    %4135 = vmatprep.subr.mxu0 0.0
    %4136 = vmatpush1.msra.mxu0 0.0
    %4137 = vmatprep.subr.mxu0 0.0
    %4138 = vmatpush1.msra.mxu0 0.0
    %4139 = vmatprep.subr.mxu0 0.0
    %4140 = vmatpush1.msra.mxu0 0.0
    %4141 = vmatprep.subr.mxu0 0.0
    %4142 = vmatpush1.msra.mxu0 0.0
    %4143 = vmatprep.subr.mxu0 0.0
    %4144 = vmatpush1.msra.mxu0 0.0
    %4145 = vmatprep.subr.mxu0 0.0
    %4146 = vmatpush1.msra.mxu0 0.0
    %4147 = vmatprep.subr.mxu0 0.0
    %4148 = vmatpush1.msra.mxu0 0.0
    %4149 = vmatprep.subr.mxu0 0.0
    %4150 = vmatpush1.msra.mxu0 0.0
    %4151 = vmatprep.subr.mxu0 0.0
    %4152 = vmatpush1.msra.mxu0 0.0
    %4153 = vmatprep.subr.mxu0 0.0
    %4154 = vmatpush1.msra.mxu0 0.0
    %4155 = vmatprep.subr.mxu0 0.0
    %4156 = vmatpush1.msra.mxu0 0.0
    %4157 = vmatprep.subr.mxu0 0.0
    %4158 = vmatpush1.msra.mxu0 0.0
    %4159 = vmatprep.subr.mxu0 0.0
    %4160 = vmatpush1.msra.mxu0 0.0
    %4161 = vmatprep.subr.mxu0 0.0
    %4162 = vmatpush1.msra.mxu0 0.0
    %4163 = vmatprep.subr.mxu0 0.0
    %4164 = vmatpush1.msra.mxu0 0.0
    %4165 = vmatprep.mubr.f32.mxu0 0.0
    %4166 = vmatmul.mubr.f32.gmra.mrb[0].mxu0 %v4033
    %v4167 = vpop.f32.mrb[0].mxu0
    %v4168 = vadd.f32 0.0, %v4167
    %v4169 = vpop.f32.mrb[0].mxu0
    %v4170 = vadd.f32 0.0, %v4169
    %4171 = vdwg.mxu0
    %4172 = vmatprep.subr.mxu0 %v4040
    %4173 = vmatpush1.msra.mxu0 %v4039
    %4174 = vmatprep.subr.mxu0 %v4044
    %4175 = vmatpush1.msra.mxu0 %v4043
    %4176 = vmatprep.subr.mxu0 %v4048
    %4177 = vmatpush1.msra.mxu0 %v4047
    %4178 = vmatprep.subr.mxu0 %v4052
    %4179 = vmatpush1.msra.mxu0 %v4051
    %4180 = vmatprep.subr.mxu0 %v4056
    %4181 = vmatpush1.msra.mxu0 %v4055
    %4182 = vmatprep.subr.mxu0 %v4060
    %4183 = vmatpush1.msra.mxu0 %v4059
    %4184 = vmatprep.subr.mxu0 %v4064
    %4185 = vmatpush1.msra.mxu0 %v4063
    %4186 = vmatprep.subr.mxu0 %v4068
    %4187 = vmatpush1.msra.mxu0 %v4067
    %4188 = vmatprep.subr.mxu0 %v4072
    %4189 = vmatpush1.msra.mxu0 %v4071
    %4190 = vmatprep.subr.mxu0 %v4076
    %4191 = vmatpush1.msra.mxu0 %v4075
    %4192 = vmatprep.subr.mxu0 %v4080
    %4193 = vmatpush1.msra.mxu0 %v4079
    %4194 = vmatprep.subr.mxu0 %v4084
    %4195 = vmatpush1.msra.mxu0 %v4083
    %4196 = vmatprep.subr.mxu0 %v4088
    %4197 = vmatpush1.msra.mxu0 %v4087
    %4198 = vmatprep.subr.mxu0 %v4092
    %4199 = vmatpush1.msra.mxu0 %v4091
    %4200 = vmatprep.subr.mxu0 %v4096
    %4201 = vmatpush1.msra.mxu0 %v4095
    %4202 = vmatprep.subr.mxu0 %v4100
    %4203 = vmatpush1.msra.mxu0 %v4099
    %4204 = vmatprep.subr.mxu0 0.0
    %4205 = vmatpush1.msra.mxu0 0.0
    %4206 = vmatprep.subr.mxu0 0.0
    %4207 = vmatpush1.msra.mxu0 0.0
    %4208 = vmatprep.subr.mxu0 0.0
    %4209 = vmatpush1.msra.mxu0 0.0
    %4210 = vmatprep.subr.mxu0 0.0
    %4211 = vmatpush1.msra.mxu0 0.0
    %4212 = vmatprep.subr.mxu0 0.0
    %4213 = vmatpush1.msra.mxu0 0.0
    %4214 = vmatprep.subr.mxu0 0.0
    %4215 = vmatpush1.msra.mxu0 0.0
    %4216 = vmatprep.subr.mxu0 0.0
    %4217 = vmatpush1.msra.mxu0 0.0
    %4218 = vmatprep.subr.mxu0 0.0
    %4219 = vmatpush1.msra.mxu0 0.0
    %4220 = vmatprep.subr.mxu0 0.0
    %4221 = vmatpush1.msra.mxu0 0.0
    %4222 = vmatprep.subr.mxu0 0.0
    %4223 = vmatpush1.msra.mxu0 0.0
    %4224 = vmatprep.subr.mxu0 0.0
    %4225 = vmatpush1.msra.mxu0 0.0
    %4226 = vmatprep.subr.mxu0 0.0
    %4227 = vmatpush1.msra.mxu0 0.0
    %4228 = vmatprep.subr.mxu0 0.0
    %4229 = vmatpush1.msra.mxu0 0.0
    %4230 = vmatprep.subr.mxu0 0.0
    %4231 = vmatpush1.msra.mxu0 0.0
    %4232 = vmatprep.subr.mxu0 0.0
    %4233 = vmatpush1.msra.mxu0 0.0
    %4234 = vmatprep.subr.mxu0 0.0
    %4235 = vmatpush1.msra.mxu0 0.0
    %4236 = vmatprep.mubr.f32.mxu0 0.0
    %4237 = vmatmul.mubr.f32.gmra.mrb[0].mxu0 %v4033
    %v4238 = vpop.f32.mrb[0].mxu0
    %v4239 = vadd.f32 0.0, %v4238
    %v4240 = vpop.f32.mrb[0].mxu0
    %v4241 = vadd.f32 0.0, %v4240
    %4242 = vdwg.mxu0
    %v4243 = vadd.f32 %v3957, %v4168
    %v4244 = vadd.f32 %v3958, %v4170
    %v4245 = vadd.f32 %v3959, %v4239
    %v4246 = vadd.f32 %v3960, %v4241
    %v4247 = vld [vmem:[%s10] sm:$0xf]
    %4249 = vset.pattern.permute.xlu0 0
    %4250 = vperm.xlu0 %4249, %v4247
    %v4251 = vpop.permute.xlu0 %4250
    %v4253 = vmul.f32 %v4243, %v4251
    %v4254 = vmul.f32 %v4244, %v4251
    %v4255 = vmul.f32 %v4245, %v4251
    %v4256 = vmul.f32 %v4246, %v4251
    %v4257 = vld [vmem:[%s11] sm:$0xf]
    %4259 = vset.pattern.permute.xlu0 0
    %4260 = vperm.xlu0 %4259, %v4257
    %v4261 = vpop.permute.xlu0 %4260
    %v4263 = vadd.f32 %v4253, %v4261
    %v4264 = vadd.f32 %v4254, %v4261
    %v4265 = vadd.f32 %v4255, %v4261
    %v4266 = vadd.f32 %v4256, %v4261
    %v4267 = vsub.f32 0.0, %v4263
    %v4268 = vsub.f32 0.0, %v4264
    %v4269 = vsub.f32 0.0, %v4265
    %v4270 = vsub.f32 0.0, %v4266
    %v4271 = vmul.f32 %v4267, 1.442695
    %v4272 = vpow.pop %v4271
    %v4273 = vmul.f32 %v4268, 1.442695
    %v4274 = vpow.pop %v4273
    %v4275 = vmul.f32 %v4269, 1.442695
    %v4276 = vpow.pop %v4275
    %v4277 = vmul.f32 %v4270, 1.442695
    %v4278 = vpow.pop %v4277
    %v4279 = vadd.f32 %v4272, 1.0
    %v4280 = vadd.f32 %v4274, 1.0
    %v4281 = vadd.f32 %v4276, 1.0
    %v4282 = vadd.f32 %v4278, 1.0
    %v4283 = vrcp.pop %v4279
    %v4284 = vmul.f32 1.0, %v4283
    %v4285 = vrcp.pop %v4280
    %v4286 = vmul.f32 1.0, %v4285
    %v4287 = vrcp.pop %v4281
    %v4288 = vmul.f32 1.0, %v4287
    %v4289 = vrcp.pop %v4282
    %v4290 = vmul.f32 1.0, %v4289
    %v4291 = vmul.f32 %v4263, %v4284
    %v4292 = vmul.f32 %v4264, %v4286
    %v4293 = vmul.f32 %v4265, %v4288
    %v4294 = vmul.f32 %v4266, %v4290
    %v4295 = vld [vmem:[#allocation13] sm:$0xff]
    %v4296 = vld [vmem:[#allocation13 + $0x8] sm:$0xff]
    %v4297 = vld [vmem:[#allocation13 + $0x10] sm:$0xff]
    %v4298 = vld [vmem:[#allocation13 + $0x18] sm:$0xff]
    %v4299 = vld [vmem:[#allocation13 + $0x20] sm:$0xff]
    %v4300 = vld [vmem:[#allocation13 + $0x28] sm:$0xff]
    %v4301 = vld [vmem:[#allocation13 + $0x30] sm:$0xff]
    %v4302 = vld [vmem:[#allocation13 + $0x38] sm:$0xff]
    %v4303 = vld [vmem:[#allocation13 + $0x40] sm:$0xff]
    %v4304 = vld [vmem:[#allocation13 + $0x48] sm:$0xff]
    %v4305 = vld [vmem:[#allocation13 + $0x50] sm:$0xff]
    %v4306 = vld [vmem:[#allocation13 + $0x58] sm:$0xff]
    %v4307 = vld [vmem:[#allocation13 + $0x60] sm:$0xff]
    %v4308 = vld [vmem:[#allocation13 + $0x68] sm:$0xff]
    %v4309 = vld [vmem:[#allocation13 + $0x70] sm:$0xff]
    %v4310 = vld [vmem:[#allocation13 + $0x78] sm:$0xff]
    %v4311 = vld [vmem:[#allocation13 + $0x80] sm:$0xff]
    %v4312 = vld [vmem:[#allocation13 + $0x88] sm:$0xff]
    %v4313 = vld [vmem:[#allocation13 + $0x90] sm:$0xff]
    %v4314 = vld [vmem:[#allocation13 + $0x98] sm:$0xff]
    %v4315 = vld [vmem:[#allocation13 + $0xa0] sm:$0xff]
    %v4316 = vld [vmem:[#allocation13 + $0xa8] sm:$0xff]
    %v4317 = vld [vmem:[#allocation13 + $0xb0] sm:$0xff]
    %v4318 = vld [vmem:[#allocation13 + $0xb8] sm:$0xff]
    %v4319 = vld [vmem:[#allocation13 + $0xc0] sm:$0xff]
    %v4320 = vld [vmem:[#allocation13 + $0xc8] sm:$0xff]
    %v4321 = vld [vmem:[#allocation13 + $0xd0] sm:$0xff]
    %v4322 = vld [vmem:[#allocation13 + $0xd8] sm:$0xff]
    %v4323 = vld [vmem:[#allocation13 + $0xe0] sm:$0xff]
    %v4324 = vld [vmem:[#allocation13 + $0xe8] sm:$0xff]
    %v4325 = vld [vmem:[#allocation13 + $0xf0] sm:$0xff]
    %v4326 = vld [vmem:[#allocation13 + $0xf8] sm:$0xff]
    %v4327 = vld [vmem:[#allocation13 + $0x100] sm:$0xff]
    %v4328 = vld [vmem:[#allocation13 + $0x108] sm:$0xff]
    %v4329 = vld [vmem:[#allocation13 + $0x110] sm:$0xff]
    %v4330 = vld [vmem:[#allocation13 + $0x118] sm:$0xff]
    %v4331 = vld [vmem:[#allocation13 + $0x120] sm:$0xff]
    %v4332 = vld [vmem:[#allocation13 + $0x128] sm:$0xff]
    %v4333 = vld [vmem:[#allocation13 + $0x130] sm:$0xff]
    %v4334 = vld [vmem:[#allocation13 + $0x138] sm:$0xff]
    %v4335 = vld [vmem:[#allocation13 + $0x140] sm:$0xff]
    %v4336 = vld [vmem:[#allocation13 + $0x148] sm:$0xff]
    %v4337 = vld [vmem:[#allocation13 + $0x150] sm:$0xff]
    %v4338 = vld [vmem:[#allocation13 + $0x158] sm:$0xff]
    %v4339 = vld [vmem:[#allocation13 + $0x160] sm:$0xff]
    %v4340 = vld [vmem:[#allocation13 + $0x168] sm:$0xff]
    %v4341 = vld [vmem:[#allocation13 + $0x170] sm:$0xff]
    %v4342 = vld [vmem:[#allocation13 + $0x178] sm:$0xff]
    %v4343 = vld [vmem:[#allocation13 + $0x180] sm:$0xff]
    %v4344 = vld [vmem:[#allocation13 + $0x188] sm:$0xff]
    %v4345 = vld [vmem:[#allocation13 + $0x190] sm:$0xff]
    %v4346 = vld [vmem:[#allocation13 + $0x198] sm:$0xff]
    %v4347 = vld [vmem:[#allocation13 + $0x1a0] sm:$0xff]
    %v4348 = vld [vmem:[#allocation13 + $0x1a8] sm:$0xff]
    %v4349 = vld [vmem:[#allocation13 + $0x1b0] sm:$0xff]
    %v4350 = vld [vmem:[#allocation13 + $0x1b8] sm:$0xff]
    %v4351 = vld [vmem:[#allocation13 + $0x1c0] sm:$0xff]
    %v4352 = vld [vmem:[#allocation13 + $0x1c8] sm:$0xff]
    %v4353 = vld [vmem:[#allocation13 + $0x1d0] sm:$0xff]
    %v4354 = vld [vmem:[#allocation13 + $0x1d8] sm:$0xff]
    %v4355 = vld [vmem:[#allocation13 + $0x1e0] sm:$0xff]
    %v4356 = vld [vmem:[#allocation13 + $0x1e8] sm:$0xff]
    %v4357 = vld [vmem:[#allocation13 + $0x1f0] sm:$0xff]
    %v4358 = vld [vmem:[#allocation13 + $0x1f8] sm:$0xff]
    %v4359 = vld [vmem:[#allocation13 + $0x200] sm:$0xff]
    %v4360 = vld [vmem:[#allocation13 + $0x208] sm:$0xff]
    %v4361 = vld [vmem:[#allocation13 + $0x210] sm:$0xff]
    %v4362 = vld [vmem:[#allocation13 + $0x218] sm:$0xff]
    %v4363 = vld [vmem:[#allocation13 + $0x220] sm:$0xff]
    %v4364 = vld [vmem:[#allocation13 + $0x228] sm:$0xff]
    %v4365 = vld [vmem:[#allocation13 + $0x230] sm:$0xff]
    %v4366 = vld [vmem:[#allocation13 + $0x238] sm:$0xff]
    %v4367 = vld [vmem:[#allocation13 + $0x240] sm:$0xff]
    %v4368 = vld [vmem:[#allocation13 + $0x248] sm:$0xff]
    %v4369 = vld [vmem:[#allocation13 + $0x250] sm:$0xff]
    %v4370 = vld [vmem:[#allocation13 + $0x258] sm:$0xff]
    %v4371 = vld [vmem:[#allocation13 + $0x260] sm:$0xff]
    %v4372 = vld [vmem:[#allocation13 + $0x268] sm:$0xff]
    %v4373 = vld [vmem:[#allocation13 + $0x270] sm:$0xff]
    %v4374 = vld [vmem:[#allocation13 + $0x278] sm:$0xff]
    %v4375 = vld [vmem:[#allocation13 + $0x280] sm:$0xff]
    %v4376 = vld [vmem:[#allocation13 + $0x288] sm:$0xff]
    %v4377 = vld [vmem:[#allocation13 + $0x290] sm:$0xff]
    %v4378 = vld [vmem:[#allocation13 + $0x298] sm:$0xff]
    %v4379 = vld [vmem:[#allocation13 + $0x2a0] sm:$0xff]
    %v4380 = vld [vmem:[#allocation13 + $0x2a8] sm:$0xff]
    %v4381 = vld [vmem:[#allocation13 + $0x2b0] sm:$0xff]
    %v4382 = vld [vmem:[#allocation13 + $0x2b8] sm:$0xff]
    %v4383 = vld [vmem:[#allocation13 + $0x2c0] sm:$0xff]
    %v4384 = vld [vmem:[#allocation13 + $0x2c8] sm:$0xff]
    %v4385 = vld [vmem:[#allocation13 + $0x2d0] sm:$0xff]
    %v4386 = vld [vmem:[#allocation13 + $0x2d8] sm:$0xff]
    %v4387 = vld [vmem:[#allocation13 + $0x2e0] sm:$0xff]
    %v4388 = vld [vmem:[#allocation13 + $0x2e8] sm:$0xff]
    %v4389 = vld [vmem:[#allocation13 + $0x2f0] sm:$0xff]
    %v4390 = vld [vmem:[#allocation13 + $0x2f8] sm:$0xff]
    %v4391 = vld [vmem:[#allocation13 + $0x300] sm:$0xff]
    %v4392 = vld [vmem:[#allocation13 + $0x308] sm:$0xff]
    %v4393 = vld [vmem:[#allocation13 + $0x310] sm:$0xff]
    %v4394 = vld [vmem:[#allocation13 + $0x318] sm:$0xff]
    %v4395 = vld [vmem:[#allocation13 + $0x320] sm:$0xff]
    %v4396 = vld [vmem:[#allocation13 + $0x328] sm:$0xff]
    %v4397 = vld [vmem:[#allocation13 + $0x330] sm:$0xff]
    %v4398 = vld [vmem:[#allocation13 + $0x338] sm:$0xff]
    %v4399 = vld [vmem:[#allocation13 + $0x340] sm:$0xff]
    %v4400 = vld [vmem:[#allocation13 + $0x348] sm:$0xff]
    %v4401 = vld [vmem:[#allocation13 + $0x350] sm:$0xff]
    %v4402 = vld [vmem:[#allocation13 + $0x358] sm:$0xff]
    %v4403 = vld [vmem:[#allocation13 + $0x360] sm:$0xff]
    %v4404 = vld [vmem:[#allocation13 + $0x368] sm:$0xff]
    %v4405 = vld [vmem:[#allocation13 + $0x370] sm:$0xff]
    %v4406 = vld [vmem:[#allocation13 + $0x378] sm:$0xff]
    %v4407 = vld [vmem:[#allocation13 + $0x380] sm:$0xff]
    %v4408 = vld [vmem:[#allocation13 + $0x388] sm:$0xff]
    %v4409 = vld [vmem:[#allocation13 + $0x390] sm:$0xff]
    %v4410 = vld [vmem:[#allocation13 + $0x398] sm:$0xff]
    %v4411 = vld [vmem:[#allocation13 + $0x3a0] sm:$0xff]
    %v4412 = vld [vmem:[#allocation13 + $0x3a8] sm:$0xff]
    %v4413 = vld [vmem:[#allocation13 + $0x3b0] sm:$0xff]
    %v4414 = vld [vmem:[#allocation13 + $0x3b8] sm:$0xff]
    %v4415 = vld [vmem:[#allocation13 + $0x3c0] sm:$0xff]
    %v4416 = vld [vmem:[#allocation13 + $0x3c8] sm:$0xff]
    %v4417 = vld [vmem:[#allocation13 + $0x3d0] sm:$0xff]
    %v4418 = vld [vmem:[#allocation13 + $0x3d8] sm:$0xff]
    %v4419 = vld [vmem:[#allocation13 + $0x3e0] sm:$0xff]
    %v4420 = vld [vmem:[#allocation13 + $0x3e8] sm:$0xff]
    %v4421 = vld [vmem:[#allocation13 + $0x3f0] sm:$0xff]
    %v4422 = vld [vmem:[#allocation13 + $0x3f8] sm:$0xff]
    %v4423 = vld [vmem:[#allocation13 + $0x400] sm:$0xff]
    %v4424 = vld [vmem:[#allocation13 + $0x408] sm:$0xff]
    %v4425 = vld [vmem:[#allocation13 + $0x410] sm:$0xff]
    %v4426 = vld [vmem:[#allocation13 + $0x418] sm:$0xff]
    %v4427 = vld [vmem:[#allocation13 + $0x420] sm:$0xff]
    %v4428 = vld [vmem:[#allocation13 + $0x428] sm:$0xff]
    %v4429 = vld [vmem:[#allocation13 + $0x430] sm:$0xff]
    %v4430 = vld [vmem:[#allocation13 + $0x438] sm:$0xff]
    %v4431 = vld [vmem:[#allocation13 + $0x440] sm:$0xff]
    %v4432 = vld [vmem:[#allocation13 + $0x448] sm:$0xff]
    %v4433 = vld [vmem:[#allocation13 + $0x450] sm:$0xff]
    %v4434 = vld [vmem:[#allocation13 + $0x458] sm:$0xff]
    %v4435 = vld [vmem:[#allocation13 + $0x460] sm:$0xff]
    %v4436 = vld [vmem:[#allocation13 + $0x468] sm:$0xff]
    %v4437 = vld [vmem:[#allocation13 + $0x470] sm:$0xff]
    %v4438 = vld [vmem:[#allocation13 + $0x478] sm:$0xff]
    %v4439 = vld [vmem:[#allocation13 + $0x480] sm:$0xff]
    %v4440 = vld [vmem:[#allocation13 + $0x488] sm:$0xff]
    %v4441 = vld [vmem:[#allocation13 + $0x490] sm:$0xff]
    %v4442 = vld [vmem:[#allocation13 + $0x498] sm:$0xff]
    %v4443 = vld [vmem:[#allocation13 + $0x4a0] sm:$0xff]
    %v4444 = vld [vmem:[#allocation13 + $0x4a8] sm:$0xff]
    %v4445 = vld [vmem:[#allocation13 + $0x4b0] sm:$0xff]
    %v4446 = vld [vmem:[#allocation13 + $0x4b8] sm:$0xff]
    %v4447 = vld [vmem:[#allocation13 + $0x4c0] sm:$0xff]
    %v4448 = vld [vmem:[#allocation13 + $0x4c8] sm:$0xff]
    %v4449 = vld [vmem:[#allocation13 + $0x4d0] sm:$0xff]
    %v4450 = vld [vmem:[#allocation13 + $0x4d8] sm:$0xff]
    %v4451 = vld [vmem:[#allocation13 + $0x4e0] sm:$0xff]
    %v4452 = vld [vmem:[#allocation13 + $0x4e8] sm:$0xff]
    %v4453 = vld [vmem:[#allocation13 + $0x4f0] sm:$0xff]
    %v4454 = vld [vmem:[#allocation13 + $0x4f8] sm:$0xff]
    %v4455 = vld [vmem:[#allocation13 + $0x500] sm:$0xff]
    %v4456 = vld [vmem:[#allocation13 + $0x508] sm:$0xff]
    %v4457 = vld [vmem:[#allocation13 + $0x510] sm:$0xff]
    %v4458 = vld [vmem:[#allocation13 + $0x518] sm:$0xff]
    %v4459 = vld [vmem:[#allocation13 + $0x520] sm:$0xff]
    %v4460 = vld [vmem:[#allocation13 + $0x528] sm:$0xff]
    %v4461 = vld [vmem:[#allocation13 + $0x530] sm:$0xff]
    %v4462 = vld [vmem:[#allocation13 + $0x538] sm:$0xff]
    %v4463 = vld [vmem:[#allocation13 + $0x540] sm:$0xff]
    %v4464 = vld [vmem:[#allocation13 + $0x548] sm:$0xff]
    %v4465 = vld [vmem:[#allocation13 + $0x550] sm:$0xff]
    %v4466 = vld [vmem:[#allocation13 + $0x558] sm:$0xff]
    %v4467 = vld [vmem:[#allocation13 + $0x560] sm:$0xff]
    %v4468 = vld [vmem:[#allocation13 + $0x568] sm:$0xff]
    %v4469 = vld [vmem:[#allocation13 + $0x570] sm:$0xff]
    %v4470 = vld [vmem:[#allocation13 + $0x578] sm:$0xff]
    %v4471 = vld [vmem:[#allocation13 + $0x580] sm:$0xff]
    %v4472 = vld [vmem:[#allocation13 + $0x588] sm:$0xff]
    %v4473 = vld [vmem:[#allocation13 + $0x590] sm:$0xff]
    %v4474 = vld [vmem:[#allocation13 + $0x598] sm:$0xff]
    %v4475 = vld [vmem:[#allocation13 + $0x5a0] sm:$0xff]
    %v4476 = vld [vmem:[#allocation13 + $0x5a8] sm:$0xff]
    %v4477 = vld [vmem:[#allocation13 + $0x5b0] sm:$0xff]
    %v4478 = vld [vmem:[#allocation13 + $0x5b8] sm:$0xff]
    %v4479 = vld [vmem:[#allocation13 + $0x5c0] sm:$0xff]
    %v4480 = vld [vmem:[#allocation13 + $0x5c8] sm:$0xff]
    %v4481 = vld [vmem:[#allocation13 + $0x5d0] sm:$0xff]
    %v4482 = vld [vmem:[#allocation13 + $0x5d8] sm:$0xff]
    %v4483 = vld [vmem:[#allocation13 + $0x5e0] sm:$0xff]
    %v4484 = vld [vmem:[#allocation13 + $0x5e8] sm:$0xff]
    %v4485 = vld [vmem:[#allocation13 + $0x5f0] sm:$0xff]
    %v4486 = vld [vmem:[#allocation13 + $0x5f8] sm:$0xff]
    %v4487 = vld [vmem:[#allocation13 + $0x600] sm:$0xff]
    %v4488 = vld [vmem:[#allocation13 + $0x608] sm:$0xff]
    %v4489 = vld [vmem:[#allocation13 + $0x610] sm:$0xff]
    %v4490 = vld [vmem:[#allocation13 + $0x618] sm:$0xff]
    %v4491 = vld [vmem:[#allocation13 + $0x620] sm:$0xff]
    %v4492 = vld [vmem:[#allocation13 + $0x628] sm:$0xff]
    %v4493 = vld [vmem:[#allocation13 + $0x630] sm:$0xff]
    %v4494 = vld [vmem:[#allocation13 + $0x638] sm:$0xff]
    %v4495 = vld [vmem:[#allocation13 + $0x640] sm:$0xff]
    %v4496 = vld [vmem:[#allocation13 + $0x648] sm:$0xff]
    %v4497 = vld [vmem:[#allocation13 + $0x650] sm:$0xff]
    %v4498 = vld [vmem:[#allocation13 + $0x658] sm:$0xff]
    %v4499 = vld [vmem:[#allocation13 + $0x660] sm:$0xff]
    %v4500 = vld [vmem:[#allocation13 + $0x668] sm:$0xff]
    %v4501 = vld [vmem:[#allocation13 + $0x670] sm:$0xff]
    %v4502 = vld [vmem:[#allocation13 + $0x678] sm:$0xff]
    %v4503 = vld [vmem:[#allocation13 + $0x680] sm:$0xff]
    %v4504 = vld [vmem:[#allocation13 + $0x688] sm:$0xff]
    %v4505 = vld [vmem:[#allocation13 + $0x690] sm:$0xff]
    %v4506 = vld [vmem:[#allocation13 + $0x698] sm:$0xff]
    %v4507 = vld [vmem:[#allocation13 + $0x6a0] sm:$0xff]
    %v4508 = vld [vmem:[#allocation13 + $0x6a8] sm:$0xff]
    %v4509 = vld [vmem:[#allocation13 + $0x6b0] sm:$0xff]
    %v4510 = vld [vmem:[#allocation13 + $0x6b8] sm:$0xff]
    %v4511 = vld [vmem:[#allocation13 + $0x6c0] sm:$0xff]
    %v4512 = vld [vmem:[#allocation13 + $0x6c8] sm:$0xff]
    %v4513 = vld [vmem:[#allocation13 + $0x6d0] sm:$0xff]
    %v4514 = vld [vmem:[#allocation13 + $0x6d8] sm:$0xff]
    %v4515 = vld [vmem:[#allocation13 + $0x6e0] sm:$0xff]
    %v4516 = vld [vmem:[#allocation13 + $0x6e8] sm:$0xff]
    %v4517 = vld [vmem:[#allocation13 + $0x6f0] sm:$0xff]
    %v4518 = vld [vmem:[#allocation13 + $0x6f8] sm:$0xff]
    %v4519 = vld [vmem:[#allocation13 + $0x700] sm:$0xff]
    %v4520 = vld [vmem:[#allocation13 + $0x708] sm:$0xff]
    %v4521 = vld [vmem:[#allocation13 + $0x710] sm:$0xff]
    %v4522 = vld [vmem:[#allocation13 + $0x718] sm:$0xff]
    %v4523 = vld [vmem:[#allocation13 + $0x720] sm:$0xff]
    %v4524 = vld [vmem:[#allocation13 + $0x728] sm:$0xff]
    %v4525 = vld [vmem:[#allocation13 + $0x730] sm:$0xff]
    %v4526 = vld [vmem:[#allocation13 + $0x738] sm:$0xff]
    %v4527 = vld [vmem:[#allocation13 + $0x740] sm:$0xff]
    %v4528 = vld [vmem:[#allocation13 + $0x748] sm:$0xff]
    %v4529 = vld [vmem:[#allocation13 + $0x750] sm:$0xff]
    %v4530 = vld [vmem:[#allocation13 + $0x758] sm:$0xff]
    %v4531 = vld [vmem:[#allocation13 + $0x760] sm:$0xff]
    %v4532 = vld [vmem:[#allocation13 + $0x768] sm:$0xff]
    %v4533 = vld [vmem:[#allocation13 + $0x770] sm:$0xff]
    %v4534 = vld [vmem:[#allocation13 + $0x778] sm:$0xff]
    %v4535 = vld [vmem:[#allocation13 + $0x780] sm:$0xff]
    %v4536 = vld [vmem:[#allocation13 + $0x788] sm:$0xff]
    %v4537 = vld [vmem:[#allocation13 + $0x790] sm:$0xff]
    %v4538 = vld [vmem:[#allocation13 + $0x798] sm:$0xff]
    %v4539 = vld [vmem:[#allocation13 + $0x7a0] sm:$0xff]
    %v4540 = vld [vmem:[#allocation13 + $0x7a8] sm:$0xff]
    %v4541 = vld [vmem:[#allocation13 + $0x7b0] sm:$0xff]
    %v4542 = vld [vmem:[#allocation13 + $0x7b8] sm:$0xff]
    %v4543 = vld [vmem:[#allocation13 + $0x7c0] sm:$0xff]
    %v4544 = vld [vmem:[#allocation13 + $0x7c8] sm:$0xff]
    %v4545 = vld [vmem:[#allocation13 + $0x7d0] sm:$0xff]
    %v4546 = vld [vmem:[#allocation13 + $0x7d8] sm:$0xff]
    %v4547 = vld [vmem:[#allocation13 + $0x7e0] sm:$0xff]
    %v4548 = vld [vmem:[#allocation13 + $0x7e8] sm:$0xff]
    %v4549 = vld [vmem:[#allocation13 + $0x7f0] sm:$0xff]
    %v4550 = vld [vmem:[#allocation13 + $0x7f8] sm:$0xff]
    %s4551 = scalar_lea.vmem [#allocation13], 2048
    %v4552 = vld [vmem:[%s4551] sm:$0xff]
    %v4553 = vld [vmem:[%s4551 + $0x8] sm:$0xff]
    %v4554 = vld [vmem:[%s4551 + $0x10] sm:$0xff]
    %v4555 = vld [vmem:[%s4551 + $0x18] sm:$0xff]
    %v4556 = vld [vmem:[%s4551 + $0x20] sm:$0xff]
    %v4557 = vld [vmem:[%s4551 + $0x28] sm:$0xff]
    %v4558 = vld [vmem:[%s4551 + $0x30] sm:$0xff]
    %v4559 = vld [vmem:[%s4551 + $0x38] sm:$0xff]
    %v4560 = vld [vmem:[%s4551 + $0x40] sm:$0xff]
    %v4561 = vld [vmem:[%s4551 + $0x48] sm:$0xff]
    %v4562 = vld [vmem:[%s4551 + $0x50] sm:$0xff]
    %v4563 = vld [vmem:[%s4551 + $0x58] sm:$0xff]
    %v4564 = vld [vmem:[%s4551 + $0x60] sm:$0xff]
    %v4565 = vld [vmem:[%s4551 + $0x68] sm:$0xff]
    %v4566 = vld [vmem:[%s4551 + $0x70] sm:$0xff]
    %v4567 = vld [vmem:[%s4551 + $0x78] sm:$0xff]
    %v4568 = vld [vmem:[%s4551 + $0x80] sm:$0xff]
    %v4569 = vld [vmem:[%s4551 + $0x88] sm:$0xff]
    %v4570 = vld [vmem:[%s4551 + $0x90] sm:$0xff]
    %v4571 = vld [vmem:[%s4551 + $0x98] sm:$0xff]
    %v4572 = vld [vmem:[%s4551 + $0xa0] sm:$0xff]
    %v4573 = vld [vmem:[%s4551 + $0xa8] sm:$0xff]
    %v4574 = vld [vmem:[%s4551 + $0xb0] sm:$0xff]
    %v4575 = vld [vmem:[%s4551 + $0xb8] sm:$0xff]
    %v4576 = vld [vmem:[%s4551 + $0xc0] sm:$0xff]
    %v4577 = vld [vmem:[%s4551 + $0xc8] sm:$0xff]
    %v4578 = vld [vmem:[%s4551 + $0xd0] sm:$0xff]
    %v4579 = vld [vmem:[%s4551 + $0xd8] sm:$0xff]
    %v4580 = vld [vmem:[%s4551 + $0xe0] sm:$0xff]
    %v4581 = vld [vmem:[%s4551 + $0xe8] sm:$0xff]
    %v4582 = vld [vmem:[%s4551 + $0xf0] sm:$0xff]
    %v4583 = vld [vmem:[%s4551 + $0xf8] sm:$0xff]
    %v4584 = vld [vmem:[%s4551 + $0x100] sm:$0xff]
    %v4585 = vld [vmem:[%s4551 + $0x108] sm:$0xff]
    %v4586 = vld [vmem:[%s4551 + $0x110] sm:$0xff]
    %v4587 = vld [vmem:[%s4551 + $0x118] sm:$0xff]
    %v4588 = vld [vmem:[%s4551 + $0x120] sm:$0xff]
    %v4589 = vld [vmem:[%s4551 + $0x128] sm:$0xff]
    %v4590 = vld [vmem:[%s4551 + $0x130] sm:$0xff]
    %v4591 = vld [vmem:[%s4551 + $0x138] sm:$0xff]
    %v4592 = vld [vmem:[%s4551 + $0x140] sm:$0xff]
    %v4593 = vld [vmem:[%s4551 + $0x148] sm:$0xff]
    %v4594 = vld [vmem:[%s4551 + $0x150] sm:$0xff]
    %v4595 = vld [vmem:[%s4551 + $0x158] sm:$0xff]
    %v4596 = vld [vmem:[%s4551 + $0x160] sm:$0xff]
    %v4597 = vld [vmem:[%s4551 + $0x168] sm:$0xff]
    %v4598 = vld [vmem:[%s4551 + $0x170] sm:$0xff]
    %v4599 = vld [vmem:[%s4551 + $0x178] sm:$0xff]
    %v4600 = vld [vmem:[%s4551 + $0x180] sm:$0xff]
    %v4601 = vld [vmem:[%s4551 + $0x188] sm:$0xff]
    %v4602 = vld [vmem:[%s4551 + $0x190] sm:$0xff]
    %v4603 = vld [vmem:[%s4551 + $0x198] sm:$0xff]
    %v4604 = vld [vmem:[%s4551 + $0x1a0] sm:$0xff]
    %v4605 = vld [vmem:[%s4551 + $0x1a8] sm:$0xff]
    %v4606 = vld [vmem:[%s4551 + $0x1b0] sm:$0xff]
    %v4607 = vld [vmem:[%s4551 + $0x1b8] sm:$0xff]
    %v4608 = vld [vmem:[%s4551 + $0x1c0] sm:$0xff]
    %v4609 = vld [vmem:[%s4551 + $0x1c8] sm:$0xff]
    %v4610 = vld [vmem:[%s4551 + $0x1d0] sm:$0xff]
    %v4611 = vld [vmem:[%s4551 + $0x1d8] sm:$0xff]
    %v4612 = vld [vmem:[%s4551 + $0x1e0] sm:$0xff]
    %v4613 = vld [vmem:[%s4551 + $0x1e8] sm:$0xff]
    %v4614 = vld [vmem:[%s4551 + $0x1f0] sm:$0xff]
    %v4615 = vld [vmem:[%s4551 + $0x1f8] sm:$0xff]
    %v4616 = vld [vmem:[%s4551 + $0x200] sm:$0xff]
    %v4617 = vld [vmem:[%s4551 + $0x208] sm:$0xff]
    %v4618 = vld [vmem:[%s4551 + $0x210] sm:$0xff]
    %v4619 = vld [vmem:[%s4551 + $0x218] sm:$0xff]
    %v4620 = vld [vmem:[%s4551 + $0x220] sm:$0xff]
    %v4621 = vld [vmem:[%s4551 + $0x228] sm:$0xff]
    %v4622 = vld [vmem:[%s4551 + $0x230] sm:$0xff]
    %v4623 = vld [vmem:[%s4551 + $0x238] sm:$0xff]
    %v4624 = vld [vmem:[%s4551 + $0x240] sm:$0xff]
    %v4625 = vld [vmem:[%s4551 + $0x248] sm:$0xff]
    %v4626 = vld [vmem:[%s4551 + $0x250] sm:$0xff]
    %v4627 = vld [vmem:[%s4551 + $0x258] sm:$0xff]
    %v4628 = vld [vmem:[%s4551 + $0x260] sm:$0xff]
    %v4629 = vld [vmem:[%s4551 + $0x268] sm:$0xff]
    %v4630 = vld [vmem:[%s4551 + $0x270] sm:$0xff]
    %v4631 = vld [vmem:[%s4551 + $0x278] sm:$0xff]
    %v4632 = vld [vmem:[%s4551 + $0x280] sm:$0xff]
    %v4633 = vld [vmem:[%s4551 + $0x288] sm:$0xff]
    %v4634 = vld [vmem:[%s4551 + $0x290] sm:$0xff]
    %v4635 = vld [vmem:[%s4551 + $0x298] sm:$0xff]
    %v4636 = vld [vmem:[%s4551 + $0x2a0] sm:$0xff]
    %v4637 = vld [vmem:[%s4551 + $0x2a8] sm:$0xff]
    %v4638 = vld [vmem:[%s4551 + $0x2b0] sm:$0xff]
    %v4639 = vld [vmem:[%s4551 + $0x2b8] sm:$0xff]
    %v4640 = vld [vmem:[%s4551 + $0x2c0] sm:$0xff]
    %v4641 = vld [vmem:[%s4551 + $0x2c8] sm:$0xff]
    %v4642 = vld [vmem:[%s4551 + $0x2d0] sm:$0xff]
    %v4643 = vld [vmem:[%s4551 + $0x2d8] sm:$0xff]
    %v4644 = vld [vmem:[%s4551 + $0x2e0] sm:$0xff]
    %v4645 = vld [vmem:[%s4551 + $0x2e8] sm:$0xff]
    %v4646 = vld [vmem:[%s4551 + $0x2f0] sm:$0xff]
    %v4647 = vld [vmem:[%s4551 + $0x2f8] sm:$0xff]
    %v4648 = vld [vmem:[%s4551 + $0x300] sm:$0xff]
    %v4649 = vld [vmem:[%s4551 + $0x308] sm:$0xff]
    %v4650 = vld [vmem:[%s4551 + $0x310] sm:$0xff]
    %v4651 = vld [vmem:[%s4551 + $0x318] sm:$0xff]
    %v4652 = vld [vmem:[%s4551 + $0x320] sm:$0xff]
    %v4653 = vld [vmem:[%s4551 + $0x328] sm:$0xff]
    %v4654 = vld [vmem:[%s4551 + $0x330] sm:$0xff]
    %v4655 = vld [vmem:[%s4551 + $0x338] sm:$0xff]
    %v4656 = vld [vmem:[%s4551 + $0x340] sm:$0xff]
    %v4657 = vld [vmem:[%s4551 + $0x348] sm:$0xff]
    %v4658 = vld [vmem:[%s4551 + $0x350] sm:$0xff]
    %v4659 = vld [vmem:[%s4551 + $0x358] sm:$0xff]
    %v4660 = vld [vmem:[%s4551 + $0x360] sm:$0xff]
    %v4661 = vld [vmem:[%s4551 + $0x368] sm:$0xff]
    %v4662 = vld [vmem:[%s4551 + $0x370] sm:$0xff]
    %v4663 = vld [vmem:[%s4551 + $0x378] sm:$0xff]
    %v4664 = vld [vmem:[%s4551 + $0x380] sm:$0xff]
    %v4665 = vld [vmem:[%s4551 + $0x388] sm:$0xff]
    %v4666 = vld [vmem:[%s4551 + $0x390] sm:$0xff]
    %v4667 = vld [vmem:[%s4551 + $0x398] sm:$0xff]
    %v4668 = vld [vmem:[%s4551 + $0x3a0] sm:$0xff]
    %v4669 = vld [vmem:[%s4551 + $0x3a8] sm:$0xff]
    %v4670 = vld [vmem:[%s4551 + $0x3b0] sm:$0xff]
    %v4671 = vld [vmem:[%s4551 + $0x3b8] sm:$0xff]
    %v4672 = vld [vmem:[%s4551 + $0x3c0] sm:$0xff]
    %v4673 = vld [vmem:[%s4551 + $0x3c8] sm:$0xff]
    %v4674 = vld [vmem:[%s4551 + $0x3d0] sm:$0xff]
    %v4675 = vld [vmem:[%s4551 + $0x3d8] sm:$0xff]
    %v4676 = vld [vmem:[%s4551 + $0x3e0] sm:$0xff]
    %v4677 = vld [vmem:[%s4551 + $0x3e8] sm:$0xff]
    %v4678 = vld [vmem:[%s4551 + $0x3f0] sm:$0xff]
    %v4679 = vld [vmem:[%s4551 + $0x3f8] sm:$0xff]
    %v4680 = vld [vmem:[%s4551 + $0x400] sm:$0xff]
    %v4681 = vld [vmem:[%s4551 + $0x408] sm:$0xff]
    %v4682 = vld [vmem:[%s4551 + $0x410] sm:$0xff]
    %v4683 = vld [vmem:[%s4551 + $0x418] sm:$0xff]
    %v4684 = vld [vmem:[%s4551 + $0x420] sm:$0xff]
    %v4685 = vld [vmem:[%s4551 + $0x428] sm:$0xff]
    %v4686 = vld [vmem:[%s4551 + $0x430] sm:$0xff]
    %v4687 = vld [vmem:[%s4551 + $0x438] sm:$0xff]
    %v4688 = vld [vmem:[%s4551 + $0x440] sm:$0xff]
    %v4689 = vld [vmem:[%s4551 + $0x448] sm:$0xff]
    %v4690 = vld [vmem:[%s4551 + $0x450] sm:$0xff]
    %v4691 = vld [vmem:[%s4551 + $0x458] sm:$0xff]
    %v4692 = vld [vmem:[%s4551 + $0x460] sm:$0xff]
    %v4693 = vld [vmem:[%s4551 + $0x468] sm:$0xff]
    %v4694 = vld [vmem:[%s4551 + $0x470] sm:$0xff]
    %v4695 = vld [vmem:[%s4551 + $0x478] sm:$0xff]
    %v4696 = vld [vmem:[%s4551 + $0x480] sm:$0xff]
    %v4697 = vld [vmem:[%s4551 + $0x488] sm:$0xff]
    %v4698 = vld [vmem:[%s4551 + $0x490] sm:$0xff]
    %v4699 = vld [vmem:[%s4551 + $0x498] sm:$0xff]
    %v4700 = vld [vmem:[%s4551 + $0x4a0] sm:$0xff]
    %v4701 = vld [vmem:[%s4551 + $0x4a8] sm:$0xff]
    %v4702 = vld [vmem:[%s4551 + $0x4b0] sm:$0xff]
    %v4703 = vld [vmem:[%s4551 + $0x4b8] sm:$0xff]
    %v4704 = vld [vmem:[%s4551 + $0x4c0] sm:$0xff]
    %v4705 = vld [vmem:[%s4551 + $0x4c8] sm:$0xff]
    %v4706 = vld [vmem:[%s4551 + $0x4d0] sm:$0xff]
    %v4707 = vld [vmem:[%s4551 + $0x4d8] sm:$0xff]
    %v4708 = vld [vmem:[%s4551 + $0x4e0] sm:$0xff]
    %v4709 = vld [vmem:[%s4551 + $0x4e8] sm:$0xff]
    %v4710 = vld [vmem:[%s4551 + $0x4f0] sm:$0xff]
    %v4711 = vld [vmem:[%s4551 + $0x4f8] sm:$0xff]
    %v4712 = vld [vmem:[%s4551 + $0x500] sm:$0xff]
    %v4713 = vld [vmem:[%s4551 + $0x508] sm:$0xff]
    %v4714 = vld [vmem:[%s4551 + $0x510] sm:$0xff]
    %v4715 = vld [vmem:[%s4551 + $0x518] sm:$0xff]
    %v4716 = vld [vmem:[%s4551 + $0x520] sm:$0xff]
    %v4717 = vld [vmem:[%s4551 + $0x528] sm:$0xff]
    %v4718 = vld [vmem:[%s4551 + $0x530] sm:$0xff]
    %v4719 = vld [vmem:[%s4551 + $0x538] sm:$0xff]
    %v4720 = vld [vmem:[%s4551 + $0x540] sm:$0xff]
    %v4721 = vld [vmem:[%s4551 + $0x548] sm:$0xff]
    %v4722 = vld [vmem:[%s4551 + $0x550] sm:$0xff]
    %v4723 = vld [vmem:[%s4551 + $0x558] sm:$0xff]
    %v4724 = vld [vmem:[%s4551 + $0x560] sm:$0xff]
    %v4725 = vld [vmem:[%s4551 + $0x568] sm:$0xff]
    %v4726 = vld [vmem:[%s4551 + $0x570] sm:$0xff]
    %v4727 = vld [vmem:[%s4551 + $0x578] sm:$0xff]
    %v4728 = vld [vmem:[%s4551 + $0x580] sm:$0xff]
    %v4729 = vld [vmem:[%s4551 + $0x588] sm:$0xff]
    %v4730 = vld [vmem:[%s4551 + $0x590] sm:$0xff]
    %v4731 = vld [vmem:[%s4551 + $0x598] sm:$0xff]
    %v4732 = vld [vmem:[%s4551 + $0x5a0] sm:$0xff]
    %v4733 = vld [vmem:[%s4551 + $0x5a8] sm:$0xff]
    %v4734 = vld [vmem:[%s4551 + $0x5b0] sm:$0xff]
    %v4735 = vld [vmem:[%s4551 + $0x5b8] sm:$0xff]
    %v4736 = vld [vmem:[%s4551 + $0x5c0] sm:$0xff]
    %v4737 = vld [vmem:[%s4551 + $0x5c8] sm:$0xff]
    %v4738 = vld [vmem:[%s4551 + $0x5d0] sm:$0xff]
    %v4739 = vld [vmem:[%s4551 + $0x5d8] sm:$0xff]
    %v4740 = vld [vmem:[%s4551 + $0x5e0] sm:$0xff]
    %v4741 = vld [vmem:[%s4551 + $0x5e8] sm:$0xff]
    %v4742 = vld [vmem:[%s4551 + $0x5f0] sm:$0xff]
    %v4743 = vld [vmem:[%s4551 + $0x5f8] sm:$0xff]
    %v4744 = vld [vmem:[%s4551 + $0x600] sm:$0xff]
    %v4745 = vld [vmem:[%s4551 + $0x608] sm:$0xff]
    %v4746 = vld [vmem:[%s4551 + $0x610] sm:$0xff]
    %v4747 = vld [vmem:[%s4551 + $0x618] sm:$0xff]
    %v4748 = vld [vmem:[%s4551 + $0x620] sm:$0xff]
    %v4749 = vld [vmem:[%s4551 + $0x628] sm:$0xff]
    %v4750 = vld [vmem:[%s4551 + $0x630] sm:$0xff]
    %v4751 = vld [vmem:[%s4551 + $0x638] sm:$0xff]
    %v4752 = vld [vmem:[%s4551 + $0x640] sm:$0xff]
    %v4753 = vld [vmem:[%s4551 + $0x648] sm:$0xff]
    %v4754 = vld [vmem:[%s4551 + $0x650] sm:$0xff]
    %v4755 = vld [vmem:[%s4551 + $0x658] sm:$0xff]
    %v4756 = vld [vmem:[%s4551 + $0x660] sm:$0xff]
    %v4757 = vld [vmem:[%s4551 + $0x668] sm:$0xff]
    %v4758 = vld [vmem:[%s4551 + $0x670] sm:$0xff]
    %v4759 = vld [vmem:[%s4551 + $0x678] sm:$0xff]
    %v4760 = vld [vmem:[%s4551 + $0x680] sm:$0xff]
    %v4761 = vld [vmem:[%s4551 + $0x688] sm:$0xff]
    %v4762 = vld [vmem:[%s4551 + $0x690] sm:$0xff]
    %v4763 = vld [vmem:[%s4551 + $0x698] sm:$0xff]
    %v4764 = vld [vmem:[%s4551 + $0x6a0] sm:$0xff]
    %v4765 = vld [vmem:[%s4551 + $0x6a8] sm:$0xff]
    %v4766 = vld [vmem:[%s4551 + $0x6b0] sm:$0xff]
    %v4767 = vld [vmem:[%s4551 + $0x6b8] sm:$0xff]
    %v4768 = vld [vmem:[%s4551 + $0x6c0] sm:$0xff]
    %v4769 = vld [vmem:[%s4551 + $0x6c8] sm:$0xff]
    %v4770 = vld [vmem:[%s4551 + $0x6d0] sm:$0xff]
    %v4771 = vld [vmem:[%s4551 + $0x6d8] sm:$0xff]
    %v4772 = vld [vmem:[%s4551 + $0x6e0] sm:$0xff]
    %v4773 = vld [vmem:[%s4551 + $0x6e8] sm:$0xff]
    %v4774 = vld [vmem:[%s4551 + $0x6f0] sm:$0xff]
    %v4775 = vld [vmem:[%s4551 + $0x6f8] sm:$0xff]
    %v4776 = vld [vmem:[%s4551 + $0x700] sm:$0xff]
    %v4777 = vld [vmem:[%s4551 + $0x708] sm:$0xff]
    %v4778 = vld [vmem:[%s4551 + $0x710] sm:$0xff]
    %v4779 = vld [vmem:[%s4551 + $0x718] sm:$0xff]
    %v4780 = vld [vmem:[%s4551 + $0x720] sm:$0xff]
    %v4781 = vld [vmem:[%s4551 + $0x728] sm:$0xff]
    %v4782 = vld [vmem:[%s4551 + $0x730] sm:$0xff]
    %v4783 = vld [vmem:[%s4551 + $0x738] sm:$0xff]
    %v4784 = vld [vmem:[%s4551 + $0x740] sm:$0xff]
    %v4785 = vld [vmem:[%s4551 + $0x748] sm:$0xff]
    %v4786 = vld [vmem:[%s4551 + $0x750] sm:$0xff]
    %v4787 = vld [vmem:[%s4551 + $0x758] sm:$0xff]
    %v4788 = vld [vmem:[%s4551 + $0x760] sm:$0xff]
    %v4789 = vld [vmem:[%s4551 + $0x768] sm:$0xff]
    %v4790 = vld [vmem:[%s4551 + $0x770] sm:$0xff]
    %v4791 = vld [vmem:[%s4551 + $0x778] sm:$0xff]
    %v4792 = vld [vmem:[%s4551 + $0x780] sm:$0xff]
    %v4793 = vld [vmem:[%s4551 + $0x788] sm:$0xff]
    %v4794 = vld [vmem:[%s4551 + $0x790] sm:$0xff]
    %v4795 = vld [vmem:[%s4551 + $0x798] sm:$0xff]
    %v4796 = vld [vmem:[%s4551 + $0x7a0] sm:$0xff]
    %v4797 = vld [vmem:[%s4551 + $0x7a8] sm:$0xff]
    %v4798 = vld [vmem:[%s4551 + $0x7b0] sm:$0xff]
    %v4799 = vld [vmem:[%s4551 + $0x7b8] sm:$0xff]
    %v4800 = vld [vmem:[%s4551 + $0x7c0] sm:$0xff]
    %v4801 = vld [vmem:[%s4551 + $0x7c8] sm:$0xff]
    %v4802 = vld [vmem:[%s4551 + $0x7d0] sm:$0xff]
    %v4803 = vld [vmem:[%s4551 + $0x7d8] sm:$0xff]
    %v4804 = vld [vmem:[%s4551 + $0x7e0] sm:$0xff]
    %v4805 = vld [vmem:[%s4551 + $0x7e8] sm:$0xff]
    %v4806 = vld [vmem:[%s4551 + $0x7f0] sm:$0xff]
    %v4807 = vld [vmem:[%s4551 + $0x7f8] sm:$0xff]
    %v4812 = vrot.slane %v4291, 1
    %v4813 = vrot.slane %v4292, 1
    %v4814 = vrot.slane %v4293, 1
    %v4815 = vrot.slane %v4294, 1
    %4820 = vmatprep.subr.mxu0 %v4553
    %4821 = vmatpush1.msra.mxu0 %v4552
    %4822 = vmatprep.subr.mxu0 %v4557
    %4823 = vmatpush1.msra.mxu0 %v4556
    %4824 = vmatprep.subr.mxu0 %v4561
    %4825 = vmatpush1.msra.mxu0 %v4560
    %4826 = vmatprep.subr.mxu0 %v4565
    %4827 = vmatpush1.msra.mxu0 %v4564
    %4828 = vmatprep.subr.mxu0 %v4569
    %4829 = vmatpush1.msra.mxu0 %v4568
    %4830 = vmatprep.subr.mxu0 %v4573
    %4831 = vmatpush1.msra.mxu0 %v4572
    %4832 = vmatprep.subr.mxu0 %v4577
    %4833 = vmatpush1.msra.mxu0 %v4576
    %4834 = vmatprep.subr.mxu0 %v4581
    %4835 = vmatpush1.msra.mxu0 %v4580
    %4836 = vmatprep.subr.mxu0 %v4585
    %4837 = vmatpush1.msra.mxu0 %v4584
    %4838 = vmatprep.subr.mxu0 %v4589
    %4839 = vmatpush1.msra.mxu0 %v4588
    %4840 = vmatprep.subr.mxu0 %v4593
    %4841 = vmatpush1.msra.mxu0 %v4592
    %4842 = vmatprep.subr.mxu0 %v4597
    %4843 = vmatpush1.msra.mxu0 %v4596
    %4844 = vmatprep.subr.mxu0 %v4601
    %4845 = vmatpush1.msra.mxu0 %v4600
    %4846 = vmatprep.subr.mxu0 %v4605
    %4847 = vmatpush1.msra.mxu0 %v4604
    %4848 = vmatprep.subr.mxu0 %v4609
    %4849 = vmatpush1.msra.mxu0 %v4608
    %4850 = vmatprep.subr.mxu0 %v4613
    %4851 = vmatpush1.msra.mxu0 %v4612
    %4852 = vmatprep.subr.mxu0 %v4617
    %4853 = vmatpush1.msra.mxu0 %v4616
    %4854 = vmatprep.subr.mxu0 %v4621
    %4855 = vmatpush1.msra.mxu0 %v4620
    %4856 = vmatprep.subr.mxu0 %v4625
    %4857 = vmatpush1.msra.mxu0 %v4624
    %4858 = vmatprep.subr.mxu0 %v4629
    %4859 = vmatpush1.msra.mxu0 %v4628
    %4860 = vmatprep.subr.mxu0 %v4633
    %4861 = vmatpush1.msra.mxu0 %v4632
    %4862 = vmatprep.subr.mxu0 %v4637
    %4863 = vmatpush1.msra.mxu0 %v4636
    %4864 = vmatprep.subr.mxu0 %v4641
    %4865 = vmatpush1.msra.mxu0 %v4640
    %4866 = vmatprep.subr.mxu0 %v4645
    %4867 = vmatpush1.msra.mxu0 %v4644
    %4868 = vmatprep.subr.mxu0 %v4649
    %4869 = vmatpush1.msra.mxu0 %v4648
    %4870 = vmatprep.subr.mxu0 %v4653
    %4871 = vmatpush1.msra.mxu0 %v4652
    %4872 = vmatprep.subr.mxu0 %v4657
    %4873 = vmatpush1.msra.mxu0 %v4656
    %4874 = vmatprep.subr.mxu0 %v4661
    %4875 = vmatpush1.msra.mxu0 %v4660
    %4876 = vmatprep.subr.mxu0 %v4665
    %4877 = vmatpush1.msra.mxu0 %v4664
    %4878 = vmatprep.subr.mxu0 %v4669
    %4879 = vmatpush1.msra.mxu0 %v4668
    %4880 = vmatprep.subr.mxu0 %v4673
    %4881 = vmatpush1.msra.mxu0 %v4672
    %4882 = vmatprep.subr.mxu0 %v4677
    %4883 = vmatpush1.msra.mxu0 %v4676
    %4884 = vmatprep.mubr.f32.mxu0 %v4813
    %4885 = vmatmul.mubr.f32.gmra.mrb[0].mxu0 %v4812
    %v4886 = vpop.f32.mrb[0].mxu0
    %v4887 = vadd.f32 0.0, %v4886
    %v4888 = vpop.f32.mrb[0].mxu0
    %v4889 = vadd.f32 0.0, %v4888
    %4890 = vdwg.mxu0
    %4891 = vmatprep.subr.mxu0 %v4681
    %4892 = vmatpush1.msra.mxu0 %v4680
    %4893 = vmatprep.subr.mxu0 %v4685
    %4894 = vmatpush1.msra.mxu0 %v4684
    %4895 = vmatprep.subr.mxu0 %v4689
    %4896 = vmatpush1.msra.mxu0 %v4688
    %4897 = vmatprep.subr.mxu0 %v4693
    %4898 = vmatpush1.msra.mxu0 %v4692
    %4899 = vmatprep.subr.mxu0 %v4697
    %4900 = vmatpush1.msra.mxu0 %v4696
    %4901 = vmatprep.subr.mxu0 %v4701
    %4902 = vmatpush1.msra.mxu0 %v4700
    %4903 = vmatprep.subr.mxu0 %v4705
    %4904 = vmatpush1.msra.mxu0 %v4704
    %4905 = vmatprep.subr.mxu0 %v4709
    %4906 = vmatpush1.msra.mxu0 %v4708
    %4907 = vmatprep.subr.mxu0 %v4713
    %4908 = vmatpush1.msra.mxu0 %v4712
    %4909 = vmatprep.subr.mxu0 %v4717
    %4910 = vmatpush1.msra.mxu0 %v4716
    %4911 = vmatprep.subr.mxu0 %v4721
    %4912 = vmatpush1.msra.mxu0 %v4720
    %4913 = vmatprep.subr.mxu0 %v4725
    %4914 = vmatpush1.msra.mxu0 %v4724
    %4915 = vmatprep.subr.mxu0 %v4729
    %4916 = vmatpush1.msra.mxu0 %v4728
    %4917 = vmatprep.subr.mxu0 %v4733
    %4918 = vmatpush1.msra.mxu0 %v4732
    %4919 = vmatprep.subr.mxu0 %v4737
    %4920 = vmatpush1.msra.mxu0 %v4736
    %4921 = vmatprep.subr.mxu0 %v4741
    %4922 = vmatpush1.msra.mxu0 %v4740
    %4923 = vmatprep.subr.mxu0 %v4745
    %4924 = vmatpush1.msra.mxu0 %v4744
    %4925 = vmatprep.subr.mxu0 %v4749
    %4926 = vmatpush1.msra.mxu0 %v4748
    %4927 = vmatprep.subr.mxu0 %v4753
    %4928 = vmatpush1.msra.mxu0 %v4752
    %4929 = vmatprep.subr.mxu0 %v4757
    %4930 = vmatpush1.msra.mxu0 %v4756
    %4931 = vmatprep.subr.mxu0 %v4761
    %4932 = vmatpush1.msra.mxu0 %v4760
    %4933 = vmatprep.subr.mxu0 %v4765
    %4934 = vmatpush1.msra.mxu0 %v4764
    %4935 = vmatprep.subr.mxu0 %v4769
    %4936 = vmatpush1.msra.mxu0 %v4768
    %4937 = vmatprep.subr.mxu0 %v4773
    %4938 = vmatpush1.msra.mxu0 %v4772
    %4939 = vmatprep.subr.mxu0 %v4777
    %4940 = vmatpush1.msra.mxu0 %v4776
    %4941 = vmatprep.subr.mxu0 %v4781
    %4942 = vmatpush1.msra.mxu0 %v4780
    %4943 = vmatprep.subr.mxu0 %v4785
    %4944 = vmatpush1.msra.mxu0 %v4784
    %4945 = vmatprep.subr.mxu0 %v4789
    %4946 = vmatpush1.msra.mxu0 %v4788
    %4947 = vmatprep.subr.mxu0 %v4793
    %4948 = vmatpush1.msra.mxu0 %v4792
    %4949 = vmatprep.subr.mxu0 %v4797
    %4950 = vmatpush1.msra.mxu0 %v4796
    %4951 = vmatprep.subr.mxu0 %v4801
    %4952 = vmatpush1.msra.mxu0 %v4800
    %4953 = vmatprep.subr.mxu0 %v4805
    %4954 = vmatpush1.msra.mxu0 %v4804
    %4955 = vmatprep.mubr.f32.mxu0 %v4815
    %4956 = vmatmul.mubr.f32.gmra.mrb[0].mxu0 %v4814
    %v4957 = vpop.f32.mrb[0].mxu0
    %v4958 = vadd.f32 %v4887, %v4957
    %v4959 = vpop.f32.mrb[0].mxu0
    %v4960 = vadd.f32 %v4889, %v4959
    %4961 = vdwg.mxu0
    %4962 = vmatprep.subr.mxu0 %v4555
    %4963 = vmatpush1.msra.mxu0 %v4554
    %4964 = vmatprep.subr.mxu0 %v4559
    %4965 = vmatpush1.msra.mxu0 %v4558
    %4966 = vmatprep.subr.mxu0 %v4563
    %4967 = vmatpush1.msra.mxu0 %v4562
    %4968 = vmatprep.subr.mxu0 %v4567
    %4969 = vmatpush1.msra.mxu0 %v4566
    %4970 = vmatprep.subr.mxu0 %v4571
    %4971 = vmatpush1.msra.mxu0 %v4570
    %4972 = vmatprep.subr.mxu0 %v4575
    %4973 = vmatpush1.msra.mxu0 %v4574
    %4974 = vmatprep.subr.mxu0 %v4579
    %4975 = vmatpush1.msra.mxu0 %v4578
    %4976 = vmatprep.subr.mxu0 %v4583
    %4977 = vmatpush1.msra.mxu0 %v4582
    %4978 = vmatprep.subr.mxu0 %v4587
    %4979 = vmatpush1.msra.mxu0 %v4586
    %4980 = vmatprep.subr.mxu0 %v4591
    %4981 = vmatpush1.msra.mxu0 %v4590
    %4982 = vmatprep.subr.mxu0 %v4595
    %4983 = vmatpush1.msra.mxu0 %v4594
    %4984 = vmatprep.subr.mxu0 %v4599
    %4985 = vmatpush1.msra.mxu0 %v4598
    %4986 = vmatprep.subr.mxu0 %v4603
    %4987 = vmatpush1.msra.mxu0 %v4602
    %4988 = vmatprep.subr.mxu0 %v4607
    %4989 = vmatpush1.msra.mxu0 %v4606
    %4990 = vmatprep.subr.mxu0 %v4611
    %4991 = vmatpush1.msra.mxu0 %v4610
    %4992 = vmatprep.subr.mxu0 %v4615
    %4993 = vmatpush1.msra.mxu0 %v4614
    %4994 = vmatprep.subr.mxu0 %v4619
    %4995 = vmatpush1.msra.mxu0 %v4618
    %4996 = vmatprep.subr.mxu0 %v4623
    %4997 = vmatpush1.msra.mxu0 %v4622
    %4998 = vmatprep.subr.mxu0 %v4627
    %4999 = vmatpush1.msra.mxu0 %v4626
    %5000 = vmatprep.subr.mxu0 %v4631
    %5001 = vmatpush1.msra.mxu0 %v4630
    %5002 = vmatprep.subr.mxu0 %v4635
    %5003 = vmatpush1.msra.mxu0 %v4634
    %5004 = vmatprep.subr.mxu0 %v4639
    %5005 = vmatpush1.msra.mxu0 %v4638
    %5006 = vmatprep.subr.mxu0 %v4643
    %5007 = vmatpush1.msra.mxu0 %v4642
    %5008 = vmatprep.subr.mxu0 %v4647
    %5009 = vmatpush1.msra.mxu0 %v4646
    %5010 = vmatprep.subr.mxu0 %v4651
    %5011 = vmatpush1.msra.mxu0 %v4650
    %5012 = vmatprep.subr.mxu0 %v4655
    %5013 = vmatpush1.msra.mxu0 %v4654
    %5014 = vmatprep.subr.mxu0 %v4659
    %5015 = vmatpush1.msra.mxu0 %v4658
    %5016 = vmatprep.subr.mxu0 %v4663
    %5017 = vmatpush1.msra.mxu0 %v4662
    %5018 = vmatprep.subr.mxu0 %v4667
    %5019 = vmatpush1.msra.mxu0 %v4666
    %5020 = vmatprep.subr.mxu0 %v4671
    %5021 = vmatpush1.msra.mxu0 %v4670
    %5022 = vmatprep.subr.mxu0 %v4675
    %5023 = vmatpush1.msra.mxu0 %v4674
    %5024 = vmatprep.subr.mxu0 %v4679
    %5025 = vmatpush1.msra.mxu0 %v4678
    %5026 = vmatprep.mubr.f32.mxu0 %v4813
    %5027 = vmatmul.mubr.f32.gmra.mrb[0].mxu0 %v4812
    %v5028 = vpop.f32.mrb[0].mxu0
    %v5029 = vadd.f32 0.0, %v5028
    %v5030 = vpop.f32.mrb[0].mxu0
    %v5031 = vadd.f32 0.0, %v5030
    %5032 = vdwg.mxu0
    %5033 = vmatprep.subr.mxu0 %v4683
    %5034 = vmatpush1.msra.mxu0 %v4682
    %5035 = vmatprep.subr.mxu0 %v4687
    %5036 = vmatpush1.msra.mxu0 %v4686
    %5037 = vmatprep.subr.mxu0 %v4691
    %5038 = vmatpush1.msra.mxu0 %v4690
    %5039 = vmatprep.subr.mxu0 %v4695
    %5040 = vmatpush1.msra.mxu0 %v4694
    %5041 = vmatprep.subr.mxu0 %v4699
    %5042 = vmatpush1.msra.mxu0 %v4698
    %5043 = vmatprep.subr.mxu0 %v4703
    %5044 = vmatpush1.msra.mxu0 %v4702
    %5045 = vmatprep.subr.mxu0 %v4707
    %5046 = vmatpush1.msra.mxu0 %v4706
    %5047 = vmatprep.subr.mxu0 %v4711
    %5048 = vmatpush1.msra.mxu0 %v4710
    %5049 = vmatprep.subr.mxu0 %v4715
    %5050 = vmatpush1.msra.mxu0 %v4714
    %5051 = vmatprep.subr.mxu0 %v4719
    %5052 = vmatpush1.msra.mxu0 %v4718
    %5053 = vmatprep.subr.mxu0 %v4723
    %5054 = vmatpush1.msra.mxu0 %v4722
    %5055 = vmatprep.subr.mxu0 %v4727
    %5056 = vmatpush1.msra.mxu0 %v4726
    %5057 = vmatprep.subr.mxu0 %v4731
    %5058 = vmatpush1.msra.mxu0 %v4730
    %5059 = vmatprep.subr.mxu0 %v4735
    %5060 = vmatpush1.msra.mxu0 %v4734
    %5061 = vmatprep.subr.mxu0 %v4739
    %5062 = vmatpush1.msra.mxu0 %v4738
    %5063 = vmatprep.subr.mxu0 %v4743
    %5064 = vmatpush1.msra.mxu0 %v4742
    %5065 = vmatprep.subr.mxu0 %v4747
    %5066 = vmatpush1.msra.mxu0 %v4746
    %5067 = vmatprep.subr.mxu0 %v4751
    %5068 = vmatpush1.msra.mxu0 %v4750
    %5069 = vmatprep.subr.mxu0 %v4755
    %5070 = vmatpush1.msra.mxu0 %v4754
    %5071 = vmatprep.subr.mxu0 %v4759
    %5072 = vmatpush1.msra.mxu0 %v4758
    %5073 = vmatprep.subr.mxu0 %v4763
    %5074 = vmatpush1.msra.mxu0 %v4762
    %5075 = vmatprep.subr.mxu0 %v4767
    %5076 = vmatpush1.msra.mxu0 %v4766
    %5077 = vmatprep.subr.mxu0 %v4771
    %5078 = vmatpush1.msra.mxu0 %v4770
    %5079 = vmatprep.subr.mxu0 %v4775
    %5080 = vmatpush1.msra.mxu0 %v4774
    %5081 = vmatprep.subr.mxu0 %v4779
    %5082 = vmatpush1.msra.mxu0 %v4778
    %5083 = vmatprep.subr.mxu0 %v4783
    %5084 = vmatpush1.msra.mxu0 %v4782
    %5085 = vmatprep.subr.mxu0 %v4787
    %5086 = vmatpush1.msra.mxu0 %v4786
    %5087 = vmatprep.subr.mxu0 %v4791
    %5088 = vmatpush1.msra.mxu0 %v4790
    %5089 = vmatprep.subr.mxu0 %v4795
    %5090 = vmatpush1.msra.mxu0 %v4794
    %5091 = vmatprep.subr.mxu0 %v4799
    %5092 = vmatpush1.msra.mxu0 %v4798
    %5093 = vmatprep.subr.mxu0 %v4803
    %5094 = vmatpush1.msra.mxu0 %v4802
    %5095 = vmatprep.subr.mxu0 %v4807
    %5096 = vmatpush1.msra.mxu0 %v4806
    %5097 = vmatprep.mubr.f32.mxu0 %v4815
    %5098 = vmatmul.mubr.f32.gmra.mrb[0].mxu0 %v4814
    %v5099 = vpop.f32.mrb[0].mxu0
    %v5100 = vadd.f32 %v5029, %v5099
    %v5101 = vpop.f32.mrb[0].mxu0
    %v5102 = vadd.f32 %v5031, %v5101
    %5103 = vdwg.mxu0
    %5104 = vmatprep.subr.mxu0 %v4296
    %5105 = vmatpush1.msra.mxu0 %v4295
    %5106 = vmatprep.subr.mxu0 %v4300
    %5107 = vmatpush1.msra.mxu0 %v4299
    %5108 = vmatprep.subr.mxu0 %v4304
    %5109 = vmatpush1.msra.mxu0 %v4303
    %5110 = vmatprep.subr.mxu0 %v4308
    %5111 = vmatpush1.msra.mxu0 %v4307
    %5112 = vmatprep.subr.mxu0 %v4312
    %5113 = vmatpush1.msra.mxu0 %v4311
    %5114 = vmatprep.subr.mxu0 %v4316
    %5115 = vmatpush1.msra.mxu0 %v4315
    %5116 = vmatprep.subr.mxu0 %v4320
    %5117 = vmatpush1.msra.mxu0 %v4319
    %5118 = vmatprep.subr.mxu0 %v4324
    %5119 = vmatpush1.msra.mxu0 %v4323
    %5120 = vmatprep.subr.mxu0 %v4328
    %5121 = vmatpush1.msra.mxu0 %v4327
    %5122 = vmatprep.subr.mxu0 %v4332
    %5123 = vmatpush1.msra.mxu0 %v4331
    %5124 = vmatprep.subr.mxu0 %v4336
    %5125 = vmatpush1.msra.mxu0 %v4335
    %5126 = vmatprep.subr.mxu0 %v4340
    %5127 = vmatpush1.msra.mxu0 %v4339
    %5128 = vmatprep.subr.mxu0 %v4344
    %5129 = vmatpush1.msra.mxu0 %v4343
    %5130 = vmatprep.subr.mxu0 %v4348
    %5131 = vmatpush1.msra.mxu0 %v4347
    %5132 = vmatprep.subr.mxu0 %v4352
    %5133 = vmatpush1.msra.mxu0 %v4351
    %5134 = vmatprep.subr.mxu0 %v4356
    %5135 = vmatpush1.msra.mxu0 %v4355
    %5136 = vmatprep.subr.mxu0 %v4360
    %5137 = vmatpush1.msra.mxu0 %v4359
    %5138 = vmatprep.subr.mxu0 %v4364
    %5139 = vmatpush1.msra.mxu0 %v4363
    %5140 = vmatprep.subr.mxu0 %v4368
    %5141 = vmatpush1.msra.mxu0 %v4367
    %5142 = vmatprep.subr.mxu0 %v4372
    %5143 = vmatpush1.msra.mxu0 %v4371
    %5144 = vmatprep.subr.mxu0 %v4376
    %5145 = vmatpush1.msra.mxu0 %v4375
    %5146 = vmatprep.subr.mxu0 %v4380
    %5147 = vmatpush1.msra.mxu0 %v4379
    %5148 = vmatprep.subr.mxu0 %v4384
    %5149 = vmatpush1.msra.mxu0 %v4383
    %5150 = vmatprep.subr.mxu0 %v4388
    %5151 = vmatpush1.msra.mxu0 %v4387
    %5152 = vmatprep.subr.mxu0 %v4392
    %5153 = vmatpush1.msra.mxu0 %v4391
    %5154 = vmatprep.subr.mxu0 %v4396
    %5155 = vmatpush1.msra.mxu0 %v4395
    %5156 = vmatprep.subr.mxu0 %v4400
    %5157 = vmatpush1.msra.mxu0 %v4399
    %5158 = vmatprep.subr.mxu0 %v4404
    %5159 = vmatpush1.msra.mxu0 %v4403
    %5160 = vmatprep.subr.mxu0 %v4408
    %5161 = vmatpush1.msra.mxu0 %v4407
    %5162 = vmatprep.subr.mxu0 %v4412
    %5163 = vmatpush1.msra.mxu0 %v4411
    %5164 = vmatprep.subr.mxu0 %v4416
    %5165 = vmatpush1.msra.mxu0 %v4415
    %5166 = vmatprep.subr.mxu0 %v4420
    %5167 = vmatpush1.msra.mxu0 %v4419
    %5168 = vmatprep.mubr.f32.mxu0 %v4292
    %5169 = vmatmul.mubr.f32.gmra.mrb[0].mxu0 %v4291
    %v5170 = vpop.f32.mrb[0].mxu0
    %v5171 = vadd.f32 %v4958, %v5170
    %v5172 = vpop.f32.mrb[0].mxu0
    %v5173 = vadd.f32 %v4960, %v5172
    %5174 = vdwg.mxu0
    %5175 = vmatprep.subr.mxu0 %v4424
    %5176 = vmatpush1.msra.mxu0 %v4423
    %5177 = vmatprep.subr.mxu0 %v4428
    %5178 = vmatpush1.msra.mxu0 %v4427
    %5179 = vmatprep.subr.mxu0 %v4432
    %5180 = vmatpush1.msra.mxu0 %v4431
    %5181 = vmatprep.subr.mxu0 %v4436
    %5182 = vmatpush1.msra.mxu0 %v4435
    %5183 = vmatprep.subr.mxu0 %v4440
    %5184 = vmatpush1.msra.mxu0 %v4439
    %5185 = vmatprep.subr.mxu0 %v4444
    %5186 = vmatpush1.msra.mxu0 %v4443
    %5187 = vmatprep.subr.mxu0 %v4448
    %5188 = vmatpush1.msra.mxu0 %v4447
    %5189 = vmatprep.subr.mxu0 %v4452
    %5190 = vmatpush1.msra.mxu0 %v4451
    %5191 = vmatprep.subr.mxu0 %v4456
    %5192 = vmatpush1.msra.mxu0 %v4455
    %5193 = vmatprep.subr.mxu0 %v4460
    %5194 = vmatpush1.msra.mxu0 %v4459
    %5195 = vmatprep.subr.mxu0 %v4464
    %5196 = vmatpush1.msra.mxu0 %v4463
    %5197 = vmatprep.subr.mxu0 %v4468
    %5198 = vmatpush1.msra.mxu0 %v4467
    %5199 = vmatprep.subr.mxu0 %v4472
    %5200 = vmatpush1.msra.mxu0 %v4471
    %5201 = vmatprep.subr.mxu0 %v4476
    %5202 = vmatpush1.msra.mxu0 %v4475
    %5203 = vmatprep.subr.mxu0 %v4480
    %5204 = vmatpush1.msra.mxu0 %v4479
    %5205 = vmatprep.subr.mxu0 %v4484
    %5206 = vmatpush1.msra.mxu0 %v4483
    %5207 = vmatprep.subr.mxu0 %v4488
    %5208 = vmatpush1.msra.mxu0 %v4487
    %5209 = vmatprep.subr.mxu0 %v4492
    %5210 = vmatpush1.msra.mxu0 %v4491
    %5211 = vmatprep.subr.mxu0 %v4496
    %5212 = vmatpush1.msra.mxu0 %v4495
    %5213 = vmatprep.subr.mxu0 %v4500
    %5214 = vmatpush1.msra.mxu0 %v4499
    %5215 = vmatprep.subr.mxu0 %v4504
    %5216 = vmatpush1.msra.mxu0 %v4503
    %5217 = vmatprep.subr.mxu0 %v4508
    %5218 = vmatpush1.msra.mxu0 %v4507
    %5219 = vmatprep.subr.mxu0 %v4512
    %5220 = vmatpush1.msra.mxu0 %v4511
    %5221 = vmatprep.subr.mxu0 %v4516
    %5222 = vmatpush1.msra.mxu0 %v4515
    %5223 = vmatprep.subr.mxu0 %v4520
    %5224 = vmatpush1.msra.mxu0 %v4519
    %5225 = vmatprep.subr.mxu0 %v4524
    %5226 = vmatpush1.msra.mxu0 %v4523
    %5227 = vmatprep.subr.mxu0 %v4528
    %5228 = vmatpush1.msra.mxu0 %v4527
    %5229 = vmatprep.subr.mxu0 %v4532
    %5230 = vmatpush1.msra.mxu0 %v4531
    %5231 = vmatprep.subr.mxu0 %v4536
    %5232 = vmatpush1.msra.mxu0 %v4535
    %5233 = vmatprep.subr.mxu0 %v4540
    %5234 = vmatpush1.msra.mxu0 %v4539
    %5235 = vmatprep.subr.mxu0 %v4544
    %5236 = vmatpush1.msra.mxu0 %v4543
    %5237 = vmatprep.subr.mxu0 %v4548
    %5238 = vmatpush1.msra.mxu0 %v4547
    %5239 = vmatprep.mubr.f32.mxu0 %v4294
    %5240 = vmatmul.mubr.f32.gmra.mrb[0].mxu0 %v4293
    %v5241 = vpop.f32.mrb[0].mxu0
    %v5242 = vadd.f32 %v5171, %v5241
    %v5243 = vpop.f32.mrb[0].mxu0
    %v5244 = vadd.f32 %v5173, %v5243
    %5245 = vdwg.mxu0
    %5246 = vmatprep.subr.mxu0 %v4298
    %5247 = vmatpush1.msra.mxu0 %v4297
    %5248 = vmatprep.subr.mxu0 %v4302
    %5249 = vmatpush1.msra.mxu0 %v4301
    %5250 = vmatprep.subr.mxu0 %v4306
    %5251 = vmatpush1.msra.mxu0 %v4305
    %5252 = vmatprep.subr.mxu0 %v4310
    %5253 = vmatpush1.msra.mxu0 %v4309
    %5254 = vmatprep.subr.mxu0 %v4314
    %5255 = vmatpush1.msra.mxu0 %v4313
    %5256 = vmatprep.subr.mxu0 %v4318
    %5257 = vmatpush1.msra.mxu0 %v4317
    %5258 = vmatprep.subr.mxu0 %v4322
    %5259 = vmatpush1.msra.mxu0 %v4321
    %5260 = vmatprep.subr.mxu0 %v4326
    %5261 = vmatpush1.msra.mxu0 %v4325
    %5262 = vmatprep.subr.mxu0 %v4330
    %5263 = vmatpush1.msra.mxu0 %v4329
    %5264 = vmatprep.subr.mxu0 %v4334
    %5265 = vmatpush1.msra.mxu0 %v4333
    %5266 = vmatprep.subr.mxu0 %v4338
    %5267 = vmatpush1.msra.mxu0 %v4337
    %5268 = vmatprep.subr.mxu0 %v4342
    %5269 = vmatpush1.msra.mxu0 %v4341
    %5270 = vmatprep.subr.mxu0 %v4346
    %5271 = vmatpush1.msra.mxu0 %v4345
    %5272 = vmatprep.subr.mxu0 %v4350
    %5273 = vmatpush1.msra.mxu0 %v4349
    %5274 = vmatprep.subr.mxu0 %v4354
    %5275 = vmatpush1.msra.mxu0 %v4353
    %5276 = vmatprep.subr.mxu0 %v4358
    %5277 = vmatpush1.msra.mxu0 %v4357
    %5278 = vmatprep.subr.mxu0 %v4362
    %5279 = vmatpush1.msra.mxu0 %v4361
    %5280 = vmatprep.subr.mxu0 %v4366
    %5281 = vmatpush1.msra.mxu0 %v4365
    %5282 = vmatprep.subr.mxu0 %v4370
    %5283 = vmatpush1.msra.mxu0 %v4369
    %5284 = vmatprep.subr.mxu0 %v4374
    %5285 = vmatpush1.msra.mxu0 %v4373
    %5286 = vmatprep.subr.mxu0 %v4378
    %5287 = vmatpush1.msra.mxu0 %v4377
    %5288 = vmatprep.subr.mxu0 %v4382
    %5289 = vmatpush1.msra.mxu0 %v4381
    %5290 = vmatprep.subr.mxu0 %v4386
    %5291 = vmatpush1.msra.mxu0 %v4385
    %5292 = vmatprep.subr.mxu0 %v4390
    %5293 = vmatpush1.msra.mxu0 %v4389
    %5294 = vmatprep.subr.mxu0 %v4394
    %5295 = vmatpush1.msra.mxu0 %v4393
    %5296 = vmatprep.subr.mxu0 %v4398
    %5297 = vmatpush1.msra.mxu0 %v4397
    %5298 = vmatprep.subr.mxu0 %v4402
    %5299 = vmatpush1.msra.mxu0 %v4401
    %5300 = vmatprep.subr.mxu0 %v4406
    %5301 = vmatpush1.msra.mxu0 %v4405
    %5302 = vmatprep.subr.mxu0 %v4410
    %5303 = vmatpush1.msra.mxu0 %v4409
    %5304 = vmatprep.subr.mxu0 %v4414
    %5305 = vmatpush1.msra.mxu0 %v4413
    %5306 = vmatprep.subr.mxu0 %v4418
    %5307 = vmatpush1.msra.mxu0 %v4417
    %5308 = vmatprep.subr.mxu0 %v4422
    %5309 = vmatpush1.msra.mxu0 %v4421
    %5310 = vmatprep.mubr.f32.mxu0 %v4292
    %5311 = vmatmul.mubr.f32.gmra.mrb[0].mxu0 %v4291
    %v5312 = vpop.f32.mrb[0].mxu0
    %v5313 = vadd.f32 %v5100, %v5312
    %v5314 = vpop.f32.mrb[0].mxu0
    %v5315 = vadd.f32 %v5102, %v5314
    %5316 = vdwg.mxu0
    %5317 = vmatprep.subr.mxu0 %v4426
    %5318 = vmatpush1.msra.mxu0 %v4425
    %5319 = vmatprep.subr.mxu0 %v4430
    %5320 = vmatpush1.msra.mxu0 %v4429
    %5321 = vmatprep.subr.mxu0 %v4434
    %5322 = vmatpush1.msra.mxu0 %v4433
    %5323 = vmatprep.subr.mxu0 %v4438
    %5324 = vmatpush1.msra.mxu0 %v4437
    %5325 = vmatprep.subr.mxu0 %v4442
    %5326 = vmatpush1.msra.mxu0 %v4441
    %5327 = vmatprep.subr.mxu0 %v4446
    %5328 = vmatpush1.msra.mxu0 %v4445
    %5329 = vmatprep.subr.mxu0 %v4450
    %5330 = vmatpush1.msra.mxu0 %v4449
    %5331 = vmatprep.subr.mxu0 %v4454
    %5332 = vmatpush1.msra.mxu0 %v4453
    %5333 = vmatprep.subr.mxu0 %v4458
    %5334 = vmatpush1.msra.mxu0 %v4457
    %5335 = vmatprep.subr.mxu0 %v4462
    %5336 = vmatpush1.msra.mxu0 %v4461
    %5337 = vmatprep.subr.mxu0 %v4466
    %5338 = vmatpush1.msra.mxu0 %v4465
    %5339 = vmatprep.subr.mxu0 %v4470
    %5340 = vmatpush1.msra.mxu0 %v4469
    %5341 = vmatprep.subr.mxu0 %v4474
    %5342 = vmatpush1.msra.mxu0 %v4473
    %5343 = vmatprep.subr.mxu0 %v4478
    %5344 = vmatpush1.msra.mxu0 %v4477
    %5345 = vmatprep.subr.mxu0 %v4482
    %5346 = vmatpush1.msra.mxu0 %v4481
    %5347 = vmatprep.subr.mxu0 %v4486
    %5348 = vmatpush1.msra.mxu0 %v4485
    %5349 = vmatprep.subr.mxu0 %v4490
    %5350 = vmatpush1.msra.mxu0 %v4489
    %5351 = vmatprep.subr.mxu0 %v4494
    %5352 = vmatpush1.msra.mxu0 %v4493
    %5353 = vmatprep.subr.mxu0 %v4498
    %5354 = vmatpush1.msra.mxu0 %v4497
    %5355 = vmatprep.subr.mxu0 %v4502
    %5356 = vmatpush1.msra.mxu0 %v4501
    %5357 = vmatprep.subr.mxu0 %v4506
    %5358 = vmatpush1.msra.mxu0 %v4505
    %5359 = vmatprep.subr.mxu0 %v4510
    %5360 = vmatpush1.msra.mxu0 %v4509
    %5361 = vmatprep.subr.mxu0 %v4514
    %5362 = vmatpush1.msra.mxu0 %v4513
    %5363 = vmatprep.subr.mxu0 %v4518
    %5364 = vmatpush1.msra.mxu0 %v4517
    %5365 = vmatprep.subr.mxu0 %v4522
    %5366 = vmatpush1.msra.mxu0 %v4521
    %5367 = vmatprep.subr.mxu0 %v4526
    %5368 = vmatpush1.msra.mxu0 %v4525
    %5369 = vmatprep.subr.mxu0 %v4530
    %5370 = vmatpush1.msra.mxu0 %v4529
    %5371 = vmatprep.subr.mxu0 %v4534
    %5372 = vmatpush1.msra.mxu0 %v4533
    %5373 = vmatprep.subr.mxu0 %v4538
    %5374 = vmatpush1.msra.mxu0 %v4537
    %5375 = vmatprep.subr.mxu0 %v4542
    %5376 = vmatpush1.msra.mxu0 %v4541
    %5377 = vmatprep.subr.mxu0 %v4546
    %5378 = vmatpush1.msra.mxu0 %v4545
    %5379 = vmatprep.subr.mxu0 %v4550
    %5380 = vmatpush1.msra.mxu0 %v4549
    %5381 = vmatprep.mubr.f32.mxu0 %v4294
    %5382 = vmatmul.mubr.f32.gmra.mrb[0].mxu0 %v4293
    %v5383 = vpop.f32.mrb[0].mxu0
    %v5384 = vadd.f32 %v5313, %v5383
    %v5385 = vpop.f32.mrb[0].mxu0
    %v5386 = vadd.f32 %v5315, %v5385
    %5387 = vdwg.mxu0
    %s5388 = scalar_lea.vmem [#allocation13], 4096
    %v5389 = vld [vmem:[%s5388] sm:$0xff]
    %v5390 = vld [vmem:[%s5388 + $0x8] sm:$0xff]
    %v5391 = vld [vmem:[%s5388 + $0x10] sm:$0xff]
    %v5392 = vld [vmem:[%s5388 + $0x18] sm:$0xff]
    %v5393 = vld [vmem:[%s5388 + $0x20] sm:$0xff]
    %v5394 = vld [vmem:[%s5388 + $0x28] sm:$0xff]
    %v5395 = vld [vmem:[%s5388 + $0x30] sm:$0xff]
    %v5396 = vld [vmem:[%s5388 + $0x38] sm:$0xff]
    %v5397 = vld [vmem:[%s5388 + $0x40] sm:$0xff]
    %v5398 = vld [vmem:[%s5388 + $0x48] sm:$0xff]
    %v5399 = vld [vmem:[%s5388 + $0x50] sm:$0xff]
    %v5400 = vld [vmem:[%s5388 + $0x58] sm:$0xff]
    %v5401 = vld [vmem:[%s5388 + $0x60] sm:$0xff]
    %v5402 = vld [vmem:[%s5388 + $0x68] sm:$0xff]
    %v5403 = vld [vmem:[%s5388 + $0x70] sm:$0xff]
    %v5404 = vld [vmem:[%s5388 + $0x78] sm:$0xff]
    %v5405 = vld [vmem:[%s5388 + $0x80] sm:$0xff]
    %v5406 = vld [vmem:[%s5388 + $0x88] sm:$0xff]
    %v5407 = vld [vmem:[%s5388 + $0x90] sm:$0xff]
    %v5408 = vld [vmem:[%s5388 + $0x98] sm:$0xff]
    %v5409 = vld [vmem:[%s5388 + $0xa0] sm:$0xff]
    %v5410 = vld [vmem:[%s5388 + $0xa8] sm:$0xff]
    %v5411 = vld [vmem:[%s5388 + $0xb0] sm:$0xff]
    %v5412 = vld [vmem:[%s5388 + $0xb8] sm:$0xff]
    %v5413 = vld [vmem:[%s5388 + $0xc0] sm:$0xff]
    %v5414 = vld [vmem:[%s5388 + $0xc8] sm:$0xff]
    %v5415 = vld [vmem:[%s5388 + $0xd0] sm:$0xff]
    %v5416 = vld [vmem:[%s5388 + $0xd8] sm:$0xff]
    %v5417 = vld [vmem:[%s5388 + $0xe0] sm:$0xff]
    %v5418 = vld [vmem:[%s5388 + $0xe8] sm:$0xff]
    %v5419 = vld [vmem:[%s5388 + $0xf0] sm:$0xff]
    %v5420 = vld [vmem:[%s5388 + $0xf8] sm:$0xff]
    %v5421 = vld [vmem:[%s5388 + $0x100] sm:$0xff]
    %v5422 = vld [vmem:[%s5388 + $0x108] sm:$0xff]
    %v5423 = vld [vmem:[%s5388 + $0x110] sm:$0xff]
    %v5424 = vld [vmem:[%s5388 + $0x118] sm:$0xff]
    %v5425 = vld [vmem:[%s5388 + $0x120] sm:$0xff]
    %v5426 = vld [vmem:[%s5388 + $0x128] sm:$0xff]
    %v5427 = vld [vmem:[%s5388 + $0x130] sm:$0xff]
    %v5428 = vld [vmem:[%s5388 + $0x138] sm:$0xff]
    %v5429 = vld [vmem:[%s5388 + $0x140] sm:$0xff]
    %v5430 = vld [vmem:[%s5388 + $0x148] sm:$0xff]
    %v5431 = vld [vmem:[%s5388 + $0x150] sm:$0xff]
    %v5432 = vld [vmem:[%s5388 + $0x158] sm:$0xff]
    %v5433 = vld [vmem:[%s5388 + $0x160] sm:$0xff]
    %v5434 = vld [vmem:[%s5388 + $0x168] sm:$0xff]
    %v5435 = vld [vmem:[%s5388 + $0x170] sm:$0xff]
    %v5436 = vld [vmem:[%s5388 + $0x178] sm:$0xff]
    %v5437 = vld [vmem:[%s5388 + $0x180] sm:$0xff]
    %v5438 = vld [vmem:[%s5388 + $0x188] sm:$0xff]
    %v5439 = vld [vmem:[%s5388 + $0x190] sm:$0xff]
    %v5440 = vld [vmem:[%s5388 + $0x198] sm:$0xff]
    %v5441 = vld [vmem:[%s5388 + $0x1a0] sm:$0xff]
    %v5442 = vld [vmem:[%s5388 + $0x1a8] sm:$0xff]
    %v5443 = vld [vmem:[%s5388 + $0x1b0] sm:$0xff]
    %v5444 = vld [vmem:[%s5388 + $0x1b8] sm:$0xff]
    %v5445 = vld [vmem:[%s5388 + $0x1c0] sm:$0xff]
    %v5446 = vld [vmem:[%s5388 + $0x1c8] sm:$0xff]
    %v5447 = vld [vmem:[%s5388 + $0x1d0] sm:$0xff]
    %v5448 = vld [vmem:[%s5388 + $0x1d8] sm:$0xff]
    %v5449 = vld [vmem:[%s5388 + $0x1e0] sm:$0xff]
    %v5450 = vld [vmem:[%s5388 + $0x1e8] sm:$0xff]
    %v5451 = vld [vmem:[%s5388 + $0x1f0] sm:$0xff]
    %v5452 = vld [vmem:[%s5388 + $0x1f8] sm:$0xff]
    %v5453 = vld [vmem:[%s5388 + $0x200] sm:$0xff]
    %v5454 = vld [vmem:[%s5388 + $0x208] sm:$0xff]
    %v5455 = vld [vmem:[%s5388 + $0x210] sm:$0xff]
    %v5456 = vld [vmem:[%s5388 + $0x218] sm:$0xff]
    %v5457 = vld [vmem:[%s5388 + $0x220] sm:$0xff]
    %v5458 = vld [vmem:[%s5388 + $0x228] sm:$0xff]
    %v5459 = vld [vmem:[%s5388 + $0x230] sm:$0xff]
    %v5460 = vld [vmem:[%s5388 + $0x238] sm:$0xff]
    %v5461 = vld [vmem:[%s5388 + $0x240] sm:$0xff]
    %v5462 = vld [vmem:[%s5388 + $0x248] sm:$0xff]
    %v5463 = vld [vmem:[%s5388 + $0x250] sm:$0xff]
    %v5464 = vld [vmem:[%s5388 + $0x258] sm:$0xff]
    %v5465 = vld [vmem:[%s5388 + $0x260] sm:$0xff]
    %v5466 = vld [vmem:[%s5388 + $0x268] sm:$0xff]
    %v5467 = vld [vmem:[%s5388 + $0x270] sm:$0xff]
    %v5468 = vld [vmem:[%s5388 + $0x278] sm:$0xff]
    %v5469 = vld [vmem:[%s5388 + $0x280] sm:$0xff]
    %v5470 = vld [vmem:[%s5388 + $0x288] sm:$0xff]
    %v5471 = vld [vmem:[%s5388 + $0x290] sm:$0xff]
    %v5472 = vld [vmem:[%s5388 + $0x298] sm:$0xff]
    %v5473 = vld [vmem:[%s5388 + $0x2a0] sm:$0xff]
    %v5474 = vld [vmem:[%s5388 + $0x2a8] sm:$0xff]
    %v5475 = vld [vmem:[%s5388 + $0x2b0] sm:$0xff]
    %v5476 = vld [vmem:[%s5388 + $0x2b8] sm:$0xff]
    %v5477 = vld [vmem:[%s5388 + $0x2c0] sm:$0xff]
    %v5478 = vld [vmem:[%s5388 + $0x2c8] sm:$0xff]
    %v5479 = vld [vmem:[%s5388 + $0x2d0] sm:$0xff]
    %v5480 = vld [vmem:[%s5388 + $0x2d8] sm:$0xff]
    %v5481 = vld [vmem:[%s5388 + $0x2e0] sm:$0xff]
    %v5482 = vld [vmem:[%s5388 + $0x2e8] sm:$0xff]
    %v5483 = vld [vmem:[%s5388 + $0x2f0] sm:$0xff]
    %v5484 = vld [vmem:[%s5388 + $0x2f8] sm:$0xff]
    %v5485 = vld [vmem:[%s5388 + $0x300] sm:$0xff]
    %v5486 = vld [vmem:[%s5388 + $0x308] sm:$0xff]
    %v5487 = vld [vmem:[%s5388 + $0x310] sm:$0xff]
    %v5488 = vld [vmem:[%s5388 + $0x318] sm:$0xff]
    %v5489 = vld [vmem:[%s5388 + $0x320] sm:$0xff]
    %v5490 = vld [vmem:[%s5388 + $0x328] sm:$0xff]
    %v5491 = vld [vmem:[%s5388 + $0x330] sm:$0xff]
    %v5492 = vld [vmem:[%s5388 + $0x338] sm:$0xff]
    %v5493 = vld [vmem:[%s5388 + $0x340] sm:$0xff]
    %v5494 = vld [vmem:[%s5388 + $0x348] sm:$0xff]
    %v5495 = vld [vmem:[%s5388 + $0x350] sm:$0xff]
    %v5496 = vld [vmem:[%s5388 + $0x358] sm:$0xff]
    %v5497 = vld [vmem:[%s5388 + $0x360] sm:$0xff]
    %v5498 = vld [vmem:[%s5388 + $0x368] sm:$0xff]
    %v5499 = vld [vmem:[%s5388 + $0x370] sm:$0xff]
    %v5500 = vld [vmem:[%s5388 + $0x378] sm:$0xff]
    %v5501 = vld [vmem:[%s5388 + $0x380] sm:$0xff]
    %v5502 = vld [vmem:[%s5388 + $0x388] sm:$0xff]
    %v5503 = vld [vmem:[%s5388 + $0x390] sm:$0xff]
    %v5504 = vld [vmem:[%s5388 + $0x398] sm:$0xff]
    %v5505 = vld [vmem:[%s5388 + $0x3a0] sm:$0xff]
    %v5506 = vld [vmem:[%s5388 + $0x3a8] sm:$0xff]
    %v5507 = vld [vmem:[%s5388 + $0x3b0] sm:$0xff]
    %v5508 = vld [vmem:[%s5388 + $0x3b8] sm:$0xff]
    %v5509 = vld [vmem:[%s5388 + $0x3c0] sm:$0xff]
    %v5510 = vld [vmem:[%s5388 + $0x3c8] sm:$0xff]
    %v5511 = vld [vmem:[%s5388 + $0x3d0] sm:$0xff]
    %v5512 = vld [vmem:[%s5388 + $0x3d8] sm:$0xff]
    %v5513 = vld [vmem:[%s5388 + $0x3e0] sm:$0xff]
    %v5514 = vld [vmem:[%s5388 + $0x3e8] sm:$0xff]
    %v5515 = vld [vmem:[%s5388 + $0x3f0] sm:$0xff]
    %v5516 = vld [vmem:[%s5388 + $0x3f8] sm:$0xff]
    %v5517 = vld [vmem:[%s5388 + $0x400] sm:$0xff]
    %v5518 = vld [vmem:[%s5388 + $0x408] sm:$0xff]
    %v5519 = vld [vmem:[%s5388 + $0x410] sm:$0xff]
    %v5520 = vld [vmem:[%s5388 + $0x418] sm:$0xff]
    %v5521 = vld [vmem:[%s5388 + $0x420] sm:$0xff]
    %v5522 = vld [vmem:[%s5388 + $0x428] sm:$0xff]
    %v5523 = vld [vmem:[%s5388 + $0x430] sm:$0xff]
    %v5524 = vld [vmem:[%s5388 + $0x438] sm:$0xff]
    %v5525 = vld [vmem:[%s5388 + $0x440] sm:$0xff]
    %v5526 = vld [vmem:[%s5388 + $0x448] sm:$0xff]
    %v5527 = vld [vmem:[%s5388 + $0x450] sm:$0xff]
    %v5528 = vld [vmem:[%s5388 + $0x458] sm:$0xff]
    %v5529 = vld [vmem:[%s5388 + $0x460] sm:$0xff]
    %v5530 = vld [vmem:[%s5388 + $0x468] sm:$0xff]
    %v5531 = vld [vmem:[%s5388 + $0x470] sm:$0xff]
    %v5532 = vld [vmem:[%s5388 + $0x478] sm:$0xff]
    %v5533 = vld [vmem:[%s5388 + $0x480] sm:$0xff]
    %v5534 = vld [vmem:[%s5388 + $0x488] sm:$0xff]
    %v5535 = vld [vmem:[%s5388 + $0x490] sm:$0xff]
    %v5536 = vld [vmem:[%s5388 + $0x498] sm:$0xff]
    %v5537 = vld [vmem:[%s5388 + $0x4a0] sm:$0xff]
    %v5538 = vld [vmem:[%s5388 + $0x4a8] sm:$0xff]
    %v5539 = vld [vmem:[%s5388 + $0x4b0] sm:$0xff]
    %v5540 = vld [vmem:[%s5388 + $0x4b8] sm:$0xff]
    %v5541 = vld [vmem:[%s5388 + $0x4c0] sm:$0xff]
    %v5542 = vld [vmem:[%s5388 + $0x4c8] sm:$0xff]
    %v5543 = vld [vmem:[%s5388 + $0x4d0] sm:$0xff]
    %v5544 = vld [vmem:[%s5388 + $0x4d8] sm:$0xff]
    %v5545 = vld [vmem:[%s5388 + $0x4e0] sm:$0xff]
    %v5546 = vld [vmem:[%s5388 + $0x4e8] sm:$0xff]
    %v5547 = vld [vmem:[%s5388 + $0x4f0] sm:$0xff]
    %v5548 = vld [vmem:[%s5388 + $0x4f8] sm:$0xff]
    %v5549 = vld [vmem:[%s5388 + $0x500] sm:$0xff]
    %v5550 = vld [vmem:[%s5388 + $0x508] sm:$0xff]
    %v5551 = vld [vmem:[%s5388 + $0x510] sm:$0xff]
    %v5552 = vld [vmem:[%s5388 + $0x518] sm:$0xff]
    %v5553 = vld [vmem:[%s5388 + $0x520] sm:$0xff]
    %v5554 = vld [vmem:[%s5388 + $0x528] sm:$0xff]
    %v5555 = vld [vmem:[%s5388 + $0x530] sm:$0xff]
    %v5556 = vld [vmem:[%s5388 + $0x538] sm:$0xff]
    %v5557 = vld [vmem:[%s5388 + $0x540] sm:$0xff]
    %v5558 = vld [vmem:[%s5388 + $0x548] sm:$0xff]
    %v5559 = vld [vmem:[%s5388 + $0x550] sm:$0xff]
    %v5560 = vld [vmem:[%s5388 + $0x558] sm:$0xff]
    %v5561 = vld [vmem:[%s5388 + $0x560] sm:$0xff]
    %v5562 = vld [vmem:[%s5388 + $0x568] sm:$0xff]
    %v5563 = vld [vmem:[%s5388 + $0x570] sm:$0xff]
    %v5564 = vld [vmem:[%s5388 + $0x578] sm:$0xff]
    %v5565 = vld [vmem:[%s5388 + $0x580] sm:$0xff]
    %v5566 = vld [vmem:[%s5388 + $0x588] sm:$0xff]
    %v5567 = vld [vmem:[%s5388 + $0x590] sm:$0xff]
    %v5568 = vld [vmem:[%s5388 + $0x598] sm:$0xff]
    %v5569 = vld [vmem:[%s5388 + $0x5a0] sm:$0xff]
    %v5570 = vld [vmem:[%s5388 + $0x5a8] sm:$0xff]
    %v5571 = vld [vmem:[%s5388 + $0x5b0] sm:$0xff]
    %v5572 = vld [vmem:[%s5388 + $0x5b8] sm:$0xff]
    %v5573 = vld [vmem:[%s5388 + $0x5c0] sm:$0xff]
    %v5574 = vld [vmem:[%s5388 + $0x5c8] sm:$0xff]
    %v5575 = vld [vmem:[%s5388 + $0x5d0] sm:$0xff]
    %v5576 = vld [vmem:[%s5388 + $0x5d8] sm:$0xff]
    %v5577 = vld [vmem:[%s5388 + $0x5e0] sm:$0xff]
    %v5578 = vld [vmem:[%s5388 + $0x5e8] sm:$0xff]
    %v5579 = vld [vmem:[%s5388 + $0x5f0] sm:$0xff]
    %v5580 = vld [vmem:[%s5388 + $0x5f8] sm:$0xff]
    %v5581 = vld [vmem:[%s5388 + $0x600] sm:$0xff]
    %v5582 = vld [vmem:[%s5388 + $0x608] sm:$0xff]
    %v5583 = vld [vmem:[%s5388 + $0x610] sm:$0xff]
    %v5584 = vld [vmem:[%s5388 + $0x618] sm:$0xff]
    %v5585 = vld [vmem:[%s5388 + $0x620] sm:$0xff]
    %v5586 = vld [vmem:[%s5388 + $0x628] sm:$0xff]
    %v5587 = vld [vmem:[%s5388 + $0x630] sm:$0xff]
    %v5588 = vld [vmem:[%s5388 + $0x638] sm:$0xff]
    %v5589 = vld [vmem:[%s5388 + $0x640] sm:$0xff]
    %v5590 = vld [vmem:[%s5388 + $0x648] sm:$0xff]
    %v5591 = vld [vmem:[%s5388 + $0x650] sm:$0xff]
    %v5592 = vld [vmem:[%s5388 + $0x658] sm:$0xff]
    %v5593 = vld [vmem:[%s5388 + $0x660] sm:$0xff]
    %v5594 = vld [vmem:[%s5388 + $0x668] sm:$0xff]
    %v5595 = vld [vmem:[%s5388 + $0x670] sm:$0xff]
    %v5596 = vld [vmem:[%s5388 + $0x678] sm:$0xff]
    %v5597 = vld [vmem:[%s5388 + $0x680] sm:$0xff]
    %v5598 = vld [vmem:[%s5388 + $0x688] sm:$0xff]
    %v5599 = vld [vmem:[%s5388 + $0x690] sm:$0xff]
    %v5600 = vld [vmem:[%s5388 + $0x698] sm:$0xff]
    %v5601 = vld [vmem:[%s5388 + $0x6a0] sm:$0xff]
    %v5602 = vld [vmem:[%s5388 + $0x6a8] sm:$0xff]
    %v5603 = vld [vmem:[%s5388 + $0x6b0] sm:$0xff]
    %v5604 = vld [vmem:[%s5388 + $0x6b8] sm:$0xff]
    %v5605 = vld [vmem:[%s5388 + $0x6c0] sm:$0xff]
    %v5606 = vld [vmem:[%s5388 + $0x6c8] sm:$0xff]
    %v5607 = vld [vmem:[%s5388 + $0x6d0] sm:$0xff]
    %v5608 = vld [vmem:[%s5388 + $0x6d8] sm:$0xff]
    %v5609 = vld [vmem:[%s5388 + $0x6e0] sm:$0xff]
    %v5610 = vld [vmem:[%s5388 + $0x6e8] sm:$0xff]
    %v5611 = vld [vmem:[%s5388 + $0x6f0] sm:$0xff]
    %v5612 = vld [vmem:[%s5388 + $0x6f8] sm:$0xff]
    %v5613 = vld [vmem:[%s5388 + $0x700] sm:$0xff]
    %v5614 = vld [vmem:[%s5388 + $0x708] sm:$0xff]
    %v5615 = vld [vmem:[%s5388 + $0x710] sm:$0xff]
    %v5616 = vld [vmem:[%s5388 + $0x718] sm:$0xff]
    %v5617 = vld [vmem:[%s5388 + $0x720] sm:$0xff]
    %v5618 = vld [vmem:[%s5388 + $0x728] sm:$0xff]
    %v5619 = vld [vmem:[%s5388 + $0x730] sm:$0xff]
    %v5620 = vld [vmem:[%s5388 + $0x738] sm:$0xff]
    %v5621 = vld [vmem:[%s5388 + $0x740] sm:$0xff]
    %v5622 = vld [vmem:[%s5388 + $0x748] sm:$0xff]
    %v5623 = vld [vmem:[%s5388 + $0x750] sm:$0xff]
    %v5624 = vld [vmem:[%s5388 + $0x758] sm:$0xff]
    %v5625 = vld [vmem:[%s5388 + $0x760] sm:$0xff]
    %v5626 = vld [vmem:[%s5388 + $0x768] sm:$0xff]
    %v5627 = vld [vmem:[%s5388 + $0x770] sm:$0xff]
    %v5628 = vld [vmem:[%s5388 + $0x778] sm:$0xff]
    %v5629 = vld [vmem:[%s5388 + $0x780] sm:$0xff]
    %v5630 = vld [vmem:[%s5388 + $0x788] sm:$0xff]
    %v5631 = vld [vmem:[%s5388 + $0x790] sm:$0xff]
    %v5632 = vld [vmem:[%s5388 + $0x798] sm:$0xff]
    %v5633 = vld [vmem:[%s5388 + $0x7a0] sm:$0xff]
    %v5634 = vld [vmem:[%s5388 + $0x7a8] sm:$0xff]
    %v5635 = vld [vmem:[%s5388 + $0x7b0] sm:$0xff]
    %v5636 = vld [vmem:[%s5388 + $0x7b8] sm:$0xff]
    %v5637 = vld [vmem:[%s5388 + $0x7c0] sm:$0xff]
    %v5638 = vld [vmem:[%s5388 + $0x7c8] sm:$0xff]
    %v5639 = vld [vmem:[%s5388 + $0x7d0] sm:$0xff]
    %v5640 = vld [vmem:[%s5388 + $0x7d8] sm:$0xff]
    %v5641 = vld [vmem:[%s5388 + $0x7e0] sm:$0xff]
    %v5642 = vld [vmem:[%s5388 + $0x7e8] sm:$0xff]
    %v5643 = vld [vmem:[%s5388 + $0x7f0] sm:$0xff]
    %v5644 = vld [vmem:[%s5388 + $0x7f8] sm:$0xff]
    %v5645 = vrot.slane %v4291, 2
    %v5646 = vrot.slane %v4292, 2
    %v5647 = vrot.slane %v4293, 2
    %v5648 = vrot.slane %v4294, 2
    %5653 = vmatprep.subr.mxu0 %v5390
    %5654 = vmatpush1.msra.mxu0 %v5389
    %5655 = vmatprep.subr.mxu0 %v5394
    %5656 = vmatpush1.msra.mxu0 %v5393
    %5657 = vmatprep.subr.mxu0 %v5398
    %5658 = vmatpush1.msra.mxu0 %v5397
    %5659 = vmatprep.subr.mxu0 %v5402
    %5660 = vmatpush1.msra.mxu0 %v5401
    %5661 = vmatprep.subr.mxu0 %v5406
    %5662 = vmatpush1.msra.mxu0 %v5405
    %5663 = vmatprep.subr.mxu0 %v5410
    %5664 = vmatpush1.msra.mxu0 %v5409
    %5665 = vmatprep.subr.mxu0 %v5414
    %5666 = vmatpush1.msra.mxu0 %v5413
    %5667 = vmatprep.subr.mxu0 %v5418
    %5668 = vmatpush1.msra.mxu0 %v5417
    %5669 = vmatprep.subr.mxu0 %v5422
    %5670 = vmatpush1.msra.mxu0 %v5421
    %5671 = vmatprep.subr.mxu0 %v5426
    %5672 = vmatpush1.msra.mxu0 %v5425
    %5673 = vmatprep.subr.mxu0 %v5430
    %5674 = vmatpush1.msra.mxu0 %v5429
    %5675 = vmatprep.subr.mxu0 %v5434
    %5676 = vmatpush1.msra.mxu0 %v5433
    %5677 = vmatprep.subr.mxu0 %v5438
    %5678 = vmatpush1.msra.mxu0 %v5437
    %5679 = vmatprep.subr.mxu0 %v5442
    %5680 = vmatpush1.msra.mxu0 %v5441
    %5681 = vmatprep.subr.mxu0 %v5446
    %5682 = vmatpush1.msra.mxu0 %v5445
    %5683 = vmatprep.subr.mxu0 %v5450
    %5684 = vmatpush1.msra.mxu0 %v5449
    %5685 = vmatprep.subr.mxu0 %v5454
    %5686 = vmatpush1.msra.mxu0 %v5453
    %5687 = vmatprep.subr.mxu0 %v5458
    %5688 = vmatpush1.msra.mxu0 %v5457
    %5689 = vmatprep.subr.mxu0 %v5462
    %5690 = vmatpush1.msra.mxu0 %v5461
    %5691 = vmatprep.subr.mxu0 %v5466
    %5692 = vmatpush1.msra.mxu0 %v5465
    %5693 = vmatprep.subr.mxu0 %v5470
    %5694 = vmatpush1.msra.mxu0 %v5469
    %5695 = vmatprep.subr.mxu0 %v5474
    %5696 = vmatpush1.msra.mxu0 %v5473
    %5697 = vmatprep.subr.mxu0 %v5478
    %5698 = vmatpush1.msra.mxu0 %v5477
    %5699 = vmatprep.subr.mxu0 %v5482
    %5700 = vmatpush1.msra.mxu0 %v5481
    %5701 = vmatprep.subr.mxu0 %v5486
    %5702 = vmatpush1.msra.mxu0 %v5485
    %5703 = vmatprep.subr.mxu0 %v5490
    %5704 = vmatpush1.msra.mxu0 %v5489
    %5705 = vmatprep.subr.mxu0 %v5494
    %5706 = vmatpush1.msra.mxu0 %v5493
    %5707 = vmatprep.subr.mxu0 %v5498
    %5708 = vmatpush1.msra.mxu0 %v5497
    %5709 = vmatprep.subr.mxu0 %v5502
    %5710 = vmatpush1.msra.mxu0 %v5501
    %5711 = vmatprep.subr.mxu0 %v5506
    %5712 = vmatpush1.msra.mxu0 %v5505
    %5713 = vmatprep.subr.mxu0 %v5510
    %5714 = vmatpush1.msra.mxu0 %v5509
    %5715 = vmatprep.subr.mxu0 %v5514
    %5716 = vmatpush1.msra.mxu0 %v5513
    %5717 = vmatprep.mubr.f32.mxu0 %v5646
    %5718 = vmatmul.mubr.f32.gmra.mrb[0].mxu0 %v5645
    %v5719 = vpop.f32.mrb[0].mxu0
    %v5720 = vadd.f32 0.0, %v5719
    %v5721 = vpop.f32.mrb[0].mxu0
    %v5722 = vadd.f32 0.0, %v5721
    %5723 = vdwg.mxu0
    %5724 = vmatprep.subr.mxu0 %v5518
    %5725 = vmatpush1.msra.mxu0 %v5517
    %5726 = vmatprep.subr.mxu0 %v5522
    %5727 = vmatpush1.msra.mxu0 %v5521
    %5728 = vmatprep.subr.mxu0 %v5526
    %5729 = vmatpush1.msra.mxu0 %v5525
    %5730 = vmatprep.subr.mxu0 %v5530
    %5731 = vmatpush1.msra.mxu0 %v5529
    %5732 = vmatprep.subr.mxu0 %v5534
    %5733 = vmatpush1.msra.mxu0 %v5533
    %5734 = vmatprep.subr.mxu0 %v5538
    %5735 = vmatpush1.msra.mxu0 %v5537
    %5736 = vmatprep.subr.mxu0 %v5542
    %5737 = vmatpush1.msra.mxu0 %v5541
    %5738 = vmatprep.subr.mxu0 %v5546
    %5739 = vmatpush1.msra.mxu0 %v5545
    %5740 = vmatprep.subr.mxu0 %v5550
    %5741 = vmatpush1.msra.mxu0 %v5549
    %5742 = vmatprep.subr.mxu0 %v5554
    %5743 = vmatpush1.msra.mxu0 %v5553
    %5744 = vmatprep.subr.mxu0 %v5558
    %5745 = vmatpush1.msra.mxu0 %v5557
    %5746 = vmatprep.subr.mxu0 %v5562
    %5747 = vmatpush1.msra.mxu0 %v5561
    %5748 = vmatprep.subr.mxu0 %v5566
    %5749 = vmatpush1.msra.mxu0 %v5565
    %5750 = vmatprep.subr.mxu0 %v5570
    %5751 = vmatpush1.msra.mxu0 %v5569
    %5752 = vmatprep.subr.mxu0 %v5574
    %5753 = vmatpush1.msra.mxu0 %v5573
    %5754 = vmatprep.subr.mxu0 %v5578
    %5755 = vmatpush1.msra.mxu0 %v5577
    %5756 = vmatprep.subr.mxu0 %v5582
    %5757 = vmatpush1.msra.mxu0 %v5581
    %5758 = vmatprep.subr.mxu0 %v5586
    %5759 = vmatpush1.msra.mxu0 %v5585
    %5760 = vmatprep.subr.mxu0 %v5590
    %5761 = vmatpush1.msra.mxu0 %v5589
    %5762 = vmatprep.subr.mxu0 %v5594
    %5763 = vmatpush1.msra.mxu0 %v5593
    %5764 = vmatprep.subr.mxu0 %v5598
    %5765 = vmatpush1.msra.mxu0 %v5597
    %5766 = vmatprep.subr.mxu0 %v5602
    %5767 = vmatpush1.msra.mxu0 %v5601
    %5768 = vmatprep.subr.mxu0 %v5606
    %5769 = vmatpush1.msra.mxu0 %v5605
    %5770 = vmatprep.subr.mxu0 %v5610
    %5771 = vmatpush1.msra.mxu0 %v5609
    %5772 = vmatprep.subr.mxu0 %v5614
    %5773 = vmatpush1.msra.mxu0 %v5613
    %5774 = vmatprep.subr.mxu0 %v5618
    %5775 = vmatpush1.msra.mxu0 %v5617
    %5776 = vmatprep.subr.mxu0 %v5622
    %5777 = vmatpush1.msra.mxu0 %v5621
    %5778 = vmatprep.subr.mxu0 %v5626
    %5779 = vmatpush1.msra.mxu0 %v5625
    %5780 = vmatprep.subr.mxu0 %v5630
    %5781 = vmatpush1.msra.mxu0 %v5629
    %5782 = vmatprep.subr.mxu0 %v5634
    %5783 = vmatpush1.msra.mxu0 %v5633
    %5784 = vmatprep.subr.mxu0 %v5638
    %5785 = vmatpush1.msra.mxu0 %v5637
    %5786 = vmatprep.subr.mxu0 %v5642
    %5787 = vmatpush1.msra.mxu0 %v5641
    %5788 = vmatprep.mubr.f32.mxu0 %v5648
    %5789 = vmatmul.mubr.f32.gmra.mrb[0].mxu0 %v5647
    %v5790 = vpop.f32.mrb[0].mxu0
    %v5791 = vadd.f32 %v5720, %v5790
    %v5792 = vpop.f32.mrb[0].mxu0
    %v5793 = vadd.f32 %v5722, %v5792
    %5794 = vdwg.mxu0
    %5795 = vmatprep.subr.mxu0 %v5392
    %5796 = vmatpush1.msra.mxu0 %v5391
    %5797 = vmatprep.subr.mxu0 %v5396
    %5798 = vmatpush1.msra.mxu0 %v5395
    %5799 = vmatprep.subr.mxu0 %v5400
    %5800 = vmatpush1.msra.mxu0 %v5399
    %5801 = vmatprep.subr.mxu0 %v5404
    %5802 = vmatpush1.msra.mxu0 %v5403
    %5803 = vmatprep.subr.mxu0 %v5408
    %5804 = vmatpush1.msra.mxu0 %v5407
    %5805 = vmatprep.subr.mxu0 %v5412
    %5806 = vmatpush1.msra.mxu0 %v5411
    %5807 = vmatprep.subr.mxu0 %v5416
    %5808 = vmatpush1.msra.mxu0 %v5415
    %5809 = vmatprep.subr.mxu0 %v5420
    %5810 = vmatpush1.msra.mxu0 %v5419
    %5811 = vmatprep.subr.mxu0 %v5424
    %5812 = vmatpush1.msra.mxu0 %v5423
    %5813 = vmatprep.subr.mxu0 %v5428
    %5814 = vmatpush1.msra.mxu0 %v5427
    %5815 = vmatprep.subr.mxu0 %v5432
    %5816 = vmatpush1.msra.mxu0 %v5431
    %5817 = vmatprep.subr.mxu0 %v5436
    %5818 = vmatpush1.msra.mxu0 %v5435
    %5819 = vmatprep.subr.mxu0 %v5440
    %5820 = vmatpush1.msra.mxu0 %v5439
    %5821 = vmatprep.subr.mxu0 %v5444
    %5822 = vmatpush1.msra.mxu0 %v5443
    %5823 = vmatprep.subr.mxu0 %v5448
    %5824 = vmatpush1.msra.mxu0 %v5447
    %5825 = vmatprep.subr.mxu0 %v5452
    %5826 = vmatpush1.msra.mxu0 %v5451
    %5827 = vmatprep.subr.mxu0 %v5456
    %5828 = vmatpush1.msra.mxu0 %v5455
    %5829 = vmatprep.subr.mxu0 %v5460
    %5830 = vmatpush1.msra.mxu0 %v5459
    %5831 = vmatprep.subr.mxu0 %v5464
    %5832 = vmatpush1.msra.mxu0 %v5463
    %5833 = vmatprep.subr.mxu0 %v5468
    %5834 = vmatpush1.msra.mxu0 %v5467
    %5835 = vmatprep.subr.mxu0 %v5472
    %5836 = vmatpush1.msra.mxu0 %v5471
    %5837 = vmatprep.subr.mxu0 %v5476
    %5838 = vmatpush1.msra.mxu0 %v5475
    %5839 = vmatprep.subr.mxu0 %v5480
    %5840 = vmatpush1.msra.mxu0 %v5479
    %5841 = vmatprep.subr.mxu0 %v5484
    %5842 = vmatpush1.msra.mxu0 %v5483
    %5843 = vmatprep.subr.mxu0 %v5488
    %5844 = vmatpush1.msra.mxu0 %v5487
    %5845 = vmatprep.subr.mxu0 %v5492
    %5846 = vmatpush1.msra.mxu0 %v5491
    %5847 = vmatprep.subr.mxu0 %v5496
    %5848 = vmatpush1.msra.mxu0 %v5495
    %5849 = vmatprep.subr.mxu0 %v5500
    %5850 = vmatpush1.msra.mxu0 %v5499
    %5851 = vmatprep.subr.mxu0 %v5504
    %5852 = vmatpush1.msra.mxu0 %v5503
    %5853 = vmatprep.subr.mxu0 %v5508
    %5854 = vmatpush1.msra.mxu0 %v5507
    %5855 = vmatprep.subr.mxu0 %v5512
    %5856 = vmatpush1.msra.mxu0 %v5511
    %5857 = vmatprep.subr.mxu0 %v5516
    %5858 = vmatpush1.msra.mxu0 %v5515
    %5859 = vmatprep.mubr.f32.mxu0 %v5646
    %5860 = vmatmul.mubr.f32.gmra.mrb[0].mxu0 %v5645
    %v5861 = vpop.f32.mrb[0].mxu0
    %v5862 = vadd.f32 0.0, %v5861
    %v5863 = vpop.f32.mrb[0].mxu0
    %v5864 = vadd.f32 0.0, %v5863
    %5865 = vdwg.mxu0
    %5866 = vmatprep.subr.mxu0 %v5520
    %5867 = vmatpush1.msra.mxu0 %v5519
    %5868 = vmatprep.subr.mxu0 %v5524
    %5869 = vmatpush1.msra.mxu0 %v5523
    %5870 = vmatprep.subr.mxu0 %v5528
    %5871 = vmatpush1.msra.mxu0 %v5527
    %5872 = vmatprep.subr.mxu0 %v5532
    %5873 = vmatpush1.msra.mxu0 %v5531
    %5874 = vmatprep.subr.mxu0 %v5536
    %5875 = vmatpush1.msra.mxu0 %v5535
    %5876 = vmatprep.subr.mxu0 %v5540
    %5877 = vmatpush1.msra.mxu0 %v5539
    %5878 = vmatprep.subr.mxu0 %v5544
    %5879 = vmatpush1.msra.mxu0 %v5543
    %5880 = vmatprep.subr.mxu0 %v5548
    %5881 = vmatpush1.msra.mxu0 %v5547
    %5882 = vmatprep.subr.mxu0 %v5552
    %5883 = vmatpush1.msra.mxu0 %v5551
    %5884 = vmatprep.subr.mxu0 %v5556
    %5885 = vmatpush1.msra.mxu0 %v5555
    %5886 = vmatprep.subr.mxu0 %v5560
    %5887 = vmatpush1.msra.mxu0 %v5559
    %5888 = vmatprep.subr.mxu0 %v5564
    %5889 = vmatpush1.msra.mxu0 %v5563
    %5890 = vmatprep.subr.mxu0 %v5568
    %5891 = vmatpush1.msra.mxu0 %v5567
    %5892 = vmatprep.subr.mxu0 %v5572
    %5893 = vmatpush1.msra.mxu0 %v5571
    %5894 = vmatprep.subr.mxu0 %v5576
    %5895 = vmatpush1.msra.mxu0 %v5575
    %5896 = vmatprep.subr.mxu0 %v5580
    %5897 = vmatpush1.msra.mxu0 %v5579
    %5898 = vmatprep.subr.mxu0 %v5584
    %5899 = vmatpush1.msra.mxu0 %v5583
    %5900 = vmatprep.subr.mxu0 %v5588
    %5901 = vmatpush1.msra.mxu0 %v5587
    %5902 = vmatprep.subr.mxu0 %v5592
    %5903 = vmatpush1.msra.mxu0 %v5591
    %5904 = vmatprep.subr.mxu0 %v5596
    %5905 = vmatpush1.msra.mxu0 %v5595
    %5906 = vmatprep.subr.mxu0 %v5600
    %5907 = vmatpush1.msra.mxu0 %v5599
    %5908 = vmatprep.subr.mxu0 %v5604
    %5909 = vmatpush1.msra.mxu0 %v5603
    %5910 = vmatprep.subr.mxu0 %v5608
    %5911 = vmatpush1.msra.mxu0 %v5607
    %5912 = vmatprep.subr.mxu0 %v5612
    %5913 = vmatpush1.msra.mxu0 %v5611
    %5914 = vmatprep.subr.mxu0 %v5616
    %5915 = vmatpush1.msra.mxu0 %v5615
    %5916 = vmatprep.subr.mxu0 %v5620
    %5917 = vmatpush1.msra.mxu0 %v5619
    %5918 = vmatprep.subr.mxu0 %v5624
    %5919 = vmatpush1.msra.mxu0 %v5623
    %5920 = vmatprep.subr.mxu0 %v5628
    %5921 = vmatpush1.msra.mxu0 %v5627
    %5922 = vmatprep.subr.mxu0 %v5632
    %5923 = vmatpush1.msra.mxu0 %v5631
    %5924 = vmatprep.subr.mxu0 %v5636
    %5925 = vmatpush1.msra.mxu0 %v5635
    %5926 = vmatprep.subr.mxu0 %v5640
    %5927 = vmatpush1.msra.mxu0 %v5639
    %5928 = vmatprep.subr.mxu0 %v5644
    %5929 = vmatpush1.msra.mxu0 %v5643
    %5930 = vmatprep.mubr.f32.mxu0 %v5648
    %5931 = vmatmul.mubr.f32.gmra.mrb[0].mxu0 %v5647
    %v5932 = vpop.f32.mrb[0].mxu0
    %v5933 = vadd.f32 %v5862, %v5932
    %v5934 = vpop.f32.mrb[0].mxu0
    %v5935 = vadd.f32 %v5864, %v5934
    %5936 = vdwg.mxu0
    %v5937 = vadd.f32 %v5242, %v5791
    %v5938 = vadd.f32 %v5244, %v5793
    %v5939 = vadd.f32 %v5384, %v5933
    %v5940 = vadd.f32 %v5386, %v5935
    %s5941 = scalar_lea.vmem [#allocation13], 6144
    %v5942 = vld [vmem:[%s5941] sm:$0xff]
    %v5943 = vld [vmem:[%s5941 + $0x8] sm:$0xff]
    %v5944 = vld [vmem:[%s5941 + $0x10] sm:$0xff]
    %v5945 = vld [vmem:[%s5941 + $0x18] sm:$0xff]
    %v5946 = vld [vmem:[%s5941 + $0x20] sm:$0xff]
    %v5947 = vld [vmem:[%s5941 + $0x28] sm:$0xff]
    %v5948 = vld [vmem:[%s5941 + $0x30] sm:$0xff]
    %v5949 = vld [vmem:[%s5941 + $0x38] sm:$0xff]
    %v5950 = vld [vmem:[%s5941 + $0x40] sm:$0xff]
    %v5951 = vld [vmem:[%s5941 + $0x48] sm:$0xff]
    %v5952 = vld [vmem:[%s5941 + $0x50] sm:$0xff]
    %v5953 = vld [vmem:[%s5941 + $0x58] sm:$0xff]
    %v5954 = vld [vmem:[%s5941 + $0x60] sm:$0xff]
    %v5955 = vld [vmem:[%s5941 + $0x68] sm:$0xff]
    %v5956 = vld [vmem:[%s5941 + $0x70] sm:$0xff]
    %v5957 = vld [vmem:[%s5941 + $0x78] sm:$0xff]
    %v5958 = vld [vmem:[%s5941 + $0x80] sm:$0xff]
    %v5959 = vld [vmem:[%s5941 + $0x88] sm:$0xff]
    %v5960 = vld [vmem:[%s5941 + $0x90] sm:$0xff]
    %v5961 = vld [vmem:[%s5941 + $0x98] sm:$0xff]
    %v5962 = vld [vmem:[%s5941 + $0xa0] sm:$0xff]
    %v5963 = vld [vmem:[%s5941 + $0xa8] sm:$0xff]
    %v5964 = vld [vmem:[%s5941 + $0xb0] sm:$0xff]
    %v5965 = vld [vmem:[%s5941 + $0xb8] sm:$0xff]
    %v5966 = vld [vmem:[%s5941 + $0xc0] sm:$0xff]
    %v5967 = vld [vmem:[%s5941 + $0xc8] sm:$0xff]
    %v5968 = vld [vmem:[%s5941 + $0xd0] sm:$0xff]
    %v5969 = vld [vmem:[%s5941 + $0xd8] sm:$0xff]
    %v5970 = vld [vmem:[%s5941 + $0xe0] sm:$0xff]
    %v5971 = vld [vmem:[%s5941 + $0xe8] sm:$0xff]
    %v5972 = vld [vmem:[%s5941 + $0xf0] sm:$0xff]
    %v5973 = vld [vmem:[%s5941 + $0xf8] sm:$0xff]
    %v5974 = vld [vmem:[%s5941 + $0x100] sm:$0xff]
    %v5975 = vld [vmem:[%s5941 + $0x108] sm:$0xff]
    %v5976 = vld [vmem:[%s5941 + $0x110] sm:$0xff]
    %v5977 = vld [vmem:[%s5941 + $0x118] sm:$0xff]
    %v5978 = vld [vmem:[%s5941 + $0x120] sm:$0xff]
    %v5979 = vld [vmem:[%s5941 + $0x128] sm:$0xff]
    %v5980 = vld [vmem:[%s5941 + $0x130] sm:$0xff]
    %v5981 = vld [vmem:[%s5941 + $0x138] sm:$0xff]
    %v5982 = vld [vmem:[%s5941 + $0x140] sm:$0xff]
    %v5983 = vld [vmem:[%s5941 + $0x148] sm:$0xff]
    %v5984 = vld [vmem:[%s5941 + $0x150] sm:$0xff]
    %v5985 = vld [vmem:[%s5941 + $0x158] sm:$0xff]
    %v5986 = vld [vmem:[%s5941 + $0x160] sm:$0xff]
    %v5987 = vld [vmem:[%s5941 + $0x168] sm:$0xff]
    %v5988 = vld [vmem:[%s5941 + $0x170] sm:$0xff]
    %v5989 = vld [vmem:[%s5941 + $0x178] sm:$0xff]
    %v5990 = vld [vmem:[%s5941 + $0x180] sm:$0xff]
    %v5991 = vld [vmem:[%s5941 + $0x188] sm:$0xff]
    %v5992 = vld [vmem:[%s5941 + $0x190] sm:$0xff]
    %v5993 = vld [vmem:[%s5941 + $0x198] sm:$0xff]
    %v5994 = vld [vmem:[%s5941 + $0x1a0] sm:$0xff]
    %v5995 = vld [vmem:[%s5941 + $0x1a8] sm:$0xff]
    %v5996 = vld [vmem:[%s5941 + $0x1b0] sm:$0xff]
    %v5997 = vld [vmem:[%s5941 + $0x1b8] sm:$0xff]
    %v5998 = vld [vmem:[%s5941 + $0x1c0] sm:$0xff]
    %v5999 = vld [vmem:[%s5941 + $0x1c8] sm:$0xff]
    %v6000 = vld [vmem:[%s5941 + $0x1d0] sm:$0xff]
    %v6001 = vld [vmem:[%s5941 + $0x1d8] sm:$0xff]
    %v6002 = vld [vmem:[%s5941 + $0x1e0] sm:$0xff]
    %v6003 = vld [vmem:[%s5941 + $0x1e8] sm:$0xff]
    %v6004 = vld [vmem:[%s5941 + $0x1f0] sm:$0xff]
    %v6005 = vld [vmem:[%s5941 + $0x1f8] sm:$0xff]
    %v6006 = vld [vmem:[%s5941 + $0x200] sm:$0xff]
    %v6007 = vld [vmem:[%s5941 + $0x208] sm:$0xff]
    %v6008 = vld [vmem:[%s5941 + $0x210] sm:$0xff]
    %v6009 = vld [vmem:[%s5941 + $0x218] sm:$0xff]
    %v6010 = vld [vmem:[%s5941 + $0x220] sm:$0xff]
    %v6011 = vld [vmem:[%s5941 + $0x228] sm:$0xff]
    %v6012 = vld [vmem:[%s5941 + $0x230] sm:$0xff]
    %v6013 = vld [vmem:[%s5941 + $0x238] sm:$0xff]
    %v6014 = vld [vmem:[%s5941 + $0x240] sm:$0xff]
    %v6015 = vld [vmem:[%s5941 + $0x248] sm:$0xff]
    %v6016 = vld [vmem:[%s5941 + $0x250] sm:$0xff]
    %v6017 = vld [vmem:[%s5941 + $0x258] sm:$0xff]
    %v6018 = vld [vmem:[%s5941 + $0x260] sm:$0xff]
    %v6019 = vld [vmem:[%s5941 + $0x268] sm:$0xff]
    %v6020 = vld [vmem:[%s5941 + $0x270] sm:$0xff]
    %v6021 = vld [vmem:[%s5941 + $0x278] sm:$0xff]
    %v6022 = vld [vmem:[%s5941 + $0x280] sm:$0xff]
    %v6023 = vld [vmem:[%s5941 + $0x288] sm:$0xff]
    %v6024 = vld [vmem:[%s5941 + $0x290] sm:$0xff]
    %v6025 = vld [vmem:[%s5941 + $0x298] sm:$0xff]
    %v6026 = vld [vmem:[%s5941 + $0x2a0] sm:$0xff]
    %v6027 = vld [vmem:[%s5941 + $0x2a8] sm:$0xff]
    %v6028 = vld [vmem:[%s5941 + $0x2b0] sm:$0xff]
    %v6029 = vld [vmem:[%s5941 + $0x2b8] sm:$0xff]
    %v6030 = vld [vmem:[%s5941 + $0x2c0] sm:$0xff]
    %v6031 = vld [vmem:[%s5941 + $0x2c8] sm:$0xff]
    %v6032 = vld [vmem:[%s5941 + $0x2d0] sm:$0xff]
    %v6033 = vld [vmem:[%s5941 + $0x2d8] sm:$0xff]
    %v6034 = vld [vmem:[%s5941 + $0x2e0] sm:$0xff]
    %v6035 = vld [vmem:[%s5941 + $0x2e8] sm:$0xff]
    %v6036 = vld [vmem:[%s5941 + $0x2f0] sm:$0xff]
    %v6037 = vld [vmem:[%s5941 + $0x2f8] sm:$0xff]
    %v6038 = vld [vmem:[%s5941 + $0x300] sm:$0xff]
    %v6039 = vld [vmem:[%s5941 + $0x308] sm:$0xff]
    %v6040 = vld [vmem:[%s5941 + $0x310] sm:$0xff]
    %v6041 = vld [vmem:[%s5941 + $0x318] sm:$0xff]
    %v6042 = vld [vmem:[%s5941 + $0x320] sm:$0xff]
    %v6043 = vld [vmem:[%s5941 + $0x328] sm:$0xff]
    %v6044 = vld [vmem:[%s5941 + $0x330] sm:$0xff]
    %v6045 = vld [vmem:[%s5941 + $0x338] sm:$0xff]
    %v6046 = vld [vmem:[%s5941 + $0x340] sm:$0xff]
    %v6047 = vld [vmem:[%s5941 + $0x348] sm:$0xff]
    %v6048 = vld [vmem:[%s5941 + $0x350] sm:$0xff]
    %v6049 = vld [vmem:[%s5941 + $0x358] sm:$0xff]
    %v6050 = vld [vmem:[%s5941 + $0x360] sm:$0xff]
    %v6051 = vld [vmem:[%s5941 + $0x368] sm:$0xff]
    %v6052 = vld [vmem:[%s5941 + $0x370] sm:$0xff]
    %v6053 = vld [vmem:[%s5941 + $0x378] sm:$0xff]
    %v6054 = vld [vmem:[%s5941 + $0x380] sm:$0xff]
    %v6055 = vld [vmem:[%s5941 + $0x388] sm:$0xff]
    %v6056 = vld [vmem:[%s5941 + $0x390] sm:$0xff]
    %v6057 = vld [vmem:[%s5941 + $0x398] sm:$0xff]
    %v6058 = vld [vmem:[%s5941 + $0x3a0] sm:$0xff]
    %v6059 = vld [vmem:[%s5941 + $0x3a8] sm:$0xff]
    %v6060 = vld [vmem:[%s5941 + $0x3b0] sm:$0xff]
    %v6061 = vld [vmem:[%s5941 + $0x3b8] sm:$0xff]
    %v6062 = vld [vmem:[%s5941 + $0x3c0] sm:$0xff]
    %v6063 = vld [vmem:[%s5941 + $0x3c8] sm:$0xff]
    %v6064 = vld [vmem:[%s5941 + $0x3d0] sm:$0xff]
    %v6065 = vld [vmem:[%s5941 + $0x3d8] sm:$0xff]
    %v6066 = vld [vmem:[%s5941 + $0x3e0] sm:$0xff]
    %v6067 = vld [vmem:[%s5941 + $0x3e8] sm:$0xff]
    %v6068 = vld [vmem:[%s5941 + $0x3f0] sm:$0xff]
    %v6069 = vld [vmem:[%s5941 + $0x3f8] sm:$0xff]
    %v6070 = vld [vmem:[%s5941 + $0x400] sm:$0xff]
    %v6071 = vld [vmem:[%s5941 + $0x408] sm:$0xff]
    %v6072 = vld [vmem:[%s5941 + $0x410] sm:$0xff]
    %v6073 = vld [vmem:[%s5941 + $0x418] sm:$0xff]
    %v6074 = vld [vmem:[%s5941 + $0x420] sm:$0xff]
    %v6075 = vld [vmem:[%s5941 + $0x428] sm:$0xff]
    %v6076 = vld [vmem:[%s5941 + $0x430] sm:$0xff]
    %v6077 = vld [vmem:[%s5941 + $0x438] sm:$0xff]
    %v6078 = vld [vmem:[%s5941 + $0x440] sm:$0xff]
    %v6079 = vld [vmem:[%s5941 + $0x448] sm:$0xff]
    %v6080 = vld [vmem:[%s5941 + $0x450] sm:$0xff]
    %v6081 = vld [vmem:[%s5941 + $0x458] sm:$0xff]
    %v6082 = vld [vmem:[%s5941 + $0x460] sm:$0xff]
    %v6083 = vld [vmem:[%s5941 + $0x468] sm:$0xff]
    %v6084 = vld [vmem:[%s5941 + $0x470] sm:$0xff]
    %v6085 = vld [vmem:[%s5941 + $0x478] sm:$0xff]
    %v6086 = vld [vmem:[%s5941 + $0x480] sm:$0xff]
    %v6087 = vld [vmem:[%s5941 + $0x488] sm:$0xff]
    %v6088 = vld [vmem:[%s5941 + $0x490] sm:$0xff]
    %v6089 = vld [vmem:[%s5941 + $0x498] sm:$0xff]
    %v6090 = vld [vmem:[%s5941 + $0x4a0] sm:$0xff]
    %v6091 = vld [vmem:[%s5941 + $0x4a8] sm:$0xff]
    %v6092 = vld [vmem:[%s5941 + $0x4b0] sm:$0xff]
    %v6093 = vld [vmem:[%s5941 + $0x4b8] sm:$0xff]
    %v6094 = vld [vmem:[%s5941 + $0x4c0] sm:$0xff]
    %v6095 = vld [vmem:[%s5941 + $0x4c8] sm:$0xff]
    %v6096 = vld [vmem:[%s5941 + $0x4d0] sm:$0xff]
    %v6097 = vld [vmem:[%s5941 + $0x4d8] sm:$0xff]
    %v6098 = vld [vmem:[%s5941 + $0x4e0] sm:$0xff]
    %v6099 = vld [vmem:[%s5941 + $0x4e8] sm:$0xff]
    %v6100 = vld [vmem:[%s5941 + $0x4f0] sm:$0xff]
    %v6101 = vld [vmem:[%s5941 + $0x4f8] sm:$0xff]
    %v6102 = vld [vmem:[%s5941 + $0x500] sm:$0xff]
    %v6103 = vld [vmem:[%s5941 + $0x508] sm:$0xff]
    %v6104 = vld [vmem:[%s5941 + $0x510] sm:$0xff]
    %v6105 = vld [vmem:[%s5941 + $0x518] sm:$0xff]
    %v6106 = vld [vmem:[%s5941 + $0x520] sm:$0xff]
    %v6107 = vld [vmem:[%s5941 + $0x528] sm:$0xff]
    %v6108 = vld [vmem:[%s5941 + $0x530] sm:$0xff]
    %v6109 = vld [vmem:[%s5941 + $0x538] sm:$0xff]
    %v6110 = vld [vmem:[%s5941 + $0x540] sm:$0xff]
    %v6111 = vld [vmem:[%s5941 + $0x548] sm:$0xff]
    %v6112 = vld [vmem:[%s5941 + $0x550] sm:$0xff]
    %v6113 = vld [vmem:[%s5941 + $0x558] sm:$0xff]
    %v6114 = vld [vmem:[%s5941 + $0x560] sm:$0xff]
    %v6115 = vld [vmem:[%s5941 + $0x568] sm:$0xff]
    %v6116 = vld [vmem:[%s5941 + $0x570] sm:$0xff]
    %v6117 = vld [vmem:[%s5941 + $0x578] sm:$0xff]
    %v6118 = vld [vmem:[%s5941 + $0x580] sm:$0xff]
    %v6119 = vld [vmem:[%s5941 + $0x588] sm:$0xff]
    %v6120 = vld [vmem:[%s5941 + $0x590] sm:$0xff]
    %v6121 = vld [vmem:[%s5941 + $0x598] sm:$0xff]
    %v6122 = vld [vmem:[%s5941 + $0x5a0] sm:$0xff]
    %v6123 = vld [vmem:[%s5941 + $0x5a8] sm:$0xff]
    %v6124 = vld [vmem:[%s5941 + $0x5b0] sm:$0xff]
    %v6125 = vld [vmem:[%s5941 + $0x5b8] sm:$0xff]
    %v6126 = vld [vmem:[%s5941 + $0x5c0] sm:$0xff]
    %v6127 = vld [vmem:[%s5941 + $0x5c8] sm:$0xff]
    %v6128 = vld [vmem:[%s5941 + $0x5d0] sm:$0xff]
    %v6129 = vld [vmem:[%s5941 + $0x5d8] sm:$0xff]
    %v6130 = vld [vmem:[%s5941 + $0x5e0] sm:$0xff]
    %v6131 = vld [vmem:[%s5941 + $0x5e8] sm:$0xff]
    %v6132 = vld [vmem:[%s5941 + $0x5f0] sm:$0xff]
    %v6133 = vld [vmem:[%s5941 + $0x5f8] sm:$0xff]
    %v6134 = vld [vmem:[%s5941 + $0x600] sm:$0xff]
    %v6135 = vld [vmem:[%s5941 + $0x608] sm:$0xff]
    %v6136 = vld [vmem:[%s5941 + $0x610] sm:$0xff]
    %v6137 = vld [vmem:[%s5941 + $0x618] sm:$0xff]
    %v6138 = vld [vmem:[%s5941 + $0x620] sm:$0xff]
    %v6139 = vld [vmem:[%s5941 + $0x628] sm:$0xff]
    %v6140 = vld [vmem:[%s5941 + $0x630] sm:$0xff]
    %v6141 = vld [vmem:[%s5941 + $0x638] sm:$0xff]
    %v6142 = vld [vmem:[%s5941 + $0x640] sm:$0xff]
    %v6143 = vld [vmem:[%s5941 + $0x648] sm:$0xff]
    %v6144 = vld [vmem:[%s5941 + $0x650] sm:$0xff]
    %v6145 = vld [vmem:[%s5941 + $0x658] sm:$0xff]
    %v6146 = vld [vmem:[%s5941 + $0x660] sm:$0xff]
    %v6147 = vld [vmem:[%s5941 + $0x668] sm:$0xff]
    %v6148 = vld [vmem:[%s5941 + $0x670] sm:$0xff]
    %v6149 = vld [vmem:[%s5941 + $0x678] sm:$0xff]
    %v6150 = vld [vmem:[%s5941 + $0x680] sm:$0xff]
    %v6151 = vld [vmem:[%s5941 + $0x688] sm:$0xff]
    %v6152 = vld [vmem:[%s5941 + $0x690] sm:$0xff]
    %v6153 = vld [vmem:[%s5941 + $0x698] sm:$0xff]
    %v6154 = vld [vmem:[%s5941 + $0x6a0] sm:$0xff]
    %v6155 = vld [vmem:[%s5941 + $0x6a8] sm:$0xff]
    %v6156 = vld [vmem:[%s5941 + $0x6b0] sm:$0xff]
    %v6157 = vld [vmem:[%s5941 + $0x6b8] sm:$0xff]
    %v6158 = vld [vmem:[%s5941 + $0x6c0] sm:$0xff]
    %v6159 = vld [vmem:[%s5941 + $0x6c8] sm:$0xff]
    %v6160 = vld [vmem:[%s5941 + $0x6d0] sm:$0xff]
    %v6161 = vld [vmem:[%s5941 + $0x6d8] sm:$0xff]
    %v6162 = vld [vmem:[%s5941 + $0x6e0] sm:$0xff]
    %v6163 = vld [vmem:[%s5941 + $0x6e8] sm:$0xff]
    %v6164 = vld [vmem:[%s5941 + $0x6f0] sm:$0xff]
    %v6165 = vld [vmem:[%s5941 + $0x6f8] sm:$0xff]
    %v6166 = vld [vmem:[%s5941 + $0x700] sm:$0xff]
    %v6167 = vld [vmem:[%s5941 + $0x708] sm:$0xff]
    %v6168 = vld [vmem:[%s5941 + $0x710] sm:$0xff]
    %v6169 = vld [vmem:[%s5941 + $0x718] sm:$0xff]
    %v6170 = vld [vmem:[%s5941 + $0x720] sm:$0xff]
    %v6171 = vld [vmem:[%s5941 + $0x728] sm:$0xff]
    %v6172 = vld [vmem:[%s5941 + $0x730] sm:$0xff]
    %v6173 = vld [vmem:[%s5941 + $0x738] sm:$0xff]
    %v6174 = vld [vmem:[%s5941 + $0x740] sm:$0xff]
    %v6175 = vld [vmem:[%s5941 + $0x748] sm:$0xff]
    %v6176 = vld [vmem:[%s5941 + $0x750] sm:$0xff]
    %v6177 = vld [vmem:[%s5941 + $0x758] sm:$0xff]
    %v6178 = vld [vmem:[%s5941 + $0x760] sm:$0xff]
    %v6179 = vld [vmem:[%s5941 + $0x768] sm:$0xff]
    %v6180 = vld [vmem:[%s5941 + $0x770] sm:$0xff]
    %v6181 = vld [vmem:[%s5941 + $0x778] sm:$0xff]
    %v6182 = vld [vmem:[%s5941 + $0x780] sm:$0xff]
    %v6183 = vld [vmem:[%s5941 + $0x788] sm:$0xff]
    %v6184 = vld [vmem:[%s5941 + $0x790] sm:$0xff]
    %v6185 = vld [vmem:[%s5941 + $0x798] sm:$0xff]
    %v6186 = vld [vmem:[%s5941 + $0x7a0] sm:$0xff]
    %v6187 = vld [vmem:[%s5941 + $0x7a8] sm:$0xff]
    %v6188 = vld [vmem:[%s5941 + $0x7b0] sm:$0xff]
    %v6189 = vld [vmem:[%s5941 + $0x7b8] sm:$0xff]
    %v6190 = vld [vmem:[%s5941 + $0x7c0] sm:$0xff]
    %v6191 = vld [vmem:[%s5941 + $0x7c8] sm:$0xff]
    %v6192 = vld [vmem:[%s5941 + $0x7d0] sm:$0xff]
    %v6193 = vld [vmem:[%s5941 + $0x7d8] sm:$0xff]
    %v6194 = vld [vmem:[%s5941 + $0x7e0] sm:$0xff]
    %v6195 = vld [vmem:[%s5941 + $0x7e8] sm:$0xff]
    %v6196 = vld [vmem:[%s5941 + $0x7f0] sm:$0xff]
    %v6197 = vld [vmem:[%s5941 + $0x7f8] sm:$0xff]
    %v6198 = vrot.slane %v4291, 3
    %v6199 = vrot.slane %v4292, 3
    %v6200 = vrot.slane %v4293, 3
    %v6201 = vrot.slane %v4294, 3
    %6206 = vmatprep.subr.mxu0 %v5943
    %6207 = vmatpush1.msra.mxu0 %v5942
    %6208 = vmatprep.subr.mxu0 %v5947
    %6209 = vmatpush1.msra.mxu0 %v5946
    %6210 = vmatprep.subr.mxu0 %v5951
    %6211 = vmatpush1.msra.mxu0 %v5950
    %6212 = vmatprep.subr.mxu0 %v5955
    %6213 = vmatpush1.msra.mxu0 %v5954
    %6214 = vmatprep.subr.mxu0 %v5959
    %6215 = vmatpush1.msra.mxu0 %v5958
    %6216 = vmatprep.subr.mxu0 %v5963
    %6217 = vmatpush1.msra.mxu0 %v5962
    %6218 = vmatprep.subr.mxu0 %v5967
    %6219 = vmatpush1.msra.mxu0 %v5966
    %6220 = vmatprep.subr.mxu0 %v5971
    %6221 = vmatpush1.msra.mxu0 %v5970
    %6222 = vmatprep.subr.mxu0 %v5975
    %6223 = vmatpush1.msra.mxu0 %v5974
    %6224 = vmatprep.subr.mxu0 %v5979
    %6225 = vmatpush1.msra.mxu0 %v5978
    %6226 = vmatprep.subr.mxu0 %v5983
    %6227 = vmatpush1.msra.mxu0 %v5982
    %6228 = vmatprep.subr.mxu0 %v5987
    %6229 = vmatpush1.msra.mxu0 %v5986
    %6230 = vmatprep.subr.mxu0 %v5991
    %6231 = vmatpush1.msra.mxu0 %v5990
    %6232 = vmatprep.subr.mxu0 %v5995
    %6233 = vmatpush1.msra.mxu0 %v5994
    %6234 = vmatprep.subr.mxu0 %v5999
    %6235 = vmatpush1.msra.mxu0 %v5998
    %6236 = vmatprep.subr.mxu0 %v6003
    %6237 = vmatpush1.msra.mxu0 %v6002
    %6238 = vmatprep.subr.mxu0 %v6007
    %6239 = vmatpush1.msra.mxu0 %v6006
    %6240 = vmatprep.subr.mxu0 %v6011
    %6241 = vmatpush1.msra.mxu0 %v6010
    %6242 = vmatprep.subr.mxu0 %v6015
    %6243 = vmatpush1.msra.mxu0 %v6014
    %6244 = vmatprep.subr.mxu0 %v6019
    %6245 = vmatpush1.msra.mxu0 %v6018
    %6246 = vmatprep.subr.mxu0 %v6023
    %6247 = vmatpush1.msra.mxu0 %v6022
    %6248 = vmatprep.subr.mxu0 %v6027
    %6249 = vmatpush1.msra.mxu0 %v6026
    %6250 = vmatprep.subr.mxu0 %v6031
    %6251 = vmatpush1.msra.mxu0 %v6030
    %6252 = vmatprep.subr.mxu0 %v6035
    %6253 = vmatpush1.msra.mxu0 %v6034
    %6254 = vmatprep.subr.mxu0 %v6039
    %6255 = vmatpush1.msra.mxu0 %v6038
    %6256 = vmatprep.subr.mxu0 %v6043
    %6257 = vmatpush1.msra.mxu0 %v6042
    %6258 = vmatprep.subr.mxu0 %v6047
    %6259 = vmatpush1.msra.mxu0 %v6046
    %6260 = vmatprep.subr.mxu0 %v6051
    %6261 = vmatpush1.msra.mxu0 %v6050
    %6262 = vmatprep.subr.mxu0 %v6055
    %6263 = vmatpush1.msra.mxu0 %v6054
    %6264 = vmatprep.subr.mxu0 %v6059
    %6265 = vmatpush1.msra.mxu0 %v6058
    %6266 = vmatprep.subr.mxu0 %v6063
    %6267 = vmatpush1.msra.mxu0 %v6062
    %6268 = vmatprep.subr.mxu0 %v6067
    %6269 = vmatpush1.msra.mxu0 %v6066
    %6270 = vmatprep.mubr.f32.mxu0 %v6199
    %6271 = vmatmul.mubr.f32.gmra.mrb[0].mxu0 %v6198
    %v6272 = vpop.f32.mrb[0].mxu0
    %v6273 = vadd.f32 0.0, %v6272
    %v6274 = vpop.f32.mrb[0].mxu0
    %v6275 = vadd.f32 0.0, %v6274
    %6276 = vdwg.mxu0
    %6277 = vmatprep.subr.mxu0 %v6071
    %6278 = vmatpush1.msra.mxu0 %v6070
    %6279 = vmatprep.subr.mxu0 %v6075
    %6280 = vmatpush1.msra.mxu0 %v6074
    %6281 = vmatprep.subr.mxu0 %v6079
    %6282 = vmatpush1.msra.mxu0 %v6078
    %6283 = vmatprep.subr.mxu0 %v6083
    %6284 = vmatpush1.msra.mxu0 %v6082
    %6285 = vmatprep.subr.mxu0 %v6087
    %6286 = vmatpush1.msra.mxu0 %v6086
    %6287 = vmatprep.subr.mxu0 %v6091
    %6288 = vmatpush1.msra.mxu0 %v6090
    %6289 = vmatprep.subr.mxu0 %v6095
    %6290 = vmatpush1.msra.mxu0 %v6094
    %6291 = vmatprep.subr.mxu0 %v6099
    %6292 = vmatpush1.msra.mxu0 %v6098
    %6293 = vmatprep.subr.mxu0 %v6103
    %6294 = vmatpush1.msra.mxu0 %v6102
    %6295 = vmatprep.subr.mxu0 %v6107
    %6296 = vmatpush1.msra.mxu0 %v6106
    %6297 = vmatprep.subr.mxu0 %v6111
    %6298 = vmatpush1.msra.mxu0 %v6110
    %6299 = vmatprep.subr.mxu0 %v6115
    %6300 = vmatpush1.msra.mxu0 %v6114
    %6301 = vmatprep.subr.mxu0 %v6119
    %6302 = vmatpush1.msra.mxu0 %v6118
    %6303 = vmatprep.subr.mxu0 %v6123
    %6304 = vmatpush1.msra.mxu0 %v6122
    %6305 = vmatprep.subr.mxu0 %v6127
    %6306 = vmatpush1.msra.mxu0 %v6126
    %6307 = vmatprep.subr.mxu0 %v6131
    %6308 = vmatpush1.msra.mxu0 %v6130
    %6309 = vmatprep.subr.mxu0 %v6135
    %6310 = vmatpush1.msra.mxu0 %v6134
    %6311 = vmatprep.subr.mxu0 %v6139
    %6312 = vmatpush1.msra.mxu0 %v6138
    %6313 = vmatprep.subr.mxu0 %v6143
    %6314 = vmatpush1.msra.mxu0 %v6142
    %6315 = vmatprep.subr.mxu0 %v6147
    %6316 = vmatpush1.msra.mxu0 %v6146
    %6317 = vmatprep.subr.mxu0 %v6151
    %6318 = vmatpush1.msra.mxu0 %v6150
    %6319 = vmatprep.subr.mxu0 %v6155
    %6320 = vmatpush1.msra.mxu0 %v6154
    %6321 = vmatprep.subr.mxu0 %v6159
    %6322 = vmatpush1.msra.mxu0 %v6158
    %6323 = vmatprep.subr.mxu0 %v6163
    %6324 = vmatpush1.msra.mxu0 %v6162
    %6325 = vmatprep.subr.mxu0 %v6167
    %6326 = vmatpush1.msra.mxu0 %v6166
    %6327 = vmatprep.subr.mxu0 %v6171
    %6328 = vmatpush1.msra.mxu0 %v6170
    %6329 = vmatprep.subr.mxu0 %v6175
    %6330 = vmatpush1.msra.mxu0 %v6174
    %6331 = vmatprep.subr.mxu0 %v6179
    %6332 = vmatpush1.msra.mxu0 %v6178
    %6333 = vmatprep.subr.mxu0 %v6183
    %6334 = vmatpush1.msra.mxu0 %v6182
    %6335 = vmatprep.subr.mxu0 %v6187
    %6336 = vmatpush1.msra.mxu0 %v6186
    %6337 = vmatprep.subr.mxu0 %v6191
    %6338 = vmatpush1.msra.mxu0 %v6190
    %6339 = vmatprep.subr.mxu0 %v6195
    %6340 = vmatpush1.msra.mxu0 %v6194
    %6341 = vmatprep.mubr.f32.mxu0 %v6201
    %6342 = vmatmul.mubr.f32.gmra.mrb[0].mxu0 %v6200
    %v6343 = vpop.f32.mrb[0].mxu0
    %v6344 = vadd.f32 %v6273, %v6343
    %v6345 = vpop.f32.mrb[0].mxu0
    %v6346 = vadd.f32 %v6275, %v6345
    %6347 = vdwg.mxu0
    %6348 = vmatprep.subr.mxu0 %v5945
    %6349 = vmatpush1.msra.mxu0 %v5944
    %6350 = vmatprep.subr.mxu0 %v5949
    %6351 = vmatpush1.msra.mxu0 %v5948
    %6352 = vmatprep.subr.mxu0 %v5953
    %6353 = vmatpush1.msra.mxu0 %v5952
    %6354 = vmatprep.subr.mxu0 %v5957
    %6355 = vmatpush1.msra.mxu0 %v5956
    %6356 = vmatprep.subr.mxu0 %v5961
    %6357 = vmatpush1.msra.mxu0 %v5960
    %6358 = vmatprep.subr.mxu0 %v5965
    %6359 = vmatpush1.msra.mxu0 %v5964
    %6360 = vmatprep.subr.mxu0 %v5969
    %6361 = vmatpush1.msra.mxu0 %v5968
    %6362 = vmatprep.subr.mxu0 %v5973
    %6363 = vmatpush1.msra.mxu0 %v5972
    %6364 = vmatprep.subr.mxu0 %v5977
    %6365 = vmatpush1.msra.mxu0 %v5976
    %6366 = vmatprep.subr.mxu0 %v5981
    %6367 = vmatpush1.msra.mxu0 %v5980
    %6368 = vmatprep.subr.mxu0 %v5985
    %6369 = vmatpush1.msra.mxu0 %v5984
    %6370 = vmatprep.subr.mxu0 %v5989
    %6371 = vmatpush1.msra.mxu0 %v5988
    %6372 = vmatprep.subr.mxu0 %v5993
    %6373 = vmatpush1.msra.mxu0 %v5992
    %6374 = vmatprep.subr.mxu0 %v5997
    %6375 = vmatpush1.msra.mxu0 %v5996
    %6376 = vmatprep.subr.mxu0 %v6001
    %6377 = vmatpush1.msra.mxu0 %v6000
    %6378 = vmatprep.subr.mxu0 %v6005
    %6379 = vmatpush1.msra.mxu0 %v6004
    %6380 = vmatprep.subr.mxu0 %v6009
    %6381 = vmatpush1.msra.mxu0 %v6008
    %6382 = vmatprep.subr.mxu0 %v6013
    %6383 = vmatpush1.msra.mxu0 %v6012
    %6384 = vmatprep.subr.mxu0 %v6017
    %6385 = vmatpush1.msra.mxu0 %v6016
    %6386 = vmatprep.subr.mxu0 %v6021
    %6387 = vmatpush1.msra.mxu0 %v6020
    %6388 = vmatprep.subr.mxu0 %v6025
    %6389 = vmatpush1.msra.mxu0 %v6024
    %6390 = vmatprep.subr.mxu0 %v6029
    %6391 = vmatpush1.msra.mxu0 %v6028
    %6392 = vmatprep.subr.mxu0 %v6033
    %6393 = vmatpush1.msra.mxu0 %v6032
    %6394 = vmatprep.subr.mxu0 %v6037
    %6395 = vmatpush1.msra.mxu0 %v6036
    %6396 = vmatprep.subr.mxu0 %v6041
    %6397 = vmatpush1.msra.mxu0 %v6040
    %6398 = vmatprep.subr.mxu0 %v6045
    %6399 = vmatpush1.msra.mxu0 %v6044
    %6400 = vmatprep.subr.mxu0 %v6049
    %6401 = vmatpush1.msra.mxu0 %v6048
    %6402 = vmatprep.subr.mxu0 %v6053
    %6403 = vmatpush1.msra.mxu0 %v6052
    %6404 = vmatprep.subr.mxu0 %v6057
    %6405 = vmatpush1.msra.mxu0 %v6056
    %6406 = vmatprep.subr.mxu0 %v6061
    %6407 = vmatpush1.msra.mxu0 %v6060
    %6408 = vmatprep.subr.mxu0 %v6065
    %6409 = vmatpush1.msra.mxu0 %v6064
    %6410 = vmatprep.subr.mxu0 %v6069
    %6411 = vmatpush1.msra.mxu0 %v6068
    %6412 = vmatprep.mubr.f32.mxu0 %v6199
    %6413 = vmatmul.mubr.f32.gmra.mrb[0].mxu0 %v6198
    %v6414 = vpop.f32.mrb[0].mxu0
    %v6415 = vadd.f32 0.0, %v6414
    %v6416 = vpop.f32.mrb[0].mxu0
    %v6417 = vadd.f32 0.0, %v6416
    %6418 = vdwg.mxu0
    %6419 = vmatprep.subr.mxu0 %v6073
    %6420 = vmatpush1.msra.mxu0 %v6072
    %6421 = vmatprep.subr.mxu0 %v6077
    %6422 = vmatpush1.msra.mxu0 %v6076
    %6423 = vmatprep.subr.mxu0 %v6081
    %6424 = vmatpush1.msra.mxu0 %v6080
    %6425 = vmatprep.subr.mxu0 %v6085
    %6426 = vmatpush1.msra.mxu0 %v6084
    %6427 = vmatprep.subr.mxu0 %v6089
    %6428 = vmatpush1.msra.mxu0 %v6088
    %6429 = vmatprep.subr.mxu0 %v6093
    %6430 = vmatpush1.msra.mxu0 %v6092
    %6431 = vmatprep.subr.mxu0 %v6097
    %6432 = vmatpush1.msra.mxu0 %v6096
    %6433 = vmatprep.subr.mxu0 %v6101
    %6434 = vmatpush1.msra.mxu0 %v6100
    %6435 = vmatprep.subr.mxu0 %v6105
    %6436 = vmatpush1.msra.mxu0 %v6104
    %6437 = vmatprep.subr.mxu0 %v6109
    %6438 = vmatpush1.msra.mxu0 %v6108
    %6439 = vmatprep.subr.mxu0 %v6113
    %6440 = vmatpush1.msra.mxu0 %v6112
    %6441 = vmatprep.subr.mxu0 %v6117
    %6442 = vmatpush1.msra.mxu0 %v6116
    %6443 = vmatprep.subr.mxu0 %v6121
    %6444 = vmatpush1.msra.mxu0 %v6120
    %6445 = vmatprep.subr.mxu0 %v6125
    %6446 = vmatpush1.msra.mxu0 %v6124
    %6447 = vmatprep.subr.mxu0 %v6129
    %6448 = vmatpush1.msra.mxu0 %v6128
    %6449 = vmatprep.subr.mxu0 %v6133
    %6450 = vmatpush1.msra.mxu0 %v6132
    %6451 = vmatprep.subr.mxu0 %v6137
    %6452 = vmatpush1.msra.mxu0 %v6136
    %6453 = vmatprep.subr.mxu0 %v6141
    %6454 = vmatpush1.msra.mxu0 %v6140
    %6455 = vmatprep.subr.mxu0 %v6145
    %6456 = vmatpush1.msra.mxu0 %v6144
    %6457 = vmatprep.subr.mxu0 %v6149
    %6458 = vmatpush1.msra.mxu0 %v6148
    %6459 = vmatprep.subr.mxu0 %v6153
    %6460 = vmatpush1.msra.mxu0 %v6152
    %6461 = vmatprep.subr.mxu0 %v6157
    %6462 = vmatpush1.msra.mxu0 %v6156
    %6463 = vmatprep.subr.mxu0 %v6161
    %6464 = vmatpush1.msra.mxu0 %v6160
    %6465 = vmatprep.subr.mxu0 %v6165
    %6466 = vmatpush1.msra.mxu0 %v6164
    %6467 = vmatprep.subr.mxu0 %v6169
    %6468 = vmatpush1.msra.mxu0 %v6168
    %6469 = vmatprep.subr.mxu0 %v6173
    %6470 = vmatpush1.msra.mxu0 %v6172
    %6471 = vmatprep.subr.mxu0 %v6177
    %6472 = vmatpush1.msra.mxu0 %v6176
    %6473 = vmatprep.subr.mxu0 %v6181
    %6474 = vmatpush1.msra.mxu0 %v6180
    %6475 = vmatprep.subr.mxu0 %v6185
    %6476 = vmatpush1.msra.mxu0 %v6184
    %6477 = vmatprep.subr.mxu0 %v6189
    %6478 = vmatpush1.msra.mxu0 %v6188
    %6479 = vmatprep.subr.mxu0 %v6193
    %6480 = vmatpush1.msra.mxu0 %v6192
    %6481 = vmatprep.subr.mxu0 %v6197
    %6482 = vmatpush1.msra.mxu0 %v6196
    %6483 = vmatprep.mubr.f32.mxu0 %v6201
    %6484 = vmatmul.mubr.f32.gmra.mrb[0].mxu0 %v6200
    %v6485 = vpop.f32.mrb[0].mxu0
    %v6486 = vadd.f32 %v6415, %v6485
    %v6487 = vpop.f32.mrb[0].mxu0
    %v6488 = vadd.f32 %v6417, %v6487
    %6489 = vdwg.mxu0
    %v6490 = vadd.f32 %v5937, %v6344
    %v6491 = vadd.f32 %v5938, %v6346
    %v6492 = vadd.f32 %v5939, %v6486
    %v6493 = vadd.f32 %v5940, %v6488
    %v6494 = vld [vmem:[#allocation2] sm:$0x1]
    %6496 = vset.pattern.permute.xlu0 0
    %6497 = vperm.xlu0 %6496, %v6494
    %v6498 = vpop.permute.xlu0 %6497
    %v6500 = vlaneseq
    %v6501 = vshrl.u32 %v6500, 7
    %v6502 = vsub.s32 0, %v6501
    %v6503 = vrot.slane %v6498, %v6502
    %v6504 = vadd.f32 %v6490, %v6503
    %v6505 = vadd.f32 %v6491, %v6503
    %v6506 = vadd.f32 %v6492, %v6503
    %v6507 = vadd.f32 %v6493, %v6503
    %v6512 = vcombine.low %v6504, %v6505
    %v6513 = vcombine.low %v6506, %v6507
    %v6515 = vunpack.c.l.s4 1966171168
    %v6516 = vunpack.c.0.s8 %v6515
    %v6517 = vlaneseq
    %v6518 = vshrl.u32 %v6517, 7
    %v6519 = vsub.s32 %v6516, %v6518
    %v6520 = vrot.slane %v6512, %v6519
    %v6522 = vunpack.c.l.s4 1966171168
    %v6523 = vunpack.c.0.s8 %v6522
    %v6524 = vlaneseq
    %v6525 = vshrl.u32 %v6524, 7
    %v6526 = vsub.s32 %v6523, %v6525
    %v6527 = vrot.slane %v6513, %v6526
    %v6528 = vcombine.low %v6520, %v6527
    %v6530 = vunpack.c.l.s4 1966171168
    %v6531 = vunpack.c.0.s8 %v6530
    %v6532 = vlaneseq
    %v6533 = vshrl.u32 %v6532, 7
    %v6534 = vsub.s32 %v6531, %v6533
    %v6535 = vrot.slane %v6528, %v6534
    %v6537 = vlaneseq
    %vm6538 = vcmp.ge.s32.totalorder %v6537, 0
    %vm6539 = vcmp.lt.s32.totalorder %v6537, 512
    %vm6540 = vmand %vm6538, %vm6539
    %6541 = vst.msk [vmem:[%s14] sm:$0xf] %vm6540, %v6535
    // Predicated region
    $region86: #{generator_forward.1} parent=1 // pred_check
      _
    $region87: #{generator_forward.1} parent=1 // pred_check_branch
      %6543 = sbr.rel (0) target = $region89
    $region88: #{generator_forward.1} parent=1 // pred_region
      _
    $region89: #{generator_forward.1} parent=1 // pred_fallthru
      _
    // Predicated region
    $region90: #{generator_forward.1} parent=1 // pred_check
      _
    $region91: #{generator_forward.1} parent=1 // pred_check_branch
      %6545 = sbr.rel (0) target = $region93
    $region92: #{generator_forward.1} parent=1 // pred_region
      _
    $region93: #{generator_forward.1} parent=1 // pred_fallthru
      _
    %6546 = vsyncpa [#allocation4], 1
    %6547 = vsyncpa [#allocation6], 1
    %6548 = vsyncpa [#allocation9], 1
    %6549 = vsyncpa [#allocation12], 1

</llo_original>
